<compile_context>
chip_gen: v5e
topology: v5e:2x2
jax: 0.10.0
libtpu: 0.0.40
codegen_flags: <defaults>
</compile_context>

<pallas_src>
import jax
import jax.numpy as jnp
from jax.experimental import pallas as pl
from jax.experimental.pallas import tpu as pltpu

EPS = 1e-5
LANE = 128


def _round_up(x, m):
    return (x + m - 1) // m * m


def _vmem_limit_bytes():
    """Per-generation scoped-VMEM budget (~3/4 of physical capacity)."""
    try:
        cap = int(pltpu.get_tpu_info().vmem_capacity_bytes)
    except Exception:
        cap = 64 * 1024 * 1024            # conservative fallback (v7x physical)
    return max(32 * 1024 * 1024, min(cap * 3 // 4, 112 * 1024 * 1024))


def _pick_chunk_h(H, W, target_rows=1024):
    """Row-chunk height TH (divides H) so each matmul chunk is ~target_rows."""
    th = max(1, min(H, max(1, target_rows // max(W, 1))))
    while H % th:
        th -= 1
    return th


def _pick_hw_tile(HW, cap=2048):
    """Row tile for the final pass: divides H*W and is a multiple of 128 (so the
    NCHW stores stay lane-dense), unless the whole image fits."""
    if HW <= cap:
        return HW
    t = cap - (cap % LANE)
    while t >= LANE:
        if HW % t == 0:
            return t
        t -= LANE
    # TODO(synk): no 128-multiple divisor -> whole-image tile; could exceed VMEM
    # for exotic H*W.  Fine for the usual power-of-two UNet spatial sizes.
    return HW


def _maybe_fori(n, body, init):
    """Bounded unrolling: tiny trip counts unroll (LLO visibility); larger trip
    counts use fori_loop so program size / vreg pressure stay capped."""
    if n <= 4:
        carry = init
        for c in range(n):
            carry = body(c, carry)
        return carry
    return jax.lax.fori_loop(0, n, body, init, unroll=2)


# --------------------------------------------------------------------------
# Kernel builder: [optional BN+ReLU of the input] -> 3x3 conv -> raw y + stats
# --------------------------------------------------------------------------
def _make_conv_kernel(H, W, Cin_k, Cp, Kp, TH, bn_relu_input):
    """Per grid step (one batch image):
         bn path   : yin (H*W, Cin_k) bf16, scale/shift (1, Cin_k) f32, w (Kp, Cp) bf16
         plain path: x (1, H, W, Cin_k) f32, w (Kp, Cp) bf16
       outputs     : y (H*W, Cp) bf16 (un-normalized conv), stats (1, 2, Cp) f32
       scratch     : xpad (H+2, W+2, Cin_k) f32, patch (TH*W, Kp) bf16
    """
    n_chunks = H // TH
    CHW = TH * W
    K_used = 9 * Cin_k

    def zero_halo(xpad_ref):
        # Only the 1-pixel border needs zeroing; the interior is fully
        # overwritten every grid step.  No program_id gating (megacore-safe).
        zrow = jnp.zeros((1, W + 2, Cin_k), xpad_ref.dtype)
        zcol = jnp.zeros((H + 2, 1, Cin_k), xpad_ref.dtype)
        xpad_ref[0:1, :, :] = zrow
        xpad_ref[H + 1:H + 2, :, :] = zrow
        xpad_ref[:, 0:1, :] = zcol
        xpad_ref[:, W + 1:W + 2, :] = zcol

    def conv_and_stats(w_ref, y_ref, stats_ref, xpad_ref, patch_ref):
        if Kp > K_used:
            # Zero the im2col K-padding columns once per grid step (the matching
            # weight rows are zero, but uninitialized VMEM could hold NaNs).
            patch_ref[:, K_used:Kp] = jnp.zeros((CHW, Kp - K_used),
                                                patch_ref.dtype)

        def body(c, carry):
            s_sum, s_sq = carry
            h0 = c * TH
            # im2col: (TH*W, Kp) bf16 patch, ONE large-K MXU matmul per chunk.
            for kh in range(3):
                for kw in range(3):
                    k = kh * 3 + kw
                    patch_ref[:, k * Cin_k:(k + 1) * Cin_k] = (
                        xpad_ref[pl.ds(h0 + kh, TH), kw:kw + W, :]
                        .reshape(CHW, Cin_k).astype(patch_ref.dtype))
            yt = jnp.dot(patch_ref[...], w_ref[...],
                         preferred_element_type=jnp.float32)
            r0 = c * CHW
            if not isinstance(c, int) and CHW % 8 == 0:
                r0 = pl.multiple_of(r0, 8)
            y_ref[pl.ds(r0, CHW), :] = yt.astype(y_ref.dtype)
            # Single-pass BN statistics (per channel), f32, from pre-cast values.
            return (s_sum + jnp.sum(yt, axis=0, keepdims=True),
                    s_sq + jnp.sum(yt * yt, axis=0, keepdims=True))

        init = (jnp.zeros((1, Cp), jnp.float32),
                jnp.zeros((1, Cp), jnp.float32))
        s_sum, s_sq = _maybe_fori(n_chunks, body, init)
        stats_ref[0:1, 0:1, :] = s_sum.reshape(1, 1, Cp)
        stats_ref[0:1, 1:2, :] = s_sq.reshape(1, 1, Cp)

    if bn_relu_input:
        def kernel(yin_ref, scale_ref, shift_ref, w_ref, y_ref, stats_ref,
                   xpad_ref, patch_ref):
            zero_halo(xpad_ref)
            scale = scale_ref[...]
            shift = shift_ref[...]

            def stage(c, carry):
                h0 = c * TH
                r0 = c * CHW
                if not isinstance(c, int) and CHW % 8 == 0:
                    r0 = pl.multiple_of(r0, 8)
                a = jnp.maximum(
                    yin_ref[pl.ds(r0, CHW), :].astype(jnp.float32) * scale
                    + shift, 0.0)
                xpad_ref[pl.ds(h0 + 1, TH), 1:W + 1, :] = (
                    a.astype(xpad_ref.dtype).reshape(TH, W, Cin_k))
                return carry

            _maybe_fori(n_chunks, stage, 0)
            conv_and_stats(w_ref, y_ref, stats_ref, xpad_ref, patch_ref)
    else:
        def kernel(x_ref, w_ref, y_ref, stats_ref, xpad_ref, patch_ref):
            zero_halo(xpad_ref)

            def stage(c, carry):
                h0 = c * TH
                blk = x_ref[0:1, pl.ds(h0, TH), :, :].reshape(TH, W, Cin_k)
                xpad_ref[pl.ds(h0 + 1, TH), 1:W + 1, :] = blk.astype(
                    xpad_ref.dtype)
                return carry

            _maybe_fori(n_chunks, stage, 0)
            conv_and_stats(w_ref, y_ref, stats_ref, xpad_ref, patch_ref)

    return kernel


def _conv_layer(x_or_y, w2d, scale, shift, *, N, H, W, Cin_k, Cp, vmem_limit):
    """One conv layer: optional fused BN+ReLU on the input, 3x3 'same' conv,
    raw (un-normalized) bf16 output + f32 per-image partial BN stats."""
    HW = H * W
    TH = _pick_chunk_h(H, W)
    Kp = w2d.shape[0]
    bn = scale is not None
    kernel = _make_conv_kernel(H, W, Cin_k, Cp, Kp, TH, bn)

    if bn:
        in_specs = [
            pl.BlockSpec((HW, Cin_k), lambda n: (n, 0)),
            pl.BlockSpec((1, Cin_k), lambda n: (0, 0)),
            pl.BlockSpec((1, Cin_k), lambda n: (0, 0)),
            pl.BlockSpec((Kp, Cp), lambda n: (0, 0)),
        ]
        args = (x_or_y, scale, shift, w2d)
    else:
        in_specs = [
            pl.BlockSpec((1, H, W, Cin_k), lambda n: (n, 0, 0, 0)),
            pl.BlockSpec((Kp, Cp), lambda n: (0, 0)),
        ]
        args = (x_or_y, w2d)

    y_raw, stats = pl.pallas_call(
        kernel,
        grid=(N,),
        in_specs=in_specs,
        out_specs=[pl.BlockSpec((HW, Cp), lambda n: (n, 0)),
                   pl.BlockSpec((1, 2, Cp), lambda n: (n, 0, 0))],
        out_shape=[jax.ShapeDtypeStruct((N * HW, Cp), jnp.bfloat16),
                   jax.ShapeDtypeStruct((N, 2, Cp), jnp.float32)],
        scratch_shapes=[pltpu.VMEM((H + 2, W + 2, Cin_k), jnp.float32),
                        pltpu.VMEM((TH * W, Kp), jnp.bfloat16)],
        compiler_params=pltpu.CompilerParams(
            dimension_semantics=("parallel",),
            vmem_limit_bytes=vmem_limit),
    )(*args)
    return y_raw, stats


def _bn_scale_shift(stats, count, gamma_p, beta_p):
    """Training-mode BN folded into y*scale + shift (per channel), O(C) math."""
    s = jnp.sum(stats, axis=0)                              # (2, Cp)
    mean = s[0] / count
    var = jnp.maximum(s[1] / count - mean * mean, 0.0)      # biased, one-pass
    scale = gamma_p * jax.lax.rsqrt(var + EPS)
    shift = beta_p - mean * scale
    return scale.reshape(1, -1), shift.reshape(1, -1)


# --------------------------------------------------------------------------
# Final BN+ReLU pass, written directly as NCHW (fused transpose + channel slice)
# --------------------------------------------------------------------------
def _make_bn_relu_nchw_kernel(Cout):
    def kernel(y_ref, scale_ref, shift_ref, o_ref):
        a = jnp.maximum(
            y_ref[...].astype(jnp.float32) * scale_ref[...] + shift_ref[...],
            0.0)                                   # (TR, Cp) f32
        # Transpose to channel-major and drop the channel padding in-kernel so
        # no trailing XLA slice + transpose HBM pass is needed.
        o_ref[0, :, :] = a.T[:Cout, :]             # (Cout, TR)
    return kernel


def _bn_relu_nchw(y_raw, scale, shift, *, N, H, W, Cout, vmem_limit):
    HW = H * W
    Cp = y_raw.shape[1]
    TR = _pick_hw_tile(HW)
    nr = HW // TR
    out3 = pl.pallas_call(
        _make_bn_relu_nchw_kernel(Cout),
        grid=(N, nr),
        in_specs=[pl.BlockSpec((TR, Cp), lambda n, r: (n * nr + r, 0)),
                  pl.BlockSpec((1, Cp), lambda n, r: (0, 0)),
                  pl.BlockSpec((1, Cp), lambda n, r: (0, 0))],
        out_specs=pl.BlockSpec((1, Cout, TR), lambda n, r: (n, 0, r)),
        out_shape=jax.ShapeDtypeStruct((N, Cout, HW), jnp.float32),
        compiler_params=pltpu.CompilerParams(
            dimension_semantics=("parallel", "parallel"),
            vmem_limit_bytes=vmem_limit),
    )(y_raw, scale, shift)
    return out3.reshape(N, Cout, H, W)             # metadata-only reshape


# --------------------------------------------------------------------------
# Public forward: DoubleConv, NCHW in / NCHW out (PyTorch convention)
# --------------------------------------------------------------------------
def double_conv(x_nchw, params):
    N, Cin, H, W = x_nchw.shape
    Cout = params["w1"].shape[-1]
    assert (H * W) % 8 == 0, "H*W must be a multiple of 8 for TPU tiling"
    C1p = _round_up(Cout, LANE)
    C2p = C1p
    Kp1 = _round_up(9 * Cin, LANE)
    Kp2 = _round_up(9 * C1p, LANE)       # == 9*C1p since C1p is a LANE multiple
    count = float(N * H * W)
    vmem_limit = _vmem_limit_bytes()

    # NCHW -> NHWC (channels in lanes); done once on the (smallest) tensor.
    x_nhwc = jnp.transpose(x_nchw, (0, 2, 3, 1))

    # Weights -> (Kp, Cp) bf16; zero rows/cols for the K / channel padding.
    # Conv biases b1/b2 are intentionally NOT used: a per-channel constant
    # cancels exactly under training-mode BatchNorm.
    w1_2d = jnp.pad(params["w1"],
                    ((0, 0), (0, 0), (0, 0), (0, C1p - Cout))
                    ).reshape(9 * Cin, C1p)
    w1_2d = jnp.pad(w1_2d, ((0, Kp1 - 9 * Cin), (0, 0))).astype(jnp.bfloat16)
    w2_2d = jnp.pad(params["w2"],
                    ((0, 0), (0, 0), (0, C1p - Cout), (0, C2p - Cout))
                    ).reshape(9 * C1p, C2p)
    w2_2d = jnp.pad(w2_2d, ((0, Kp2 - 9 * C1p), (0, 0))).astype(jnp.bfloat16)
    g1 = jnp.pad(params["g1"], (0, C1p - Cout))
    be1 = jnp.pad(params["be1"], (0, C1p - Cout))
    g2 = jnp.pad(params["g2"], (0, C2p - Cout))
    be2 = jnp.pad(params["be2"], (0, C2p - Cout))

    # Layer 1: conv + partial BN stats.
    y1, st1 = _conv_layer(x_nhwc, w1_2d, None, None,
                          N=N, H=H, W=W, Cin_k=Cin, Cp=C1p,
                          vmem_limit=vmem_limit)
    scale1, shift1 = _bn_scale_shift(st1, count, g1, be1)

    # Layer 2: BN1+ReLU fused with conv2 + partial BN stats.
    y2, st2 = _conv_layer(y1, w2_2d, scale1, shift1,
                          N=N, H=H, W=W, Cin_k=C1p, Cp=C2p,
                          vmem_limit=vmem_limit)
    scale2, shift2 = _bn_scale_shift(st2, count, g2, be2)

    # Final BN2 + ReLU, stored directly as NCHW (channel pad dropped in-kernel).
    return _bn_relu_nchw(y2, scale2, shift2,
                         N=N, H=H, W=W, Cout=Cout, vmem_limit=vmem_limit)


# ---------------- pure-JAX reference (for correctness check) ----------------
def _ref_layer(x_nchw, w_hwio, b, gamma, beta):
    w_oihw = jnp.transpose(w_hwio, (3, 2, 0, 1))
    y = jax.lax.conv_general_dilated(
        x_nchw, w_oihw, window_strides=(1, 1), padding=((1, 1), (1, 1)),
        dimension_numbers=("NCHW", "OIHW", "NCHW"))
    y = y + b.reshape(1, -1, 1, 1)
    mean = jnp.mean(y, axis=(0, 2, 3), keepdims=True)
    var = jnp.mean(jnp.square(y - mean), axis=(0, 2, 3), keepdims=True)
    y = (y - mean) * jax.lax.rsqrt(var + EPS)
    y = y * gamma.reshape(1, -1, 1, 1) + beta.reshape(1, -1, 1, 1)
    return jnp.maximum(y, 0.0)


def double_conv_ref(x_nchw, p):
    y = _ref_layer(x_nchw, p["w1"], p["b1"], p["g1"], p["be1"])
    return _ref_layer(y, p["w2"], p["b2"], p["g2"], p["be2"])


def init_params(key, in_ch, out_ch):
    k1, k2, k3, k4 = jax.random.split(key, 4)
    bound1 = 1.0 / jnp.sqrt(in_ch * 9.0)
    bound2 = 1.0 / jnp.sqrt(out_ch * 9.0)
    return {
        "w1": jax.random.uniform(k1, (3, 3, in_ch, out_ch), jnp.float32,
                                 -bound1, bound1),
        "b1": jax.random.uniform(k2, (out_ch,), jnp.float32, -bound1, bound1),
        "g1": jnp.ones((out_ch,), jnp.float32),
        "be1": jnp.zeros((out_ch,), jnp.float32),
        "w2": jax.random.uniform(k3, (3, 3, out_ch, out_ch), jnp.float32,
                                 -bound2, bound2),
        "b2": jax.random.uniform(k4, (out_ch,), jnp.float32, -bound2, bound2),
        "g2": jnp.ones((out_ch,), jnp.float32),
        "be2": jnp.zeros((out_ch,), jnp.float32),
    }


if __name__ == "__main__":
    key = jax.random.PRNGKey(0)
    kx, kp = jax.random.split(key)
    N, Cin, Cout, H, W = 2, 4, 8, 16, 16

    x = jax.random.normal(kx, (N, Cin, H, W), jnp.float32)   # NCHW, like PyTorch
    params = init_params(kp, Cin, Cout)

    out = jax.block_until_ready(jax.jit(double_conv)(x, params))
    ref = jax.block_until_ready(double_conv_ref(x, params))

    assert out.shape == (N, Cout, H, W), out.shape
    # bf16 MXU operands (+ bf16 inter-pass intermediates) vs the f32 reference:
    # expected max abs error is ~1e-2 on O(1) BN outputs, so tolerance is 5e-2.
    max_err = float(jnp.max(jnp.abs(out - ref)))
    assert jnp.allclose(out, ref, atol=5e-2, rtol=5e-2), max_err
    print("KERNEL_OK")
</pallas_src>

<mosaic_0001>
module attributes {stable_mosaic.version = 11 : i64} {
  func.func @kernel(%arg0: i32, %arg1: memref<1x16x16x4xf32, #tpu.memory_space<vmem>>, %arg2: memref<128x128xbf16, #tpu.memory_space<vmem>>, %arg3: memref<256x128xbf16, #tpu.memory_space<vmem>>, %arg4: memref<1x2x128xf32, #tpu.memory_space<vmem>>, %arg5: memref<18x18x4xf32, #tpu.memory_space<vmem>>, %arg6: memref<256x128xbf16, #tpu.memory_space<vmem>>) attributes {dimension_semantics = [#tpu.dimension_semantics<parallel>], iteration_bounds = array<i64: 2>, scalar_prefetch = 0 : i64, scratch_operands = 2 : i64, tpu.core_type = #tpu.core_type<tc>, window_params = [{transform_indices = @transform_0, window_bounds = array<i64: 1, 16, 16, 4>}, {pipeline_mode = #tpu.pipeline_mode<synchronous>, transform_indices = @transform_1, window_bounds = array<i64: 128, 128>}, {transform_indices = @transform_2, window_bounds = array<i64: 256, 128>}, {transform_indices = @transform_3, window_bounds = array<i64: 1, 2, 128>}]} {
    %cst = arith.constant 0.000000e+00 : f32
    %0 = vector.broadcast %cst : f32 to vector<1x18x4xf32>
    %cst_0 = arith.constant 0.000000e+00 : f32
    %1 = vector.broadcast %cst_0 : f32 to vector<18x1x4xf32>
    %c0 = arith.constant 0 : index
    %c0_1 = arith.constant 0 : index
    %c0_2 = arith.constant 0 : index
    %2 = vector.load %arg5[%c0, %c0_1, %c0_2] : memref<18x18x4xf32, #tpu.memory_space<vmem>>, vector<1x18x4xf32>
    tpu.vector_store %arg5[%c0, %c0_1, %c0_2], %0 {strides = array<i32>} : memref<18x18x4xf32, #tpu.memory_space<vmem>>, vector<1x18x4xf32>,
    %c17 = arith.constant 17 : index
    %c0_3 = arith.constant 0 : index
    %c0_4 = arith.constant 0 : index
    %3 = vector.load %arg5[%c17, %c0_3, %c0_4] : memref<18x18x4xf32, #tpu.memory_space<vmem>>, vector<1x18x4xf32>
    tpu.vector_store %arg5[%c17, %c0_3, %c0_4], %0 {strides = array<i32>} : memref<18x18x4xf32, #tpu.memory_space<vmem>>, vector<1x18x4xf32>,
    %c0_5 = arith.constant 0 : index
    %c0_6 = arith.constant 0 : index
    %c0_7 = arith.constant 0 : index
    %4 = vector.load %arg5[%c0_5, %c0_6, %c0_7] : memref<18x18x4xf32, #tpu.memory_space<vmem>>, vector<18x1x4xf32>
    tpu.vector_store %arg5[%c0_5, %c0_6, %c0_7], %1 {strides = array<i32>} : memref<18x18x4xf32, #tpu.memory_space<vmem>>, vector<18x1x4xf32>,
    %c0_8 = arith.constant 0 : index
    %c17_9 = arith.constant 17 : index
    %c0_10 = arith.constant 0 : index
    %5 = vector.load %arg5[%c0_8, %c17_9, %c0_10] : memref<18x18x4xf32, #tpu.memory_space<vmem>>, vector<18x1x4xf32>
    tpu.vector_store %arg5[%c0_8, %c17_9, %c0_10], %1 {strides = array<i32>} : memref<18x18x4xf32, #tpu.memory_space<vmem>>, vector<18x1x4xf32>,
    %c0_11 = arith.constant 0 : index
    %c0_12 = arith.constant 0 : index
    %c0_13 = arith.constant 0 : index
    %c0_14 = arith.constant 0 : index
    %6 = vector.load %arg1[%c0_11, %c0_12, %c0_13, %c0_14] : memref<1x16x16x4xf32, #tpu.memory_space<vmem>>, vector<1x16x16x4xf32>
    %7 = vector.shape_cast %6 : vector<1x16x16x4xf32> to vector<16x16x4xf32>
    %c1 = arith.constant 1 : index
    %c1_15 = arith.constant 1 : index
    %c0_16 = arith.constant 0 : index
    %8 = vector.load %arg5[%c1, %c1_15, %c0_16] : memref<18x18x4xf32, #tpu.memory_space<vmem>>, vector<16x16x4xf32>
    tpu.vector_store %arg5[%c1, %c1_15, %c0_16], %7 {strides = array<i32>} : memref<18x18x4xf32, #tpu.memory_space<vmem>>, vector<16x16x4xf32>,
    %cst_17 = arith.constant 0.000000e+00 : bf16
    %9 = vector.broadcast %cst_17 : bf16 to vector<256x92xbf16>
    %c0_18 = arith.constant 0 : index
    %c36 = arith.constant 36 : index
    %10 = vector.load %arg6[%c0_18, %c36] : memref<256x128xbf16, #tpu.memory_space<vmem>>, vector<256x92xbf16>
    tpu.vector_store %arg6[%c0_18, %c36], %9 {strides = array<i32>} : memref<256x128xbf16, #tpu.memory_space<vmem>>, vector<256x92xbf16>,
    %cst_19 = arith.constant 0.000000e+00 : f32
    %11 = vector.broadcast %cst_19 : f32 to vector<1x128xf32>
    %cst_20 = arith.constant 0.000000e+00 : f32
    %12 = vector.broadcast %cst_20 : f32 to vector<1x128xf32>
    %c0_21 = arith.constant 0 : index
    %c0_22 = arith.constant 0 : index
    %c0_23 = arith.constant 0 : index
    %13 = vector.load %arg5[%c0_21, %c0_22, %c0_23] : memref<18x18x4xf32, #tpu.memory_space<vmem>>, vector<16x16x4xf32>
    %14 = vector.shape_cast %13 : vector<16x16x4xf32> to vector<256x4xf32>
    %15 = arith.truncf %14 : vector<256x4xf32> to vector<256x4xbf16>
    %c0_24 = arith.constant 0 : index
    %c0_25 = arith.constant 0 : index
    %16 = vector.load %arg6[%c0_24, %c0_25] : memref<256x128xbf16, #tpu.memory_space<vmem>>, vector<256x4xbf16>
    tpu.vector_store %arg6[%c0_24, %c0_25], %15 {strides = array<i32>} : memref<256x128xbf16, #tpu.memory_space<vmem>>, vector<256x4xbf16>,
    %c0_26 = arith.constant 0 : index
    %c1_27 = arith.constant 1 : index
    %c0_28 = arith.constant 0 : index
    %17 = vector.load %arg5[%c0_26, %c1_27, %c0_28] : memref<18x18x4xf32, #tpu.memory_space<vmem>>, vector<16x16x4xf32>
    %18 = vector.shape_cast %17 : vector<16x16x4xf32> to vector<256x4xf32>
    %19 = arith.truncf %18 : vector<256x4xf32> to vector<256x4xbf16>
    %c0_29 = arith.constant 0 : index
    %c4 = arith.constant 4 : index
    %20 = vector.load %arg6[%c0_29, %c4] : memref<256x128xbf16, #tpu.memory_space<vmem>>, vector<256x4xbf16>
    tpu.vector_store %arg6[%c0_29, %c4], %19 {strides = array<i32>} : memref<256x128xbf16, #tpu.memory_space<vmem>>, vector<256x4xbf16>,
    %c0_30 = arith.constant 0 : index
    %c2 = arith.constant 2 : index
    %c0_31 = arith.constant 0 : index
    %21 = vector.load %arg5[%c0_30, %c2, %c0_31] : memref<18x18x4xf32, #tpu.memory_space<vmem>>, vector<16x16x4xf32>
    %22 = vector.shape_cast %21 : vector<16x16x4xf32> to vector<256x4xf32>
    %23 = arith.truncf %22 : vector<256x4xf32> to vector<256x4xbf16>
    %c0_32 = arith.constant 0 : index
    %c8 = arith.constant 8 : index
    %24 = vector.load %arg6[%c0_32, %c8] : memref<256x128xbf16, #tpu.memory_space<vmem>>, vector<256x4xbf16>
    tpu.vector_store %arg6[%c0_32, %c8], %23 {strides = array<i32>} : memref<256x128xbf16, #tpu.memory_space<vmem>>, vector<256x4xbf16>,
    %c1_33 = arith.constant 1 : index
    %c0_34 = arith.constant 0 : index
    %c0_35 = arith.constant 0 : index
    %25 = vector.load %arg5[%c1_33, %c0_34, %c0_35] : memref<18x18x4xf32, #tpu.memory_space<vmem>>, vector<16x16x4xf32>
    %26 = vector.shape_cast %25 : vector<16x16x4xf32> to vector<256x4xf32>
    %27 = arith.truncf %26 : vector<256x4xf32> to vector<256x4xbf16>
    %c0_36 = arith.constant 0 : index
    %c12 = arith.constant 12 : index
    %28 = vector.load %arg6[%c0_36, %c12] : memref<256x128xbf16, #tpu.memory_space<vmem>>, vector<256x4xbf16>
    tpu.vector_store %arg6[%c0_36, %c12], %27 {strides = array<i32>} : memref<256x128xbf16, #tpu.memory_space<vmem>>, vector<256x4xbf16>,
    %c1_37 = arith.constant 1 : index
    %c1_38 = arith.constant 1 : index
    %c0_39 = arith.constant 0 : index
    %29 = vector.load %arg5[%c1_37, %c1_38, %c0_39] : memref<18x18x4xf32, #tpu.memory_space<vmem>>, vector<16x16x4xf32>
    %30 = vector.shape_cast %29 : vector<16x16x4xf32> to vector<256x4xf32>
    %31 = arith.truncf %30 : vector<256x4xf32> to vector<256x4xbf16>
    %c0_40 = arith.constant 0 : index
    %c16 = arith.constant 16 : index
    %32 = vector.load %arg6[%c0_40, %c16] : memref<256x128xbf16, #tpu.memory_space<vmem>>, vector<256x4xbf16>
    tpu.vector_store %arg6[%c0_40, %c16], %31 {strides = array<i32>} : memref<256x128xbf16, #tpu.memory_space<vmem>>, vector<256x4xbf16>,
    %c1_41 = arith.constant 1 : index
    %c2_42 = arith.constant 2 : index
    %c0_43 = arith.constant 0 : index
    %33 = vector.load %arg5[%c1_41, %c2_42, %c0_43] : memref<18x18x4xf32, #tpu.memory_space<vmem>>, vector<16x16x4xf32>
    %34 = vector.shape_cast %33 : vector<16x16x4xf32> to vector<256x4xf32>
    %35 = arith.truncf %34 : vector<256x4xf32> to vector<256x4xbf16>
    %c0_44 = arith.constant 0 : index
    %c20 = arith.constant 20 : index
    %36 = vector.load %arg6[%c0_44, %c20] : memref<256x128xbf16, #tpu.memory_space<vmem>>, vector<256x4xbf16>
    tpu.vector_store %arg6[%c0_44, %c20], %35 {strides = array<i32>} : memref<256x128xbf16, #tpu.memory_space<vmem>>, vector<256x4xbf16>,
    %c2_45 = arith.constant 2 : index
    %c0_46 = arith.constant 0 : index
    %c0_47 = arith.constant 0 : index
    %37 = vector.load %arg5[%c2_45, %c0_46, %c0_47] : memref<18x18x4xf32, #tpu.memory_space<vmem>>, vector<16x16x4xf32>
    %38 = vector.shape_cast %37 : vector<16x16x4xf32> to vector<256x4xf32>
    %39 = arith.truncf %38 : vector<256x4xf32> to vector<256x4xbf16>
    %c0_48 = arith.constant 0 : index
    %c24 = arith.constant 24 : index
    %40 = vector.load %arg6[%c0_48, %c24] : memref<256x128xbf16, #tpu.memory_space<vmem>>, vector<256x4xbf16>
    tpu.vector_store %arg6[%c0_48, %c24], %39 {strides = array<i32>} : memref<256x128xbf16, #tpu.memory_space<vmem>>, vector<256x4xbf16>,
    %c2_49 = arith.constant 2 : index
    %c1_50 = arith.constant 1 : index
    %c0_51 = arith.constant 0 : index
    %41 = vector.load %arg5[%c2_49, %c1_50, %c0_51] : memref<18x18x4xf32, #tpu.memory_space<vmem>>, vector<16x16x4xf32>
    %42 = vector.shape_cast %41 : vector<16x16x4xf32> to vector<256x4xf32>
    %43 = arith.truncf %42 : vector<256x4xf32> to vector<256x4xbf16>
    %c0_52 = arith.constant 0 : index
    %c28 = arith.constant 28 : index
    %44 = vector.load %arg6[%c0_52, %c28] : memref<256x128xbf16, #tpu.memory_space<vmem>>, vector<256x4xbf16>
    tpu.vector_store %arg6[%c0_52, %c28], %43 {strides = array<i32>} : memref<256x128xbf16, #tpu.memory_space<vmem>>, vector<256x4xbf16>,
    %c2_53 = arith.constant 2 : index
    %c2_54 = arith.constant 2 : index
    %c0_55 = arith.constant 0 : index
    %45 = vector.load %arg5[%c2_53, %c2_54, %c0_55] : memref<18x18x4xf32, #tpu.memory_space<vmem>>, vector<16x16x4xf32>
    %46 = vector.shape_cast %45 : vector<16x16x4xf32> to vector<256x4xf32>
    %47 = arith.truncf %46 : vector<256x4xf32> to vector<256x4xbf16>
    %c0_56 = arith.constant 0 : index
    %c32 = arith.constant 32 : index
    %48 = vector.load %arg6[%c0_56, %c32] : memref<256x128xbf16, #tpu.memory_space<vmem>>, vector<256x4xbf16>
    tpu.vector_store %arg6[%c0_56, %c32], %47 {strides = array<i32>} : memref<256x128xbf16, #tpu.memory_space<vmem>>, vector<256x4xbf16>,
    %c0_57 = arith.constant 0 : index
    %c0_58 = arith.constant 0 : index
    %49 = vector.load %arg6[%c0_57, %c0_58] : memref<256x128xbf16, #tpu.memory_space<vmem>>, vector<256x128xbf16>
    %c0_59 = arith.constant 0 : index
    %c0_60 = arith.constant 0 : index
    %50 = vector.load %arg2[%c0_59, %c0_60] : memref<128x128xbf16, #tpu.memory_space<vmem>>, vector<128x128xbf16>
    %cst_61 = arith.constant dense<0.000000e+00> : vector<256x128xf32>
    %51 = tpu.matmul %49, %50, %cst_61 {dimension_numbers = #tpu.dot_dimension_numbers<[1], [0], [0], [1], [0, 0, 1, 1], [], []>} : vector<256x128xbf16>, vector<128x128xbf16>, vector<256x128xf32> -> vector<256x128xf32>
    %52 = arith.truncf %51 : vector<256x128xf32> to vector<256x128xbf16>
    %c0_62 = arith.constant 0 : index
    %c0_63 = arith.constant 0 : index
    %53 = vector.load %arg3[%c0_62, %c0_63] : memref<256x128xbf16, #tpu.memory_space<vmem>>, vector<256x128xbf16>
    tpu.vector_store %arg3[%c0_62, %c0_63], %52 {strides = array<i32>} : memref<256x128xbf16, #tpu.memory_space<vmem>>, vector<256x128xbf16>,
    %cst_64 = arith.constant dense<0.000000e+00> : vector<128xf32>
    %54 = vector.multi_reduction <add>, %51, %cst_64 [0] : vector<256x128xf32> to vector<128xf32>
    %55 = vector.shape_cast %54 : vector<128xf32> to vector<1x128xf32>
    %56 = arith.addf %11, %55 : vector<1x128xf32>
    %57 = arith.mulf %51, %51 : vector<256x128xf32>
    %cst_65 = arith.constant dense<0.000000e+00> : vector<128xf32>
    %58 = vector.multi_reduction <add>, %57, %cst_65 [0] : vector<256x128xf32> to vector<128xf32>
    %59 = vector.shape_cast %58 : vector<128xf32> to vector<1x128xf32>
    %60 = arith.addf %12, %59 : vector<1x128xf32>
    %61 = vector.shape_cast %56 : vector<1x128xf32> to vector<1x1x128xf32>
    %c0_66 = arith.constant 0 : index
    %c0_67 = arith.constant 0 : index
    %c0_68 = arith.constant 0 : index
    %62 = vector.load %arg4[%c0_66, %c0_67, %c0_68] : memref<1x2x128xf32, #tpu.memory_space<vmem>>, vector<1x1x128xf32>
    tpu.vector_store %arg4[%c0_66, %c0_67, %c0_68], %61 {strides = array<i32>} : memref<1x2x128xf32, #tpu.memory_space<vmem>>, vector<1x1x128xf32>,
    %63 = vector.shape_cast %60 : vector<1x128xf32> to vector<1x1x128xf32>
    %c0_69 = arith.constant 0 : index
    %c1_70 = arith.constant 1 : index
    %c0_71 = arith.constant 0 : index
    %64 = vector.load %arg4[%c0_69, %c1_70, %c0_71] : memref<1x2x128xf32, #tpu.memory_space<vmem>>, vector<1x1x128xf32>
    tpu.vector_store %arg4[%c0_69, %c1_70, %c0_71], %63 {strides = array<i32>} : memref<1x2x128xf32, #tpu.memory_space<vmem>>, vector<1x1x128xf32>,
    return
  }
  func.func @transform_0(%arg0: i32) -> (i32, i32, i32, i32) {
    %c0_i32 = arith.constant 0 : i32
    %c0_i32_0 = arith.constant 0 : i32
    %c0_i32_1 = arith.constant 0 : i32
    %c0_i32_2 = arith.constant 0 : i32
    return %arg0, %c0_i32, %c0_i32_0, %c0_i32_1 : i32, i32, i32, i32
  }
  func.func @transform_1(%arg0: i32) -> (i32, i32) {
    %c0_i32 = arith.constant 0 : i32
    %c0_i32_0 = arith.constant 0 : i32
    %c0_i32_1 = arith.constant 0 : i32
    return %c0_i32, %c0_i32_0 : i32, i32
  }
  func.func @transform_2(%arg0: i32) -> (i32, i32) {
    %c0_i32 = arith.constant 0 : i32
    %c0_i32_0 = arith.constant 0 : i32
    return %arg0, %c0_i32 : i32, i32
  }
  func.func @transform_3(%arg0: i32) -> (i32, i32, i32) {
    %c0_i32 = arith.constant 0 : i32
    %c0_i32_0 = arith.constant 0 : i32
    %c0_i32_1 = arith.constant 0 : i32
    return %arg0, %c0_i32, %c0_i32_0 : i32, i32, i32
  }
}

module attributes {stable_mosaic.version = 11 : i64} {
  func.func @kernel(%arg0: i32, %arg1: memref<256x128xbf16, #tpu.memory_space<vmem>>, %arg2: memref<1x128xf32, #tpu.memory_space<vmem>>, %arg3: memref<1x128xf32, #tpu.memory_space<vmem>>, %arg4: memref<1152x128xbf16, #tpu.memory_space<vmem>>, %arg5: memref<256x128xbf16, #tpu.memory_space<vmem>>, %arg6: memref<1x2x128xf32, #tpu.memory_space<vmem>>, %arg7: memref<18x18x128xf32, #tpu.memory_space<vmem>>, %arg8: memref<256x1152xbf16, #tpu.memory_space<vmem>>) attributes {dimension_semantics = [#tpu.dimension_semantics<parallel>], iteration_bounds = array<i64: 2>, scalar_prefetch = 0 : i64, scratch_operands = 2 : i64, tpu.core_type = #tpu.core_type<tc>, window_params = [{transform_indices = @transform_0, window_bounds = array<i64: 256, 128>}, {pipeline_mode = #tpu.pipeline_mode<synchronous>, transform_indices = @transform_1, window_bounds = array<i64: 1, 128>}, {pipeline_mode = #tpu.pipeline_mode<synchronous>, transform_indices = @transform_2, window_bounds = array<i64: 1, 128>}, {pipeline_mode = #tpu.pipeline_mode<synchronous>, transform_indices = @transform_3, window_bounds = array<i64: 1152, 128>}, {transform_indices = @transform_4, window_bounds = array<i64: 256, 128>}, {transform_indices = @transform_5, window_bounds = array<i64: 1, 2, 128>}]} {
    %cst = arith.constant 0.000000e+00 : f32
    %0 = vector.broadcast %cst : f32 to vector<1x18x128xf32>
    %cst_0 = arith.constant 0.000000e+00 : f32
    %1 = vector.broadcast %cst_0 : f32 to vector<18x1x128xf32>
    %c0 = arith.constant 0 : index
    %c0_1 = arith.constant 0 : index
    %c0_2 = arith.constant 0 : index
    %2 = vector.load %arg7[%c0, %c0_1, %c0_2] : memref<18x18x128xf32, #tpu.memory_space<vmem>>, vector<1x18x128xf32>
    tpu.vector_store %arg7[%c0, %c0_1, %c0_2], %0 {strides = array<i32>} : memref<18x18x128xf32, #tpu.memory_space<vmem>>, vector<1x18x128xf32>,
    %c17 = arith.constant 17 : index
    %c0_3 = arith.constant 0 : index
    %c0_4 = arith.constant 0 : index
    %3 = vector.load %arg7[%c17, %c0_3, %c0_4] : memref<18x18x128xf32, #tpu.memory_space<vmem>>, vector<1x18x128xf32>
    tpu.vector_store %arg7[%c17, %c0_3, %c0_4], %0 {strides = array<i32>} : memref<18x18x128xf32, #tpu.memory_space<vmem>>, vector<1x18x128xf32>,
    %c0_5 = arith.constant 0 : index
    %c0_6 = arith.constant 0 : index
    %c0_7 = arith.constant 0 : index
    %4 = vector.load %arg7[%c0_5, %c0_6, %c0_7] : memref<18x18x128xf32, #tpu.memory_space<vmem>>, vector<18x1x128xf32>
    tpu.vector_store %arg7[%c0_5, %c0_6, %c0_7], %1 {strides = array<i32>} : memref<18x18x128xf32, #tpu.memory_space<vmem>>, vector<18x1x128xf32>,
    %c0_8 = arith.constant 0 : index
    %c17_9 = arith.constant 17 : index
    %c0_10 = arith.constant 0 : index
    %5 = vector.load %arg7[%c0_8, %c17_9, %c0_10] : memref<18x18x128xf32, #tpu.memory_space<vmem>>, vector<18x1x128xf32>
    tpu.vector_store %arg7[%c0_8, %c17_9, %c0_10], %1 {strides = array<i32>} : memref<18x18x128xf32, #tpu.memory_space<vmem>>, vector<18x1x128xf32>,
    %c0_11 = arith.constant 0 : index
    %c0_12 = arith.constant 0 : index
    %6 = vector.load %arg2[%c0_11, %c0_12] : memref<1x128xf32, #tpu.memory_space<vmem>>, vector<1x128xf32>
    %c0_13 = arith.constant 0 : index
    %c0_14 = arith.constant 0 : index
    %7 = vector.load %arg3[%c0_13, %c0_14] : memref<1x128xf32, #tpu.memory_space<vmem>>, vector<1x128xf32>
    %c0_15 = arith.constant 0 : index
    %c0_16 = arith.constant 0 : index
    %8 = vector.load %arg1[%c0_15, %c0_16] : memref<256x128xbf16, #tpu.memory_space<vmem>>, vector<256x128xbf16>
    %9 = arith.extf %8 : vector<256x128xbf16> to vector<256x128xf32>
    %10 = vector.broadcast %6 : vector<1x128xf32> to vector<256x128xf32>
    %11 = arith.mulf %9, %10 : vector<256x128xf32>
    %12 = vector.broadcast %7 : vector<1x128xf32> to vector<256x128xf32>
    %13 = arith.addf %11, %12 : vector<256x128xf32>
    %cst_17 = arith.constant 0.000000e+00 : f32
    %14 = vector.broadcast %cst_17 : f32 to vector<256x128xf32>
    %15 = arith.maximumf %13, %14 : vector<256x128xf32>
    %16 = vector.shape_cast %15 : vector<256x128xf32> to vector<16x16x128xf32>
    %c1 = arith.constant 1 : index
    %c1_18 = arith.constant 1 : index
    %c0_19 = arith.constant 0 : index
    %17 = vector.load %arg7[%c1, %c1_18, %c0_19] : memref<18x18x128xf32, #tpu.memory_space<vmem>>, vector<16x16x128xf32>
    tpu.vector_store %arg7[%c1, %c1_18, %c0_19], %16 {strides = array<i32>} : memref<18x18x128xf32, #tpu.memory_space<vmem>>, vector<16x16x128xf32>,
    %cst_20 = arith.constant 0.000000e+00 : f32
    %18 = vector.broadcast %cst_20 : f32 to vector<1x128xf32>
    %cst_21 = arith.constant 0.000000e+00 : f32
    %19 = vector.broadcast %cst_21 : f32 to vector<1x128xf32>
    %c0_22 = arith.constant 0 : index
    %c0_23 = arith.constant 0 : index
    %c0_24 = arith.constant 0 : index
    %20 = vector.load %arg7[%c0_22, %c0_23, %c0_24] : memref<18x18x128xf32, #tpu.memory_space<vmem>>, vector<16x16x128xf32>
    %21 = vector.shape_cast %20 : vector<16x16x128xf32> to vector<256x128xf32>
    %22 = arith.truncf %21 : vector<256x128xf32> to vector<256x128xbf16>
    %c0_25 = arith.constant 0 : index
    %c0_26 = arith.constant 0 : index
    %23 = vector.load %arg8[%c0_25, %c0_26] : memref<256x1152xbf16, #tpu.memory_space<vmem>>, vector<256x128xbf16>
    tpu.vector_store %arg8[%c0_25, %c0_26], %22 {strides = array<i32>} : memref<256x1152xbf16, #tpu.memory_space<vmem>>, vector<256x128xbf16>,
    %c0_27 = arith.constant 0 : index
    %c1_28 = arith.constant 1 : index
    %c0_29 = arith.constant 0 : index
    %24 = vector.load %arg7[%c0_27, %c1_28, %c0_29] : memref<18x18x128xf32, #tpu.memory_space<vmem>>, vector<16x16x128xf32>
    %25 = vector.shape_cast %24 : vector<16x16x128xf32> to vector<256x128xf32>
    %26 = arith.truncf %25 : vector<256x128xf32> to vector<256x128xbf16>
    %c0_30 = arith.constant 0 : index
    %c128 = arith.constant 128 : index
    %27 = vector.load %arg8[%c0_30, %c128] : memref<256x1152xbf16, #tpu.memory_space<vmem>>, vector<256x128xbf16>
    tpu.vector_store %arg8[%c0_30, %c128], %26 {strides = array<i32>} : memref<256x1152xbf16, #tpu.memory_space<vmem>>, vector<256x128xbf16>,
    %c0_31 = arith.constant 0 : index
    %c2 = arith.constant 2 : index
    %c0_32 = arith.constant 0 : index
    %28 = vector.load %arg7[%c0_31, %c2, %c0_32] : memref<18x18x128xf32, #tpu.memory_space<vmem>>, vector<16x16x128xf32>
    %29 = vector.shape_cast %28 : vector<16x16x128xf32> to vector<256x128xf32>
    %30 = arith.truncf %29 : vector<256x128xf32> to vector<256x128xbf16>
    %c0_33 = arith.constant 0 : index
    %c256 = arith.constant 256 : index
    %31 = vector.load %arg8[%c0_33, %c256] : memref<256x1152xbf16, #tpu.memory_space<vmem>>, vector<256x128xbf16>
    tpu.vector_store %arg8[%c0_33, %c256], %30 {strides = array<i32>} : memref<256x1152xbf16, #tpu.memory_space<vmem>>, vector<256x128xbf16>,
    %c1_34 = arith.constant 1 : index
    %c0_35 = arith.constant 0 : index
    %c0_36 = arith.constant 0 : index
    %32 = vector.load %arg7[%c1_34, %c0_35, %c0_36] : memref<18x18x128xf32, #tpu.memory_space<vmem>>, vector<16x16x128xf32>
    %33 = vector.shape_cast %32 : vector<16x16x128xf32> to vector<256x128xf32>
    %34 = arith.truncf %33 : vector<256x128xf32> to vector<256x128xbf16>
    %c0_37 = arith.constant 0 : index
    %c384 = arith.constant 384 : index
    %35 = vector.load %arg8[%c0_37, %c384] : memref<256x1152xbf16, #tpu.memory_space<vmem>>, vector<256x128xbf16>
    tpu.vector_store %arg8[%c0_37, %c384], %34 {strides = array<i32>} : memref<256x1152xbf16, #tpu.memory_space<vmem>>, vector<256x128xbf16>,
    %c1_38 = arith.constant 1 : index
    %c1_39 = arith.constant 1 : index
    %c0_40 = arith.constant 0 : index
    %36 = vector.load %arg7[%c1_38, %c1_39, %c0_40] : memref<18x18x128xf32, #tpu.memory_space<vmem>>, vector<16x16x128xf32>
    %37 = vector.shape_cast %36 : vector<16x16x128xf32> to vector<256x128xf32>
    %38 = arith.truncf %37 : vector<256x128xf32> to vector<256x128xbf16>
    %c0_41 = arith.constant 0 : index
    %c512 = arith.constant 512 : index
    %39 = vector.load %arg8[%c0_41, %c512] : memref<256x1152xbf16, #tpu.memory_space<vmem>>, vector<256x128xbf16>
    tpu.vector_store %arg8[%c0_41, %c512], %38 {strides = array<i32>} : memref<256x1152xbf16, #tpu.memory_space<vmem>>, vector<256x128xbf16>,
    %c1_42 = arith.constant 1 : index
    %c2_43 = arith.constant 2 : index
    %c0_44 = arith.constant 0 : index
    %40 = vector.load %arg7[%c1_42, %c2_43, %c0_44] : memref<18x18x128xf32, #tpu.memory_space<vmem>>, vector<16x16x128xf32>
    %41 = vector.shape_cast %40 : vector<16x16x128xf32> to vector<256x128xf32>
    %42 = arith.truncf %41 : vector<256x128xf32> to vector<256x128xbf16>
    %c0_45 = arith.constant 0 : index
    %c640 = arith.constant 640 : index
    %43 = vector.load %arg8[%c0_45, %c640] : memref<256x1152xbf16, #tpu.memory_space<vmem>>, vector<256x128xbf16>
    tpu.vector_store %arg8[%c0_45, %c640], %42 {strides = array<i32>} : memref<256x1152xbf16, #tpu.memory_space<vmem>>, vector<256x128xbf16>,
    %c2_46 = arith.constant 2 : index
    %c0_47 = arith.constant 0 : index
    %c0_48 = arith.constant 0 : index
    %44 = vector.load %arg7[%c2_46, %c0_47, %c0_48] : memref<18x18x128xf32, #tpu.memory_space<vmem>>, vector<16x16x128xf32>
    %45 = vector.shape_cast %44 : vector<16x16x128xf32> to vector<256x128xf32>
    %46 = arith.truncf %45 : vector<256x128xf32> to vector<256x128xbf16>
    %c0_49 = arith.constant 0 : index
    %c768 = arith.constant 768 : index
    %47 = vector.load %arg8[%c0_49, %c768] : memref<256x1152xbf16, #tpu.memory_space<vmem>>, vector<256x128xbf16>
    tpu.vector_store %arg8[%c0_49, %c768], %46 {strides = array<i32>} : memref<256x1152xbf16, #tpu.memory_space<vmem>>, vector<256x128xbf16>,
    %c2_50 = arith.constant 2 : index
    %c1_51 = arith.constant 1 : index
    %c0_52 = arith.constant 0 : index
    %48 = vector.load %arg7[%c2_50, %c1_51, %c0_52] : memref<18x18x128xf32, #tpu.memory_space<vmem>>, vector<16x16x128xf32>
    %49 = vector.shape_cast %48 : vector<16x16x128xf32> to vector<256x128xf32>
    %50 = arith.truncf %49 : vector<256x128xf32> to vector<256x128xbf16>
    %c0_53 = arith.constant 0 : index
    %c896 = arith.constant 896 : index
    %51 = vector.load %arg8[%c0_53, %c896] : memref<256x1152xbf16, #tpu.memory_space<vmem>>, vector<256x128xbf16>
    tpu.vector_store %arg8[%c0_53, %c896], %50 {strides = array<i32>} : memref<256x1152xbf16, #tpu.memory_space<vmem>>, vector<256x128xbf16>,
    %c2_54 = arith.constant 2 : index
    %c2_55 = arith.constant 2 : index
    %c0_56 = arith.constant 0 : index
    %52 = vector.load %arg7[%c2_54, %c2_55, %c0_56] : memref<18x18x128xf32, #tpu.memory_space<vmem>>, vector<16x16x128xf32>
    %53 = vector.shape_cast %52 : vector<16x16x128xf32> to vector<256x128xf32>
    %54 = arith.truncf %53 : vector<256x128xf32> to vector<256x128xbf16>
    %c0_57 = arith.constant 0 : index
    %c1024 = arith.constant 1024 : index
    %55 = vector.load %arg8[%c0_57, %c1024] : memref<256x1152xbf16, #tpu.memory_space<vmem>>, vector<256x128xbf16>
    tpu.vector_store %arg8[%c0_57, %c1024], %54 {strides = array<i32>} : memref<256x1152xbf16, #tpu.memory_space<vmem>>, vector<256x128xbf16>,
    %c0_58 = arith.constant 0 : index
    %c0_59 = arith.constant 0 : index
    %56 = vector.load %arg8[%c0_58, %c0_59] : memref<256x1152xbf16, #tpu.memory_space<vmem>>, vector<256x1152xbf16>
    %c0_60 = arith.constant 0 : index
    %c0_61 = arith.constant 0 : index
    %57 = vector.load %arg4[%c0_60, %c0_61] : memref<1152x128xbf16, #tpu.memory_space<vmem>>, vector<1152x128xbf16>
    %cst_62 = arith.constant dense<0.000000e+00> : vector<256x128xf32>
    %58 = tpu.matmul %56, %57, %cst_62 {dimension_numbers = #tpu.dot_dimension_numbers<[1], [0], [0], [1], [0, 0, 1, 1], [], []>} : vector<256x1152xbf16>, vector<1152x128xbf16>, vector<256x128xf32> -> vector<256x128xf32>
    %59 = arith.truncf %58 : vector<256x128xf32> to vector<256x128xbf16>
    %c0_63 = arith.constant 0 : index
    %c0_64 = arith.constant 0 : index
    %60 = vector.load %arg5[%c0_63, %c0_64] : memref<256x128xbf16, #tpu.memory_space<vmem>>, vector<256x128xbf16>
    tpu.vector_store %arg5[%c0_63, %c0_64], %59 {strides = array<i32>} : memref<256x128xbf16, #tpu.memory_space<vmem>>, vector<256x128xbf16>,
    %cst_65 = arith.constant dense<0.000000e+00> : vector<128xf32>
    %61 = vector.multi_reduction <add>, %58, %cst_65 [0] : vector<256x128xf32> to vector<128xf32>
    %62 = vector.shape_cast %61 : vector<128xf32> to vector<1x128xf32>
    %63 = arith.addf %18, %62 : vector<1x128xf32>
    %64 = arith.mulf %58, %58 : vector<256x128xf32>
    %cst_66 = arith.constant dense<0.000000e+00> : vector<128xf32>
    %65 = vector.multi_reduction <add>, %64, %cst_66 [0] : vector<256x128xf32> to vector<128xf32>
    %66 = vector.shape_cast %65 : vector<128xf32> to vector<1x128xf32>
    %67 = arith.addf %19, %66 : vector<1x128xf32>
    %68 = vector.shape_cast %63 : vector<1x128xf32> to vector<1x1x128xf32>
    %c0_67 = arith.constant 0 : index
    %c0_68 = arith.constant 0 : index
    %c0_69 = arith.constant 0 : index
    %69 = vector.load %arg6[%c0_67, %c0_68, %c0_69] : memref<1x2x128xf32, #tpu.memory_space<vmem>>, vector<1x1x128xf32>
    tpu.vector_store %arg6[%c0_67, %c0_68, %c0_69], %68 {strides = array<i32>} : memref<1x2x128xf32, #tpu.memory_space<vmem>>, vector<1x1x128xf32>,
    %70 = vector.shape_cast %67 : vector<1x128xf32> to vector<1x1x128xf32>
    %c0_70 = arith.constant 0 : index
    %c1_71 = arith.constant 1 : index
    %c0_72 = arith.constant 0 : index
    %71 = vector.load %arg6[%c0_70, %c1_71, %c0_72] : memref<1x2x128xf32, #tpu.memory_space<vmem>>, vector<1x1x128xf32>
    tpu.vector_store %arg6[%c0_70, %c1_71, %c0_72], %70 {strides = array<i32>} : memref<1x2x128xf32, #tpu.memory_space<vmem>>, vector<1x1x128xf32>,
    return
  }
  func.func @transform_0(%arg0: i32) -> (i32, i32) {
    %c0_i32 = arith.constant 0 : i32
    %c0_i32_0 = arith.constant 0 : i32
    return %arg0, %c0_i32 : i32, i32
  }
  func.func @transform_1(%arg0: i32) -> (i32, i32) {
    %c0_i32 = arith.constant 0 : i32
    %c0_i32_0 = arith.constant 0 : i32
    %c0_i32_1 = arith.constant 0 : i32
    return %c0_i32, %c0_i32_0 : i32, i32
  }
  func.func @transform_2(%arg0: i32) -> (i32, i32) {
    %c0_i32 = arith.constant 0 : i32
    %c0_i32_0 = arith.constant 0 : i32
    %c0_i32_1 = arith.constant 0 : i32
    return %c0_i32, %c0_i32_0 : i32, i32
  }
  func.func @transform_3(%arg0: i32) -> (i32, i32) {
    %c0_i32 = arith.constant 0 : i32
    %c0_i32_0 = arith.constant 0 : i32
    %c0_i32_1 = arith.constant 0 : i32
    return %c0_i32, %c0_i32_0 : i32, i32
  }
  func.func @transform_4(%arg0: i32) -> (i32, i32) {
    %c0_i32 = arith.constant 0 : i32
    %c0_i32_0 = arith.constant 0 : i32
    return %arg0, %c0_i32 : i32, i32
  }
  func.func @transform_5(%arg0: i32) -> (i32, i32, i32) {
    %c0_i32 = arith.constant 0 : i32
    %c0_i32_0 = arith.constant 0 : i32
    %c0_i32_1 = arith.constant 0 : i32
    return %arg0, %c0_i32, %c0_i32_0 : i32, i32, i32
  }
}

module attributes {stable_mosaic.version = 11 : i64} {
  func.func @kernel(%arg0: i32, %arg1: i32, %arg2: memref<256x128xbf16, #tpu.memory_space<vmem>>, %arg3: memref<1x128xf32, #tpu.memory_space<vmem>>, %arg4: memref<1x128xf32, #tpu.memory_space<vmem>>, %arg5: memref<1x8x256xf32, #tpu.memory_space<vmem>>) attributes {dimension_semantics = [#tpu.dimension_semantics<parallel>, #tpu.dimension_semantics<parallel>], iteration_bounds = array<i64: 2, 1>, scalar_prefetch = 0 : i64, scratch_operands = 0 : i64, tpu.core_type = #tpu.core_type<tc>, window_params = [{transform_indices = @transform_0, window_bounds = array<i64: 256, 128>}, {pipeline_mode = #tpu.pipeline_mode<synchronous>, transform_indices = @transform_1, window_bounds = array<i64: 1, 128>}, {pipeline_mode = #tpu.pipeline_mode<synchronous>, transform_indices = @transform_2, window_bounds = array<i64: 1, 128>}, {transform_indices = @transform_3, window_bounds = array<i64: 1, 8, 256>}]} {
    %c0 = arith.constant 0 : index
    %c0_0 = arith.constant 0 : index
    %0 = vector.load %arg2[%c0, %c0_0] : memref<256x128xbf16, #tpu.memory_space<vmem>>, vector<256x128xbf16>
    %1 = arith.extf %0 : vector<256x128xbf16> to vector<256x128xf32>
    %c0_1 = arith.constant 0 : index
    %c0_2 = arith.constant 0 : index
    %2 = vector.load %arg3[%c0_1, %c0_2] : memref<1x128xf32, #tpu.memory_space<vmem>>, vector<1x128xf32>
    %3 = vector.broadcast %2 : vector<1x128xf32> to vector<256x128xf32>
    %4 = arith.mulf %1, %3 : vector<256x128xf32>
    %c0_3 = arith.constant 0 : index
    %c0_4 = arith.constant 0 : index
    %5 = vector.load %arg4[%c0_3, %c0_4] : memref<1x128xf32, #tpu.memory_space<vmem>>, vector<1x128xf32>
    %6 = vector.broadcast %5 : vector<1x128xf32> to vector<256x128xf32>
    %7 = arith.addf %4, %6 : vector<256x128xf32>
    %cst = arith.constant 0.000000e+00 : f32
    %8 = vector.broadcast %cst : f32 to vector<256x128xf32>
    %9 = arith.maximumf %7, %8 : vector<256x128xf32>
    %10 = tpu.transpose %9, [1, 0] : vector<256x128xf32> -> vector<128x256xf32>
    %11 = vector.extract_strided_slice %10 {offsets = [0, 0], sizes = [8, 256], strides = [1, 1]} : vector<128x256xf32> to vector<8x256xf32>
    %c0_5 = arith.constant 0 : index
    %c0_6 = arith.constant 0 : index
    %c0_7 = arith.constant 0 : index
    %12 = vector.load %arg5[%c0_5, %c0_6, %c0_7] : memref<1x8x256xf32, #tpu.memory_space<vmem>>, vector<1x8x256xf32>
    %13 = vector.shape_cast %12 : vector<1x8x256xf32> to vector<8x256xf32>
    %14 = vector.shape_cast %11 : vector<8x256xf32> to vector<1x8x256xf32>
    tpu.vector_store %arg5[%c0_5, %c0_6, %c0_7], %14 {strides = array<i32>} : memref<1x8x256xf32, #tpu.memory_space<vmem>>, vector<1x8x256xf32>,
    return
  }
  func.func @transform_0(%arg0: i32, %arg1: i32) -> (i32, i32) {
    %c1_i32 = arith.constant 1 : i32
    %0 = arith.muli %arg0, %c1_i32 : i32
    %1 = arith.addi %0, %arg1 : i32
    %c0_i32 = arith.constant 0 : i32
    %c0_i32_0 = arith.constant 0 : i32
    return %1, %c0_i32 : i32, i32
  }
  func.func @transform_1(%arg0: i32, %arg1: i32) -> (i32, i32) {
    %c0_i32 = arith.constant 0 : i32
    %c0_i32_0 = arith.constant 0 : i32
    %c0_i32_1 = arith.constant 0 : i32
    return %c0_i32, %c0_i32_0 : i32, i32
  }
  func.func @transform_2(%arg0: i32, %arg1: i32) -> (i32, i32) {
    %c0_i32 = arith.constant 0 : i32
    %c0_i32_0 = arith.constant 0 : i32
    %c0_i32_1 = arith.constant 0 : i32
    return %c0_i32, %c0_i32_0 : i32, i32
  }
  func.func @transform_3(%arg0: i32, %arg1: i32) -> (i32, i32, i32) {
    %c0_i32 = arith.constant 0 : i32
    %c0_i32_0 = arith.constant 0 : i32
    return %arg0, %c0_i32, %arg1 : i32, i32, i32
  }
}

</mosaic_0001>

<llo_original>
// kernel: double_conv.5
$region0: #{double_conv.5}
  #allocation0 [shape = 'u32[]', space=smem, size = 0x4, offset = 0x4, fixed_abs, tag = 'smem constant byte address 0x4 - core index']
  #allocation1 [shape = 'u32[72,128]{1,0:T(1,128)}', space=vmem, size = 0x9000, scoped, tag = 'internal scratch']
  %s0 = inlined_call_operand.vmem [shape: bf16[512,128], index: 0, kind: input, shape index: {}]
  %s1 = inlined_call_operand.vmem [shape: f32[1,128], index: 1, kind: input, shape index: {}]
  %s2 = inlined_call_operand.vmem [shape: f32[1,128], index: 2, kind: input, shape index: {}]
  %s3 = inlined_call_operand.vmem [shape: f32[2,8,256], index: 3, kind: output, shape index: {}]
  %s4 = sld [smem:[#allocation0]]
  $region45: #{double_conv.5} parent=0
    _
  %s6 = ssub.s32 1, %s4
  %s7 = scalar_select 0, %s6, %s4
  loop: start=0, step=1, limit=4
  $region2: #{double_conv.5} parent=0 // loop_pre_header
    _
  $region3: #{double_conv.5} parent=0 // loop_header
    %s9 = sphi 0, %s13
    %p10 = scmp.ge.s32.totalorder %s9, 4
    %s16 = sphi 0, %s28
    %s17 = sphi 0, %s24
    %s18 = sphi 0, %s16
    %s19 = sphi 0, %s17
    %s20 = sphi 0, %s18
    %s21 = sphi 0, %s19
    %s33 = sphi 0, %s35
    %s36 = sphi 0, %s33
    %s37 = sphi 0, %s36
    %s53 = sphi 0, %s37
    %s57 = sphi 0, %s57
    %s59 = sphi 0, %s57
    %s60 = sphi 0, %s59
    %s74 = sphi 0, %s60
    %s78 = sphi 0, %s78
    %s80 = sphi 0, %s78
    %s81 = sphi 0, %s80
    %s95 = sphi 0, %s81
    %s103 = sphi 0, %s105
    %s106 = sphi 0, %s103
    %s107 = sphi 0, %s106
    %s123 = sphi 0, %s107
  $region4: #{double_conv.5} parent=0 // loop_header_branch
    %12 = sbr.rel (%p10) target = $region8
  $region5: #{double_conv.5} parent=0 // loop_body
    %s14 = ssub.s32 %s9, 1
    %s15 = ssub.s32 %s9, 2
    %s22 = sadd.s32 1, %s17
    %p23 = scmp.ge.s32.totalorder %s22, 1
    %s24 = scalar_select %p23, 0, %s22
    %s25 = sadd.s32 1, %s16
    %s26 = scalar_select %p23, %s25, %s16
    %p27 = scmp.ge.s32.totalorder %s26, 2
    %s28 = scalar_select %p27, 0, %s26
    %s29 = sadd.s32 %s16, %s17
    %s30 = sadd.s32 %s28, %s24
    %s31 = ssub.s32 %s29, %s30
    %p32 = scmp.eq.s32.totalorder %s31, 0
    %s34 = sadd.s32 %s33, 1
    %s35 = scalar_select %p32, %s33, %s34
    %p38 = pneg %p32
    %p39 = scmp.eq.s32.totalorder %s9, 1
    %p40 = por %p38, %p39
    %p41 = scmp.ne.s32.totalorder %s33, %s36
    %p42 = scmp.eq.s32.totalorder %s9, 0
    %p43 = por %p41, %p42
    %p44 = scmp.ne.s32.totalorder %s33, %s36
    %p45 = scmp.eq.s32.totalorder %s14, 1
    %p46 = por %p44, %p45
    %p47 = scmp.ne.s32.totalorder %s36, %s37
    %p48 = scmp.eq.s32.totalorder %s14, 0
    %p49 = por %p47, %p48
    %p50 = scmp.ne.s32.totalorder %s36, %s37
    %p51 = scmp.eq.s32.totalorder %s15, 1
    %p52 = por %p50, %p51
    %p54 = scmp.ne.s32.totalorder %s37, %s53
    %p55 = scmp.eq.s32.totalorder %s15, 0
    %p56 = por %p54, %p55
    %s58 = sadd.s32 %s57, 1
    %p61 = scmp.eq.s32.totalorder %s9, 1
    %p62 = scmp.ne.s32.totalorder %s57, %s59
    %p63 = scmp.eq.s32.totalorder %s9, 0
    %p64 = por %p62, %p63
    %p65 = scmp.ne.s32.totalorder %s57, %s59
    %p66 = scmp.eq.s32.totalorder %s14, 1
    %p67 = por %p65, %p66
    %p68 = scmp.ne.s32.totalorder %s59, %s60
    %p69 = scmp.eq.s32.totalorder %s14, 0
    %p70 = por %p68, %p69
    %p71 = scmp.ne.s32.totalorder %s59, %s60
    %p72 = scmp.eq.s32.totalorder %s15, 1
    %p73 = por %p71, %p72
    %p75 = scmp.ne.s32.totalorder %s60, %s74
    %p76 = scmp.eq.s32.totalorder %s15, 0
    %p77 = por %p75, %p76
    %s79 = sadd.s32 %s78, 1
    %p82 = scmp.eq.s32.totalorder %s9, 1
    %p83 = scmp.ne.s32.totalorder %s78, %s80
    %p84 = scmp.eq.s32.totalorder %s9, 0
    %p85 = por %p83, %p84
    %p86 = scmp.ne.s32.totalorder %s78, %s80
    %p87 = scmp.eq.s32.totalorder %s14, 1
    %p88 = por %p86, %p87
    %p89 = scmp.ne.s32.totalorder %s80, %s81
    %p90 = scmp.eq.s32.totalorder %s14, 0
    %p91 = por %p89, %p90
    %p92 = scmp.ne.s32.totalorder %s80, %s81
    %p93 = scmp.eq.s32.totalorder %s15, 1
    %p94 = por %p92, %p93
    %p96 = scmp.ne.s32.totalorder %s81, %s95
    %p97 = scmp.eq.s32.totalorder %s15, 0
    %p98 = por %p96, %p97
    %s99 = ssub.s32 %s16, %s28
    %s100 = ssub.s32 %s17, %s24
    %s101 = sor.u32 %s99, %s100
    %p102 = scmp.eq.s32.totalorder %s101, 0
    %s104 = sadd.s32 %s103, 1
    %s105 = scalar_select %p102, %s103, %s104
    %p108 = pneg %p102
    %p109 = scmp.eq.s32.totalorder %s9, 1
    %p110 = por %p108, %p109
    %p111 = scmp.ne.s32.totalorder %s103, %s106
    %p112 = scmp.eq.s32.totalorder %s9, 0
    %p113 = por %p111, %p112
    %p114 = scmp.ne.s32.totalorder %s103, %s106
    %p115 = scmp.eq.s32.totalorder %s14, 1
    %p116 = por %p114, %p115
    %p117 = scmp.ne.s32.totalorder %s106, %s107
    %p118 = scmp.eq.s32.totalorder %s14, 0
    %p119 = por %p117, %p118
    %p120 = scmp.ne.s32.totalorder %s106, %s107
    %p121 = scmp.eq.s32.totalorder %s15, 1
    %p122 = por %p120, %p121
    %p124 = scmp.ne.s32.totalorder %s107, %s123
    %p125 = scmp.eq.s32.totalorder %s15, 0
    %p126 = por %p124, %p125
    %p127 = scmp.le.s32.totalorder 1, %s9
    %p128 = scmp.lt.s32.totalorder %s9, 3
    %p129 = pnand %p127, %p128
    %p130 = pneg %p129
    // Predicated region
    $region9: #{double_conv.5} parent=5 // pred_check
      _
    $region10: #{double_conv.5} parent=5 // pred_check_branch
      %132 = sbr.rel (%p129) target = $region12
    $region11: #{double_conv.5} parent=5 // pred_region
      %s133 = ssub.s32 %s9, 1
      // Predicated region
      $region13: #{double_conv.5} parent=11 // pred_check
        %p134 = pneg %p70
      $region14: #{double_conv.5} parent=11 // pred_check_branch
        %136 = sbr.rel (%p134) target = $region16
      $region15: #{double_conv.5} parent=11 // pred_region
        _
      $region16: #{double_conv.5} parent=11 // pred_fallthru
        _
      // Predicated region
      $region17: #{double_conv.5} parent=11 // pred_check
        %p137 = pneg %p91
      $region18: #{double_conv.5} parent=11 // pred_check_branch
        %139 = sbr.rel (%p137) target = $region20
      $region19: #{double_conv.5} parent=11 // pred_region
        _
      $region20: #{double_conv.5} parent=11 // pred_fallthru
        _
    $region12: #{double_conv.5} parent=5 // pred_fallthru
      _
    %p140 = scmp.lt.s32.totalorder %s9, 2
    // Predicated region
    $region21: #{double_conv.5} parent=5 // pred_check
      %p141 = pneg %p140
    $region22: #{double_conv.5} parent=5 // pred_check_branch
      %143 = sbr.rel (%p141) target = $region24
    $region23: #{double_conv.5} parent=5 // pred_region
      // Predicated region
      $region25: #{double_conv.5} parent=23 // pred_check
        %p144 = pneg %p43
      $region26: #{double_conv.5} parent=23 // pred_check_branch
        %146 = sbr.rel (%p144) target = $region28
      $region27: #{double_conv.5} parent=23 // pred_region
        %s147 = sadd.s32 %s16, %s17
        %s148 = smul.u32 32, %s147
        %p149 = scmp.lt.s32.totalorder %s148, 63
        %s150 = scalar_select %p149, %s148, 63
        %s151 = smul.addr %s150, 4
        %s152 = scalar_lea.vmem %s0, %s151
        %s153 = sadd.s32 %s16, %s17
        %s154 = smul.u32 32, %s153
      $region28: #{double_conv.5} parent=23 // pred_fallthru
        _
    $region24: #{double_conv.5} parent=5 // pred_fallthru
      _
    %p155 = scmp.le.s32.totalorder 1, %s9
    %p156 = scmp.lt.s32.totalorder %s9, 3
    %p157 = pnand %p155, %p156
    %p158 = pneg %p157
    // Predicated region
    $region29: #{double_conv.5} parent=5 // pred_check
      _
    $region30: #{double_conv.5} parent=5 // pred_check_branch
      %160 = sbr.rel (%p157) target = $region32
    $region31: #{double_conv.5} parent=5 // pred_region
      %s161 = ssub.s32 %s9, 1
      %s162 = sadd.s32 %s18, %s19
      %s163 = smul.u32 32, %s162
      %p164 = scmp.lt.s32.totalorder %s163, 63
      %s165 = scalar_select %p164, %s163, 63
      %s166 = smul.addr %s165, 4
      %s167 = scalar_lea.vmem %s0, %s166
      %p168 = pneg %p49
      %p169 = pneg %p46
      %p170 = pneg %p70
      %p171 = pneg %p67
      %p172 = pneg %p91
      %p173 = pneg %p88
      %p174 = pneg %p119
      %p175 = pneg %p116
      %s176 = smul.u32 2, %s19
      %p177 = scmp.lt.s32.totalorder %s18, 1
      %s178 = scalar_select %p177, %s18, 1
      %p179 = scmp.lt.s32.totalorder %s176, 1
      %s180 = scalar_select %p179, %s176, 1
      %s181 = smul.addr %s178, 2
      %s182 = sadd.s32 %s180, %s181
      %s183 = smul.addr %s182, 8
      %s184 = scalar_lea.vmem %s3, %s183
      %s185 = sadd.s32 %s18, %s19
      %s186 = smul.u32 32, %s185
      %p187 = scmp.lt.s32.totalorder %s186, 63
      %s188 = scalar_select %p187, %s186, 63
      %s189 = smul.addr %s188, 4
      %s190 = scalar_lea.vmem %s0, %s189
      %s191 = sadd.s32 %s18, %s19
      %s192 = smul.u32 32, %s191
      %s193 = smul.u32 2, %s19
      %p194 = scmp.lt.s32.totalorder %s18, 1
      %s195 = scalar_select %p194, %s18, 1
      %p196 = scmp.lt.s32.totalorder %s193, 1
      %s197 = scalar_select %p196, %s193, 1
      %s198 = smul.addr %s195, 2
      %s199 = sadd.s32 %s197, %s198
      %s200 = smul.addr %s199, 8
      %s201 = scalar_lea.vmem %s3, %s200
      %s202 = smul.u32 2, %s19
      %v203 = vld [vmem:[%s190] sm:$0xf]
      %v204 = vld [vmem:[%s190 + $0x4] sm:$0xf]
      %v205 = vld [vmem:[%s190 + $0x8] sm:$0xf]
      %v206 = vld [vmem:[%s190 + $0xc] sm:$0xf]
      %v207 = vld [vmem:[%s190 + $0x10] sm:$0xf]
      %v208 = vld [vmem:[%s190 + $0x14] sm:$0xf]
      %v209 = vld [vmem:[%s190 + $0x18] sm:$0xf]
      %v210 = vld [vmem:[%s190 + $0x1c] sm:$0xf]
      %v211 = vld [vmem:[%s190 + $0x20] sm:$0xf]
      %v212 = vld [vmem:[%s190 + $0x24] sm:$0xf]
      %v213 = vld [vmem:[%s190 + $0x28] sm:$0xf]
      %v214 = vld [vmem:[%s190 + $0x2c] sm:$0xf]
      %v215 = vld [vmem:[%s190 + $0x30] sm:$0xf]
      %v216 = vld [vmem:[%s190 + $0x34] sm:$0xf]
      %v217 = vld [vmem:[%s190 + $0x38] sm:$0xf]
      %v218 = vld [vmem:[%s190 + $0x3c] sm:$0xf]
      %v219 = vld [vmem:[%s190 + $0x40] sm:$0xf]
      %v220 = vld [vmem:[%s190 + $0x44] sm:$0xf]
      %v221 = vld [vmem:[%s190 + $0x48] sm:$0xf]
      %v222 = vld [vmem:[%s190 + $0x4c] sm:$0xf]
      %v223 = vld [vmem:[%s190 + $0x50] sm:$0xf]
      %v224 = vld [vmem:[%s190 + $0x54] sm:$0xf]
      %v225 = vld [vmem:[%s190 + $0x58] sm:$0xf]
      %v226 = vld [vmem:[%s190 + $0x5c] sm:$0xf]
      %v227 = vld [vmem:[%s190 + $0x60] sm:$0xf]
      %v228 = vld [vmem:[%s190 + $0x64] sm:$0xf]
      %v229 = vld [vmem:[%s190 + $0x68] sm:$0xf]
      %v230 = vld [vmem:[%s190 + $0x6c] sm:$0xf]
      %v231 = vld [vmem:[%s190 + $0x70] sm:$0xf]
      %v232 = vld [vmem:[%s190 + $0x74] sm:$0xf]
      %v233 = vld [vmem:[%s190 + $0x78] sm:$0xf]
      %v234 = vld [vmem:[%s190 + $0x7c] sm:$0xf]
      %v235 = vunpack.c.l.bf16 %v203
      %v236 = vunpack.c.l.bf16 %v204
      %v237 = vunpack.c.l.bf16 %v205
      %v238 = vunpack.c.l.bf16 %v206
      %v239 = vunpack.c.l.bf16 %v207
      %v240 = vunpack.c.l.bf16 %v208
      %v241 = vunpack.c.l.bf16 %v209
      %v242 = vunpack.c.l.bf16 %v210
      %v243 = vunpack.c.l.bf16 %v211
      %v244 = vunpack.c.l.bf16 %v212
      %v245 = vunpack.c.l.bf16 %v213
      %v246 = vunpack.c.l.bf16 %v214
      %v247 = vunpack.c.l.bf16 %v215
      %v248 = vunpack.c.l.bf16 %v216
      %v249 = vunpack.c.l.bf16 %v217
      %v250 = vunpack.c.l.bf16 %v218
      %v251 = vunpack.c.l.bf16 %v219
      %v252 = vunpack.c.l.bf16 %v220
      %v253 = vunpack.c.l.bf16 %v221
      %v254 = vunpack.c.l.bf16 %v222
      %v255 = vunpack.c.l.bf16 %v223
      %v256 = vunpack.c.l.bf16 %v224
      %v257 = vunpack.c.l.bf16 %v225
      %v258 = vunpack.c.l.bf16 %v226
      %v259 = vunpack.c.l.bf16 %v227
      %v260 = vunpack.c.l.bf16 %v228
      %v261 = vunpack.c.l.bf16 %v229
      %v262 = vunpack.c.l.bf16 %v230
      %v263 = vunpack.c.l.bf16 %v231
      %v264 = vunpack.c.l.bf16 %v232
      %v265 = vunpack.c.l.bf16 %v233
      %v266 = vunpack.c.l.bf16 %v234
      %v267 = vld [vmem:[%s1] sm:$0x1]
      %v269 = vperm.slane %v267, 0
      %v271 = vmul.f32 %v235, %v269
      %v272 = vmul.f32 %v236, %v269
      %v273 = vmul.f32 %v237, %v269
      %v274 = vmul.f32 %v238, %v269
      %v275 = vmul.f32 %v239, %v269
      %v276 = vmul.f32 %v240, %v269
      %v277 = vmul.f32 %v241, %v269
      %v278 = vmul.f32 %v242, %v269
      %v279 = vmul.f32 %v243, %v269
      %v280 = vmul.f32 %v244, %v269
      %v281 = vmul.f32 %v245, %v269
      %v282 = vmul.f32 %v246, %v269
      %v283 = vmul.f32 %v247, %v269
      %v284 = vmul.f32 %v248, %v269
      %v285 = vmul.f32 %v249, %v269
      %v286 = vmul.f32 %v250, %v269
      %v287 = vmul.f32 %v251, %v269
      %v288 = vmul.f32 %v252, %v269
      %v289 = vmul.f32 %v253, %v269
      %v290 = vmul.f32 %v254, %v269
      %v291 = vmul.f32 %v255, %v269
      %v292 = vmul.f32 %v256, %v269
      %v293 = vmul.f32 %v257, %v269
      %v294 = vmul.f32 %v258, %v269
      %v295 = vmul.f32 %v259, %v269
      %v296 = vmul.f32 %v260, %v269
      %v297 = vmul.f32 %v261, %v269
      %v298 = vmul.f32 %v262, %v269
      %v299 = vmul.f32 %v263, %v269
      %v300 = vmul.f32 %v264, %v269
      %v301 = vmul.f32 %v265, %v269
      %v302 = vmul.f32 %v266, %v269
      %v303 = vld [vmem:[%s2] sm:$0x1]
      %v305 = vperm.slane %v303, 0
      %v307 = vadd.f32 %v271, %v305
      %v308 = vadd.f32 %v272, %v305
      %v309 = vadd.f32 %v273, %v305
      %v310 = vadd.f32 %v274, %v305
      %v311 = vadd.f32 %v275, %v305
      %v312 = vadd.f32 %v276, %v305
      %v313 = vadd.f32 %v277, %v305
      %v314 = vadd.f32 %v278, %v305
      %v315 = vadd.f32 %v279, %v305
      %v316 = vadd.f32 %v280, %v305
      %v317 = vadd.f32 %v281, %v305
      %v318 = vadd.f32 %v282, %v305
      %v319 = vadd.f32 %v283, %v305
      %v320 = vadd.f32 %v284, %v305
      %v321 = vadd.f32 %v285, %v305
      %v322 = vadd.f32 %v286, %v305
      %v323 = vadd.f32 %v287, %v305
      %v324 = vadd.f32 %v288, %v305
      %v325 = vadd.f32 %v289, %v305
      %v326 = vadd.f32 %v290, %v305
      %v327 = vadd.f32 %v291, %v305
      %v328 = vadd.f32 %v292, %v305
      %v329 = vadd.f32 %v293, %v305
      %v330 = vadd.f32 %v294, %v305
      %v331 = vadd.f32 %v295, %v305
      %v332 = vadd.f32 %v296, %v305
      %v333 = vadd.f32 %v297, %v305
      %v334 = vadd.f32 %v298, %v305
      %v335 = vadd.f32 %v299, %v305
      %v336 = vadd.f32 %v300, %v305
      %v337 = vadd.f32 %v301, %v305
      %v338 = vadd.f32 %v302, %v305
      %v339 = vmax.f32 %v307, 0.0
      %v340 = vmax.f32 %v308, 0.0
      %v341 = vmax.f32 %v309, 0.0
      %v342 = vmax.f32 %v310, 0.0
      %v343 = vmax.f32 %v311, 0.0
      %v344 = vmax.f32 %v312, 0.0
      %v345 = vmax.f32 %v313, 0.0
      %v346 = vmax.f32 %v314, 0.0
      %v347 = vmax.f32 %v315, 0.0
      %v348 = vmax.f32 %v316, 0.0
      %v349 = vmax.f32 %v317, 0.0
      %v350 = vmax.f32 %v318, 0.0
      %v351 = vmax.f32 %v319, 0.0
      %v352 = vmax.f32 %v320, 0.0
      %v353 = vmax.f32 %v321, 0.0
      %v354 = vmax.f32 %v322, 0.0
      %v355 = vmax.f32 %v323, 0.0
      %v356 = vmax.f32 %v324, 0.0
      %v357 = vmax.f32 %v325, 0.0
      %v358 = vmax.f32 %v326, 0.0
      %v359 = vmax.f32 %v327, 0.0
      %v360 = vmax.f32 %v328, 0.0
      %v361 = vmax.f32 %v329, 0.0
      %v362 = vmax.f32 %v330, 0.0
      %v363 = vmax.f32 %v331, 0.0
      %v364 = vmax.f32 %v332, 0.0
      %v365 = vmax.f32 %v333, 0.0
      %v366 = vmax.f32 %v334, 0.0
      %v367 = vmax.f32 %v335, 0.0
      %v368 = vmax.f32 %v336, 0.0
      %v369 = vmax.f32 %v337, 0.0
      %v370 = vmax.f32 %v338, 0.0
      %371 = vxpose.xlu0.b32.start [1/16] %v339, 128
      %372 = vxpose.xlu0.b32.cont [2/16] %v340, 128
      %373 = vxpose.xlu0.b32.cont [3/16] %v341, 128
      %374 = vxpose.xlu0.b32.cont [4/16] %v342, 128
      %375 = vxpose.xlu0.b32.cont [5/16] %v343, 128
      %376 = vxpose.xlu0.b32.cont [6/16] %v344, 128
      %377 = vxpose.xlu0.b32.cont [7/16] %v345, 128
      %378 = vxpose.xlu0.b32.cont [8/16] %v346, 128
      %379 = vxpose.xlu0.b32.cont [9/16] %v347, 128
      %380 = vxpose.xlu0.b32.cont [10/16] %v348, 128
      %381 = vxpose.xlu0.b32.cont [11/16] %v349, 128
      %382 = vxpose.xlu0.b32.cont [12/16] %v350, 128
      %383 = vxpose.xlu0.b32.cont [13/16] %v351, 128
      %384 = vxpose.xlu0.b32.cont [14/16] %v352, 128
      %385 = vxpose.xlu0.b32.cont [15/16] %v353, 128
      %386 = vxpose.xlu0.b32.end [16/16] %v354, 128
      %v387 = vpop.trf.xlu0
      %v388 = vpop.trf.xlu0
      %v389 = vpop.trf.xlu0
      %v390 = vpop.trf.xlu0
      %v391 = vpop.trf.xlu0
      %v392 = vpop.trf.xlu0
      %v393 = vpop.trf.xlu0
      %v394 = vpop.trf.xlu0
      %v395 = vpop.trf.xlu0
      %v396 = vpop.trf.xlu0
      %v397 = vpop.trf.xlu0
      %v398 = vpop.trf.xlu0
      %v399 = vpop.trf.xlu0
      %v400 = vpop.trf.xlu0
      %v401 = vpop.trf.xlu0
      %v402 = vpop.trf.xlu0
      %403 = vxpose.xlu0.b32.start [1/16] %v355, 128
      %404 = vxpose.xlu0.b32.cont [2/16] %v356, 128
      %405 = vxpose.xlu0.b32.cont [3/16] %v357, 128
      %406 = vxpose.xlu0.b32.cont [4/16] %v358, 128
      %407 = vxpose.xlu0.b32.cont [5/16] %v359, 128
      %408 = vxpose.xlu0.b32.cont [6/16] %v360, 128
      %409 = vxpose.xlu0.b32.cont [7/16] %v361, 128
      %410 = vxpose.xlu0.b32.cont [8/16] %v362, 128
      %411 = vxpose.xlu0.b32.cont [9/16] %v363, 128
      %412 = vxpose.xlu0.b32.cont [10/16] %v364, 128
      %413 = vxpose.xlu0.b32.cont [11/16] %v365, 128
      %414 = vxpose.xlu0.b32.cont [12/16] %v366, 128
      %415 = vxpose.xlu0.b32.cont [13/16] %v367, 128
      %416 = vxpose.xlu0.b32.cont [14/16] %v368, 128
      %417 = vxpose.xlu0.b32.cont [15/16] %v369, 128
      %418 = vxpose.xlu0.b32.end [16/16] %v370, 128
      %v419 = vpop.trf.xlu0
      %v420 = vpop.trf.xlu0
      %v421 = vpop.trf.xlu0
      %v422 = vpop.trf.xlu0
      %v423 = vpop.trf.xlu0
      %v424 = vpop.trf.xlu0
      %v425 = vpop.trf.xlu0
      %v426 = vpop.trf.xlu0
      %v427 = vpop.trf.xlu0
      %v428 = vpop.trf.xlu0
      %v429 = vpop.trf.xlu0
      %v430 = vpop.trf.xlu0
      %v431 = vpop.trf.xlu0
      %v432 = vpop.trf.xlu0
      %v433 = vpop.trf.xlu0
      %v434 = vpop.trf.xlu0
      %435 = vst [vmem:[%s201] sm:$0xff] %v387
      %436 = vst [vmem:[%s201 + $0x8] sm:$0xff] %v419
      %s437 = smul.u32 2, %s19
      %p438 = scmp.lt.s32.totalorder %s18, 1
      %s439 = scalar_select %p438, %s18, 1
      %p440 = scmp.lt.s32.totalorder %s437, 1
      %s441 = scalar_select %p440, %s437, 1
      %s442 = smul.addr %s439, 2
      %s443 = sadd.s32 %s441, %s442
      %s444 = smul.addr %s443, 8
      %s445 = scalar_lea.vmem %s3, %s444
      // Predicated region
      $region33: #{double_conv.5} parent=31 // pred_check
        %p446 = pneg %p116
      $region34: #{double_conv.5} parent=31 // pred_check_branch
        %448 = sbr.rel (%p446) target = $region36
      $region35: #{double_conv.5} parent=31 // pred_region
        %s449 = smul.u32 2, %s19
      $region36: #{double_conv.5} parent=31 // pred_fallthru
        _
    $region32: #{double_conv.5} parent=5 // pred_fallthru
      _
    %p450 = scmp.le.s32.totalorder 2, %s9
    // Predicated region
    $region37: #{double_conv.5} parent=5 // pred_check
      %p451 = pneg %p450
    $region38: #{double_conv.5} parent=5 // pred_check_branch
      %453 = sbr.rel (%p451) target = $region40
    $region39: #{double_conv.5} parent=5 // pred_region
      %s454 = ssub.s32 %s9, 2
      // Predicated region
      $region41: #{double_conv.5} parent=39 // pred_check
        %p455 = pneg %p122
      $region42: #{double_conv.5} parent=39 // pred_check_branch
        %457 = sbr.rel (%p455) target = $region44
      $region43: #{double_conv.5} parent=39 // pred_region
        %s458 = smul.u32 2, %s21
        %p459 = scmp.lt.s32.totalorder %s20, 1
        %s460 = scalar_select %p459, %s20, 1
        %p461 = scmp.lt.s32.totalorder %s458, 1
        %s462 = scalar_select %p461, %s458, 1
        %s463 = smul.addr %s460, 2
        %s464 = sadd.s32 %s462, %s463
        %s465 = smul.addr %s464, 8
        %s466 = scalar_lea.vmem %s3, %s465
      $region44: #{double_conv.5} parent=39 // pred_fallthru
        _
    $region40: #{double_conv.5} parent=5 // pred_fallthru
      _
  $region6: #{double_conv.5} parent=0 // loop_footer
    %s13 = sadd.s32 1, %s9
  $region7: #{double_conv.5} parent=0 // loop_footer_branch
    %8 = sbr.rel target = $region3
  $region8: #{double_conv.5} parent=0 // loop_exit
    _

// kernel: double_conv.3
$region0: #{double_conv.3}
  #allocation0 [shape = 'u32[]', space=smem, size = 0x4, offset = 0x4, fixed_abs, tag = 'smem constant byte address 0x4 - core index']
  #allocation1 [shape = 'u32[72,128]{1,0:T(1,128)}', space=vmem, size = 0x9000, scoped, tag = 'internal scratch']
  #allocation2 [shape = 'f32[18,18,4]{2,1,0:T(8,128)}', space=vmem, size = 0x36000, scoped, tag = 'scratch operand']
  #allocation3 [shape = 'bf16[256,128]{1,0:T(8,128)(2,1)}', space=vmem, size = 0x10000, scoped, tag = 'scratch operand']
  %s0 = inlined_call_operand.vmem [shape: f32[2,16,16,4], index: 0, kind: input, shape index: {}]
  %s1 = inlined_call_operand.vmem [shape: bf16[128,128], index: 1, kind: input, shape index: {}]
  %s2 = inlined_call_operand.vmem [shape: bf16[512,128], index: 2, kind: output, shape index: {0}]
  %s3 = inlined_call_operand.vmem [shape: f32[2,2,128], index: 3, kind: output, shape index: {1}]
  %4 = xla_tuple %s2, %s3
  %s5 = sld [smem:[#allocation0]]
  $region49: #{double_conv.3} parent=0
    _
  %s7 = ssub.s32 1, %s5
  %s8 = scalar_select 0, %s7, %s5
  loop: start=0, step=1, limit=4
  $region2: #{double_conv.3} parent=0 // loop_pre_header
    _
  $region3: #{double_conv.3} parent=0 // loop_header
    %s10 = sphi 0, %s14
    %p11 = scmp.ge.s32.totalorder %s10, 4
    %s20 = sphi 0, %s22
    %s23 = sphi 0, %s20
    %s24 = sphi 0, %s23
    %s40 = sphi 0, %s24
    %s44 = sphi 0, %s44
    %s46 = sphi 0, %s44
    %s47 = sphi 0, %s46
    %s61 = sphi 0, %s47
    %s67 = sphi 0, %s69
    %s70 = sphi 0, %s67
    %s71 = sphi 0, %s70
    %s87 = sphi 0, %s71
    %s93 = sphi 0, %s95
    %s96 = sphi 0, %s93
    %s97 = sphi 0, %s96
    %s113 = sphi 0, %s97
  $region4: #{double_conv.3} parent=0 // loop_header_branch
    %13 = sbr.rel (%p11) target = $region8
  $region5: #{double_conv.3} parent=0 // loop_body
    %s15 = ssub.s32 %s10, 1
    %s16 = ssub.s32 %s10, 2
    %s17 = sadd.s32 %s10, 1
    %s18 = ssub.s32 %s10, %s17
    %p19 = scmp.eq.s32.totalorder %s18, 0
    %s21 = sadd.s32 %s20, 1
    %s22 = scalar_select %p19, %s20, %s21
    %p25 = pneg %p19
    %p26 = scmp.eq.s32.totalorder %s10, 1
    %p27 = por %p25, %p26
    %p28 = scmp.ne.s32.totalorder %s20, %s23
    %p29 = scmp.eq.s32.totalorder %s10, 0
    %p30 = por %p28, %p29
    %p31 = scmp.ne.s32.totalorder %s20, %s23
    %p32 = scmp.eq.s32.totalorder %s15, 1
    %p33 = por %p31, %p32
    %p34 = scmp.ne.s32.totalorder %s23, %s24
    %p35 = scmp.eq.s32.totalorder %s15, 0
    %p36 = por %p34, %p35
    %p37 = scmp.ne.s32.totalorder %s23, %s24
    %p38 = scmp.eq.s32.totalorder %s16, 1
    %p39 = por %p37, %p38
    %p41 = scmp.ne.s32.totalorder %s24, %s40
    %p42 = scmp.eq.s32.totalorder %s16, 0
    %p43 = por %p41, %p42
    %s45 = sadd.s32 %s44, 1
    %p48 = scmp.eq.s32.totalorder %s10, 1
    %p49 = scmp.ne.s32.totalorder %s44, %s46
    %p50 = scmp.eq.s32.totalorder %s10, 0
    %p51 = por %p49, %p50
    %p52 = scmp.ne.s32.totalorder %s44, %s46
    %p53 = scmp.eq.s32.totalorder %s15, 1
    %p54 = por %p52, %p53
    %p55 = scmp.ne.s32.totalorder %s46, %s47
    %p56 = scmp.eq.s32.totalorder %s15, 0
    %p57 = por %p55, %p56
    %p58 = scmp.ne.s32.totalorder %s46, %s47
    %p59 = scmp.eq.s32.totalorder %s16, 1
    %p60 = por %p58, %p59
    %p62 = scmp.ne.s32.totalorder %s47, %s61
    %p63 = scmp.eq.s32.totalorder %s16, 0
    %p64 = por %p62, %p63
    %s65 = ssub.s32 %s10, %s17
    %p66 = scmp.eq.s32.totalorder %s65, 0
    %s68 = sadd.s32 %s67, 1
    %s69 = scalar_select %p66, %s67, %s68
    %p72 = pneg %p66
    %p73 = scmp.eq.s32.totalorder %s10, 1
    %p74 = por %p72, %p73
    %p75 = scmp.ne.s32.totalorder %s67, %s70
    %p76 = scmp.eq.s32.totalorder %s10, 0
    %p77 = por %p75, %p76
    %p78 = scmp.ne.s32.totalorder %s67, %s70
    %p79 = scmp.eq.s32.totalorder %s15, 1
    %p80 = por %p78, %p79
    %p81 = scmp.ne.s32.totalorder %s70, %s71
    %p82 = scmp.eq.s32.totalorder %s15, 0
    %p83 = por %p81, %p82
    %p84 = scmp.ne.s32.totalorder %s70, %s71
    %p85 = scmp.eq.s32.totalorder %s16, 1
    %p86 = por %p84, %p85
    %p88 = scmp.ne.s32.totalorder %s71, %s87
    %p89 = scmp.eq.s32.totalorder %s16, 0
    %p90 = por %p88, %p89
    %s91 = ssub.s32 %s10, %s17
    %p92 = scmp.eq.s32.totalorder %s91, 0
    %s94 = sadd.s32 %s93, 1
    %s95 = scalar_select %p92, %s93, %s94
    %p98 = pneg %p92
    %p99 = scmp.eq.s32.totalorder %s10, 1
    %p100 = por %p98, %p99
    %p101 = scmp.ne.s32.totalorder %s93, %s96
    %p102 = scmp.eq.s32.totalorder %s10, 0
    %p103 = por %p101, %p102
    %p104 = scmp.ne.s32.totalorder %s93, %s96
    %p105 = scmp.eq.s32.totalorder %s15, 1
    %p106 = por %p104, %p105
    %p107 = scmp.ne.s32.totalorder %s96, %s97
    %p108 = scmp.eq.s32.totalorder %s15, 0
    %p109 = por %p107, %p108
    %p110 = scmp.ne.s32.totalorder %s96, %s97
    %p111 = scmp.eq.s32.totalorder %s16, 1
    %p112 = por %p110, %p111
    %p114 = scmp.ne.s32.totalorder %s97, %s113
    %p115 = scmp.eq.s32.totalorder %s16, 0
    %p116 = por %p114, %p115
    %p117 = scmp.le.s32.totalorder 1, %s10
    %p118 = scmp.lt.s32.totalorder %s10, 3
    %p119 = pnand %p117, %p118
    %p120 = pneg %p119
    // Predicated region
    $region9: #{double_conv.3} parent=5 // pred_check
      _
    $region10: #{double_conv.3} parent=5 // pred_check_branch
      %122 = sbr.rel (%p119) target = $region12
    $region11: #{double_conv.3} parent=5 // pred_region
      %s123 = ssub.s32 %s10, 1
      // Predicated region
      $region13: #{double_conv.3} parent=11 // pred_check
        %p124 = pneg %p57
      $region14: #{double_conv.3} parent=11 // pred_check_branch
        %126 = sbr.rel (%p124) target = $region16
      $region15: #{double_conv.3} parent=11 // pred_region
        _
      $region16: #{double_conv.3} parent=11 // pred_fallthru
        _
    $region12: #{double_conv.3} parent=5 // pred_fallthru
      _
    %p127 = scmp.lt.s32.totalorder %s10, 2
    // Predicated region
    $region17: #{double_conv.3} parent=5 // pred_check
      %p128 = pneg %p127
    $region18: #{double_conv.3} parent=5 // pred_check_branch
      %130 = sbr.rel (%p128) target = $region20
    $region19: #{double_conv.3} parent=5 // pred_region
      // Predicated region
      $region21: #{double_conv.3} parent=19 // pred_check
        %p131 = pneg %p30
      $region22: #{double_conv.3} parent=19 // pred_check_branch
        %133 = sbr.rel (%p131) target = $region24
      $region23: #{double_conv.3} parent=19 // pred_region
        %p134 = scmp.lt.s32.totalorder %s10, 1
        %s135 = scalar_select %p134, %s10, 1
        %s136 = smul.addr %s135, 32
        %s137 = smul.addr %s136, 8
        %s138 = scalar_lea.vmem %s0, %s137
      $region24: #{double_conv.3} parent=19 // pred_fallthru
        _
    $region20: #{double_conv.3} parent=5 // pred_fallthru
      _
    %p139 = scmp.le.s32.totalorder 1, %s10
    %p140 = scmp.lt.s32.totalorder %s10, 3
    %p141 = pnand %p139, %p140
    %p142 = pneg %p141
    // Predicated region
    $region25: #{double_conv.3} parent=5 // pred_check
      _
    $region26: #{double_conv.3} parent=5 // pred_check_branch
      %144 = sbr.rel (%p141) target = $region28
    $region27: #{double_conv.3} parent=5 // pred_region
      %s145 = ssub.s32 %s10, 1
      %p146 = scmp.lt.s32.totalorder %s15, 1
      %s147 = scalar_select %p146, %s15, 1
      %s148 = smul.addr %s147, 32
      %s149 = smul.addr %s148, 8
      %s150 = scalar_lea.vmem %s0, %s149
      %p151 = pneg %p36
      %p152 = pneg %p33
      %p153 = pneg %p57
      %p154 = pneg %p54
      %p155 = pneg %p83
      %p156 = pneg %p80
      %s157 = smul.u32 32, %s15
      %p158 = scmp.lt.s32.totalorder %s157, 63
      %s159 = scalar_select %p158, %s157, 63
      %s160 = smul.addr %s159, 4
      %s161 = scalar_lea.vmem %s2, %s160
      %p162 = pneg %p109
      %p163 = pneg %p106
      %p164 = scmp.lt.s32.totalorder %s15, 1
      %s165 = scalar_select %p164, %s15, 1
      %s166 = smul.addr %s165, 2
      %s167 = scalar_lea.vmem %s3, %s166
      %p168 = scmp.lt.s32.totalorder %s15, 1
      %s169 = scalar_select %p168, %s15, 1
      %s170 = smul.addr %s169, 32
      %s171 = smul.addr %s170, 8
      %s172 = scalar_lea.vmem %s0, %s171
      %s173 = smul.u32 32, %s15
      %p174 = scmp.lt.s32.totalorder %s173, 63
      %s175 = scalar_select %p174, %s173, 63
      %s176 = smul.addr %s175, 4
      %s177 = scalar_lea.vmem %s2, %s176
      %s178 = smul.u32 32, %s15
      %p179 = scmp.lt.s32.totalorder %s15, 1
      %s180 = scalar_select %p179, %s15, 1
      %s181 = smul.addr %s180, 2
      %s182 = scalar_lea.vmem %s3, %s181
      %vm184 = vcmask 31744
      %185 = vst.msk [vmem:[#allocation2] sm:$0xff] %vm184, 0.0
      %186 = vst.msk [vmem:[#allocation2 + $0x8] sm:$0xff] %vm184, 0.0
      %vm187 = vcmask 25600
      %188 = vst.msk [vmem:[#allocation2 + $0x10] sm:$0x3] %vm187, 0.0
      %s189 = scalar_lea.vmem [#allocation2], 408
      %190 = vst.msk [vmem:[%s189] sm:$0xff] %vm184, 0.0
      %191 = vst.msk [vmem:[%s189 + $0x8] sm:$0xff] %vm184, 0.0
      %192 = vst.msk [vmem:[%s189 + $0x10] sm:$0x3] %vm187, 0.0
      %vm193 = vcmask 24576
      %194 = vst.msk [vmem:[#allocation2] sm:$0x1] %vm193, 0.0
      %195 = vst.msk [vmem:[#allocation2 + $0x18] sm:$0x1] %vm193, 0.0
      %196 = vst.msk [vmem:[#allocation2 + $0x30] sm:$0x1] %vm193, 0.0
      %197 = vst.msk [vmem:[#allocation2 + $0x48] sm:$0x1] %vm193, 0.0
      %198 = vst.msk [vmem:[#allocation2 + $0x60] sm:$0x1] %vm193, 0.0
      %199 = vst.msk [vmem:[#allocation2 + $0x78] sm:$0x1] %vm193, 0.0
      %200 = vst.msk [vmem:[#allocation2 + $0x90] sm:$0x1] %vm193, 0.0
      %201 = vst.msk [vmem:[#allocation2 + $0xa8] sm:$0x1] %vm193, 0.0
      %202 = vst.msk [vmem:[#allocation2 + $0xc0] sm:$0x1] %vm193, 0.0
      %203 = vst.msk [vmem:[#allocation2 + $0xd8] sm:$0x1] %vm193, 0.0
      %204 = vst.msk [vmem:[#allocation2 + $0xf0] sm:$0x1] %vm193, 0.0
      %205 = vst.msk [vmem:[#allocation2 + $0x108] sm:$0x1] %vm193, 0.0
      %206 = vst.msk [vmem:[#allocation2 + $0x120] sm:$0x1] %vm193, 0.0
      %207 = vst.msk [vmem:[#allocation2 + $0x138] sm:$0x1] %vm193, 0.0
      %208 = vst.msk [vmem:[#allocation2 + $0x150] sm:$0x1] %vm193, 0.0
      %209 = vst.msk [vmem:[#allocation2 + $0x168] sm:$0x1] %vm193, 0.0
      %210 = vst.msk [vmem:[#allocation2 + $0x180] sm:$0x1] %vm193, 0.0
      %211 = vst.msk [vmem:[#allocation2 + $0x198] sm:$0x1] %vm193, 0.0
      %212 = vst.msk [vmem:[#allocation2 + $0x11] sm:$0x1] %vm193, 0.0
      %213 = vst.msk [vmem:[#allocation2 + $0x29] sm:$0x1] %vm193, 0.0
      %214 = vst.msk [vmem:[#allocation2 + $0x41] sm:$0x1] %vm193, 0.0
      %215 = vst.msk [vmem:[#allocation2 + $0x59] sm:$0x1] %vm193, 0.0
      %216 = vst.msk [vmem:[#allocation2 + $0x71] sm:$0x1] %vm193, 0.0
      %217 = vst.msk [vmem:[#allocation2 + $0x89] sm:$0x1] %vm193, 0.0
      %218 = vst.msk [vmem:[#allocation2 + $0xa1] sm:$0x1] %vm193, 0.0
      %219 = vst.msk [vmem:[#allocation2 + $0xb9] sm:$0x1] %vm193, 0.0
      %220 = vst.msk [vmem:[#allocation2 + $0xd1] sm:$0x1] %vm193, 0.0
      %221 = vst.msk [vmem:[#allocation2 + $0xe9] sm:$0x1] %vm193, 0.0
      %222 = vst.msk [vmem:[#allocation2 + $0x101] sm:$0x1] %vm193, 0.0
      %223 = vst.msk [vmem:[#allocation2 + $0x119] sm:$0x1] %vm193, 0.0
      %224 = vst.msk [vmem:[#allocation2 + $0x131] sm:$0x1] %vm193, 0.0
      %225 = vst.msk [vmem:[#allocation2 + $0x149] sm:$0x1] %vm193, 0.0
      %226 = vst.msk [vmem:[#allocation2 + $0x161] sm:$0x1] %vm193, 0.0
      %227 = vst.msk [vmem:[#allocation2 + $0x179] sm:$0x1] %vm193, 0.0
      %228 = vst.msk [vmem:[#allocation2 + $0x191] sm:$0x1] %vm193, 0.0
      %229 = vst.msk [vmem:[#allocation2 + $0x1a9] sm:$0x1] %vm193, 0.0
      %v230 = vld [vmem:[%s172] sm:$0xff]
      %v231 = vld [vmem:[%s172 + $0x8] sm:$0xff]
      %v232 = vld [vmem:[%s172 + $0x10] sm:$0xff]
      %v233 = vld [vmem:[%s172 + $0x18] sm:$0xff]
      %v234 = vld [vmem:[%s172 + $0x20] sm:$0xff]
      %v235 = vld [vmem:[%s172 + $0x28] sm:$0xff]
      %v236 = vld [vmem:[%s172 + $0x30] sm:$0xff]
      %v237 = vld [vmem:[%s172 + $0x38] sm:$0xff]
      %v238 = vld [vmem:[%s172 + $0x40] sm:$0xff]
      %v239 = vld [vmem:[%s172 + $0x48] sm:$0xff]
      %v240 = vld [vmem:[%s172 + $0x50] sm:$0xff]
      %v241 = vld [vmem:[%s172 + $0x58] sm:$0xff]
      %v242 = vld [vmem:[%s172 + $0x60] sm:$0xff]
      %v243 = vld [vmem:[%s172 + $0x68] sm:$0xff]
      %v244 = vld [vmem:[%s172 + $0x70] sm:$0xff]
      %v245 = vld [vmem:[%s172 + $0x78] sm:$0xff]
      %v246 = vld [vmem:[%s172 + $0x80] sm:$0xff]
      %v247 = vld [vmem:[%s172 + $0x88] sm:$0xff]
      %v248 = vld [vmem:[%s172 + $0x90] sm:$0xff]
      %v249 = vld [vmem:[%s172 + $0x98] sm:$0xff]
      %v250 = vld [vmem:[%s172 + $0xa0] sm:$0xff]
      %v251 = vld [vmem:[%s172 + $0xa8] sm:$0xff]
      %v252 = vld [vmem:[%s172 + $0xb0] sm:$0xff]
      %v253 = vld [vmem:[%s172 + $0xb8] sm:$0xff]
      %v254 = vld [vmem:[%s172 + $0xc0] sm:$0xff]
      %v255 = vld [vmem:[%s172 + $0xc8] sm:$0xff]
      %v256 = vld [vmem:[%s172 + $0xd0] sm:$0xff]
      %v257 = vld [vmem:[%s172 + $0xd8] sm:$0xff]
      %v258 = vld [vmem:[%s172 + $0xe0] sm:$0xff]
      %v259 = vld [vmem:[%s172 + $0xe8] sm:$0xff]
      %v260 = vld [vmem:[%s172 + $0xf0] sm:$0xff]
      %v261 = vld [vmem:[%s172 + $0xf8] sm:$0xff]
      %s262 = scalar_lea.vmem [#allocation2], 24
      %263 = vst.msk [vmem:[%s262 + $0x1] sm:$0xff] %vm184, %v230
      %264 = vst.msk [vmem:[%s262 + $0x9] sm:$0xff] %vm184, %v231
      %265 = vst.msk [vmem:[%s262 + $0x19] sm:$0xff] %vm184, %v232
      %266 = vst.msk [vmem:[%s262 + $0x21] sm:$0xff] %vm184, %v233
      %267 = vst.msk [vmem:[%s262 + $0x31] sm:$0xff] %vm184, %v234
      %268 = vst.msk [vmem:[%s262 + $0x39] sm:$0xff] %vm184, %v235
      %269 = vst.msk [vmem:[%s262 + $0x49] sm:$0xff] %vm184, %v236
      %270 = vst.msk [vmem:[%s262 + $0x51] sm:$0xff] %vm184, %v237
      %271 = vst.msk [vmem:[%s262 + $0x61] sm:$0xff] %vm184, %v238
      %272 = vst.msk [vmem:[%s262 + $0x69] sm:$0xff] %vm184, %v239
      %273 = vst.msk [vmem:[%s262 + $0x79] sm:$0xff] %vm184, %v240
      %274 = vst.msk [vmem:[%s262 + $0x81] sm:$0xff] %vm184, %v241
      %275 = vst.msk [vmem:[%s262 + $0x91] sm:$0xff] %vm184, %v242
      %276 = vst.msk [vmem:[%s262 + $0x99] sm:$0xff] %vm184, %v243
      %277 = vst.msk [vmem:[%s262 + $0xa9] sm:$0xff] %vm184, %v244
      %278 = vst.msk [vmem:[%s262 + $0xb1] sm:$0xff] %vm184, %v245
      %279 = vst.msk [vmem:[%s262 + $0xc1] sm:$0xff] %vm184, %v246
      %280 = vst.msk [vmem:[%s262 + $0xc9] sm:$0xff] %vm184, %v247
      %281 = vst.msk [vmem:[%s262 + $0xd9] sm:$0xff] %vm184, %v248
      %282 = vst.msk [vmem:[%s262 + $0xe1] sm:$0xff] %vm184, %v249
      %283 = vst.msk [vmem:[%s262 + $0xf1] sm:$0xff] %vm184, %v250
      %284 = vst.msk [vmem:[%s262 + $0xf9] sm:$0xff] %vm184, %v251
      %285 = vst.msk [vmem:[%s262 + $0x109] sm:$0xff] %vm184, %v252
      %286 = vst.msk [vmem:[%s262 + $0x111] sm:$0xff] %vm184, %v253
      %287 = vst.msk [vmem:[%s262 + $0x121] sm:$0xff] %vm184, %v254
      %288 = vst.msk [vmem:[%s262 + $0x129] sm:$0xff] %vm184, %v255
      %289 = vst.msk [vmem:[%s262 + $0x139] sm:$0xff] %vm184, %v256
      %290 = vst.msk [vmem:[%s262 + $0x141] sm:$0xff] %vm184, %v257
      %291 = vst.msk [vmem:[%s262 + $0x151] sm:$0xff] %vm184, %v258
      %292 = vst.msk [vmem:[%s262 + $0x159] sm:$0xff] %vm184, %v259
      %293 = vst.msk [vmem:[%s262 + $0x169] sm:$0xff] %vm184, %v260
      %294 = vst.msk [vmem:[%s262 + $0x171] sm:$0xff] %vm184, %v261
      %vm295 = vcmask 1043744
      %296 = vst.msk [vmem:[#allocation3] sm:$0xf] %vm295, 0
      %297 = vst.msk [vmem:[#allocation3 + $0x4] sm:$0xf] %vm295, 0
      %298 = vst.msk [vmem:[#allocation3 + $0x8] sm:$0xf] %vm295, 0
      %299 = vst.msk [vmem:[#allocation3 + $0xc] sm:$0xf] %vm295, 0
      %300 = vst.msk [vmem:[#allocation3 + $0x10] sm:$0xf] %vm295, 0
      %301 = vst.msk [vmem:[#allocation3 + $0x14] sm:$0xf] %vm295, 0
      %302 = vst.msk [vmem:[#allocation3 + $0x18] sm:$0xf] %vm295, 0
      %303 = vst.msk [vmem:[#allocation3 + $0x1c] sm:$0xf] %vm295, 0
      %304 = vst.msk [vmem:[#allocation3 + $0x20] sm:$0xf] %vm295, 0
      %305 = vst.msk [vmem:[#allocation3 + $0x24] sm:$0xf] %vm295, 0
      %306 = vst.msk [vmem:[#allocation3 + $0x28] sm:$0xf] %vm295, 0
      %307 = vst.msk [vmem:[#allocation3 + $0x2c] sm:$0xf] %vm295, 0
      %308 = vst.msk [vmem:[#allocation3 + $0x30] sm:$0xf] %vm295, 0
      %309 = vst.msk [vmem:[#allocation3 + $0x34] sm:$0xf] %vm295, 0
      %310 = vst.msk [vmem:[#allocation3 + $0x38] sm:$0xf] %vm295, 0
      %311 = vst.msk [vmem:[#allocation3 + $0x3c] sm:$0xf] %vm295, 0
      %312 = vst.msk [vmem:[#allocation3 + $0x40] sm:$0xf] %vm295, 0
      %313 = vst.msk [vmem:[#allocation3 + $0x44] sm:$0xf] %vm295, 0
      %314 = vst.msk [vmem:[#allocation3 + $0x48] sm:$0xf] %vm295, 0
      %315 = vst.msk [vmem:[#allocation3 + $0x4c] sm:$0xf] %vm295, 0
      %316 = vst.msk [vmem:[#allocation3 + $0x50] sm:$0xf] %vm295, 0
      %317 = vst.msk [vmem:[#allocation3 + $0x54] sm:$0xf] %vm295, 0
      %318 = vst.msk [vmem:[#allocation3 + $0x58] sm:$0xf] %vm295, 0
      %319 = vst.msk [vmem:[#allocation3 + $0x5c] sm:$0xf] %vm295, 0
      %320 = vst.msk [vmem:[#allocation3 + $0x60] sm:$0xf] %vm295, 0
      %321 = vst.msk [vmem:[#allocation3 + $0x64] sm:$0xf] %vm295, 0
      %322 = vst.msk [vmem:[#allocation3 + $0x68] sm:$0xf] %vm295, 0
      %323 = vst.msk [vmem:[#allocation3 + $0x6c] sm:$0xf] %vm295, 0
      %324 = vst.msk [vmem:[#allocation3 + $0x70] sm:$0xf] %vm295, 0
      %325 = vst.msk [vmem:[#allocation3 + $0x74] sm:$0xf] %vm295, 0
      %326 = vst.msk [vmem:[#allocation3 + $0x78] sm:$0xf] %vm295, 0
      %327 = vst.msk [vmem:[#allocation3 + $0x7c] sm:$0xf] %vm295, 0
      %v328 = vld [vmem:[#allocation2] sm:$0xff]
      %v329 = vld [vmem:[#allocation2 + $0x8] sm:$0xff]
      %v330 = vld [vmem:[#allocation2 + $0x18] sm:$0xff]
      %v331 = vld [vmem:[#allocation2 + $0x20] sm:$0xff]
      %v332 = vld [vmem:[#allocation2 + $0x30] sm:$0xff]
      %v333 = vld [vmem:[#allocation2 + $0x38] sm:$0xff]
      %v334 = vld [vmem:[#allocation2 + $0x48] sm:$0xff]
      %v335 = vld [vmem:[#allocation2 + $0x50] sm:$0xff]
      %v336 = vld [vmem:[#allocation2 + $0x60] sm:$0xff]
      %v337 = vld [vmem:[#allocation2 + $0x68] sm:$0xff]
      %v338 = vld [vmem:[#allocation2 + $0x78] sm:$0xff]
      %v339 = vld [vmem:[#allocation2 + $0x80] sm:$0xff]
      %v340 = vld [vmem:[#allocation2 + $0x90] sm:$0xff]
      %v341 = vld [vmem:[#allocation2 + $0x98] sm:$0xff]
      %v342 = vld [vmem:[#allocation2 + $0xa8] sm:$0xff]
      %v343 = vld [vmem:[#allocation2 + $0xb0] sm:$0xff]
      %v344 = vld [vmem:[#allocation2 + $0xc0] sm:$0xff]
      %v345 = vld [vmem:[#allocation2 + $0xc8] sm:$0xff]
      %v346 = vld [vmem:[#allocation2 + $0xd8] sm:$0xff]
      %v347 = vld [vmem:[#allocation2 + $0xe0] sm:$0xff]
      %v348 = vld [vmem:[#allocation2 + $0xf0] sm:$0xff]
      %v349 = vld [vmem:[#allocation2 + $0xf8] sm:$0xff]
      %v350 = vld [vmem:[#allocation2 + $0x108] sm:$0xff]
      %v351 = vld [vmem:[#allocation2 + $0x110] sm:$0xff]
      %v352 = vld [vmem:[#allocation2 + $0x120] sm:$0xff]
      %v353 = vld [vmem:[#allocation2 + $0x128] sm:$0xff]
      %v354 = vld [vmem:[#allocation2 + $0x138] sm:$0xff]
      %v355 = vld [vmem:[#allocation2 + $0x140] sm:$0xff]
      %v356 = vld [vmem:[#allocation2 + $0x150] sm:$0xff]
      %v357 = vld [vmem:[#allocation2 + $0x158] sm:$0xff]
      %v358 = vld [vmem:[#allocation2 + $0x168] sm:$0xff]
      %v359 = vld [vmem:[#allocation2 + $0x170] sm:$0xff]
      %v360 = vpack.c.bf16 %v328, %v328
      %v361 = vpack.c.bf16 %v329, %v329
      %v362 = vpack.c.bf16 %v330, %v330
      %v363 = vpack.c.bf16 %v331, %v331
      %v364 = vpack.c.bf16 %v332, %v332
      %v365 = vpack.c.bf16 %v333, %v333
      %v366 = vpack.c.bf16 %v334, %v334
      %v367 = vpack.c.bf16 %v335, %v335
      %v368 = vpack.c.bf16 %v336, %v336
      %v369 = vpack.c.bf16 %v337, %v337
      %v370 = vpack.c.bf16 %v338, %v338
      %v371 = vpack.c.bf16 %v339, %v339
      %v372 = vpack.c.bf16 %v340, %v340
      %v373 = vpack.c.bf16 %v341, %v341
      %v374 = vpack.c.bf16 %v342, %v342
      %v375 = vpack.c.bf16 %v343, %v343
      %v376 = vpack.c.bf16 %v344, %v344
      %v377 = vpack.c.bf16 %v345, %v345
      %v378 = vpack.c.bf16 %v346, %v346
      %v379 = vpack.c.bf16 %v347, %v347
      %v380 = vpack.c.bf16 %v348, %v348
      %v381 = vpack.c.bf16 %v349, %v349
      %v382 = vpack.c.bf16 %v350, %v350
      %v383 = vpack.c.bf16 %v351, %v351
      %v384 = vpack.c.bf16 %v352, %v352
      %v385 = vpack.c.bf16 %v353, %v353
      %v386 = vpack.c.bf16 %v354, %v354
      %v387 = vpack.c.bf16 %v355, %v355
      %v388 = vpack.c.bf16 %v356, %v356
      %v389 = vpack.c.bf16 %v357, %v357
      %v390 = vpack.c.bf16 %v358, %v358
      %v391 = vpack.c.bf16 %v359, %v359
      %vm392 = vcmask 27648
      %393 = vst.msk [vmem:[#allocation3] sm:$0xf] %vm392, %v360
      %394 = vst.msk [vmem:[#allocation3 + $0x4] sm:$0xf] %vm392, %v361
      %395 = vst.msk [vmem:[#allocation3 + $0x8] sm:$0xf] %vm392, %v362
      %396 = vst.msk [vmem:[#allocation3 + $0xc] sm:$0xf] %vm392, %v363
      %397 = vst.msk [vmem:[#allocation3 + $0x10] sm:$0xf] %vm392, %v364
      %398 = vst.msk [vmem:[#allocation3 + $0x14] sm:$0xf] %vm392, %v365
      %399 = vst.msk [vmem:[#allocation3 + $0x18] sm:$0xf] %vm392, %v366
      %400 = vst.msk [vmem:[#allocation3 + $0x1c] sm:$0xf] %vm392, %v367
      %401 = vst.msk [vmem:[#allocation3 + $0x20] sm:$0xf] %vm392, %v368
      %402 = vst.msk [vmem:[#allocation3 + $0x24] sm:$0xf] %vm392, %v369
      %403 = vst.msk [vmem:[#allocation3 + $0x28] sm:$0xf] %vm392, %v370
      %404 = vst.msk [vmem:[#allocation3 + $0x2c] sm:$0xf] %vm392, %v371
      %405 = vst.msk [vmem:[#allocation3 + $0x30] sm:$0xf] %vm392, %v372
      %406 = vst.msk [vmem:[#allocation3 + $0x34] sm:$0xf] %vm392, %v373
      %407 = vst.msk [vmem:[#allocation3 + $0x38] sm:$0xf] %vm392, %v374
      %408 = vst.msk [vmem:[#allocation3 + $0x3c] sm:$0xf] %vm392, %v375
      %409 = vst.msk [vmem:[#allocation3 + $0x40] sm:$0xf] %vm392, %v376
      %410 = vst.msk [vmem:[#allocation3 + $0x44] sm:$0xf] %vm392, %v377
      %411 = vst.msk [vmem:[#allocation3 + $0x48] sm:$0xf] %vm392, %v378
      %412 = vst.msk [vmem:[#allocation3 + $0x4c] sm:$0xf] %vm392, %v379
      %413 = vst.msk [vmem:[#allocation3 + $0x50] sm:$0xf] %vm392, %v380
      %414 = vst.msk [vmem:[#allocation3 + $0x54] sm:$0xf] %vm392, %v381
      %415 = vst.msk [vmem:[#allocation3 + $0x58] sm:$0xf] %vm392, %v382
      %416 = vst.msk [vmem:[#allocation3 + $0x5c] sm:$0xf] %vm392, %v383
      %417 = vst.msk [vmem:[#allocation3 + $0x60] sm:$0xf] %vm392, %v384
      %418 = vst.msk [vmem:[#allocation3 + $0x64] sm:$0xf] %vm392, %v385
      %419 = vst.msk [vmem:[#allocation3 + $0x68] sm:$0xf] %vm392, %v386
      %420 = vst.msk [vmem:[#allocation3 + $0x6c] sm:$0xf] %vm392, %v387
      %421 = vst.msk [vmem:[#allocation3 + $0x70] sm:$0xf] %vm392, %v388
      %422 = vst.msk [vmem:[#allocation3 + $0x74] sm:$0xf] %vm392, %v389
      %423 = vst.msk [vmem:[#allocation3 + $0x78] sm:$0xf] %vm392, %v390
      %424 = vst.msk [vmem:[#allocation3 + $0x7c] sm:$0xf] %vm392, %v391
      %v425 = vld [vmem:[#allocation2 + $0x1] sm:$0xff]
      %v426 = vld [vmem:[#allocation2 + $0x9] sm:$0xff]
      %v427 = vld [vmem:[#allocation2 + $0x19] sm:$0xff]
      %v428 = vld [vmem:[#allocation2 + $0x21] sm:$0xff]
      %v429 = vld [vmem:[#allocation2 + $0x31] sm:$0xff]
      %v430 = vld [vmem:[#allocation2 + $0x39] sm:$0xff]
      %v431 = vld [vmem:[#allocation2 + $0x49] sm:$0xff]
      %v432 = vld [vmem:[#allocation2 + $0x51] sm:$0xff]
      %v433 = vld [vmem:[#allocation2 + $0x61] sm:$0xff]
      %v434 = vld [vmem:[#allocation2 + $0x69] sm:$0xff]
      %v435 = vld [vmem:[#allocation2 + $0x79] sm:$0xff]
      %v436 = vld [vmem:[#allocation2 + $0x81] sm:$0xff]
      %v437 = vld [vmem:[#allocation2 + $0x91] sm:$0xff]
      %v438 = vld [vmem:[#allocation2 + $0x99] sm:$0xff]
      %v439 = vld [vmem:[#allocation2 + $0xa9] sm:$0xff]
      %v440 = vld [vmem:[#allocation2 + $0xb1] sm:$0xff]
      %v441 = vld [vmem:[#allocation2 + $0xc1] sm:$0xff]
      %v442 = vld [vmem:[#allocation2 + $0xc9] sm:$0xff]
      %v443 = vld [vmem:[#allocation2 + $0xd9] sm:$0xff]
      %v444 = vld [vmem:[#allocation2 + $0xe1] sm:$0xff]
      %v445 = vld [vmem:[#allocation2 + $0xf1] sm:$0xff]
      %v446 = vld [vmem:[#allocation2 + $0xf9] sm:$0xff]
      %v447 = vld [vmem:[#allocation2 + $0x109] sm:$0xff]
      %v448 = vld [vmem:[#allocation2 + $0x111] sm:$0xff]
      %v449 = vld [vmem:[#allocation2 + $0x121] sm:$0xff]
      %v450 = vld [vmem:[#allocation2 + $0x129] sm:$0xff]
      %v451 = vld [vmem:[#allocation2 + $0x139] sm:$0xff]
      %v452 = vld [vmem:[#allocation2 + $0x141] sm:$0xff]
      %v453 = vld [vmem:[#allocation2 + $0x151] sm:$0xff]
      %v454 = vld [vmem:[#allocation2 + $0x159] sm:$0xff]
      %v455 = vld [vmem:[#allocation2 + $0x169] sm:$0xff]
      %v456 = vld [vmem:[#allocation2 + $0x171] sm:$0xff]
      %v457 = vpack.c.bf16 %v425, %v425
      %v458 = vpack.c.bf16 %v426, %v426
      %v459 = vpack.c.bf16 %v427, %v427
      %v460 = vpack.c.bf16 %v428, %v428
      %v461 = vpack.c.bf16 %v429, %v429
      %v462 = vpack.c.bf16 %v430, %v430
      %v463 = vpack.c.bf16 %v431, %v431
      %v464 = vpack.c.bf16 %v432, %v432
      %v465 = vpack.c.bf16 %v433, %v433
      %v466 = vpack.c.bf16 %v434, %v434
      %v467 = vpack.c.bf16 %v435, %v435
      %v468 = vpack.c.bf16 %v436, %v436
      %v469 = vpack.c.bf16 %v437, %v437
      %v470 = vpack.c.bf16 %v438, %v438
      %v471 = vpack.c.bf16 %v439, %v439
      %v472 = vpack.c.bf16 %v440, %v440
      %v473 = vpack.c.bf16 %v441, %v441
      %v474 = vpack.c.bf16 %v442, %v442
      %v475 = vpack.c.bf16 %v443, %v443
      %v476 = vpack.c.bf16 %v444, %v444
      %v477 = vpack.c.bf16 %v445, %v445
      %v478 = vpack.c.bf16 %v446, %v446
      %v479 = vpack.c.bf16 %v447, %v447
      %v480 = vpack.c.bf16 %v448, %v448
      %v481 = vpack.c.bf16 %v449, %v449
      %v482 = vpack.c.bf16 %v450, %v450
      %v483 = vpack.c.bf16 %v451, %v451
      %v484 = vpack.c.bf16 %v452, %v452
      %v485 = vpack.c.bf16 %v453, %v453
      %v486 = vpack.c.bf16 %v454, %v454
      %v487 = vpack.c.bf16 %v455, %v455
      %v488 = vpack.c.bf16 %v456, %v456
      %521 = vrot.lane.b32.xlu0 %v457, 4
      %v522 = vpop.permute.xlu0 %521
      %523 = vrot.lane.b32.xlu0 %v458, 4
      %v524 = vpop.permute.xlu0 %523
      %525 = vrot.lane.b32.xlu0 %v459, 4
      %v526 = vpop.permute.xlu0 %525
      %527 = vrot.lane.b32.xlu0 %v460, 4
      %v528 = vpop.permute.xlu0 %527
      %529 = vrot.lane.b32.xlu0 %v461, 4
      %v530 = vpop.permute.xlu0 %529
      %531 = vrot.lane.b32.xlu0 %v462, 4
      %v532 = vpop.permute.xlu0 %531
      %533 = vrot.lane.b32.xlu0 %v463, 4
      %v534 = vpop.permute.xlu0 %533
      %535 = vrot.lane.b32.xlu0 %v464, 4
      %v536 = vpop.permute.xlu0 %535
      %537 = vrot.lane.b32.xlu0 %v465, 4
      %v538 = vpop.permute.xlu0 %537
      %539 = vrot.lane.b32.xlu0 %v466, 4
      %v540 = vpop.permute.xlu0 %539
      %541 = vrot.lane.b32.xlu0 %v467, 4
      %v542 = vpop.permute.xlu0 %541
      %543 = vrot.lane.b32.xlu0 %v468, 4
      %v544 = vpop.permute.xlu0 %543
      %545 = vrot.lane.b32.xlu0 %v469, 4
      %v546 = vpop.permute.xlu0 %545
      %547 = vrot.lane.b32.xlu0 %v470, 4
      %v548 = vpop.permute.xlu0 %547
      %549 = vrot.lane.b32.xlu0 %v471, 4
      %v550 = vpop.permute.xlu0 %549
      %551 = vrot.lane.b32.xlu0 %v472, 4
      %v552 = vpop.permute.xlu0 %551
      %553 = vrot.lane.b32.xlu0 %v473, 4
      %v554 = vpop.permute.xlu0 %553
      %555 = vrot.lane.b32.xlu0 %v474, 4
      %v556 = vpop.permute.xlu0 %555
      %557 = vrot.lane.b32.xlu0 %v475, 4
      %v558 = vpop.permute.xlu0 %557
      %559 = vrot.lane.b32.xlu0 %v476, 4
      %v560 = vpop.permute.xlu0 %559
      %561 = vrot.lane.b32.xlu0 %v477, 4
      %v562 = vpop.permute.xlu0 %561
      %563 = vrot.lane.b32.xlu0 %v478, 4
      %v564 = vpop.permute.xlu0 %563
      %565 = vrot.lane.b32.xlu0 %v479, 4
      %v566 = vpop.permute.xlu0 %565
      %567 = vrot.lane.b32.xlu0 %v480, 4
      %v568 = vpop.permute.xlu0 %567
      %569 = vrot.lane.b32.xlu0 %v481, 4
      %v570 = vpop.permute.xlu0 %569
      %571 = vrot.lane.b32.xlu0 %v482, 4
      %v572 = vpop.permute.xlu0 %571
      %573 = vrot.lane.b32.xlu0 %v483, 4
      %v574 = vpop.permute.xlu0 %573
      %575 = vrot.lane.b32.xlu0 %v484, 4
      %v576 = vpop.permute.xlu0 %575
      %577 = vrot.lane.b32.xlu0 %v485, 4
      %v578 = vpop.permute.xlu0 %577
      %579 = vrot.lane.b32.xlu0 %v486, 4
      %v580 = vpop.permute.xlu0 %579
      %581 = vrot.lane.b32.xlu0 %v487, 4
      %v582 = vpop.permute.xlu0 %581
      %583 = vrot.lane.b32.xlu0 %v488, 4
      %v584 = vpop.permute.xlu0 %583
      %vm617 = vcmask 60448
      %618 = vst.msk [vmem:[#allocation3] sm:$0xf] %vm617, %v522
      %619 = vst.msk [vmem:[#allocation3 + $0x4] sm:$0xf] %vm617, %v524
      %620 = vst.msk [vmem:[#allocation3 + $0x8] sm:$0xf] %vm617, %v526
      %621 = vst.msk [vmem:[#allocation3 + $0xc] sm:$0xf] %vm617, %v528
      %622 = vst.msk [vmem:[#allocation3 + $0x10] sm:$0xf] %vm617, %v530
      %623 = vst.msk [vmem:[#allocation3 + $0x14] sm:$0xf] %vm617, %v532
      %624 = vst.msk [vmem:[#allocation3 + $0x18] sm:$0xf] %vm617, %v534
      %625 = vst.msk [vmem:[#allocation3 + $0x1c] sm:$0xf] %vm617, %v536
      %626 = vst.msk [vmem:[#allocation3 + $0x20] sm:$0xf] %vm617, %v538
      %627 = vst.msk [vmem:[#allocation3 + $0x24] sm:$0xf] %vm617, %v540
      %628 = vst.msk [vmem:[#allocation3 + $0x28] sm:$0xf] %vm617, %v542
      %629 = vst.msk [vmem:[#allocation3 + $0x2c] sm:$0xf] %vm617, %v544
      %630 = vst.msk [vmem:[#allocation3 + $0x30] sm:$0xf] %vm617, %v546
      %631 = vst.msk [vmem:[#allocation3 + $0x34] sm:$0xf] %vm617, %v548
      %632 = vst.msk [vmem:[#allocation3 + $0x38] sm:$0xf] %vm617, %v550
      %633 = vst.msk [vmem:[#allocation3 + $0x3c] sm:$0xf] %vm617, %v552
      %634 = vst.msk [vmem:[#allocation3 + $0x40] sm:$0xf] %vm617, %v554
      %635 = vst.msk [vmem:[#allocation3 + $0x44] sm:$0xf] %vm617, %v556
      %636 = vst.msk [vmem:[#allocation3 + $0x48] sm:$0xf] %vm617, %v558
      %637 = vst.msk [vmem:[#allocation3 + $0x4c] sm:$0xf] %vm617, %v560
      %638 = vst.msk [vmem:[#allocation3 + $0x50] sm:$0xf] %vm617, %v562
      %639 = vst.msk [vmem:[#allocation3 + $0x54] sm:$0xf] %vm617, %v564
      %640 = vst.msk [vmem:[#allocation3 + $0x58] sm:$0xf] %vm617, %v566
      %641 = vst.msk [vmem:[#allocation3 + $0x5c] sm:$0xf] %vm617, %v568
      %642 = vst.msk [vmem:[#allocation3 + $0x60] sm:$0xf] %vm617, %v570
      %643 = vst.msk [vmem:[#allocation3 + $0x64] sm:$0xf] %vm617, %v572
      %644 = vst.msk [vmem:[#allocation3 + $0x68] sm:$0xf] %vm617, %v574
      %645 = vst.msk [vmem:[#allocation3 + $0x6c] sm:$0xf] %vm617, %v576
      %646 = vst.msk [vmem:[#allocation3 + $0x70] sm:$0xf] %vm617, %v578
      %647 = vst.msk [vmem:[#allocation3 + $0x74] sm:$0xf] %vm617, %v580
      %648 = vst.msk [vmem:[#allocation3 + $0x78] sm:$0xf] %vm617, %v582
      %649 = vst.msk [vmem:[#allocation3 + $0x7c] sm:$0xf] %vm617, %v584
      %v650 = vld [vmem:[#allocation2 + $0x2] sm:$0xff]
      %v651 = vld [vmem:[#allocation2 + $0xa] sm:$0xff]
      %v652 = vld [vmem:[#allocation2 + $0x1a] sm:$0xff]
      %v653 = vld [vmem:[#allocation2 + $0x22] sm:$0xff]
      %v654 = vld [vmem:[#allocation2 + $0x32] sm:$0xff]
      %v655 = vld [vmem:[#allocation2 + $0x3a] sm:$0xff]
      %v656 = vld [vmem:[#allocation2 + $0x4a] sm:$0xff]
      %v657 = vld [vmem:[#allocation2 + $0x52] sm:$0xff]
      %v658 = vld [vmem:[#allocation2 + $0x62] sm:$0xff]
      %v659 = vld [vmem:[#allocation2 + $0x6a] sm:$0xff]
      %v660 = vld [vmem:[#allocation2 + $0x7a] sm:$0xff]
      %v661 = vld [vmem:[#allocation2 + $0x82] sm:$0xff]
      %v662 = vld [vmem:[#allocation2 + $0x92] sm:$0xff]
      %v663 = vld [vmem:[#allocation2 + $0x9a] sm:$0xff]
      %v664 = vld [vmem:[#allocation2 + $0xaa] sm:$0xff]
      %v665 = vld [vmem:[#allocation2 + $0xb2] sm:$0xff]
      %v666 = vld [vmem:[#allocation2 + $0xc2] sm:$0xff]
      %v667 = vld [vmem:[#allocation2 + $0xca] sm:$0xff]
      %v668 = vld [vmem:[#allocation2 + $0xda] sm:$0xff]
      %v669 = vld [vmem:[#allocation2 + $0xe2] sm:$0xff]
      %v670 = vld [vmem:[#allocation2 + $0xf2] sm:$0xff]
      %v671 = vld [vmem:[#allocation2 + $0xfa] sm:$0xff]
      %v672 = vld [vmem:[#allocation2 + $0x10a] sm:$0xff]
      %v673 = vld [vmem:[#allocation2 + $0x112] sm:$0xff]
      %v674 = vld [vmem:[#allocation2 + $0x122] sm:$0xff]
      %v675 = vld [vmem:[#allocation2 + $0x12a] sm:$0xff]
      %v676 = vld [vmem:[#allocation2 + $0x13a] sm:$0xff]
      %v677 = vld [vmem:[#allocation2 + $0x142] sm:$0xff]
      %v678 = vld [vmem:[#allocation2 + $0x152] sm:$0xff]
      %v679 = vld [vmem:[#allocation2 + $0x15a] sm:$0xff]
      %v680 = vld [vmem:[#allocation2 + $0x16a] sm:$0xff]
      %v681 = vld [vmem:[#allocation2 + $0x172] sm:$0xff]
      %v682 = vpack.c.bf16 %v650, %v650
      %v683 = vpack.c.bf16 %v651, %v651
      %v684 = vpack.c.bf16 %v652, %v652
      %v685 = vpack.c.bf16 %v653, %v653
      %v686 = vpack.c.bf16 %v654, %v654
      %v687 = vpack.c.bf16 %v655, %v655
      %v688 = vpack.c.bf16 %v656, %v656
      %v689 = vpack.c.bf16 %v657, %v657
      %v690 = vpack.c.bf16 %v658, %v658
      %v691 = vpack.c.bf16 %v659, %v659
      %v692 = vpack.c.bf16 %v660, %v660
      %v693 = vpack.c.bf16 %v661, %v661
      %v694 = vpack.c.bf16 %v662, %v662
      %v695 = vpack.c.bf16 %v663, %v663
      %v696 = vpack.c.bf16 %v664, %v664
      %v697 = vpack.c.bf16 %v665, %v665
      %v698 = vpack.c.bf16 %v666, %v666
      %v699 = vpack.c.bf16 %v667, %v667
      %v700 = vpack.c.bf16 %v668, %v668
      %v701 = vpack.c.bf16 %v669, %v669
      %v702 = vpack.c.bf16 %v670, %v670
      %v703 = vpack.c.bf16 %v671, %v671
      %v704 = vpack.c.bf16 %v672, %v672
      %v705 = vpack.c.bf16 %v673, %v673
      %v706 = vpack.c.bf16 %v674, %v674
      %v707 = vpack.c.bf16 %v675, %v675
      %v708 = vpack.c.bf16 %v676, %v676
      %v709 = vpack.c.bf16 %v677, %v677
      %v710 = vpack.c.bf16 %v678, %v678
      %v711 = vpack.c.bf16 %v679, %v679
      %v712 = vpack.c.bf16 %v680, %v680
      %v713 = vpack.c.bf16 %v681, %v681
      %746 = vrot.lane.b32.xlu0 %v682, 8
      %v747 = vpop.permute.xlu0 %746
      %748 = vrot.lane.b32.xlu0 %v683, 8
      %v749 = vpop.permute.xlu0 %748
      %750 = vrot.lane.b32.xlu0 %v684, 8
      %v751 = vpop.permute.xlu0 %750
      %752 = vrot.lane.b32.xlu0 %v685, 8
      %v753 = vpop.permute.xlu0 %752
      %754 = vrot.lane.b32.xlu0 %v686, 8
      %v755 = vpop.permute.xlu0 %754
      %756 = vrot.lane.b32.xlu0 %v687, 8
      %v757 = vpop.permute.xlu0 %756
      %758 = vrot.lane.b32.xlu0 %v688, 8
      %v759 = vpop.permute.xlu0 %758
      %760 = vrot.lane.b32.xlu0 %v689, 8
      %v761 = vpop.permute.xlu0 %760
      %762 = vrot.lane.b32.xlu0 %v690, 8
      %v763 = vpop.permute.xlu0 %762
      %764 = vrot.lane.b32.xlu0 %v691, 8
      %v765 = vpop.permute.xlu0 %764
      %766 = vrot.lane.b32.xlu0 %v692, 8
      %v767 = vpop.permute.xlu0 %766
      %768 = vrot.lane.b32.xlu0 %v693, 8
      %v769 = vpop.permute.xlu0 %768
      %770 = vrot.lane.b32.xlu0 %v694, 8
      %v771 = vpop.permute.xlu0 %770
      %772 = vrot.lane.b32.xlu0 %v695, 8
      %v773 = vpop.permute.xlu0 %772
      %774 = vrot.lane.b32.xlu0 %v696, 8
      %v775 = vpop.permute.xlu0 %774
      %776 = vrot.lane.b32.xlu0 %v697, 8
      %v777 = vpop.permute.xlu0 %776
      %778 = vrot.lane.b32.xlu0 %v698, 8
      %v779 = vpop.permute.xlu0 %778
      %780 = vrot.lane.b32.xlu0 %v699, 8
      %v781 = vpop.permute.xlu0 %780
      %782 = vrot.lane.b32.xlu0 %v700, 8
      %v783 = vpop.permute.xlu0 %782
      %784 = vrot.lane.b32.xlu0 %v701, 8
      %v785 = vpop.permute.xlu0 %784
      %786 = vrot.lane.b32.xlu0 %v702, 8
      %v787 = vpop.permute.xlu0 %786
      %788 = vrot.lane.b32.xlu0 %v703, 8
      %v789 = vpop.permute.xlu0 %788
      %790 = vrot.lane.b32.xlu0 %v704, 8
      %v791 = vpop.permute.xlu0 %790
      %792 = vrot.lane.b32.xlu0 %v705, 8
      %v793 = vpop.permute.xlu0 %792
      %794 = vrot.lane.b32.xlu0 %v706, 8
      %v795 = vpop.permute.xlu0 %794
      %796 = vrot.lane.b32.xlu0 %v707, 8
      %v797 = vpop.permute.xlu0 %796
      %798 = vrot.lane.b32.xlu0 %v708, 8
      %v799 = vpop.permute.xlu0 %798
      %800 = vrot.lane.b32.xlu0 %v709, 8
      %v801 = vpop.permute.xlu0 %800
      %802 = vrot.lane.b32.xlu0 %v710, 8
      %v803 = vpop.permute.xlu0 %802
      %804 = vrot.lane.b32.xlu0 %v711, 8
      %v805 = vpop.permute.xlu0 %804
      %806 = vrot.lane.b32.xlu0 %v712, 8
      %v807 = vpop.permute.xlu0 %806
      %808 = vrot.lane.b32.xlu0 %v713, 8
      %v809 = vpop.permute.xlu0 %808
      %vm842 = vcmask 93248
      %843 = vst.msk [vmem:[#allocation3] sm:$0xf] %vm842, %v747
      %844 = vst.msk [vmem:[#allocation3 + $0x4] sm:$0xf] %vm842, %v749
      %845 = vst.msk [vmem:[#allocation3 + $0x8] sm:$0xf] %vm842, %v751
      %846 = vst.msk [vmem:[#allocation3 + $0xc] sm:$0xf] %vm842, %v753
      %847 = vst.msk [vmem:[#allocation3 + $0x10] sm:$0xf] %vm842, %v755
      %848 = vst.msk [vmem:[#allocation3 + $0x14] sm:$0xf] %vm842, %v757
      %849 = vst.msk [vmem:[#allocation3 + $0x18] sm:$0xf] %vm842, %v759
      %850 = vst.msk [vmem:[#allocation3 + $0x1c] sm:$0xf] %vm842, %v761
      %851 = vst.msk [vmem:[#allocation3 + $0x20] sm:$0xf] %vm842, %v763
      %852 = vst.msk [vmem:[#allocation3 + $0x24] sm:$0xf] %vm842, %v765
      %853 = vst.msk [vmem:[#allocation3 + $0x28] sm:$0xf] %vm842, %v767
      %854 = vst.msk [vmem:[#allocation3 + $0x2c] sm:$0xf] %vm842, %v769
      %855 = vst.msk [vmem:[#allocation3 + $0x30] sm:$0xf] %vm842, %v771
      %856 = vst.msk [vmem:[#allocation3 + $0x34] sm:$0xf] %vm842, %v773
      %857 = vst.msk [vmem:[#allocation3 + $0x38] sm:$0xf] %vm842, %v775
      %858 = vst.msk [vmem:[#allocation3 + $0x3c] sm:$0xf] %vm842, %v777
      %859 = vst.msk [vmem:[#allocation3 + $0x40] sm:$0xf] %vm842, %v779
      %860 = vst.msk [vmem:[#allocation3 + $0x44] sm:$0xf] %vm842, %v781
      %861 = vst.msk [vmem:[#allocation3 + $0x48] sm:$0xf] %vm842, %v783
      %862 = vst.msk [vmem:[#allocation3 + $0x4c] sm:$0xf] %vm842, %v785
      %863 = vst.msk [vmem:[#allocation3 + $0x50] sm:$0xf] %vm842, %v787
      %864 = vst.msk [vmem:[#allocation3 + $0x54] sm:$0xf] %vm842, %v789
      %865 = vst.msk [vmem:[#allocation3 + $0x58] sm:$0xf] %vm842, %v791
      %866 = vst.msk [vmem:[#allocation3 + $0x5c] sm:$0xf] %vm842, %v793
      %867 = vst.msk [vmem:[#allocation3 + $0x60] sm:$0xf] %vm842, %v795
      %868 = vst.msk [vmem:[#allocation3 + $0x64] sm:$0xf] %vm842, %v797
      %869 = vst.msk [vmem:[#allocation3 + $0x68] sm:$0xf] %vm842, %v799
      %870 = vst.msk [vmem:[#allocation3 + $0x6c] sm:$0xf] %vm842, %v801
      %871 = vst.msk [vmem:[#allocation3 + $0x70] sm:$0xf] %vm842, %v803
      %872 = vst.msk [vmem:[#allocation3 + $0x74] sm:$0xf] %vm842, %v805
      %873 = vst.msk [vmem:[#allocation3 + $0x78] sm:$0xf] %vm842, %v807
      %874 = vst.msk [vmem:[#allocation3 + $0x7c] sm:$0xf] %vm842, %v809
      %v875 = vld [vmem:[%s262] sm:$0xff]
      %v876 = vld [vmem:[%s262 + $0x8] sm:$0xff]
      %v877 = vld [vmem:[%s262 + $0x18] sm:$0xff]
      %v878 = vld [vmem:[%s262 + $0x20] sm:$0xff]
      %v879 = vld [vmem:[%s262 + $0x30] sm:$0xff]
      %v880 = vld [vmem:[%s262 + $0x38] sm:$0xff]
      %v881 = vld [vmem:[%s262 + $0x48] sm:$0xff]
      %v882 = vld [vmem:[%s262 + $0x50] sm:$0xff]
      %v883 = vld [vmem:[%s262 + $0x60] sm:$0xff]
      %v884 = vld [vmem:[%s262 + $0x68] sm:$0xff]
      %v885 = vld [vmem:[%s262 + $0x78] sm:$0xff]
      %v886 = vld [vmem:[%s262 + $0x80] sm:$0xff]
      %v887 = vld [vmem:[%s262 + $0x90] sm:$0xff]
      %v888 = vld [vmem:[%s262 + $0x98] sm:$0xff]
      %v889 = vld [vmem:[%s262 + $0xa8] sm:$0xff]
      %v890 = vld [vmem:[%s262 + $0xb0] sm:$0xff]
      %v891 = vld [vmem:[%s262 + $0xc0] sm:$0xff]
      %v892 = vld [vmem:[%s262 + $0xc8] sm:$0xff]
      %v893 = vld [vmem:[%s262 + $0xd8] sm:$0xff]
      %v894 = vld [vmem:[%s262 + $0xe0] sm:$0xff]
      %v895 = vld [vmem:[%s262 + $0xf0] sm:$0xff]
      %v896 = vld [vmem:[%s262 + $0xf8] sm:$0xff]
      %v897 = vld [vmem:[%s262 + $0x108] sm:$0xff]
      %v898 = vld [vmem:[%s262 + $0x110] sm:$0xff]
      %v899 = vld [vmem:[%s262 + $0x120] sm:$0xff]
      %v900 = vld [vmem:[%s262 + $0x128] sm:$0xff]
      %v901 = vld [vmem:[%s262 + $0x138] sm:$0xff]
      %v902 = vld [vmem:[%s262 + $0x140] sm:$0xff]
      %v903 = vld [vmem:[%s262 + $0x150] sm:$0xff]
      %v904 = vld [vmem:[%s262 + $0x158] sm:$0xff]
      %v905 = vld [vmem:[%s262 + $0x168] sm:$0xff]
      %v906 = vld [vmem:[%s262 + $0x170] sm:$0xff]
      %v907 = vpack.c.bf16 %v875, %v875
      %v908 = vpack.c.bf16 %v876, %v876
      %v909 = vpack.c.bf16 %v877, %v877
      %v910 = vpack.c.bf16 %v878, %v878
      %v911 = vpack.c.bf16 %v879, %v879
      %v912 = vpack.c.bf16 %v880, %v880
      %v913 = vpack.c.bf16 %v881, %v881
      %v914 = vpack.c.bf16 %v882, %v882
      %v915 = vpack.c.bf16 %v883, %v883
      %v916 = vpack.c.bf16 %v884, %v884
      %v917 = vpack.c.bf16 %v885, %v885
      %v918 = vpack.c.bf16 %v886, %v886
      %v919 = vpack.c.bf16 %v887, %v887
      %v920 = vpack.c.bf16 %v888, %v888
      %v921 = vpack.c.bf16 %v889, %v889
      %v922 = vpack.c.bf16 %v890, %v890
      %v923 = vpack.c.bf16 %v891, %v891
      %v924 = vpack.c.bf16 %v892, %v892
      %v925 = vpack.c.bf16 %v893, %v893
      %v926 = vpack.c.bf16 %v894, %v894
      %v927 = vpack.c.bf16 %v895, %v895
      %v928 = vpack.c.bf16 %v896, %v896
      %v929 = vpack.c.bf16 %v897, %v897
      %v930 = vpack.c.bf16 %v898, %v898
      %v931 = vpack.c.bf16 %v899, %v899
      %v932 = vpack.c.bf16 %v900, %v900
      %v933 = vpack.c.bf16 %v901, %v901
      %v934 = vpack.c.bf16 %v902, %v902
      %v935 = vpack.c.bf16 %v903, %v903
      %v936 = vpack.c.bf16 %v904, %v904
      %v937 = vpack.c.bf16 %v905, %v905
      %v938 = vpack.c.bf16 %v906, %v906
      %971 = vrot.lane.b32.xlu0 %v907, 12
      %v972 = vpop.permute.xlu0 %971
      %973 = vrot.lane.b32.xlu0 %v908, 12
      %v974 = vpop.permute.xlu0 %973
      %975 = vrot.lane.b32.xlu0 %v909, 12
      %v976 = vpop.permute.xlu0 %975
      %977 = vrot.lane.b32.xlu0 %v910, 12
      %v978 = vpop.permute.xlu0 %977
      %979 = vrot.lane.b32.xlu0 %v911, 12
      %v980 = vpop.permute.xlu0 %979
      %981 = vrot.lane.b32.xlu0 %v912, 12
      %v982 = vpop.permute.xlu0 %981
      %983 = vrot.lane.b32.xlu0 %v913, 12
      %v984 = vpop.permute.xlu0 %983
      %985 = vrot.lane.b32.xlu0 %v914, 12
      %v986 = vpop.permute.xlu0 %985
      %987 = vrot.lane.b32.xlu0 %v915, 12
      %v988 = vpop.permute.xlu0 %987
      %989 = vrot.lane.b32.xlu0 %v916, 12
      %v990 = vpop.permute.xlu0 %989
      %991 = vrot.lane.b32.xlu0 %v917, 12
      %v992 = vpop.permute.xlu0 %991
      %993 = vrot.lane.b32.xlu0 %v918, 12
      %v994 = vpop.permute.xlu0 %993
      %995 = vrot.lane.b32.xlu0 %v919, 12
      %v996 = vpop.permute.xlu0 %995
      %997 = vrot.lane.b32.xlu0 %v920, 12
      %v998 = vpop.permute.xlu0 %997
      %999 = vrot.lane.b32.xlu0 %v921, 12
      %v1000 = vpop.permute.xlu0 %999
      %1001 = vrot.lane.b32.xlu0 %v922, 12
      %v1002 = vpop.permute.xlu0 %1001
      %1003 = vrot.lane.b32.xlu0 %v923, 12
      %v1004 = vpop.permute.xlu0 %1003
      %1005 = vrot.lane.b32.xlu0 %v924, 12
      %v1006 = vpop.permute.xlu0 %1005
      %1007 = vrot.lane.b32.xlu0 %v925, 12
      %v1008 = vpop.permute.xlu0 %1007
      %1009 = vrot.lane.b32.xlu0 %v926, 12
      %v1010 = vpop.permute.xlu0 %1009
      %1011 = vrot.lane.b32.xlu0 %v927, 12
      %v1012 = vpop.permute.xlu0 %1011
      %1013 = vrot.lane.b32.xlu0 %v928, 12
      %v1014 = vpop.permute.xlu0 %1013
      %1015 = vrot.lane.b32.xlu0 %v929, 12
      %v1016 = vpop.permute.xlu0 %1015
      %1017 = vrot.lane.b32.xlu0 %v930, 12
      %v1018 = vpop.permute.xlu0 %1017
      %1019 = vrot.lane.b32.xlu0 %v931, 12
      %v1020 = vpop.permute.xlu0 %1019
      %1021 = vrot.lane.b32.xlu0 %v932, 12
      %v1022 = vpop.permute.xlu0 %1021
      %1023 = vrot.lane.b32.xlu0 %v933, 12
      %v1024 = vpop.permute.xlu0 %1023
      %1025 = vrot.lane.b32.xlu0 %v934, 12
      %v1026 = vpop.permute.xlu0 %1025
      %1027 = vrot.lane.b32.xlu0 %v935, 12
      %v1028 = vpop.permute.xlu0 %1027
      %1029 = vrot.lane.b32.xlu0 %v936, 12
      %v1030 = vpop.permute.xlu0 %1029
      %1031 = vrot.lane.b32.xlu0 %v937, 12
      %v1032 = vpop.permute.xlu0 %1031
      %1033 = vrot.lane.b32.xlu0 %v938, 12
      %v1034 = vpop.permute.xlu0 %1033
      %vm1067 = vcmask 126048
      %1068 = vst.msk [vmem:[#allocation3] sm:$0xf] %vm1067, %v972
      %1069 = vst.msk [vmem:[#allocation3 + $0x4] sm:$0xf] %vm1067, %v974
      %1070 = vst.msk [vmem:[#allocation3 + $0x8] sm:$0xf] %vm1067, %v976
      %1071 = vst.msk [vmem:[#allocation3 + $0xc] sm:$0xf] %vm1067, %v978
      %1072 = vst.msk [vmem:[#allocation3 + $0x10] sm:$0xf] %vm1067, %v980
      %1073 = vst.msk [vmem:[#allocation3 + $0x14] sm:$0xf] %vm1067, %v982
      %1074 = vst.msk [vmem:[#allocation3 + $0x18] sm:$0xf] %vm1067, %v984
      %1075 = vst.msk [vmem:[#allocation3 + $0x1c] sm:$0xf] %vm1067, %v986
      %1076 = vst.msk [vmem:[#allocation3 + $0x20] sm:$0xf] %vm1067, %v988
      %1077 = vst.msk [vmem:[#allocation3 + $0x24] sm:$0xf] %vm1067, %v990
      %1078 = vst.msk [vmem:[#allocation3 + $0x28] sm:$0xf] %vm1067, %v992
      %1079 = vst.msk [vmem:[#allocation3 + $0x2c] sm:$0xf] %vm1067, %v994
      %1080 = vst.msk [vmem:[#allocation3 + $0x30] sm:$0xf] %vm1067, %v996
      %1081 = vst.msk [vmem:[#allocation3 + $0x34] sm:$0xf] %vm1067, %v998
      %1082 = vst.msk [vmem:[#allocation3 + $0x38] sm:$0xf] %vm1067, %v1000
      %1083 = vst.msk [vmem:[#allocation3 + $0x3c] sm:$0xf] %vm1067, %v1002
      %1084 = vst.msk [vmem:[#allocation3 + $0x40] sm:$0xf] %vm1067, %v1004
      %1085 = vst.msk [vmem:[#allocation3 + $0x44] sm:$0xf] %vm1067, %v1006
      %1086 = vst.msk [vmem:[#allocation3 + $0x48] sm:$0xf] %vm1067, %v1008
      %1087 = vst.msk [vmem:[#allocation3 + $0x4c] sm:$0xf] %vm1067, %v1010
      %1088 = vst.msk [vmem:[#allocation3 + $0x50] sm:$0xf] %vm1067, %v1012
      %1089 = vst.msk [vmem:[#allocation3 + $0x54] sm:$0xf] %vm1067, %v1014
      %1090 = vst.msk [vmem:[#allocation3 + $0x58] sm:$0xf] %vm1067, %v1016
      %1091 = vst.msk [vmem:[#allocation3 + $0x5c] sm:$0xf] %vm1067, %v1018
      %1092 = vst.msk [vmem:[#allocation3 + $0x60] sm:$0xf] %vm1067, %v1020
      %1093 = vst.msk [vmem:[#allocation3 + $0x64] sm:$0xf] %vm1067, %v1022
      %1094 = vst.msk [vmem:[#allocation3 + $0x68] sm:$0xf] %vm1067, %v1024
      %1095 = vst.msk [vmem:[#allocation3 + $0x6c] sm:$0xf] %vm1067, %v1026
      %1096 = vst.msk [vmem:[#allocation3 + $0x70] sm:$0xf] %vm1067, %v1028
      %1097 = vst.msk [vmem:[#allocation3 + $0x74] sm:$0xf] %vm1067, %v1030
      %1098 = vst.msk [vmem:[#allocation3 + $0x78] sm:$0xf] %vm1067, %v1032
      %1099 = vst.msk [vmem:[#allocation3 + $0x7c] sm:$0xf] %vm1067, %v1034
      %v1100 = vld [vmem:[%s262 + $0x1] sm:$0xff]
      %v1101 = vld [vmem:[%s262 + $0x9] sm:$0xff]
      %v1102 = vld [vmem:[%s262 + $0x19] sm:$0xff]
      %v1103 = vld [vmem:[%s262 + $0x21] sm:$0xff]
      %v1104 = vld [vmem:[%s262 + $0x31] sm:$0xff]
      %v1105 = vld [vmem:[%s262 + $0x39] sm:$0xff]
      %v1106 = vld [vmem:[%s262 + $0x49] sm:$0xff]
      %v1107 = vld [vmem:[%s262 + $0x51] sm:$0xff]
      %v1108 = vld [vmem:[%s262 + $0x61] sm:$0xff]
      %v1109 = vld [vmem:[%s262 + $0x69] sm:$0xff]
      %v1110 = vld [vmem:[%s262 + $0x79] sm:$0xff]
      %v1111 = vld [vmem:[%s262 + $0x81] sm:$0xff]
      %v1112 = vld [vmem:[%s262 + $0x91] sm:$0xff]
      %v1113 = vld [vmem:[%s262 + $0x99] sm:$0xff]
      %v1114 = vld [vmem:[%s262 + $0xa9] sm:$0xff]
      %v1115 = vld [vmem:[%s262 + $0xb1] sm:$0xff]
      %v1116 = vld [vmem:[%s262 + $0xc1] sm:$0xff]
      %v1117 = vld [vmem:[%s262 + $0xc9] sm:$0xff]
      %v1118 = vld [vmem:[%s262 + $0xd9] sm:$0xff]
      %v1119 = vld [vmem:[%s262 + $0xe1] sm:$0xff]
      %v1120 = vld [vmem:[%s262 + $0xf1] sm:$0xff]
      %v1121 = vld [vmem:[%s262 + $0xf9] sm:$0xff]
      %v1122 = vld [vmem:[%s262 + $0x109] sm:$0xff]
      %v1123 = vld [vmem:[%s262 + $0x111] sm:$0xff]
      %v1124 = vld [vmem:[%s262 + $0x121] sm:$0xff]
      %v1125 = vld [vmem:[%s262 + $0x129] sm:$0xff]
      %v1126 = vld [vmem:[%s262 + $0x139] sm:$0xff]
      %v1127 = vld [vmem:[%s262 + $0x141] sm:$0xff]
      %v1128 = vld [vmem:[%s262 + $0x151] sm:$0xff]
      %v1129 = vld [vmem:[%s262 + $0x159] sm:$0xff]
      %v1130 = vld [vmem:[%s262 + $0x169] sm:$0xff]
      %v1131 = vld [vmem:[%s262 + $0x171] sm:$0xff]
      %v1132 = vpack.c.bf16 %v1100, %v1100
      %v1133 = vpack.c.bf16 %v1101, %v1101
      %v1134 = vpack.c.bf16 %v1102, %v1102
      %v1135 = vpack.c.bf16 %v1103, %v1103
      %v1136 = vpack.c.bf16 %v1104, %v1104
      %v1137 = vpack.c.bf16 %v1105, %v1105
      %v1138 = vpack.c.bf16 %v1106, %v1106
      %v1139 = vpack.c.bf16 %v1107, %v1107
      %v1140 = vpack.c.bf16 %v1108, %v1108
      %v1141 = vpack.c.bf16 %v1109, %v1109
      %v1142 = vpack.c.bf16 %v1110, %v1110
      %v1143 = vpack.c.bf16 %v1111, %v1111
      %v1144 = vpack.c.bf16 %v1112, %v1112
      %v1145 = vpack.c.bf16 %v1113, %v1113
      %v1146 = vpack.c.bf16 %v1114, %v1114
      %v1147 = vpack.c.bf16 %v1115, %v1115
      %v1148 = vpack.c.bf16 %v1116, %v1116
      %v1149 = vpack.c.bf16 %v1117, %v1117
      %v1150 = vpack.c.bf16 %v1118, %v1118
      %v1151 = vpack.c.bf16 %v1119, %v1119
      %v1152 = vpack.c.bf16 %v1120, %v1120
      %v1153 = vpack.c.bf16 %v1121, %v1121
      %v1154 = vpack.c.bf16 %v1122, %v1122
      %v1155 = vpack.c.bf16 %v1123, %v1123
      %v1156 = vpack.c.bf16 %v1124, %v1124
      %v1157 = vpack.c.bf16 %v1125, %v1125
      %v1158 = vpack.c.bf16 %v1126, %v1126
      %v1159 = vpack.c.bf16 %v1127, %v1127
      %v1160 = vpack.c.bf16 %v1128, %v1128
      %v1161 = vpack.c.bf16 %v1129, %v1129
      %v1162 = vpack.c.bf16 %v1130, %v1130
      %v1163 = vpack.c.bf16 %v1131, %v1131
      %1196 = vrot.lane.b32.xlu0 %v1132, 16
      %v1197 = vpop.permute.xlu0 %1196
      %1198 = vrot.lane.b32.xlu0 %v1133, 16
      %v1199 = vpop.permute.xlu0 %1198
      %1200 = vrot.lane.b32.xlu0 %v1134, 16
      %v1201 = vpop.permute.xlu0 %1200
      %1202 = vrot.lane.b32.xlu0 %v1135, 16
      %v1203 = vpop.permute.xlu0 %1202
      %1204 = vrot.lane.b32.xlu0 %v1136, 16
      %v1205 = vpop.permute.xlu0 %1204
      %1206 = vrot.lane.b32.xlu0 %v1137, 16
      %v1207 = vpop.permute.xlu0 %1206
      %1208 = vrot.lane.b32.xlu0 %v1138, 16
      %v1209 = vpop.permute.xlu0 %1208
      %1210 = vrot.lane.b32.xlu0 %v1139, 16
      %v1211 = vpop.permute.xlu0 %1210
      %1212 = vrot.lane.b32.xlu0 %v1140, 16
      %v1213 = vpop.permute.xlu0 %1212
      %1214 = vrot.lane.b32.xlu0 %v1141, 16
      %v1215 = vpop.permute.xlu0 %1214
      %1216 = vrot.lane.b32.xlu0 %v1142, 16
      %v1217 = vpop.permute.xlu0 %1216
      %1218 = vrot.lane.b32.xlu0 %v1143, 16
      %v1219 = vpop.permute.xlu0 %1218
      %1220 = vrot.lane.b32.xlu0 %v1144, 16
      %v1221 = vpop.permute.xlu0 %1220
      %1222 = vrot.lane.b32.xlu0 %v1145, 16
      %v1223 = vpop.permute.xlu0 %1222
      %1224 = vrot.lane.b32.xlu0 %v1146, 16
      %v1225 = vpop.permute.xlu0 %1224
      %1226 = vrot.lane.b32.xlu0 %v1147, 16
      %v1227 = vpop.permute.xlu0 %1226
      %1228 = vrot.lane.b32.xlu0 %v1148, 16
      %v1229 = vpop.permute.xlu0 %1228
      %1230 = vrot.lane.b32.xlu0 %v1149, 16
      %v1231 = vpop.permute.xlu0 %1230
      %1232 = vrot.lane.b32.xlu0 %v1150, 16
      %v1233 = vpop.permute.xlu0 %1232
      %1234 = vrot.lane.b32.xlu0 %v1151, 16
      %v1235 = vpop.permute.xlu0 %1234
      %1236 = vrot.lane.b32.xlu0 %v1152, 16
      %v1237 = vpop.permute.xlu0 %1236
      %1238 = vrot.lane.b32.xlu0 %v1153, 16
      %v1239 = vpop.permute.xlu0 %1238
      %1240 = vrot.lane.b32.xlu0 %v1154, 16
      %v1241 = vpop.permute.xlu0 %1240
      %1242 = vrot.lane.b32.xlu0 %v1155, 16
      %v1243 = vpop.permute.xlu0 %1242
      %1244 = vrot.lane.b32.xlu0 %v1156, 16
      %v1245 = vpop.permute.xlu0 %1244
      %1246 = vrot.lane.b32.xlu0 %v1157, 16
      %v1247 = vpop.permute.xlu0 %1246
      %1248 = vrot.lane.b32.xlu0 %v1158, 16
      %v1249 = vpop.permute.xlu0 %1248
      %1250 = vrot.lane.b32.xlu0 %v1159, 16
      %v1251 = vpop.permute.xlu0 %1250
      %1252 = vrot.lane.b32.xlu0 %v1160, 16
      %v1253 = vpop.permute.xlu0 %1252
      %1254 = vrot.lane.b32.xlu0 %v1161, 16
      %v1255 = vpop.permute.xlu0 %1254
      %1256 = vrot.lane.b32.xlu0 %v1162, 16
      %v1257 = vpop.permute.xlu0 %1256
      %1258 = vrot.lane.b32.xlu0 %v1163, 16
      %v1259 = vpop.permute.xlu0 %1258
      %vm1292 = vcmask 158848
      %1293 = vst.msk [vmem:[#allocation3] sm:$0xf] %vm1292, %v1197
      %1294 = vst.msk [vmem:[#allocation3 + $0x4] sm:$0xf] %vm1292, %v1199
      %1295 = vst.msk [vmem:[#allocation3 + $0x8] sm:$0xf] %vm1292, %v1201
      %1296 = vst.msk [vmem:[#allocation3 + $0xc] sm:$0xf] %vm1292, %v1203
      %1297 = vst.msk [vmem:[#allocation3 + $0x10] sm:$0xf] %vm1292, %v1205
      %1298 = vst.msk [vmem:[#allocation3 + $0x14] sm:$0xf] %vm1292, %v1207
      %1299 = vst.msk [vmem:[#allocation3 + $0x18] sm:$0xf] %vm1292, %v1209
      %1300 = vst.msk [vmem:[#allocation3 + $0x1c] sm:$0xf] %vm1292, %v1211
      %1301 = vst.msk [vmem:[#allocation3 + $0x20] sm:$0xf] %vm1292, %v1213
      %1302 = vst.msk [vmem:[#allocation3 + $0x24] sm:$0xf] %vm1292, %v1215
      %1303 = vst.msk [vmem:[#allocation3 + $0x28] sm:$0xf] %vm1292, %v1217
      %1304 = vst.msk [vmem:[#allocation3 + $0x2c] sm:$0xf] %vm1292, %v1219
      %1305 = vst.msk [vmem:[#allocation3 + $0x30] sm:$0xf] %vm1292, %v1221
      %1306 = vst.msk [vmem:[#allocation3 + $0x34] sm:$0xf] %vm1292, %v1223
      %1307 = vst.msk [vmem:[#allocation3 + $0x38] sm:$0xf] %vm1292, %v1225
      %1308 = vst.msk [vmem:[#allocation3 + $0x3c] sm:$0xf] %vm1292, %v1227
      %1309 = vst.msk [vmem:[#allocation3 + $0x40] sm:$0xf] %vm1292, %v1229
      %1310 = vst.msk [vmem:[#allocation3 + $0x44] sm:$0xf] %vm1292, %v1231
      %1311 = vst.msk [vmem:[#allocation3 + $0x48] sm:$0xf] %vm1292, %v1233
      %1312 = vst.msk [vmem:[#allocation3 + $0x4c] sm:$0xf] %vm1292, %v1235
      %1313 = vst.msk [vmem:[#allocation3 + $0x50] sm:$0xf] %vm1292, %v1237
      %1314 = vst.msk [vmem:[#allocation3 + $0x54] sm:$0xf] %vm1292, %v1239
      %1315 = vst.msk [vmem:[#allocation3 + $0x58] sm:$0xf] %vm1292, %v1241
      %1316 = vst.msk [vmem:[#allocation3 + $0x5c] sm:$0xf] %vm1292, %v1243
      %1317 = vst.msk [vmem:[#allocation3 + $0x60] sm:$0xf] %vm1292, %v1245
      %1318 = vst.msk [vmem:[#allocation3 + $0x64] sm:$0xf] %vm1292, %v1247
      %1319 = vst.msk [vmem:[#allocation3 + $0x68] sm:$0xf] %vm1292, %v1249
      %1320 = vst.msk [vmem:[#allocation3 + $0x6c] sm:$0xf] %vm1292, %v1251
      %1321 = vst.msk [vmem:[#allocation3 + $0x70] sm:$0xf] %vm1292, %v1253
      %1322 = vst.msk [vmem:[#allocation3 + $0x74] sm:$0xf] %vm1292, %v1255
      %1323 = vst.msk [vmem:[#allocation3 + $0x78] sm:$0xf] %vm1292, %v1257
      %1324 = vst.msk [vmem:[#allocation3 + $0x7c] sm:$0xf] %vm1292, %v1259
      %v1325 = vld [vmem:[%s262 + $0x2] sm:$0xff]
      %v1326 = vld [vmem:[%s262 + $0xa] sm:$0xff]
      %v1327 = vld [vmem:[%s262 + $0x1a] sm:$0xff]
      %v1328 = vld [vmem:[%s262 + $0x22] sm:$0xff]
      %v1329 = vld [vmem:[%s262 + $0x32] sm:$0xff]
      %v1330 = vld [vmem:[%s262 + $0x3a] sm:$0xff]
      %v1331 = vld [vmem:[%s262 + $0x4a] sm:$0xff]
      %v1332 = vld [vmem:[%s262 + $0x52] sm:$0xff]
      %v1333 = vld [vmem:[%s262 + $0x62] sm:$0xff]
      %v1334 = vld [vmem:[%s262 + $0x6a] sm:$0xff]
      %v1335 = vld [vmem:[%s262 + $0x7a] sm:$0xff]
      %v1336 = vld [vmem:[%s262 + $0x82] sm:$0xff]
      %v1337 = vld [vmem:[%s262 + $0x92] sm:$0xff]
      %v1338 = vld [vmem:[%s262 + $0x9a] sm:$0xff]
      %v1339 = vld [vmem:[%s262 + $0xaa] sm:$0xff]
      %v1340 = vld [vmem:[%s262 + $0xb2] sm:$0xff]
      %v1341 = vld [vmem:[%s262 + $0xc2] sm:$0xff]
      %v1342 = vld [vmem:[%s262 + $0xca] sm:$0xff]
      %v1343 = vld [vmem:[%s262 + $0xda] sm:$0xff]
      %v1344 = vld [vmem:[%s262 + $0xe2] sm:$0xff]
      %v1345 = vld [vmem:[%s262 + $0xf2] sm:$0xff]
      %v1346 = vld [vmem:[%s262 + $0xfa] sm:$0xff]
      %v1347 = vld [vmem:[%s262 + $0x10a] sm:$0xff]
      %v1348 = vld [vmem:[%s262 + $0x112] sm:$0xff]
      %v1349 = vld [vmem:[%s262 + $0x122] sm:$0xff]
      %v1350 = vld [vmem:[%s262 + $0x12a] sm:$0xff]
      %v1351 = vld [vmem:[%s262 + $0x13a] sm:$0xff]
      %v1352 = vld [vmem:[%s262 + $0x142] sm:$0xff]
      %v1353 = vld [vmem:[%s262 + $0x152] sm:$0xff]
      %v1354 = vld [vmem:[%s262 + $0x15a] sm:$0xff]
      %v1355 = vld [vmem:[%s262 + $0x16a] sm:$0xff]
      %v1356 = vld [vmem:[%s262 + $0x172] sm:$0xff]
      %v1357 = vpack.c.bf16 %v1325, %v1325
      %v1358 = vpack.c.bf16 %v1326, %v1326
      %v1359 = vpack.c.bf16 %v1327, %v1327
      %v1360 = vpack.c.bf16 %v1328, %v1328
      %v1361 = vpack.c.bf16 %v1329, %v1329
      %v1362 = vpack.c.bf16 %v1330, %v1330
      %v1363 = vpack.c.bf16 %v1331, %v1331
      %v1364 = vpack.c.bf16 %v1332, %v1332
      %v1365 = vpack.c.bf16 %v1333, %v1333
      %v1366 = vpack.c.bf16 %v1334, %v1334
      %v1367 = vpack.c.bf16 %v1335, %v1335
      %v1368 = vpack.c.bf16 %v1336, %v1336
      %v1369 = vpack.c.bf16 %v1337, %v1337
      %v1370 = vpack.c.bf16 %v1338, %v1338
      %v1371 = vpack.c.bf16 %v1339, %v1339
      %v1372 = vpack.c.bf16 %v1340, %v1340
      %v1373 = vpack.c.bf16 %v1341, %v1341
      %v1374 = vpack.c.bf16 %v1342, %v1342
      %v1375 = vpack.c.bf16 %v1343, %v1343
      %v1376 = vpack.c.bf16 %v1344, %v1344
      %v1377 = vpack.c.bf16 %v1345, %v1345
      %v1378 = vpack.c.bf16 %v1346, %v1346
      %v1379 = vpack.c.bf16 %v1347, %v1347
      %v1380 = vpack.c.bf16 %v1348, %v1348
      %v1381 = vpack.c.bf16 %v1349, %v1349
      %v1382 = vpack.c.bf16 %v1350, %v1350
      %v1383 = vpack.c.bf16 %v1351, %v1351
      %v1384 = vpack.c.bf16 %v1352, %v1352
      %v1385 = vpack.c.bf16 %v1353, %v1353
      %v1386 = vpack.c.bf16 %v1354, %v1354
      %v1387 = vpack.c.bf16 %v1355, %v1355
      %v1388 = vpack.c.bf16 %v1356, %v1356
      %1421 = vrot.lane.b32.xlu0 %v1357, 20
      %v1422 = vpop.permute.xlu0 %1421
      %1423 = vrot.lane.b32.xlu0 %v1358, 20
      %v1424 = vpop.permute.xlu0 %1423
      %1425 = vrot.lane.b32.xlu0 %v1359, 20
      %v1426 = vpop.permute.xlu0 %1425
      %1427 = vrot.lane.b32.xlu0 %v1360, 20
      %v1428 = vpop.permute.xlu0 %1427
      %1429 = vrot.lane.b32.xlu0 %v1361, 20
      %v1430 = vpop.permute.xlu0 %1429
      %1431 = vrot.lane.b32.xlu0 %v1362, 20
      %v1432 = vpop.permute.xlu0 %1431
      %1433 = vrot.lane.b32.xlu0 %v1363, 20
      %v1434 = vpop.permute.xlu0 %1433
      %1435 = vrot.lane.b32.xlu0 %v1364, 20
      %v1436 = vpop.permute.xlu0 %1435
      %1437 = vrot.lane.b32.xlu0 %v1365, 20
      %v1438 = vpop.permute.xlu0 %1437
      %1439 = vrot.lane.b32.xlu0 %v1366, 20
      %v1440 = vpop.permute.xlu0 %1439
      %1441 = vrot.lane.b32.xlu0 %v1367, 20
      %v1442 = vpop.permute.xlu0 %1441
      %1443 = vrot.lane.b32.xlu0 %v1368, 20
      %v1444 = vpop.permute.xlu0 %1443
      %1445 = vrot.lane.b32.xlu0 %v1369, 20
      %v1446 = vpop.permute.xlu0 %1445
      %1447 = vrot.lane.b32.xlu0 %v1370, 20
      %v1448 = vpop.permute.xlu0 %1447
      %1449 = vrot.lane.b32.xlu0 %v1371, 20
      %v1450 = vpop.permute.xlu0 %1449
      %1451 = vrot.lane.b32.xlu0 %v1372, 20
      %v1452 = vpop.permute.xlu0 %1451
      %1453 = vrot.lane.b32.xlu0 %v1373, 20
      %v1454 = vpop.permute.xlu0 %1453
      %1455 = vrot.lane.b32.xlu0 %v1374, 20
      %v1456 = vpop.permute.xlu0 %1455
      %1457 = vrot.lane.b32.xlu0 %v1375, 20
      %v1458 = vpop.permute.xlu0 %1457
      %1459 = vrot.lane.b32.xlu0 %v1376, 20
      %v1460 = vpop.permute.xlu0 %1459
      %1461 = vrot.lane.b32.xlu0 %v1377, 20
      %v1462 = vpop.permute.xlu0 %1461
      %1463 = vrot.lane.b32.xlu0 %v1378, 20
      %v1464 = vpop.permute.xlu0 %1463
      %1465 = vrot.lane.b32.xlu0 %v1379, 20
      %v1466 = vpop.permute.xlu0 %1465
      %1467 = vrot.lane.b32.xlu0 %v1380, 20
      %v1468 = vpop.permute.xlu0 %1467
      %1469 = vrot.lane.b32.xlu0 %v1381, 20
      %v1470 = vpop.permute.xlu0 %1469
      %1471 = vrot.lane.b32.xlu0 %v1382, 20
      %v1472 = vpop.permute.xlu0 %1471
      %1473 = vrot.lane.b32.xlu0 %v1383, 20
      %v1474 = vpop.permute.xlu0 %1473
      %1475 = vrot.lane.b32.xlu0 %v1384, 20
      %v1476 = vpop.permute.xlu0 %1475
      %1477 = vrot.lane.b32.xlu0 %v1385, 20
      %v1478 = vpop.permute.xlu0 %1477
      %1479 = vrot.lane.b32.xlu0 %v1386, 20
      %v1480 = vpop.permute.xlu0 %1479
      %1481 = vrot.lane.b32.xlu0 %v1387, 20
      %v1482 = vpop.permute.xlu0 %1481
      %1483 = vrot.lane.b32.xlu0 %v1388, 20
      %v1484 = vpop.permute.xlu0 %1483
      %vm1517 = vcmask 191648
      %1518 = vst.msk [vmem:[#allocation3] sm:$0xf] %vm1517, %v1422
      %1519 = vst.msk [vmem:[#allocation3 + $0x4] sm:$0xf] %vm1517, %v1424
      %1520 = vst.msk [vmem:[#allocation3 + $0x8] sm:$0xf] %vm1517, %v1426
      %1521 = vst.msk [vmem:[#allocation3 + $0xc] sm:$0xf] %vm1517, %v1428
      %1522 = vst.msk [vmem:[#allocation3 + $0x10] sm:$0xf] %vm1517, %v1430
      %1523 = vst.msk [vmem:[#allocation3 + $0x14] sm:$0xf] %vm1517, %v1432
      %1524 = vst.msk [vmem:[#allocation3 + $0x18] sm:$0xf] %vm1517, %v1434
      %1525 = vst.msk [vmem:[#allocation3 + $0x1c] sm:$0xf] %vm1517, %v1436
      %1526 = vst.msk [vmem:[#allocation3 + $0x20] sm:$0xf] %vm1517, %v1438
      %1527 = vst.msk [vmem:[#allocation3 + $0x24] sm:$0xf] %vm1517, %v1440
      %1528 = vst.msk [vmem:[#allocation3 + $0x28] sm:$0xf] %vm1517, %v1442
      %1529 = vst.msk [vmem:[#allocation3 + $0x2c] sm:$0xf] %vm1517, %v1444
      %1530 = vst.msk [vmem:[#allocation3 + $0x30] sm:$0xf] %vm1517, %v1446
      %1531 = vst.msk [vmem:[#allocation3 + $0x34] sm:$0xf] %vm1517, %v1448
      %1532 = vst.msk [vmem:[#allocation3 + $0x38] sm:$0xf] %vm1517, %v1450
      %1533 = vst.msk [vmem:[#allocation3 + $0x3c] sm:$0xf] %vm1517, %v1452
      %1534 = vst.msk [vmem:[#allocation3 + $0x40] sm:$0xf] %vm1517, %v1454
      %1535 = vst.msk [vmem:[#allocation3 + $0x44] sm:$0xf] %vm1517, %v1456
      %1536 = vst.msk [vmem:[#allocation3 + $0x48] sm:$0xf] %vm1517, %v1458
      %1537 = vst.msk [vmem:[#allocation3 + $0x4c] sm:$0xf] %vm1517, %v1460
      %1538 = vst.msk [vmem:[#allocation3 + $0x50] sm:$0xf] %vm1517, %v1462
      %1539 = vst.msk [vmem:[#allocation3 + $0x54] sm:$0xf] %vm1517, %v1464
      %1540 = vst.msk [vmem:[#allocation3 + $0x58] sm:$0xf] %vm1517, %v1466
      %1541 = vst.msk [vmem:[#allocation3 + $0x5c] sm:$0xf] %vm1517, %v1468
      %1542 = vst.msk [vmem:[#allocation3 + $0x60] sm:$0xf] %vm1517, %v1470
      %1543 = vst.msk [vmem:[#allocation3 + $0x64] sm:$0xf] %vm1517, %v1472
      %1544 = vst.msk [vmem:[#allocation3 + $0x68] sm:$0xf] %vm1517, %v1474
      %1545 = vst.msk [vmem:[#allocation3 + $0x6c] sm:$0xf] %vm1517, %v1476
      %1546 = vst.msk [vmem:[#allocation3 + $0x70] sm:$0xf] %vm1517, %v1478
      %1547 = vst.msk [vmem:[#allocation3 + $0x74] sm:$0xf] %vm1517, %v1480
      %1548 = vst.msk [vmem:[#allocation3 + $0x78] sm:$0xf] %vm1517, %v1482
      %1549 = vst.msk [vmem:[#allocation3 + $0x7c] sm:$0xf] %vm1517, %v1484
      %s1550 = scalar_lea.vmem [#allocation2], 48
      %v1551 = vld [vmem:[%s1550] sm:$0xff]
      %v1552 = vld [vmem:[%s1550 + $0x8] sm:$0xff]
      %v1553 = vld [vmem:[%s1550 + $0x18] sm:$0xff]
      %v1554 = vld [vmem:[%s1550 + $0x20] sm:$0xff]
      %v1555 = vld [vmem:[%s1550 + $0x30] sm:$0xff]
      %v1556 = vld [vmem:[%s1550 + $0x38] sm:$0xff]
      %v1557 = vld [vmem:[%s1550 + $0x48] sm:$0xff]
      %v1558 = vld [vmem:[%s1550 + $0x50] sm:$0xff]
      %v1559 = vld [vmem:[%s1550 + $0x60] sm:$0xff]
      %v1560 = vld [vmem:[%s1550 + $0x68] sm:$0xff]
      %v1561 = vld [vmem:[%s1550 + $0x78] sm:$0xff]
      %v1562 = vld [vmem:[%s1550 + $0x80] sm:$0xff]
      %v1563 = vld [vmem:[%s1550 + $0x90] sm:$0xff]
      %v1564 = vld [vmem:[%s1550 + $0x98] sm:$0xff]
      %v1565 = vld [vmem:[%s1550 + $0xa8] sm:$0xff]
      %v1566 = vld [vmem:[%s1550 + $0xb0] sm:$0xff]
      %v1567 = vld [vmem:[%s1550 + $0xc0] sm:$0xff]
      %v1568 = vld [vmem:[%s1550 + $0xc8] sm:$0xff]
      %v1569 = vld [vmem:[%s1550 + $0xd8] sm:$0xff]
      %v1570 = vld [vmem:[%s1550 + $0xe0] sm:$0xff]
      %v1571 = vld [vmem:[%s1550 + $0xf0] sm:$0xff]
      %v1572 = vld [vmem:[%s1550 + $0xf8] sm:$0xff]
      %v1573 = vld [vmem:[%s1550 + $0x108] sm:$0xff]
      %v1574 = vld [vmem:[%s1550 + $0x110] sm:$0xff]
      %v1575 = vld [vmem:[%s1550 + $0x120] sm:$0xff]
      %v1576 = vld [vmem:[%s1550 + $0x128] sm:$0xff]
      %v1577 = vld [vmem:[%s1550 + $0x138] sm:$0xff]
      %v1578 = vld [vmem:[%s1550 + $0x140] sm:$0xff]
      %v1579 = vld [vmem:[%s1550 + $0x150] sm:$0xff]
      %v1580 = vld [vmem:[%s1550 + $0x158] sm:$0xff]
      %v1581 = vld [vmem:[%s1550 + $0x168] sm:$0xff]
      %v1582 = vld [vmem:[%s1550 + $0x170] sm:$0xff]
      %v1583 = vpack.c.bf16 %v1551, %v1551
      %v1584 = vpack.c.bf16 %v1552, %v1552
      %v1585 = vpack.c.bf16 %v1553, %v1553
      %v1586 = vpack.c.bf16 %v1554, %v1554
      %v1587 = vpack.c.bf16 %v1555, %v1555
      %v1588 = vpack.c.bf16 %v1556, %v1556
      %v1589 = vpack.c.bf16 %v1557, %v1557
      %v1590 = vpack.c.bf16 %v1558, %v1558
      %v1591 = vpack.c.bf16 %v1559, %v1559
      %v1592 = vpack.c.bf16 %v1560, %v1560
      %v1593 = vpack.c.bf16 %v1561, %v1561
      %v1594 = vpack.c.bf16 %v1562, %v1562
      %v1595 = vpack.c.bf16 %v1563, %v1563
      %v1596 = vpack.c.bf16 %v1564, %v1564
      %v1597 = vpack.c.bf16 %v1565, %v1565
      %v1598 = vpack.c.bf16 %v1566, %v1566
      %v1599 = vpack.c.bf16 %v1567, %v1567
      %v1600 = vpack.c.bf16 %v1568, %v1568
      %v1601 = vpack.c.bf16 %v1569, %v1569
      %v1602 = vpack.c.bf16 %v1570, %v1570
      %v1603 = vpack.c.bf16 %v1571, %v1571
      %v1604 = vpack.c.bf16 %v1572, %v1572
      %v1605 = vpack.c.bf16 %v1573, %v1573
      %v1606 = vpack.c.bf16 %v1574, %v1574
      %v1607 = vpack.c.bf16 %v1575, %v1575
      %v1608 = vpack.c.bf16 %v1576, %v1576
      %v1609 = vpack.c.bf16 %v1577, %v1577
      %v1610 = vpack.c.bf16 %v1578, %v1578
      %v1611 = vpack.c.bf16 %v1579, %v1579
      %v1612 = vpack.c.bf16 %v1580, %v1580
      %v1613 = vpack.c.bf16 %v1581, %v1581
      %v1614 = vpack.c.bf16 %v1582, %v1582
      %1647 = vrot.lane.b32.xlu0 %v1583, 24
      %v1648 = vpop.permute.xlu0 %1647
      %1649 = vrot.lane.b32.xlu0 %v1584, 24
      %v1650 = vpop.permute.xlu0 %1649
      %1651 = vrot.lane.b32.xlu0 %v1585, 24
      %v1652 = vpop.permute.xlu0 %1651
      %1653 = vrot.lane.b32.xlu0 %v1586, 24
      %v1654 = vpop.permute.xlu0 %1653
      %1655 = vrot.lane.b32.xlu0 %v1587, 24
      %v1656 = vpop.permute.xlu0 %1655
      %1657 = vrot.lane.b32.xlu0 %v1588, 24
      %v1658 = vpop.permute.xlu0 %1657
      %1659 = vrot.lane.b32.xlu0 %v1589, 24
      %v1660 = vpop.permute.xlu0 %1659
      %1661 = vrot.lane.b32.xlu0 %v1590, 24
      %v1662 = vpop.permute.xlu0 %1661
      %1663 = vrot.lane.b32.xlu0 %v1591, 24
      %v1664 = vpop.permute.xlu0 %1663
      %1665 = vrot.lane.b32.xlu0 %v1592, 24
      %v1666 = vpop.permute.xlu0 %1665
      %1667 = vrot.lane.b32.xlu0 %v1593, 24
      %v1668 = vpop.permute.xlu0 %1667
      %1669 = vrot.lane.b32.xlu0 %v1594, 24
      %v1670 = vpop.permute.xlu0 %1669
      %1671 = vrot.lane.b32.xlu0 %v1595, 24
      %v1672 = vpop.permute.xlu0 %1671
      %1673 = vrot.lane.b32.xlu0 %v1596, 24
      %v1674 = vpop.permute.xlu0 %1673
      %1675 = vrot.lane.b32.xlu0 %v1597, 24
      %v1676 = vpop.permute.xlu0 %1675
      %1677 = vrot.lane.b32.xlu0 %v1598, 24
      %v1678 = vpop.permute.xlu0 %1677
      %1679 = vrot.lane.b32.xlu0 %v1599, 24
      %v1680 = vpop.permute.xlu0 %1679
      %1681 = vrot.lane.b32.xlu0 %v1600, 24
      %v1682 = vpop.permute.xlu0 %1681
      %1683 = vrot.lane.b32.xlu0 %v1601, 24
      %v1684 = vpop.permute.xlu0 %1683
      %1685 = vrot.lane.b32.xlu0 %v1602, 24
      %v1686 = vpop.permute.xlu0 %1685
      %1687 = vrot.lane.b32.xlu0 %v1603, 24
      %v1688 = vpop.permute.xlu0 %1687
      %1689 = vrot.lane.b32.xlu0 %v1604, 24
      %v1690 = vpop.permute.xlu0 %1689
      %1691 = vrot.lane.b32.xlu0 %v1605, 24
      %v1692 = vpop.permute.xlu0 %1691
      %1693 = vrot.lane.b32.xlu0 %v1606, 24
      %v1694 = vpop.permute.xlu0 %1693
      %1695 = vrot.lane.b32.xlu0 %v1607, 24
      %v1696 = vpop.permute.xlu0 %1695
      %1697 = vrot.lane.b32.xlu0 %v1608, 24
      %v1698 = vpop.permute.xlu0 %1697
      %1699 = vrot.lane.b32.xlu0 %v1609, 24
      %v1700 = vpop.permute.xlu0 %1699
      %1701 = vrot.lane.b32.xlu0 %v1610, 24
      %v1702 = vpop.permute.xlu0 %1701
      %1703 = vrot.lane.b32.xlu0 %v1611, 24
      %v1704 = vpop.permute.xlu0 %1703
      %1705 = vrot.lane.b32.xlu0 %v1612, 24
      %v1706 = vpop.permute.xlu0 %1705
      %1707 = vrot.lane.b32.xlu0 %v1613, 24
      %v1708 = vpop.permute.xlu0 %1707
      %1709 = vrot.lane.b32.xlu0 %v1614, 24
      %v1710 = vpop.permute.xlu0 %1709
      %vm1743 = vcmask 224448
      %1744 = vst.msk [vmem:[#allocation3] sm:$0xf] %vm1743, %v1648
      %1745 = vst.msk [vmem:[#allocation3 + $0x4] sm:$0xf] %vm1743, %v1650
      %1746 = vst.msk [vmem:[#allocation3 + $0x8] sm:$0xf] %vm1743, %v1652
      %1747 = vst.msk [vmem:[#allocation3 + $0xc] sm:$0xf] %vm1743, %v1654
      %1748 = vst.msk [vmem:[#allocation3 + $0x10] sm:$0xf] %vm1743, %v1656
      %1749 = vst.msk [vmem:[#allocation3 + $0x14] sm:$0xf] %vm1743, %v1658
      %1750 = vst.msk [vmem:[#allocation3 + $0x18] sm:$0xf] %vm1743, %v1660
      %1751 = vst.msk [vmem:[#allocation3 + $0x1c] sm:$0xf] %vm1743, %v1662
      %1752 = vst.msk [vmem:[#allocation3 + $0x20] sm:$0xf] %vm1743, %v1664
      %1753 = vst.msk [vmem:[#allocation3 + $0x24] sm:$0xf] %vm1743, %v1666
      %1754 = vst.msk [vmem:[#allocation3 + $0x28] sm:$0xf] %vm1743, %v1668
      %1755 = vst.msk [vmem:[#allocation3 + $0x2c] sm:$0xf] %vm1743, %v1670
      %1756 = vst.msk [vmem:[#allocation3 + $0x30] sm:$0xf] %vm1743, %v1672
      %1757 = vst.msk [vmem:[#allocation3 + $0x34] sm:$0xf] %vm1743, %v1674
      %1758 = vst.msk [vmem:[#allocation3 + $0x38] sm:$0xf] %vm1743, %v1676
      %1759 = vst.msk [vmem:[#allocation3 + $0x3c] sm:$0xf] %vm1743, %v1678
      %1760 = vst.msk [vmem:[#allocation3 + $0x40] sm:$0xf] %vm1743, %v1680
      %1761 = vst.msk [vmem:[#allocation3 + $0x44] sm:$0xf] %vm1743, %v1682
      %1762 = vst.msk [vmem:[#allocation3 + $0x48] sm:$0xf] %vm1743, %v1684
      %1763 = vst.msk [vmem:[#allocation3 + $0x4c] sm:$0xf] %vm1743, %v1686
      %1764 = vst.msk [vmem:[#allocation3 + $0x50] sm:$0xf] %vm1743, %v1688
      %1765 = vst.msk [vmem:[#allocation3 + $0x54] sm:$0xf] %vm1743, %v1690
      %1766 = vst.msk [vmem:[#allocation3 + $0x58] sm:$0xf] %vm1743, %v1692
      %1767 = vst.msk [vmem:[#allocation3 + $0x5c] sm:$0xf] %vm1743, %v1694
      %1768 = vst.msk [vmem:[#allocation3 + $0x60] sm:$0xf] %vm1743, %v1696
      %1769 = vst.msk [vmem:[#allocation3 + $0x64] sm:$0xf] %vm1743, %v1698
      %1770 = vst.msk [vmem:[#allocation3 + $0x68] sm:$0xf] %vm1743, %v1700
      %1771 = vst.msk [vmem:[#allocation3 + $0x6c] sm:$0xf] %vm1743, %v1702
      %1772 = vst.msk [vmem:[#allocation3 + $0x70] sm:$0xf] %vm1743, %v1704
      %1773 = vst.msk [vmem:[#allocation3 + $0x74] sm:$0xf] %vm1743, %v1706
      %1774 = vst.msk [vmem:[#allocation3 + $0x78] sm:$0xf] %vm1743, %v1708
      %1775 = vst.msk [vmem:[#allocation3 + $0x7c] sm:$0xf] %vm1743, %v1710
      %v1776 = vld [vmem:[%s1550 + $0x1] sm:$0xff]
      %v1777 = vld [vmem:[%s1550 + $0x9] sm:$0xff]
      %v1778 = vld [vmem:[%s1550 + $0x19] sm:$0xff]
      %v1779 = vld [vmem:[%s1550 + $0x21] sm:$0xff]
      %v1780 = vld [vmem:[%s1550 + $0x31] sm:$0xff]
      %v1781 = vld [vmem:[%s1550 + $0x39] sm:$0xff]
      %v1782 = vld [vmem:[%s1550 + $0x49] sm:$0xff]
      %v1783 = vld [vmem:[%s1550 + $0x51] sm:$0xff]
      %v1784 = vld [vmem:[%s1550 + $0x61] sm:$0xff]
      %v1785 = vld [vmem:[%s1550 + $0x69] sm:$0xff]
      %v1786 = vld [vmem:[%s1550 + $0x79] sm:$0xff]
      %v1787 = vld [vmem:[%s1550 + $0x81] sm:$0xff]
      %v1788 = vld [vmem:[%s1550 + $0x91] sm:$0xff]
      %v1789 = vld [vmem:[%s1550 + $0x99] sm:$0xff]
      %v1790 = vld [vmem:[%s1550 + $0xa9] sm:$0xff]
      %v1791 = vld [vmem:[%s1550 + $0xb1] sm:$0xff]
      %v1792 = vld [vmem:[%s1550 + $0xc1] sm:$0xff]
      %v1793 = vld [vmem:[%s1550 + $0xc9] sm:$0xff]
      %v1794 = vld [vmem:[%s1550 + $0xd9] sm:$0xff]
      %v1795 = vld [vmem:[%s1550 + $0xe1] sm:$0xff]
      %v1796 = vld [vmem:[%s1550 + $0xf1] sm:$0xff]
      %v1797 = vld [vmem:[%s1550 + $0xf9] sm:$0xff]
      %v1798 = vld [vmem:[%s1550 + $0x109] sm:$0xff]
      %v1799 = vld [vmem:[%s1550 + $0x111] sm:$0xff]
      %v1800 = vld [vmem:[%s1550 + $0x121] sm:$0xff]
      %v1801 = vld [vmem:[%s1550 + $0x129] sm:$0xff]
      %v1802 = vld [vmem:[%s1550 + $0x139] sm:$0xff]
      %v1803 = vld [vmem:[%s1550 + $0x141] sm:$0xff]
      %v1804 = vld [vmem:[%s1550 + $0x151] sm:$0xff]
      %v1805 = vld [vmem:[%s1550 + $0x159] sm:$0xff]
      %v1806 = vld [vmem:[%s1550 + $0x169] sm:$0xff]
      %v1807 = vld [vmem:[%s1550 + $0x171] sm:$0xff]
      %v1808 = vpack.c.bf16 %v1776, %v1776
      %v1809 = vpack.c.bf16 %v1777, %v1777
      %v1810 = vpack.c.bf16 %v1778, %v1778
      %v1811 = vpack.c.bf16 %v1779, %v1779
      %v1812 = vpack.c.bf16 %v1780, %v1780
      %v1813 = vpack.c.bf16 %v1781, %v1781
      %v1814 = vpack.c.bf16 %v1782, %v1782
      %v1815 = vpack.c.bf16 %v1783, %v1783
      %v1816 = vpack.c.bf16 %v1784, %v1784
      %v1817 = vpack.c.bf16 %v1785, %v1785
      %v1818 = vpack.c.bf16 %v1786, %v1786
      %v1819 = vpack.c.bf16 %v1787, %v1787
      %v1820 = vpack.c.bf16 %v1788, %v1788
      %v1821 = vpack.c.bf16 %v1789, %v1789
      %v1822 = vpack.c.bf16 %v1790, %v1790
      %v1823 = vpack.c.bf16 %v1791, %v1791
      %v1824 = vpack.c.bf16 %v1792, %v1792
      %v1825 = vpack.c.bf16 %v1793, %v1793
      %v1826 = vpack.c.bf16 %v1794, %v1794
      %v1827 = vpack.c.bf16 %v1795, %v1795
      %v1828 = vpack.c.bf16 %v1796, %v1796
      %v1829 = vpack.c.bf16 %v1797, %v1797
      %v1830 = vpack.c.bf16 %v1798, %v1798
      %v1831 = vpack.c.bf16 %v1799, %v1799
      %v1832 = vpack.c.bf16 %v1800, %v1800
      %v1833 = vpack.c.bf16 %v1801, %v1801
      %v1834 = vpack.c.bf16 %v1802, %v1802
      %v1835 = vpack.c.bf16 %v1803, %v1803
      %v1836 = vpack.c.bf16 %v1804, %v1804
      %v1837 = vpack.c.bf16 %v1805, %v1805
      %v1838 = vpack.c.bf16 %v1806, %v1806
      %v1839 = vpack.c.bf16 %v1807, %v1807
      %1872 = vrot.lane.b32.xlu0 %v1808, 28
      %v1873 = vpop.permute.xlu0 %1872
      %1874 = vrot.lane.b32.xlu0 %v1809, 28
      %v1875 = vpop.permute.xlu0 %1874
      %1876 = vrot.lane.b32.xlu0 %v1810, 28
      %v1877 = vpop.permute.xlu0 %1876
      %1878 = vrot.lane.b32.xlu0 %v1811, 28
      %v1879 = vpop.permute.xlu0 %1878
      %1880 = vrot.lane.b32.xlu0 %v1812, 28
      %v1881 = vpop.permute.xlu0 %1880
      %1882 = vrot.lane.b32.xlu0 %v1813, 28
      %v1883 = vpop.permute.xlu0 %1882
      %1884 = vrot.lane.b32.xlu0 %v1814, 28
      %v1885 = vpop.permute.xlu0 %1884
      %1886 = vrot.lane.b32.xlu0 %v1815, 28
      %v1887 = vpop.permute.xlu0 %1886
      %1888 = vrot.lane.b32.xlu0 %v1816, 28
      %v1889 = vpop.permute.xlu0 %1888
      %1890 = vrot.lane.b32.xlu0 %v1817, 28
      %v1891 = vpop.permute.xlu0 %1890
      %1892 = vrot.lane.b32.xlu0 %v1818, 28
      %v1893 = vpop.permute.xlu0 %1892
      %1894 = vrot.lane.b32.xlu0 %v1819, 28
      %v1895 = vpop.permute.xlu0 %1894
      %1896 = vrot.lane.b32.xlu0 %v1820, 28
      %v1897 = vpop.permute.xlu0 %1896
      %1898 = vrot.lane.b32.xlu0 %v1821, 28
      %v1899 = vpop.permute.xlu0 %1898
      %1900 = vrot.lane.b32.xlu0 %v1822, 28
      %v1901 = vpop.permute.xlu0 %1900
      %1902 = vrot.lane.b32.xlu0 %v1823, 28
      %v1903 = vpop.permute.xlu0 %1902
      %1904 = vrot.lane.b32.xlu0 %v1824, 28
      %v1905 = vpop.permute.xlu0 %1904
      %1906 = vrot.lane.b32.xlu0 %v1825, 28
      %v1907 = vpop.permute.xlu0 %1906
      %1908 = vrot.lane.b32.xlu0 %v1826, 28
      %v1909 = vpop.permute.xlu0 %1908
      %1910 = vrot.lane.b32.xlu0 %v1827, 28
      %v1911 = vpop.permute.xlu0 %1910
      %1912 = vrot.lane.b32.xlu0 %v1828, 28
      %v1913 = vpop.permute.xlu0 %1912
      %1914 = vrot.lane.b32.xlu0 %v1829, 28
      %v1915 = vpop.permute.xlu0 %1914
      %1916 = vrot.lane.b32.xlu0 %v1830, 28
      %v1917 = vpop.permute.xlu0 %1916
      %1918 = vrot.lane.b32.xlu0 %v1831, 28
      %v1919 = vpop.permute.xlu0 %1918
      %1920 = vrot.lane.b32.xlu0 %v1832, 28
      %v1921 = vpop.permute.xlu0 %1920
      %1922 = vrot.lane.b32.xlu0 %v1833, 28
      %v1923 = vpop.permute.xlu0 %1922
      %1924 = vrot.lane.b32.xlu0 %v1834, 28
      %v1925 = vpop.permute.xlu0 %1924
      %1926 = vrot.lane.b32.xlu0 %v1835, 28
      %v1927 = vpop.permute.xlu0 %1926
      %1928 = vrot.lane.b32.xlu0 %v1836, 28
      %v1929 = vpop.permute.xlu0 %1928
      %1930 = vrot.lane.b32.xlu0 %v1837, 28
      %v1931 = vpop.permute.xlu0 %1930
      %1932 = vrot.lane.b32.xlu0 %v1838, 28
      %v1933 = vpop.permute.xlu0 %1932
      %1934 = vrot.lane.b32.xlu0 %v1839, 28
      %v1935 = vpop.permute.xlu0 %1934
      %vm1968 = vcmask 257248
      %1969 = vst.msk [vmem:[#allocation3] sm:$0xf] %vm1968, %v1873
      %1970 = vst.msk [vmem:[#allocation3 + $0x4] sm:$0xf] %vm1968, %v1875
      %1971 = vst.msk [vmem:[#allocation3 + $0x8] sm:$0xf] %vm1968, %v1877
      %1972 = vst.msk [vmem:[#allocation3 + $0xc] sm:$0xf] %vm1968, %v1879
      %1973 = vst.msk [vmem:[#allocation3 + $0x10] sm:$0xf] %vm1968, %v1881
      %1974 = vst.msk [vmem:[#allocation3 + $0x14] sm:$0xf] %vm1968, %v1883
      %1975 = vst.msk [vmem:[#allocation3 + $0x18] sm:$0xf] %vm1968, %v1885
      %1976 = vst.msk [vmem:[#allocation3 + $0x1c] sm:$0xf] %vm1968, %v1887
      %1977 = vst.msk [vmem:[#allocation3 + $0x20] sm:$0xf] %vm1968, %v1889
      %1978 = vst.msk [vmem:[#allocation3 + $0x24] sm:$0xf] %vm1968, %v1891
      %1979 = vst.msk [vmem:[#allocation3 + $0x28] sm:$0xf] %vm1968, %v1893
      %1980 = vst.msk [vmem:[#allocation3 + $0x2c] sm:$0xf] %vm1968, %v1895
      %1981 = vst.msk [vmem:[#allocation3 + $0x30] sm:$0xf] %vm1968, %v1897
      %1982 = vst.msk [vmem:[#allocation3 + $0x34] sm:$0xf] %vm1968, %v1899
      %1983 = vst.msk [vmem:[#allocation3 + $0x38] sm:$0xf] %vm1968, %v1901
      %1984 = vst.msk [vmem:[#allocation3 + $0x3c] sm:$0xf] %vm1968, %v1903
      %1985 = vst.msk [vmem:[#allocation3 + $0x40] sm:$0xf] %vm1968, %v1905
      %1986 = vst.msk [vmem:[#allocation3 + $0x44] sm:$0xf] %vm1968, %v1907
      %1987 = vst.msk [vmem:[#allocation3 + $0x48] sm:$0xf] %vm1968, %v1909
      %1988 = vst.msk [vmem:[#allocation3 + $0x4c] sm:$0xf] %vm1968, %v1911
      %1989 = vst.msk [vmem:[#allocation3 + $0x50] sm:$0xf] %vm1968, %v1913
      %1990 = vst.msk [vmem:[#allocation3 + $0x54] sm:$0xf] %vm1968, %v1915
      %1991 = vst.msk [vmem:[#allocation3 + $0x58] sm:$0xf] %vm1968, %v1917
      %1992 = vst.msk [vmem:[#allocation3 + $0x5c] sm:$0xf] %vm1968, %v1919
      %1993 = vst.msk [vmem:[#allocation3 + $0x60] sm:$0xf] %vm1968, %v1921
      %1994 = vst.msk [vmem:[#allocation3 + $0x64] sm:$0xf] %vm1968, %v1923
      %1995 = vst.msk [vmem:[#allocation3 + $0x68] sm:$0xf] %vm1968, %v1925
      %1996 = vst.msk [vmem:[#allocation3 + $0x6c] sm:$0xf] %vm1968, %v1927
      %1997 = vst.msk [vmem:[#allocation3 + $0x70] sm:$0xf] %vm1968, %v1929
      %1998 = vst.msk [vmem:[#allocation3 + $0x74] sm:$0xf] %vm1968, %v1931
      %1999 = vst.msk [vmem:[#allocation3 + $0x78] sm:$0xf] %vm1968, %v1933
      %2000 = vst.msk [vmem:[#allocation3 + $0x7c] sm:$0xf] %vm1968, %v1935
      %v2001 = vld [vmem:[%s1550 + $0x2] sm:$0xff]
      %v2002 = vld [vmem:[%s1550 + $0xa] sm:$0xff]
      %v2003 = vld [vmem:[%s1550 + $0x1a] sm:$0xff]
      %v2004 = vld [vmem:[%s1550 + $0x22] sm:$0xff]
      %v2005 = vld [vmem:[%s1550 + $0x32] sm:$0xff]
      %v2006 = vld [vmem:[%s1550 + $0x3a] sm:$0xff]
      %v2007 = vld [vmem:[%s1550 + $0x4a] sm:$0xff]
      %v2008 = vld [vmem:[%s1550 + $0x52] sm:$0xff]
      %v2009 = vld [vmem:[%s1550 + $0x62] sm:$0xff]
      %v2010 = vld [vmem:[%s1550 + $0x6a] sm:$0xff]
      %v2011 = vld [vmem:[%s1550 + $0x7a] sm:$0xff]
      %v2012 = vld [vmem:[%s1550 + $0x82] sm:$0xff]
      %v2013 = vld [vmem:[%s1550 + $0x92] sm:$0xff]
      %v2014 = vld [vmem:[%s1550 + $0x9a] sm:$0xff]
      %v2015 = vld [vmem:[%s1550 + $0xaa] sm:$0xff]
      %v2016 = vld [vmem:[%s1550 + $0xb2] sm:$0xff]
      %v2017 = vld [vmem:[%s1550 + $0xc2] sm:$0xff]
      %v2018 = vld [vmem:[%s1550 + $0xca] sm:$0xff]
      %v2019 = vld [vmem:[%s1550 + $0xda] sm:$0xff]
      %v2020 = vld [vmem:[%s1550 + $0xe2] sm:$0xff]
      %v2021 = vld [vmem:[%s1550 + $0xf2] sm:$0xff]
      %v2022 = vld [vmem:[%s1550 + $0xfa] sm:$0xff]
      %v2023 = vld [vmem:[%s1550 + $0x10a] sm:$0xff]
      %v2024 = vld [vmem:[%s1550 + $0x112] sm:$0xff]
      %v2025 = vld [vmem:[%s1550 + $0x122] sm:$0xff]
      %v2026 = vld [vmem:[%s1550 + $0x12a] sm:$0xff]
      %v2027 = vld [vmem:[%s1550 + $0x13a] sm:$0xff]
      %v2028 = vld [vmem:[%s1550 + $0x142] sm:$0xff]
      %v2029 = vld [vmem:[%s1550 + $0x152] sm:$0xff]
      %v2030 = vld [vmem:[%s1550 + $0x15a] sm:$0xff]
      %v2031 = vld [vmem:[%s1550 + $0x16a] sm:$0xff]
      %v2032 = vld [vmem:[%s1550 + $0x172] sm:$0xff]
      %v2033 = vpack.c.bf16 %v2001, %v2001
      %v2034 = vpack.c.bf16 %v2002, %v2002
      %v2035 = vpack.c.bf16 %v2003, %v2003
      %v2036 = vpack.c.bf16 %v2004, %v2004
      %v2037 = vpack.c.bf16 %v2005, %v2005
      %v2038 = vpack.c.bf16 %v2006, %v2006
      %v2039 = vpack.c.bf16 %v2007, %v2007
      %v2040 = vpack.c.bf16 %v2008, %v2008
      %v2041 = vpack.c.bf16 %v2009, %v2009
      %v2042 = vpack.c.bf16 %v2010, %v2010
      %v2043 = vpack.c.bf16 %v2011, %v2011
      %v2044 = vpack.c.bf16 %v2012, %v2012
      %v2045 = vpack.c.bf16 %v2013, %v2013
      %v2046 = vpack.c.bf16 %v2014, %v2014
      %v2047 = vpack.c.bf16 %v2015, %v2015
      %v2048 = vpack.c.bf16 %v2016, %v2016
      %v2049 = vpack.c.bf16 %v2017, %v2017
      %v2050 = vpack.c.bf16 %v2018, %v2018
      %v2051 = vpack.c.bf16 %v2019, %v2019
      %v2052 = vpack.c.bf16 %v2020, %v2020
      %v2053 = vpack.c.bf16 %v2021, %v2021
      %v2054 = vpack.c.bf16 %v2022, %v2022
      %v2055 = vpack.c.bf16 %v2023, %v2023
      %v2056 = vpack.c.bf16 %v2024, %v2024
      %v2057 = vpack.c.bf16 %v2025, %v2025
      %v2058 = vpack.c.bf16 %v2026, %v2026
      %v2059 = vpack.c.bf16 %v2027, %v2027
      %v2060 = vpack.c.bf16 %v2028, %v2028
      %v2061 = vpack.c.bf16 %v2029, %v2029
      %v2062 = vpack.c.bf16 %v2030, %v2030
      %v2063 = vpack.c.bf16 %v2031, %v2031
      %v2064 = vpack.c.bf16 %v2032, %v2032
      %2097 = vrot.lane.b32.xlu0 %v2033, 32
      %v2098 = vpop.permute.xlu0 %2097
      %2099 = vrot.lane.b32.xlu0 %v2034, 32
      %v2100 = vpop.permute.xlu0 %2099
      %2101 = vrot.lane.b32.xlu0 %v2035, 32
      %v2102 = vpop.permute.xlu0 %2101
      %2103 = vrot.lane.b32.xlu0 %v2036, 32
      %v2104 = vpop.permute.xlu0 %2103
      %2105 = vrot.lane.b32.xlu0 %v2037, 32
      %v2106 = vpop.permute.xlu0 %2105
      %2107 = vrot.lane.b32.xlu0 %v2038, 32
      %v2108 = vpop.permute.xlu0 %2107
      %2109 = vrot.lane.b32.xlu0 %v2039, 32
      %v2110 = vpop.permute.xlu0 %2109
      %2111 = vrot.lane.b32.xlu0 %v2040, 32
      %v2112 = vpop.permute.xlu0 %2111
      %2113 = vrot.lane.b32.xlu0 %v2041, 32
      %v2114 = vpop.permute.xlu0 %2113
      %2115 = vrot.lane.b32.xlu0 %v2042, 32
      %v2116 = vpop.permute.xlu0 %2115
      %2117 = vrot.lane.b32.xlu0 %v2043, 32
      %v2118 = vpop.permute.xlu0 %2117
      %2119 = vrot.lane.b32.xlu0 %v2044, 32
      %v2120 = vpop.permute.xlu0 %2119
      %2121 = vrot.lane.b32.xlu0 %v2045, 32
      %v2122 = vpop.permute.xlu0 %2121
      %2123 = vrot.lane.b32.xlu0 %v2046, 32
      %v2124 = vpop.permute.xlu0 %2123
      %2125 = vrot.lane.b32.xlu0 %v2047, 32
      %v2126 = vpop.permute.xlu0 %2125
      %2127 = vrot.lane.b32.xlu0 %v2048, 32
      %v2128 = vpop.permute.xlu0 %2127
      %2129 = vrot.lane.b32.xlu0 %v2049, 32
      %v2130 = vpop.permute.xlu0 %2129
      %2131 = vrot.lane.b32.xlu0 %v2050, 32
      %v2132 = vpop.permute.xlu0 %2131
      %2133 = vrot.lane.b32.xlu0 %v2051, 32
      %v2134 = vpop.permute.xlu0 %2133
      %2135 = vrot.lane.b32.xlu0 %v2052, 32
      %v2136 = vpop.permute.xlu0 %2135
      %2137 = vrot.lane.b32.xlu0 %v2053, 32
      %v2138 = vpop.permute.xlu0 %2137
      %2139 = vrot.lane.b32.xlu0 %v2054, 32
      %v2140 = vpop.permute.xlu0 %2139
      %2141 = vrot.lane.b32.xlu0 %v2055, 32
      %v2142 = vpop.permute.xlu0 %2141
      %2143 = vrot.lane.b32.xlu0 %v2056, 32
      %v2144 = vpop.permute.xlu0 %2143
      %2145 = vrot.lane.b32.xlu0 %v2057, 32
      %v2146 = vpop.permute.xlu0 %2145
      %2147 = vrot.lane.b32.xlu0 %v2058, 32
      %v2148 = vpop.permute.xlu0 %2147
      %2149 = vrot.lane.b32.xlu0 %v2059, 32
      %v2150 = vpop.permute.xlu0 %2149
      %2151 = vrot.lane.b32.xlu0 %v2060, 32
      %v2152 = vpop.permute.xlu0 %2151
      %2153 = vrot.lane.b32.xlu0 %v2061, 32
      %v2154 = vpop.permute.xlu0 %2153
      %2155 = vrot.lane.b32.xlu0 %v2062, 32
      %v2156 = vpop.permute.xlu0 %2155
      %2157 = vrot.lane.b32.xlu0 %v2063, 32
      %v2158 = vpop.permute.xlu0 %2157
      %2159 = vrot.lane.b32.xlu0 %v2064, 32
      %v2160 = vpop.permute.xlu0 %2159
      %vm2193 = vcmask 290048
      %2194 = vst.msk [vmem:[#allocation3] sm:$0xf] %vm2193, %v2098
      %2195 = vst.msk [vmem:[#allocation3 + $0x4] sm:$0xf] %vm2193, %v2100
      %2196 = vst.msk [vmem:[#allocation3 + $0x8] sm:$0xf] %vm2193, %v2102
      %2197 = vst.msk [vmem:[#allocation3 + $0xc] sm:$0xf] %vm2193, %v2104
      %2198 = vst.msk [vmem:[#allocation3 + $0x10] sm:$0xf] %vm2193, %v2106
      %2199 = vst.msk [vmem:[#allocation3 + $0x14] sm:$0xf] %vm2193, %v2108
      %2200 = vst.msk [vmem:[#allocation3 + $0x18] sm:$0xf] %vm2193, %v2110
      %2201 = vst.msk [vmem:[#allocation3 + $0x1c] sm:$0xf] %vm2193, %v2112
      %2202 = vst.msk [vmem:[#allocation3 + $0x20] sm:$0xf] %vm2193, %v2114
      %2203 = vst.msk [vmem:[#allocation3 + $0x24] sm:$0xf] %vm2193, %v2116
      %2204 = vst.msk [vmem:[#allocation3 + $0x28] sm:$0xf] %vm2193, %v2118
      %2205 = vst.msk [vmem:[#allocation3 + $0x2c] sm:$0xf] %vm2193, %v2120
      %2206 = vst.msk [vmem:[#allocation3 + $0x30] sm:$0xf] %vm2193, %v2122
      %2207 = vst.msk [vmem:[#allocation3 + $0x34] sm:$0xf] %vm2193, %v2124
      %2208 = vst.msk [vmem:[#allocation3 + $0x38] sm:$0xf] %vm2193, %v2126
      %2209 = vst.msk [vmem:[#allocation3 + $0x3c] sm:$0xf] %vm2193, %v2128
      %2210 = vst.msk [vmem:[#allocation3 + $0x40] sm:$0xf] %vm2193, %v2130
      %2211 = vst.msk [vmem:[#allocation3 + $0x44] sm:$0xf] %vm2193, %v2132
      %2212 = vst.msk [vmem:[#allocation3 + $0x48] sm:$0xf] %vm2193, %v2134
      %2213 = vst.msk [vmem:[#allocation3 + $0x4c] sm:$0xf] %vm2193, %v2136
      %2214 = vst.msk [vmem:[#allocation3 + $0x50] sm:$0xf] %vm2193, %v2138
      %2215 = vst.msk [vmem:[#allocation3 + $0x54] sm:$0xf] %vm2193, %v2140
      %2216 = vst.msk [vmem:[#allocation3 + $0x58] sm:$0xf] %vm2193, %v2142
      %2217 = vst.msk [vmem:[#allocation3 + $0x5c] sm:$0xf] %vm2193, %v2144
      %2218 = vst.msk [vmem:[#allocation3 + $0x60] sm:$0xf] %vm2193, %v2146
      %2219 = vst.msk [vmem:[#allocation3 + $0x64] sm:$0xf] %vm2193, %v2148
      %2220 = vst.msk [vmem:[#allocation3 + $0x68] sm:$0xf] %vm2193, %v2150
      %2221 = vst.msk [vmem:[#allocation3 + $0x6c] sm:$0xf] %vm2193, %v2152
      %2222 = vst.msk [vmem:[#allocation3 + $0x70] sm:$0xf] %vm2193, %v2154
      %2223 = vst.msk [vmem:[#allocation3 + $0x74] sm:$0xf] %vm2193, %v2156
      %2224 = vst.msk [vmem:[#allocation3 + $0x78] sm:$0xf] %vm2193, %v2158
      %2225 = vst.msk [vmem:[#allocation3 + $0x7c] sm:$0xf] %vm2193, %v2160
      %v2226 = vld [vmem:[#allocation3] sm:$0xf]
      %v2227 = vld [vmem:[#allocation3 + $0x4] sm:$0xf]
      %v2228 = vld [vmem:[#allocation3 + $0x8] sm:$0xf]
      %v2229 = vld [vmem:[#allocation3 + $0xc] sm:$0xf]
      %v2230 = vld [vmem:[#allocation3 + $0x10] sm:$0xf]
      %v2231 = vld [vmem:[#allocation3 + $0x14] sm:$0xf]
      %v2232 = vld [vmem:[#allocation3 + $0x18] sm:$0xf]
      %v2233 = vld [vmem:[#allocation3 + $0x1c] sm:$0xf]
      %v2234 = vld [vmem:[#allocation3 + $0x20] sm:$0xf]
      %v2235 = vld [vmem:[#allocation3 + $0x24] sm:$0xf]
      %v2236 = vld [vmem:[#allocation3 + $0x28] sm:$0xf]
      %v2237 = vld [vmem:[#allocation3 + $0x2c] sm:$0xf]
      %v2238 = vld [vmem:[#allocation3 + $0x30] sm:$0xf]
      %v2239 = vld [vmem:[#allocation3 + $0x34] sm:$0xf]
      %v2240 = vld [vmem:[#allocation3 + $0x38] sm:$0xf]
      %v2241 = vld [vmem:[#allocation3 + $0x3c] sm:$0xf]
      %v2242 = vld [vmem:[#allocation3 + $0x40] sm:$0xf]
      %v2243 = vld [vmem:[#allocation3 + $0x44] sm:$0xf]
      %v2244 = vld [vmem:[#allocation3 + $0x48] sm:$0xf]
      %v2245 = vld [vmem:[#allocation3 + $0x4c] sm:$0xf]
      %v2246 = vld [vmem:[#allocation3 + $0x50] sm:$0xf]
      %v2247 = vld [vmem:[#allocation3 + $0x54] sm:$0xf]
      %v2248 = vld [vmem:[#allocation3 + $0x58] sm:$0xf]
      %v2249 = vld [vmem:[#allocation3 + $0x5c] sm:$0xf]
      %v2250 = vld [vmem:[#allocation3 + $0x60] sm:$0xf]
      %v2251 = vld [vmem:[#allocation3 + $0x64] sm:$0xf]
      %v2252 = vld [vmem:[#allocation3 + $0x68] sm:$0xf]
      %v2253 = vld [vmem:[#allocation3 + $0x6c] sm:$0xf]
      %v2254 = vld [vmem:[#allocation3 + $0x70] sm:$0xf]
      %v2255 = vld [vmem:[#allocation3 + $0x74] sm:$0xf]
      %v2256 = vld [vmem:[#allocation3 + $0x78] sm:$0xf]
      %v2257 = vld [vmem:[#allocation3 + $0x7c] sm:$0xf]
      %v2258 = vld [vmem:[%s1] sm:$0xf]
      %v2259 = vld [vmem:[%s1 + $0x4] sm:$0xf]
      %v2260 = vld [vmem:[%s1 + $0x8] sm:$0xf]
      %v2261 = vld [vmem:[%s1 + $0xc] sm:$0xf]
      %v2262 = vld [vmem:[%s1 + $0x10] sm:$0xf]
      %v2263 = vld [vmem:[%s1 + $0x14] sm:$0xf]
      %v2264 = vld [vmem:[%s1 + $0x18] sm:$0xf]
      %v2265 = vld [vmem:[%s1 + $0x1c] sm:$0xf]
      %v2266 = vld [vmem:[%s1 + $0x20] sm:$0xf]
      %v2267 = vld [vmem:[%s1 + $0x24] sm:$0xf]
      %v2268 = vld [vmem:[%s1 + $0x28] sm:$0xf]
      %v2269 = vld [vmem:[%s1 + $0x2c] sm:$0xf]
      %v2270 = vld [vmem:[%s1 + $0x30] sm:$0xf]
      %v2271 = vld [vmem:[%s1 + $0x34] sm:$0xf]
      %v2272 = vld [vmem:[%s1 + $0x38] sm:$0xf]
      %v2273 = vld [vmem:[%s1 + $0x3c] sm:$0xf]
      %v2306 = vunpack.c.l.b16 %v2226
      %v2307 = vunpack.c.l.b16 %v2227
      %v2308 = vunpack.c.l.b16 %v2228
      %v2309 = vunpack.c.l.b16 %v2229
      %v2310 = vunpack.c.l.b16 %v2230
      %v2311 = vunpack.c.l.b16 %v2231
      %v2312 = vunpack.c.l.b16 %v2232
      %v2313 = vunpack.c.l.b16 %v2233
      %v2314 = vunpack.c.l.b16 %v2234
      %v2315 = vunpack.c.l.b16 %v2235
      %v2316 = vunpack.c.l.b16 %v2236
      %v2317 = vunpack.c.l.b16 %v2237
      %v2318 = vunpack.c.l.b16 %v2238
      %v2319 = vunpack.c.l.b16 %v2239
      %v2320 = vunpack.c.l.b16 %v2240
      %v2321 = vunpack.c.l.b16 %v2241
      %v2322 = vunpack.c.l.b16 %v2242
      %v2323 = vunpack.c.l.b16 %v2243
      %v2324 = vunpack.c.l.b16 %v2244
      %v2325 = vunpack.c.l.b16 %v2245
      %v2326 = vunpack.c.l.b16 %v2246
      %v2327 = vunpack.c.l.b16 %v2247
      %v2328 = vunpack.c.l.b16 %v2248
      %v2329 = vunpack.c.l.b16 %v2249
      %v2330 = vunpack.c.l.b16 %v2250
      %v2331 = vunpack.c.l.b16 %v2251
      %v2332 = vunpack.c.l.b16 %v2252
      %v2333 = vunpack.c.l.b16 %v2253
      %v2334 = vunpack.c.l.b16 %v2254
      %v2335 = vunpack.c.l.b16 %v2255
      %v2336 = vunpack.c.l.b16 %v2256
      %v2337 = vunpack.c.l.b16 %v2257
      %v2338 = vpack.c.b16 %v2307, %v2306
      %v2339 = vpack.c.b16 %v2309, %v2308
      %v2340 = vpack.c.b16 %v2311, %v2310
      %v2341 = vpack.c.b16 %v2313, %v2312
      %v2342 = vpack.c.b16 %v2315, %v2314
      %v2343 = vpack.c.b16 %v2317, %v2316
      %v2344 = vpack.c.b16 %v2319, %v2318
      %v2345 = vpack.c.b16 %v2321, %v2320
      %v2346 = vpack.c.b16 %v2323, %v2322
      %v2347 = vpack.c.b16 %v2325, %v2324
      %v2348 = vpack.c.b16 %v2327, %v2326
      %v2349 = vpack.c.b16 %v2329, %v2328
      %v2350 = vpack.c.b16 %v2331, %v2330
      %v2351 = vpack.c.b16 %v2333, %v2332
      %v2352 = vpack.c.b16 %v2335, %v2334
      %v2353 = vpack.c.b16 %v2337, %v2336
      %v2386 = vunpack.c.l.b16 %v2258
      %v2387 = vunpack.c.l.b16 %v2259
      %v2388 = vunpack.c.l.b16 %v2260
      %v2389 = vunpack.c.l.b16 %v2261
      %v2390 = vunpack.c.l.b16 %v2262
      %v2391 = vunpack.c.l.b16 %v2263
      %v2392 = vunpack.c.l.b16 %v2264
      %v2393 = vunpack.c.l.b16 %v2265
      %v2394 = vunpack.c.l.b16 %v2266
      %v2395 = vunpack.c.l.b16 %v2267
      %v2396 = vunpack.c.l.b16 %v2268
      %v2397 = vunpack.c.l.b16 %v2269
      %v2398 = vunpack.c.l.b16 %v2270
      %v2399 = vunpack.c.l.b16 %v2271
      %v2400 = vunpack.c.l.b16 %v2272
      %v2401 = vunpack.c.l.b16 %v2273
      %v2402 = vpack.c.b16 %v2387, %v2386
      %v2403 = vpack.c.b16 %v2389, %v2388
      %v2404 = vpack.c.b16 %v2391, %v2390
      %v2405 = vpack.c.b16 %v2393, %v2392
      %v2406 = vpack.c.b16 %v2395, %v2394
      %v2407 = vpack.c.b16 %v2397, %v2396
      %v2408 = vpack.c.b16 %v2399, %v2398
      %v2409 = vpack.c.b16 %v2401, %v2400
      %2418 = vmatpush.bf16.msra.mxu0 %v2409
      %2419 = vmatpush.bf16.msra.mxu0 %v2408
      %2420 = vmatpush.bf16.msra.mxu0 %v2407
      %2421 = vmatpush.bf16.msra.mxu0 %v2406
      %2422 = vmatpush.bf16.msra.mxu0 %v2405
      %2423 = vmatpush.bf16.msra.mxu0 %v2404
      %2424 = vmatpush.bf16.msra.mxu0 %v2403
      %2425 = vmatpush.bf16.msra.mxu0 %v2402
      %2426 = vmatmul.bf16.gmra.mxu0 %v2338
      %v2427 = vpop.f32.mrf.mxu0
      %v2428 = vadd.f32 0.0, %v2427
      %v2429 = vpop.f32.mrf.mxu0
      %v2430 = vadd.f32 0.0, %v2429
      %2431 = vmatmul.bf16.gmra.mxu0 %v2339
      %v2432 = vpop.f32.mrf.mxu0
      %v2433 = vadd.f32 0.0, %v2432
      %v2434 = vpop.f32.mrf.mxu0
      %v2435 = vadd.f32 0.0, %v2434
      %2436 = vmatmul.bf16.gmra.mxu0 %v2340
      %v2437 = vpop.f32.mrf.mxu0
      %v2438 = vadd.f32 0.0, %v2437
      %v2439 = vpop.f32.mrf.mxu0
      %v2440 = vadd.f32 0.0, %v2439
      %2441 = vmatmul.bf16.gmra.mxu0 %v2341
      %v2442 = vpop.f32.mrf.mxu0
      %v2443 = vadd.f32 0.0, %v2442
      %v2444 = vpop.f32.mrf.mxu0
      %v2445 = vadd.f32 0.0, %v2444
      %2446 = vmatmul.bf16.gmra.mxu0 %v2342
      %v2447 = vpop.f32.mrf.mxu0
      %v2448 = vadd.f32 0.0, %v2447
      %v2449 = vpop.f32.mrf.mxu0
      %v2450 = vadd.f32 0.0, %v2449
      %2451 = vmatmul.bf16.gmra.mxu0 %v2343
      %v2452 = vpop.f32.mrf.mxu0
      %v2453 = vadd.f32 0.0, %v2452
      %v2454 = vpop.f32.mrf.mxu0
      %v2455 = vadd.f32 0.0, %v2454
      %2456 = vmatmul.bf16.gmra.mxu0 %v2344
      %v2457 = vpop.f32.mrf.mxu0
      %v2458 = vadd.f32 0.0, %v2457
      %v2459 = vpop.f32.mrf.mxu0
      %v2460 = vadd.f32 0.0, %v2459
      %2461 = vmatmul.bf16.gmra.mxu0 %v2345
      %v2462 = vpop.f32.mrf.mxu0
      %v2463 = vadd.f32 0.0, %v2462
      %v2464 = vpop.f32.mrf.mxu0
      %v2465 = vadd.f32 0.0, %v2464
      %2466 = vmatmul.bf16.gmra.mxu0 %v2346
      %v2467 = vpop.f32.mrf.mxu0
      %v2468 = vadd.f32 0.0, %v2467
      %v2469 = vpop.f32.mrf.mxu0
      %v2470 = vadd.f32 0.0, %v2469
      %2471 = vmatmul.bf16.gmra.mxu0 %v2347
      %v2472 = vpop.f32.mrf.mxu0
      %v2473 = vadd.f32 0.0, %v2472
      %v2474 = vpop.f32.mrf.mxu0
      %v2475 = vadd.f32 0.0, %v2474
      %2476 = vmatmul.bf16.gmra.mxu0 %v2348
      %v2477 = vpop.f32.mrf.mxu0
      %v2478 = vadd.f32 0.0, %v2477
      %v2479 = vpop.f32.mrf.mxu0
      %v2480 = vadd.f32 0.0, %v2479
      %2481 = vmatmul.bf16.gmra.mxu0 %v2349
      %v2482 = vpop.f32.mrf.mxu0
      %v2483 = vadd.f32 0.0, %v2482
      %v2484 = vpop.f32.mrf.mxu0
      %v2485 = vadd.f32 0.0, %v2484
      %2486 = vmatmul.bf16.gmra.mxu0 %v2350
      %v2487 = vpop.f32.mrf.mxu0
      %v2488 = vadd.f32 0.0, %v2487
      %v2489 = vpop.f32.mrf.mxu0
      %v2490 = vadd.f32 0.0, %v2489
      %2491 = vmatmul.bf16.gmra.mxu0 %v2351
      %v2492 = vpop.f32.mrf.mxu0
      %v2493 = vadd.f32 0.0, %v2492
      %v2494 = vpop.f32.mrf.mxu0
      %v2495 = vadd.f32 0.0, %v2494
      %2496 = vmatmul.bf16.gmra.mxu0 %v2352
      %v2497 = vpop.f32.mrf.mxu0
      %v2498 = vadd.f32 0.0, %v2497
      %v2499 = vpop.f32.mrf.mxu0
      %v2500 = vadd.f32 0.0, %v2499
      %2501 = vmatmul.bf16.gmra.mxu0 %v2353
      %v2502 = vpop.f32.mrf.mxu0
      %v2503 = vadd.f32 0.0, %v2502
      %v2504 = vpop.f32.mrf.mxu0
      %v2505 = vadd.f32 0.0, %v2504
      %2506 = vdwg.mxu0
      %v2507 = vpack.c.bf16 %v2428, %v2428
      %v2508 = vpack.c.bf16 %v2430, %v2430
      %v2509 = vpack.c.bf16 %v2433, %v2433
      %v2510 = vpack.c.bf16 %v2435, %v2435
      %v2511 = vpack.c.bf16 %v2438, %v2438
      %v2512 = vpack.c.bf16 %v2440, %v2440
      %v2513 = vpack.c.bf16 %v2443, %v2443
      %v2514 = vpack.c.bf16 %v2445, %v2445
      %v2515 = vpack.c.bf16 %v2448, %v2448
      %v2516 = vpack.c.bf16 %v2450, %v2450
      %v2517 = vpack.c.bf16 %v2453, %v2453
      %v2518 = vpack.c.bf16 %v2455, %v2455
      %v2519 = vpack.c.bf16 %v2458, %v2458
      %v2520 = vpack.c.bf16 %v2460, %v2460
      %v2521 = vpack.c.bf16 %v2463, %v2463
      %v2522 = vpack.c.bf16 %v2465, %v2465
      %v2523 = vpack.c.bf16 %v2468, %v2468
      %v2524 = vpack.c.bf16 %v2470, %v2470
      %v2525 = vpack.c.bf16 %v2473, %v2473
      %v2526 = vpack.c.bf16 %v2475, %v2475
      %v2527 = vpack.c.bf16 %v2478, %v2478
      %v2528 = vpack.c.bf16 %v2480, %v2480
      %v2529 = vpack.c.bf16 %v2483, %v2483
      %v2530 = vpack.c.bf16 %v2485, %v2485
      %v2531 = vpack.c.bf16 %v2488, %v2488
      %v2532 = vpack.c.bf16 %v2490, %v2490
      %v2533 = vpack.c.bf16 %v2493, %v2493
      %v2534 = vpack.c.bf16 %v2495, %v2495
      %v2535 = vpack.c.bf16 %v2498, %v2498
      %v2536 = vpack.c.bf16 %v2500, %v2500
      %v2537 = vpack.c.bf16 %v2503, %v2503
      %v2538 = vpack.c.bf16 %v2505, %v2505
      %2539 = vst [vmem:[%s177] sm:$0xf] %v2507
      %2540 = vst [vmem:[%s177 + $0x4] sm:$0xf] %v2508
      %2541 = vst [vmem:[%s177 + $0x8] sm:$0xf] %v2509
      %2542 = vst [vmem:[%s177 + $0xc] sm:$0xf] %v2510
      %2543 = vst [vmem:[%s177 + $0x10] sm:$0xf] %v2511
      %2544 = vst [vmem:[%s177 + $0x14] sm:$0xf] %v2512
      %2545 = vst [vmem:[%s177 + $0x18] sm:$0xf] %v2513
      %2546 = vst [vmem:[%s177 + $0x1c] sm:$0xf] %v2514
      %2547 = vst [vmem:[%s177 + $0x20] sm:$0xf] %v2515
      %2548 = vst [vmem:[%s177 + $0x24] sm:$0xf] %v2516
      %2549 = vst [vmem:[%s177 + $0x28] sm:$0xf] %v2517
      %2550 = vst [vmem:[%s177 + $0x2c] sm:$0xf] %v2518
      %2551 = vst [vmem:[%s177 + $0x30] sm:$0xf] %v2519
      %2552 = vst [vmem:[%s177 + $0x34] sm:$0xf] %v2520
      %2553 = vst [vmem:[%s177 + $0x38] sm:$0xf] %v2521
      %2554 = vst [vmem:[%s177 + $0x3c] sm:$0xf] %v2522
      %2555 = vst [vmem:[%s177 + $0x40] sm:$0xf] %v2523
      %2556 = vst [vmem:[%s177 + $0x44] sm:$0xf] %v2524
      %2557 = vst [vmem:[%s177 + $0x48] sm:$0xf] %v2525
      %2558 = vst [vmem:[%s177 + $0x4c] sm:$0xf] %v2526
      %2559 = vst [vmem:[%s177 + $0x50] sm:$0xf] %v2527
      %2560 = vst [vmem:[%s177 + $0x54] sm:$0xf] %v2528
      %2561 = vst [vmem:[%s177 + $0x58] sm:$0xf] %v2529
      %2562 = vst [vmem:[%s177 + $0x5c] sm:$0xf] %v2530
      %2563 = vst [vmem:[%s177 + $0x60] sm:$0xf] %v2531
      %2564 = vst [vmem:[%s177 + $0x64] sm:$0xf] %v2532
      %2565 = vst [vmem:[%s177 + $0x68] sm:$0xf] %v2533
      %2566 = vst [vmem:[%s177 + $0x6c] sm:$0xf] %v2534
      %2567 = vst [vmem:[%s177 + $0x70] sm:$0xf] %v2535
      %2568 = vst [vmem:[%s177 + $0x74] sm:$0xf] %v2536
      %2569 = vst [vmem:[%s177 + $0x78] sm:$0xf] %v2537
      %2570 = vst [vmem:[%s177 + $0x7c] sm:$0xf] %v2538
      %v2571 = vadd.f32 %v2428, %v2430
      %v2572 = vadd.f32 %v2571, %v2433
      %v2573 = vadd.f32 %v2572, %v2435
      %v2574 = vadd.f32 %v2573, %v2438
      %v2575 = vadd.f32 %v2574, %v2440
      %v2576 = vadd.f32 %v2575, %v2443
      %v2577 = vadd.f32 %v2576, %v2445
      %v2578 = vadd.f32 %v2577, %v2448
      %v2579 = vadd.f32 %v2578, %v2450
      %v2580 = vadd.f32 %v2579, %v2453
      %v2581 = vadd.f32 %v2580, %v2455
      %v2582 = vadd.f32 %v2581, %v2458
      %v2583 = vadd.f32 %v2582, %v2460
      %v2584 = vadd.f32 %v2583, %v2463
      %v2585 = vadd.f32 %v2584, %v2465
      %v2586 = vadd.f32 %v2585, %v2468
      %v2587 = vadd.f32 %v2586, %v2470
      %v2588 = vadd.f32 %v2587, %v2473
      %v2589 = vadd.f32 %v2588, %v2475
      %v2590 = vadd.f32 %v2589, %v2478
      %v2591 = vadd.f32 %v2590, %v2480
      %v2592 = vadd.f32 %v2591, %v2483
      %v2593 = vadd.f32 %v2592, %v2485
      %v2594 = vadd.f32 %v2593, %v2488
      %v2595 = vadd.f32 %v2594, %v2490
      %v2596 = vadd.f32 %v2595, %v2493
      %v2597 = vadd.f32 %v2596, %v2495
      %v2598 = vadd.f32 %v2597, %v2498
      %v2599 = vadd.f32 %v2598, %v2500
      %v2600 = vadd.f32 %v2599, %v2503
      %v2601 = vadd.f32 %v2600, %v2505
      %v2602 = vrot.slane %v2601, 4
      %v2603 = vadd.f32 %v2601, %v2602
      %v2604 = vrot.slane %v2603, 2
      %v2605 = vadd.f32 %v2603, %v2604
      %v2606 = vrot.slane %v2605, 1
      %v2607 = vadd.f32 %v2605, %v2606
      %v2608 = vadd.f32 %v2607, 0.0
      %v2609 = vmul.f32 %v2428, %v2428
      %v2610 = vmul.f32 %v2430, %v2430
      %v2611 = vmul.f32 %v2433, %v2433
      %v2612 = vmul.f32 %v2435, %v2435
      %v2613 = vmul.f32 %v2438, %v2438
      %v2614 = vmul.f32 %v2440, %v2440
      %v2615 = vmul.f32 %v2443, %v2443
      %v2616 = vmul.f32 %v2445, %v2445
      %v2617 = vmul.f32 %v2448, %v2448
      %v2618 = vmul.f32 %v2450, %v2450
      %v2619 = vmul.f32 %v2453, %v2453
      %v2620 = vmul.f32 %v2455, %v2455
      %v2621 = vmul.f32 %v2458, %v2458
      %v2622 = vmul.f32 %v2460, %v2460
      %v2623 = vmul.f32 %v2463, %v2463
      %v2624 = vmul.f32 %v2465, %v2465
      %v2625 = vmul.f32 %v2468, %v2468
      %v2626 = vmul.f32 %v2470, %v2470
      %v2627 = vmul.f32 %v2473, %v2473
      %v2628 = vmul.f32 %v2475, %v2475
      %v2629 = vmul.f32 %v2478, %v2478
      %v2630 = vmul.f32 %v2480, %v2480
      %v2631 = vmul.f32 %v2483, %v2483
      %v2632 = vmul.f32 %v2485, %v2485
      %v2633 = vmul.f32 %v2488, %v2488
      %v2634 = vmul.f32 %v2490, %v2490
      %v2635 = vmul.f32 %v2493, %v2493
      %v2636 = vmul.f32 %v2495, %v2495
      %v2637 = vmul.f32 %v2498, %v2498
      %v2638 = vmul.f32 %v2500, %v2500
      %v2639 = vmul.f32 %v2503, %v2503
      %v2640 = vmul.f32 %v2505, %v2505
      %v2641 = vadd.f32 %v2609, %v2610
      %v2642 = vadd.f32 %v2641, %v2611
      %v2643 = vadd.f32 %v2642, %v2612
      %v2644 = vadd.f32 %v2643, %v2613
      %v2645 = vadd.f32 %v2644, %v2614
      %v2646 = vadd.f32 %v2645, %v2615
      %v2647 = vadd.f32 %v2646, %v2616
      %v2648 = vadd.f32 %v2647, %v2617
      %v2649 = vadd.f32 %v2648, %v2618
      %v2650 = vadd.f32 %v2649, %v2619
      %v2651 = vadd.f32 %v2650, %v2620
      %v2652 = vadd.f32 %v2651, %v2621
      %v2653 = vadd.f32 %v2652, %v2622
      %v2654 = vadd.f32 %v2653, %v2623
      %v2655 = vadd.f32 %v2654, %v2624
      %v2656 = vadd.f32 %v2655, %v2625
      %v2657 = vadd.f32 %v2656, %v2626
      %v2658 = vadd.f32 %v2657, %v2627
      %v2659 = vadd.f32 %v2658, %v2628
      %v2660 = vadd.f32 %v2659, %v2629
      %v2661 = vadd.f32 %v2660, %v2630
      %v2662 = vadd.f32 %v2661, %v2631
      %v2663 = vadd.f32 %v2662, %v2632
      %v2664 = vadd.f32 %v2663, %v2633
      %v2665 = vadd.f32 %v2664, %v2634
      %v2666 = vadd.f32 %v2665, %v2635
      %v2667 = vadd.f32 %v2666, %v2636
      %v2668 = vadd.f32 %v2667, %v2637
      %v2669 = vadd.f32 %v2668, %v2638
      %v2670 = vadd.f32 %v2669, %v2639
      %v2671 = vadd.f32 %v2670, %v2640
      %v2672 = vrot.slane %v2671, 4
      %v2673 = vadd.f32 %v2671, %v2672
      %v2674 = vrot.slane %v2673, 2
      %v2675 = vadd.f32 %v2673, %v2674
      %v2676 = vrot.slane %v2675, 1
      %v2677 = vadd.f32 %v2675, %v2676
      %v2678 = vadd.f32 %v2677, 0.0
      %2679 = vst [vmem:[%s182] sm:$0x1] %v2608
      %2680 = vst [vmem:[%s182 + $0x1] sm:$0x1] %v2678
      %s2681 = smul.u32 32, %s15
      %p2682 = scmp.lt.s32.totalorder %s2681, 63
      %s2683 = scalar_select %p2682, %s2681, 63
      %s2684 = smul.addr %s2683, 4
      %s2685 = scalar_lea.vmem %s2, %s2684
      %p2686 = scmp.lt.s32.totalorder %s15, 1
      %s2687 = scalar_select %p2686, %s15, 1
      %s2688 = smul.addr %s2687, 2
      %s2689 = scalar_lea.vmem %s3, %s2688
      // Predicated region
      $region29: #{double_conv.3} parent=27 // pred_check
        %p2690 = pneg %p80
      $region30: #{double_conv.3} parent=27 // pred_check_branch
        %2692 = sbr.rel (%p2690) target = $region32
      $region31: #{double_conv.3} parent=27 // pred_region
        %s2693 = smul.u32 32, %s15
      $region32: #{double_conv.3} parent=27 // pred_fallthru
        _
      // Predicated region
      $region33: #{double_conv.3} parent=27 // pred_check
        %p2694 = pneg %p106
      $region34: #{double_conv.3} parent=27 // pred_check_branch
        %2696 = sbr.rel (%p2694) target = $region36
      $region35: #{double_conv.3} parent=27 // pred_region
        _
      $region36: #{double_conv.3} parent=27 // pred_fallthru
        _
    $region28: #{double_conv.3} parent=5 // pred_fallthru
      _
    %p2697 = scmp.le.s32.totalorder 2, %s10
    // Predicated region
    $region37: #{double_conv.3} parent=5 // pred_check
      %p2698 = pneg %p2697
    $region38: #{double_conv.3} parent=5 // pred_check_branch
      %2700 = sbr.rel (%p2698) target = $region40
    $region39: #{double_conv.3} parent=5 // pred_region
      %s2701 = ssub.s32 %s10, 2
      // Predicated region
      $region41: #{double_conv.3} parent=39 // pred_check
        %p2702 = pneg %p86
      $region42: #{double_conv.3} parent=39 // pred_check_branch
        %2704 = sbr.rel (%p2702) target = $region44
      $region43: #{double_conv.3} parent=39 // pred_region
        %s2705 = smul.u32 32, %s16
        %p2706 = scmp.lt.s32.totalorder %s2705, 63
        %s2707 = scalar_select %p2706, %s2705, 63
        %s2708 = smul.addr %s2707, 4
        %s2709 = scalar_lea.vmem %s2, %s2708
      $region44: #{double_conv.3} parent=39 // pred_fallthru
        _
      // Predicated region
      $region45: #{double_conv.3} parent=39 // pred_check
        %p2710 = pneg %p112
      $region46: #{double_conv.3} parent=39 // pred_check_branch
        %2712 = sbr.rel (%p2710) target = $region48
      $region47: #{double_conv.3} parent=39 // pred_region
        %p2713 = scmp.lt.s32.totalorder %s16, 1
        %s2714 = scalar_select %p2713, %s16, 1
        %s2715 = smul.addr %s2714, 2
        %s2716 = scalar_lea.vmem %s3, %s2715
      $region48: #{double_conv.3} parent=39 // pred_fallthru
        _
    $region40: #{double_conv.3} parent=5 // pred_fallthru
      _
  $region6: #{double_conv.3} parent=0 // loop_footer
    %s14 = sadd.s32 1, %s10
  $region7: #{double_conv.3} parent=0 // loop_footer_branch
    %9 = sbr.rel target = $region3
  $region8: #{double_conv.3} parent=0 // loop_exit
    _

// kernel: double_conv.4
$region0: #{double_conv.4}
  #allocation0 [shape = 'u32[]', space=smem, size = 0x4, offset = 0x4, fixed_abs, tag = 'smem constant byte address 0x4 - core index']
  #allocation1 [shape = 'u32[72,128]{1,0:T(1,128)}', space=vmem, size = 0x9000, scoped, tag = 'internal scratch']
  #allocation2 [shape = 'f32[18,18,128]{2,1,0:T(8,128)}', space=vmem, size = 0x36000, scoped, tag = 'scratch operand']
  #allocation3 [shape = 'bf16[256,1152]{1,0:T(8,128)(2,1)}', space=vmem, size = 0x90000, scoped, tag = 'scratch operand']
  %s0 = inlined_call_operand.vmem [shape: bf16[512,128], index: 0, kind: input, shape index: {}]
  %s1 = inlined_call_operand.vmem [shape: f32[1,128], index: 1, kind: input, shape index: {}]
  %s2 = inlined_call_operand.vmem [shape: f32[1,128], index: 2, kind: input, shape index: {}]
  %s3 = inlined_call_operand.vmem [shape: bf16[1152,128], index: 3, kind: input, shape index: {}]
  %s4 = inlined_call_operand.vmem [shape: bf16[512,128], index: 4, kind: output, shape index: {0}]
  %s5 = inlined_call_operand.vmem [shape: f32[2,2,128], index: 5, kind: output, shape index: {1}]
  %6 = xla_tuple %s4, %s5
  %s7 = sld [smem:[#allocation0]]
  $region57: #{double_conv.4} parent=0
    _
  %s9 = ssub.s32 1, %s7
  %s10 = scalar_select 0, %s9, %s7
  loop: start=0, step=1, limit=4
  $region2: #{double_conv.4} parent=0 // loop_pre_header
    _
  $region3: #{double_conv.4} parent=0 // loop_header
    %s12 = sphi 0, %s16
    %p13 = scmp.ge.s32.totalorder %s12, 4
    %s22 = sphi 0, %s24
    %s25 = sphi 0, %s22
    %s26 = sphi 0, %s25
    %s42 = sphi 0, %s26
    %s46 = sphi 0, %s46
    %s48 = sphi 0, %s46
    %s49 = sphi 0, %s48
    %s63 = sphi 0, %s49
    %s67 = sphi 0, %s67
    %s69 = sphi 0, %s67
    %s70 = sphi 0, %s69
    %s84 = sphi 0, %s70
    %s88 = sphi 0, %s88
    %s90 = sphi 0, %s88
    %s91 = sphi 0, %s90
    %s105 = sphi 0, %s91
    %s111 = sphi 0, %s113
    %s114 = sphi 0, %s111
    %s115 = sphi 0, %s114
    %s131 = sphi 0, %s115
    %s137 = sphi 0, %s139
    %s140 = sphi 0, %s137
    %s141 = sphi 0, %s140
    %s157 = sphi 0, %s141
  $region4: #{double_conv.4} parent=0 // loop_header_branch
    %15 = sbr.rel (%p13) target = $region8
  $region5: #{double_conv.4} parent=0 // loop_body
    %s17 = ssub.s32 %s12, 1
    %s18 = ssub.s32 %s12, 2
    %s19 = sadd.s32 %s12, 1
    %s20 = ssub.s32 %s12, %s19
    %p21 = scmp.eq.s32.totalorder %s20, 0
    %s23 = sadd.s32 %s22, 1
    %s24 = scalar_select %p21, %s22, %s23
    %p27 = pneg %p21
    %p28 = scmp.eq.s32.totalorder %s12, 1
    %p29 = por %p27, %p28
    %p30 = scmp.ne.s32.totalorder %s22, %s25
    %p31 = scmp.eq.s32.totalorder %s12, 0
    %p32 = por %p30, %p31
    %p33 = scmp.ne.s32.totalorder %s22, %s25
    %p34 = scmp.eq.s32.totalorder %s17, 1
    %p35 = por %p33, %p34
    %p36 = scmp.ne.s32.totalorder %s25, %s26
    %p37 = scmp.eq.s32.totalorder %s17, 0
    %p38 = por %p36, %p37
    %p39 = scmp.ne.s32.totalorder %s25, %s26
    %p40 = scmp.eq.s32.totalorder %s18, 1
    %p41 = por %p39, %p40
    %p43 = scmp.ne.s32.totalorder %s26, %s42
    %p44 = scmp.eq.s32.totalorder %s18, 0
    %p45 = por %p43, %p44
    %s47 = sadd.s32 %s46, 1
    %p50 = scmp.eq.s32.totalorder %s12, 1
    %p51 = scmp.ne.s32.totalorder %s46, %s48
    %p52 = scmp.eq.s32.totalorder %s12, 0
    %p53 = por %p51, %p52
    %p54 = scmp.ne.s32.totalorder %s46, %s48
    %p55 = scmp.eq.s32.totalorder %s17, 1
    %p56 = por %p54, %p55
    %p57 = scmp.ne.s32.totalorder %s48, %s49
    %p58 = scmp.eq.s32.totalorder %s17, 0
    %p59 = por %p57, %p58
    %p60 = scmp.ne.s32.totalorder %s48, %s49
    %p61 = scmp.eq.s32.totalorder %s18, 1
    %p62 = por %p60, %p61
    %p64 = scmp.ne.s32.totalorder %s49, %s63
    %p65 = scmp.eq.s32.totalorder %s18, 0
    %p66 = por %p64, %p65
    %s68 = sadd.s32 %s67, 1
    %p71 = scmp.eq.s32.totalorder %s12, 1
    %p72 = scmp.ne.s32.totalorder %s67, %s69
    %p73 = scmp.eq.s32.totalorder %s12, 0
    %p74 = por %p72, %p73
    %p75 = scmp.ne.s32.totalorder %s67, %s69
    %p76 = scmp.eq.s32.totalorder %s17, 1
    %p77 = por %p75, %p76
    %p78 = scmp.ne.s32.totalorder %s69, %s70
    %p79 = scmp.eq.s32.totalorder %s17, 0
    %p80 = por %p78, %p79
    %p81 = scmp.ne.s32.totalorder %s69, %s70
    %p82 = scmp.eq.s32.totalorder %s18, 1
    %p83 = por %p81, %p82
    %p85 = scmp.ne.s32.totalorder %s70, %s84
    %p86 = scmp.eq.s32.totalorder %s18, 0
    %p87 = por %p85, %p86
    %s89 = sadd.s32 %s88, 1
    %p92 = scmp.eq.s32.totalorder %s12, 1
    %p93 = scmp.ne.s32.totalorder %s88, %s90
    %p94 = scmp.eq.s32.totalorder %s12, 0
    %p95 = por %p93, %p94
    %p96 = scmp.ne.s32.totalorder %s88, %s90
    %p97 = scmp.eq.s32.totalorder %s17, 1
    %p98 = por %p96, %p97
    %p99 = scmp.ne.s32.totalorder %s90, %s91
    %p100 = scmp.eq.s32.totalorder %s17, 0
    %p101 = por %p99, %p100
    %p102 = scmp.ne.s32.totalorder %s90, %s91
    %p103 = scmp.eq.s32.totalorder %s18, 1
    %p104 = por %p102, %p103
    %p106 = scmp.ne.s32.totalorder %s91, %s105
    %p107 = scmp.eq.s32.totalorder %s18, 0
    %p108 = por %p106, %p107
    %s109 = ssub.s32 %s12, %s19
    %p110 = scmp.eq.s32.totalorder %s109, 0
    %s112 = sadd.s32 %s111, 1
    %s113 = scalar_select %p110, %s111, %s112
    %p116 = pneg %p110
    %p117 = scmp.eq.s32.totalorder %s12, 1
    %p118 = por %p116, %p117
    %p119 = scmp.ne.s32.totalorder %s111, %s114
    %p120 = scmp.eq.s32.totalorder %s12, 0
    %p121 = por %p119, %p120
    %p122 = scmp.ne.s32.totalorder %s111, %s114
    %p123 = scmp.eq.s32.totalorder %s17, 1
    %p124 = por %p122, %p123
    %p125 = scmp.ne.s32.totalorder %s114, %s115
    %p126 = scmp.eq.s32.totalorder %s17, 0
    %p127 = por %p125, %p126
    %p128 = scmp.ne.s32.totalorder %s114, %s115
    %p129 = scmp.eq.s32.totalorder %s18, 1
    %p130 = por %p128, %p129
    %p132 = scmp.ne.s32.totalorder %s115, %s131
    %p133 = scmp.eq.s32.totalorder %s18, 0
    %p134 = por %p132, %p133
    %s135 = ssub.s32 %s12, %s19
    %p136 = scmp.eq.s32.totalorder %s135, 0
    %s138 = sadd.s32 %s137, 1
    %s139 = scalar_select %p136, %s137, %s138
    %p142 = pneg %p136
    %p143 = scmp.eq.s32.totalorder %s12, 1
    %p144 = por %p142, %p143
    %p145 = scmp.ne.s32.totalorder %s137, %s140
    %p146 = scmp.eq.s32.totalorder %s12, 0
    %p147 = por %p145, %p146
    %p148 = scmp.ne.s32.totalorder %s137, %s140
    %p149 = scmp.eq.s32.totalorder %s17, 1
    %p150 = por %p148, %p149
    %p151 = scmp.ne.s32.totalorder %s140, %s141
    %p152 = scmp.eq.s32.totalorder %s17, 0
    %p153 = por %p151, %p152
    %p154 = scmp.ne.s32.totalorder %s140, %s141
    %p155 = scmp.eq.s32.totalorder %s18, 1
    %p156 = por %p154, %p155
    %p158 = scmp.ne.s32.totalorder %s141, %s157
    %p159 = scmp.eq.s32.totalorder %s18, 0
    %p160 = por %p158, %p159
    %p161 = scmp.le.s32.totalorder 1, %s12
    %p162 = scmp.lt.s32.totalorder %s12, 3
    %p163 = pnand %p161, %p162
    %p164 = pneg %p163
    // Predicated region
    $region9: #{double_conv.4} parent=5 // pred_check
      _
    $region10: #{double_conv.4} parent=5 // pred_check_branch
      %166 = sbr.rel (%p163) target = $region12
    $region11: #{double_conv.4} parent=5 // pred_region
      %s167 = ssub.s32 %s12, 1
      // Predicated region
      $region13: #{double_conv.4} parent=11 // pred_check
        %p168 = pneg %p59
      $region14: #{double_conv.4} parent=11 // pred_check_branch
        %170 = sbr.rel (%p168) target = $region16
      $region15: #{double_conv.4} parent=11 // pred_region
        _
      $region16: #{double_conv.4} parent=11 // pred_fallthru
        _
      // Predicated region
      $region17: #{double_conv.4} parent=11 // pred_check
        %p171 = pneg %p80
      $region18: #{double_conv.4} parent=11 // pred_check_branch
        %173 = sbr.rel (%p171) target = $region20
      $region19: #{double_conv.4} parent=11 // pred_region
        _
      $region20: #{double_conv.4} parent=11 // pred_fallthru
        _
      // Predicated region
      $region21: #{double_conv.4} parent=11 // pred_check
        %p174 = pneg %p101
      $region22: #{double_conv.4} parent=11 // pred_check_branch
        %176 = sbr.rel (%p174) target = $region24
      $region23: #{double_conv.4} parent=11 // pred_region
        _
      $region24: #{double_conv.4} parent=11 // pred_fallthru
        _
    $region12: #{double_conv.4} parent=5 // pred_fallthru
      _
    %p177 = scmp.lt.s32.totalorder %s12, 2
    // Predicated region
    $region25: #{double_conv.4} parent=5 // pred_check
      %p178 = pneg %p177
    $region26: #{double_conv.4} parent=5 // pred_check_branch
      %180 = sbr.rel (%p178) target = $region28
    $region27: #{double_conv.4} parent=5 // pred_region
      // Predicated region
      $region29: #{double_conv.4} parent=27 // pred_check
        %p181 = pneg %p32
      $region30: #{double_conv.4} parent=27 // pred_check_branch
        %183 = sbr.rel (%p181) target = $region32
      $region31: #{double_conv.4} parent=27 // pred_region
        %s184 = smul.u32 32, %s12
        %p185 = scmp.lt.s32.totalorder %s184, 63
        %s186 = scalar_select %p185, %s184, 63
        %s187 = smul.addr %s186, 4
        %s188 = scalar_lea.vmem %s0, %s187
        %s189 = smul.u32 32, %s12
      $region32: #{double_conv.4} parent=27 // pred_fallthru
        _
    $region28: #{double_conv.4} parent=5 // pred_fallthru
      _
    %p190 = scmp.le.s32.totalorder 1, %s12
    %p191 = scmp.lt.s32.totalorder %s12, 3
    %p192 = pnand %p190, %p191
    %p193 = pneg %p192
    // Predicated region
    $region33: #{double_conv.4} parent=5 // pred_check
      _
    $region34: #{double_conv.4} parent=5 // pred_check_branch
      %195 = sbr.rel (%p192) target = $region36
    $region35: #{double_conv.4} parent=5 // pred_region
      %s196 = ssub.s32 %s12, 1
      %s197 = smul.u32 32, %s17
      %p198 = scmp.lt.s32.totalorder %s197, 63
      %s199 = scalar_select %p198, %s197, 63
      %s200 = smul.addr %s199, 4
      %s201 = scalar_lea.vmem %s0, %s200
      %p202 = pneg %p38
      %p203 = pneg %p35
      %p204 = pneg %p59
      %p205 = pneg %p56
      %p206 = pneg %p80
      %p207 = pneg %p77
      %p208 = pneg %p101
      %p209 = pneg %p98
      %p210 = pneg %p127
      %p211 = pneg %p124
      %s212 = smul.u32 32, %s17
      %p213 = scmp.lt.s32.totalorder %s212, 63
      %s214 = scalar_select %p213, %s212, 63
      %s215 = smul.addr %s214, 4
      %s216 = scalar_lea.vmem %s4, %s215
      %p217 = pneg %p153
      %p218 = pneg %p150
      %p219 = scmp.lt.s32.totalorder %s17, 1
      %s220 = scalar_select %p219, %s17, 1
      %s221 = smul.addr %s220, 2
      %s222 = scalar_lea.vmem %s5, %s221
      %s223 = smul.u32 32, %s17
      %p224 = scmp.lt.s32.totalorder %s223, 63
      %s225 = scalar_select %p224, %s223, 63
      %s226 = smul.addr %s225, 4
      %s227 = scalar_lea.vmem %s0, %s226
      %s228 = smul.u32 32, %s17
      %s229 = smul.u32 32, %s17
      %p230 = scmp.lt.s32.totalorder %s229, 63
      %s231 = scalar_select %p230, %s229, 63
      %s232 = smul.addr %s231, 4
      %s233 = scalar_lea.vmem %s4, %s232
      %s234 = smul.u32 32, %s17
      %p235 = scmp.lt.s32.totalorder %s17, 1
      %s236 = scalar_select %p235, %s17, 1
      %s237 = smul.addr %s236, 2
      %s238 = scalar_lea.vmem %s5, %s237
      %239 = vst [vmem:[#allocation2] sm:$0xff] 0.0
      %240 = vst [vmem:[#allocation2 + $0x8] sm:$0xff] 0.0
      %241 = vst [vmem:[#allocation2 + $0x10] sm:$0x3] 0.0
      %s242 = scalar_lea.vmem [#allocation2], 408
      %243 = vst [vmem:[%s242] sm:$0xff] 0.0
      %244 = vst [vmem:[%s242 + $0x8] sm:$0xff] 0.0
      %245 = vst [vmem:[%s242 + $0x10] sm:$0x3] 0.0
      %246 = vst [vmem:[#allocation2] sm:$0x1] 0.0
      %247 = vst [vmem:[#allocation2 + $0x18] sm:$0x1] 0.0
      %248 = vst [vmem:[#allocation2 + $0x30] sm:$0x1] 0.0
      %249 = vst [vmem:[#allocation2 + $0x48] sm:$0x1] 0.0
      %250 = vst [vmem:[#allocation2 + $0x60] sm:$0x1] 0.0
      %251 = vst [vmem:[#allocation2 + $0x78] sm:$0x1] 0.0
      %252 = vst [vmem:[#allocation2 + $0x90] sm:$0x1] 0.0
      %253 = vst [vmem:[#allocation2 + $0xa8] sm:$0x1] 0.0
      %254 = vst [vmem:[#allocation2 + $0xc0] sm:$0x1] 0.0
      %255 = vst [vmem:[#allocation2 + $0xd8] sm:$0x1] 0.0
      %256 = vst [vmem:[#allocation2 + $0xf0] sm:$0x1] 0.0
      %257 = vst [vmem:[#allocation2 + $0x108] sm:$0x1] 0.0
      %258 = vst [vmem:[#allocation2 + $0x120] sm:$0x1] 0.0
      %259 = vst [vmem:[#allocation2 + $0x138] sm:$0x1] 0.0
      %260 = vst [vmem:[#allocation2 + $0x150] sm:$0x1] 0.0
      %261 = vst [vmem:[#allocation2 + $0x168] sm:$0x1] 0.0
      %262 = vst [vmem:[#allocation2 + $0x180] sm:$0x1] 0.0
      %263 = vst [vmem:[#allocation2 + $0x198] sm:$0x1] 0.0
      %264 = vst [vmem:[#allocation2 + $0x11] sm:$0x1] 0.0
      %265 = vst [vmem:[#allocation2 + $0x29] sm:$0x1] 0.0
      %266 = vst [vmem:[#allocation2 + $0x41] sm:$0x1] 0.0
      %267 = vst [vmem:[#allocation2 + $0x59] sm:$0x1] 0.0
      %268 = vst [vmem:[#allocation2 + $0x71] sm:$0x1] 0.0
      %269 = vst [vmem:[#allocation2 + $0x89] sm:$0x1] 0.0
      %270 = vst [vmem:[#allocation2 + $0xa1] sm:$0x1] 0.0
      %271 = vst [vmem:[#allocation2 + $0xb9] sm:$0x1] 0.0
      %272 = vst [vmem:[#allocation2 + $0xd1] sm:$0x1] 0.0
      %273 = vst [vmem:[#allocation2 + $0xe9] sm:$0x1] 0.0
      %274 = vst [vmem:[#allocation2 + $0x101] sm:$0x1] 0.0
      %275 = vst [vmem:[#allocation2 + $0x119] sm:$0x1] 0.0
      %276 = vst [vmem:[#allocation2 + $0x131] sm:$0x1] 0.0
      %277 = vst [vmem:[#allocation2 + $0x149] sm:$0x1] 0.0
      %278 = vst [vmem:[#allocation2 + $0x161] sm:$0x1] 0.0
      %279 = vst [vmem:[#allocation2 + $0x179] sm:$0x1] 0.0
      %280 = vst [vmem:[#allocation2 + $0x191] sm:$0x1] 0.0
      %281 = vst [vmem:[#allocation2 + $0x1a9] sm:$0x1] 0.0
      %v282 = vld [vmem:[%s1] sm:$0x1]
      %v283 = vld [vmem:[%s2] sm:$0x1]
      %v284 = vld [vmem:[%s227] sm:$0xf]
      %v285 = vld [vmem:[%s227 + $0x4] sm:$0xf]
      %v286 = vld [vmem:[%s227 + $0x8] sm:$0xf]
      %v287 = vld [vmem:[%s227 + $0xc] sm:$0xf]
      %v288 = vld [vmem:[%s227 + $0x10] sm:$0xf]
      %v289 = vld [vmem:[%s227 + $0x14] sm:$0xf]
      %v290 = vld [vmem:[%s227 + $0x18] sm:$0xf]
      %v291 = vld [vmem:[%s227 + $0x1c] sm:$0xf]
      %v292 = vld [vmem:[%s227 + $0x20] sm:$0xf]
      %v293 = vld [vmem:[%s227 + $0x24] sm:$0xf]
      %v294 = vld [vmem:[%s227 + $0x28] sm:$0xf]
      %v295 = vld [vmem:[%s227 + $0x2c] sm:$0xf]
      %v296 = vld [vmem:[%s227 + $0x30] sm:$0xf]
      %v297 = vld [vmem:[%s227 + $0x34] sm:$0xf]
      %v298 = vld [vmem:[%s227 + $0x38] sm:$0xf]
      %v299 = vld [vmem:[%s227 + $0x3c] sm:$0xf]
      %v300 = vld [vmem:[%s227 + $0x40] sm:$0xf]
      %v301 = vld [vmem:[%s227 + $0x44] sm:$0xf]
      %v302 = vld [vmem:[%s227 + $0x48] sm:$0xf]
      %v303 = vld [vmem:[%s227 + $0x4c] sm:$0xf]
      %v304 = vld [vmem:[%s227 + $0x50] sm:$0xf]
      %v305 = vld [vmem:[%s227 + $0x54] sm:$0xf]
      %v306 = vld [vmem:[%s227 + $0x58] sm:$0xf]
      %v307 = vld [vmem:[%s227 + $0x5c] sm:$0xf]
      %v308 = vld [vmem:[%s227 + $0x60] sm:$0xf]
      %v309 = vld [vmem:[%s227 + $0x64] sm:$0xf]
      %v310 = vld [vmem:[%s227 + $0x68] sm:$0xf]
      %v311 = vld [vmem:[%s227 + $0x6c] sm:$0xf]
      %v312 = vld [vmem:[%s227 + $0x70] sm:$0xf]
      %v313 = vld [vmem:[%s227 + $0x74] sm:$0xf]
      %v314 = vld [vmem:[%s227 + $0x78] sm:$0xf]
      %v315 = vld [vmem:[%s227 + $0x7c] sm:$0xf]
      %v316 = vunpack.c.l.bf16 %v284
      %v317 = vunpack.c.l.bf16 %v285
      %v318 = vunpack.c.l.bf16 %v286
      %v319 = vunpack.c.l.bf16 %v287
      %v320 = vunpack.c.l.bf16 %v288
      %v321 = vunpack.c.l.bf16 %v289
      %v322 = vunpack.c.l.bf16 %v290
      %v323 = vunpack.c.l.bf16 %v291
      %v324 = vunpack.c.l.bf16 %v292
      %v325 = vunpack.c.l.bf16 %v293
      %v326 = vunpack.c.l.bf16 %v294
      %v327 = vunpack.c.l.bf16 %v295
      %v328 = vunpack.c.l.bf16 %v296
      %v329 = vunpack.c.l.bf16 %v297
      %v330 = vunpack.c.l.bf16 %v298
      %v331 = vunpack.c.l.bf16 %v299
      %v332 = vunpack.c.l.bf16 %v300
      %v333 = vunpack.c.l.bf16 %v301
      %v334 = vunpack.c.l.bf16 %v302
      %v335 = vunpack.c.l.bf16 %v303
      %v336 = vunpack.c.l.bf16 %v304
      %v337 = vunpack.c.l.bf16 %v305
      %v338 = vunpack.c.l.bf16 %v306
      %v339 = vunpack.c.l.bf16 %v307
      %v340 = vunpack.c.l.bf16 %v308
      %v341 = vunpack.c.l.bf16 %v309
      %v342 = vunpack.c.l.bf16 %v310
      %v343 = vunpack.c.l.bf16 %v311
      %v344 = vunpack.c.l.bf16 %v312
      %v345 = vunpack.c.l.bf16 %v313
      %v346 = vunpack.c.l.bf16 %v314
      %v347 = vunpack.c.l.bf16 %v315
      %v349 = vperm.slane %v282, 0
      %v351 = vmul.f32 %v316, %v349
      %v352 = vmul.f32 %v317, %v349
      %v353 = vmul.f32 %v318, %v349
      %v354 = vmul.f32 %v319, %v349
      %v355 = vmul.f32 %v320, %v349
      %v356 = vmul.f32 %v321, %v349
      %v357 = vmul.f32 %v322, %v349
      %v358 = vmul.f32 %v323, %v349
      %v359 = vmul.f32 %v324, %v349
      %v360 = vmul.f32 %v325, %v349
      %v361 = vmul.f32 %v326, %v349
      %v362 = vmul.f32 %v327, %v349
      %v363 = vmul.f32 %v328, %v349
      %v364 = vmul.f32 %v329, %v349
      %v365 = vmul.f32 %v330, %v349
      %v366 = vmul.f32 %v331, %v349
      %v367 = vmul.f32 %v332, %v349
      %v368 = vmul.f32 %v333, %v349
      %v369 = vmul.f32 %v334, %v349
      %v370 = vmul.f32 %v335, %v349
      %v371 = vmul.f32 %v336, %v349
      %v372 = vmul.f32 %v337, %v349
      %v373 = vmul.f32 %v338, %v349
      %v374 = vmul.f32 %v339, %v349
      %v375 = vmul.f32 %v340, %v349
      %v376 = vmul.f32 %v341, %v349
      %v377 = vmul.f32 %v342, %v349
      %v378 = vmul.f32 %v343, %v349
      %v379 = vmul.f32 %v344, %v349
      %v380 = vmul.f32 %v345, %v349
      %v381 = vmul.f32 %v346, %v349
      %v382 = vmul.f32 %v347, %v349
      %v384 = vperm.slane %v283, 0
      %v386 = vadd.f32 %v351, %v384
      %v387 = vadd.f32 %v352, %v384
      %v388 = vadd.f32 %v353, %v384
      %v389 = vadd.f32 %v354, %v384
      %v390 = vadd.f32 %v355, %v384
      %v391 = vadd.f32 %v356, %v384
      %v392 = vadd.f32 %v357, %v384
      %v393 = vadd.f32 %v358, %v384
      %v394 = vadd.f32 %v359, %v384
      %v395 = vadd.f32 %v360, %v384
      %v396 = vadd.f32 %v361, %v384
      %v397 = vadd.f32 %v362, %v384
      %v398 = vadd.f32 %v363, %v384
      %v399 = vadd.f32 %v364, %v384
      %v400 = vadd.f32 %v365, %v384
      %v401 = vadd.f32 %v366, %v384
      %v402 = vadd.f32 %v367, %v384
      %v403 = vadd.f32 %v368, %v384
      %v404 = vadd.f32 %v369, %v384
      %v405 = vadd.f32 %v370, %v384
      %v406 = vadd.f32 %v371, %v384
      %v407 = vadd.f32 %v372, %v384
      %v408 = vadd.f32 %v373, %v384
      %v409 = vadd.f32 %v374, %v384
      %v410 = vadd.f32 %v375, %v384
      %v411 = vadd.f32 %v376, %v384
      %v412 = vadd.f32 %v377, %v384
      %v413 = vadd.f32 %v378, %v384
      %v414 = vadd.f32 %v379, %v384
      %v415 = vadd.f32 %v380, %v384
      %v416 = vadd.f32 %v381, %v384
      %v417 = vadd.f32 %v382, %v384
      %v418 = vmax.f32 %v386, 0.0
      %v419 = vmax.f32 %v387, 0.0
      %v420 = vmax.f32 %v388, 0.0
      %v421 = vmax.f32 %v389, 0.0
      %v422 = vmax.f32 %v390, 0.0
      %v423 = vmax.f32 %v391, 0.0
      %v424 = vmax.f32 %v392, 0.0
      %v425 = vmax.f32 %v393, 0.0
      %v426 = vmax.f32 %v394, 0.0
      %v427 = vmax.f32 %v395, 0.0
      %v428 = vmax.f32 %v396, 0.0
      %v429 = vmax.f32 %v397, 0.0
      %v430 = vmax.f32 %v398, 0.0
      %v431 = vmax.f32 %v399, 0.0
      %v432 = vmax.f32 %v400, 0.0
      %v433 = vmax.f32 %v401, 0.0
      %v434 = vmax.f32 %v402, 0.0
      %v435 = vmax.f32 %v403, 0.0
      %v436 = vmax.f32 %v404, 0.0
      %v437 = vmax.f32 %v405, 0.0
      %v438 = vmax.f32 %v406, 0.0
      %v439 = vmax.f32 %v407, 0.0
      %v440 = vmax.f32 %v408, 0.0
      %v441 = vmax.f32 %v409, 0.0
      %v442 = vmax.f32 %v410, 0.0
      %v443 = vmax.f32 %v411, 0.0
      %v444 = vmax.f32 %v412, 0.0
      %v445 = vmax.f32 %v413, 0.0
      %v446 = vmax.f32 %v414, 0.0
      %v447 = vmax.f32 %v415, 0.0
      %v448 = vmax.f32 %v416, 0.0
      %v449 = vmax.f32 %v417, 0.0
      %s450 = scalar_lea.vmem [#allocation2], 24
      %451 = vst [vmem:[%s450 + $0x1] sm:$0xff] %v418
      %452 = vst [vmem:[%s450 + $0x9] sm:$0xff] %v419
      %453 = vst [vmem:[%s450 + $0x19] sm:$0xff] %v420
      %454 = vst [vmem:[%s450 + $0x21] sm:$0xff] %v421
      %455 = vst [vmem:[%s450 + $0x31] sm:$0xff] %v422
      %456 = vst [vmem:[%s450 + $0x39] sm:$0xff] %v423
      %457 = vst [vmem:[%s450 + $0x49] sm:$0xff] %v424
      %458 = vst [vmem:[%s450 + $0x51] sm:$0xff] %v425
      %459 = vst [vmem:[%s450 + $0x61] sm:$0xff] %v426
      %460 = vst [vmem:[%s450 + $0x69] sm:$0xff] %v427
      %461 = vst [vmem:[%s450 + $0x79] sm:$0xff] %v428
      %462 = vst [vmem:[%s450 + $0x81] sm:$0xff] %v429
      %463 = vst [vmem:[%s450 + $0x91] sm:$0xff] %v430
      %464 = vst [vmem:[%s450 + $0x99] sm:$0xff] %v431
      %465 = vst [vmem:[%s450 + $0xa9] sm:$0xff] %v432
      %466 = vst [vmem:[%s450 + $0xb1] sm:$0xff] %v433
      %467 = vst [vmem:[%s450 + $0xc1] sm:$0xff] %v434
      %468 = vst [vmem:[%s450 + $0xc9] sm:$0xff] %v435
      %469 = vst [vmem:[%s450 + $0xd9] sm:$0xff] %v436
      %470 = vst [vmem:[%s450 + $0xe1] sm:$0xff] %v437
      %471 = vst [vmem:[%s450 + $0xf1] sm:$0xff] %v438
      %472 = vst [vmem:[%s450 + $0xf9] sm:$0xff] %v439
      %473 = vst [vmem:[%s450 + $0x109] sm:$0xff] %v440
      %474 = vst [vmem:[%s450 + $0x111] sm:$0xff] %v441
      %475 = vst [vmem:[%s450 + $0x121] sm:$0xff] %v442
      %476 = vst [vmem:[%s450 + $0x129] sm:$0xff] %v443
      %477 = vst [vmem:[%s450 + $0x139] sm:$0xff] %v444
      %478 = vst [vmem:[%s450 + $0x141] sm:$0xff] %v445
      %479 = vst [vmem:[%s450 + $0x151] sm:$0xff] %v446
      %480 = vst [vmem:[%s450 + $0x159] sm:$0xff] %v447
      %481 = vst [vmem:[%s450 + $0x169] sm:$0xff] %v448
      %482 = vst [vmem:[%s450 + $0x171] sm:$0xff] %v449
      %v483 = vld [vmem:[#allocation2] sm:$0xff]
      %v484 = vld [vmem:[#allocation2 + $0x8] sm:$0xff]
      %v485 = vld [vmem:[#allocation2 + $0x18] sm:$0xff]
      %v486 = vld [vmem:[#allocation2 + $0x20] sm:$0xff]
      %v487 = vld [vmem:[#allocation2 + $0x30] sm:$0xff]
      %v488 = vld [vmem:[#allocation2 + $0x38] sm:$0xff]
      %v489 = vld [vmem:[#allocation2 + $0x48] sm:$0xff]
      %v490 = vld [vmem:[#allocation2 + $0x50] sm:$0xff]
      %v491 = vld [vmem:[#allocation2 + $0x60] sm:$0xff]
      %v492 = vld [vmem:[#allocation2 + $0x68] sm:$0xff]
      %v493 = vld [vmem:[#allocation2 + $0x78] sm:$0xff]
      %v494 = vld [vmem:[#allocation2 + $0x80] sm:$0xff]
      %v495 = vld [vmem:[#allocation2 + $0x90] sm:$0xff]
      %v496 = vld [vmem:[#allocation2 + $0x98] sm:$0xff]
      %v497 = vld [vmem:[#allocation2 + $0xa8] sm:$0xff]
      %v498 = vld [vmem:[#allocation2 + $0xb0] sm:$0xff]
      %v499 = vld [vmem:[#allocation2 + $0xc0] sm:$0xff]
      %v500 = vld [vmem:[#allocation2 + $0xc8] sm:$0xff]
      %v501 = vld [vmem:[#allocation2 + $0xd8] sm:$0xff]
      %v502 = vld [vmem:[#allocation2 + $0xe0] sm:$0xff]
      %v503 = vld [vmem:[#allocation2 + $0xf0] sm:$0xff]
      %v504 = vld [vmem:[#allocation2 + $0xf8] sm:$0xff]
      %v505 = vld [vmem:[#allocation2 + $0x108] sm:$0xff]
      %v506 = vld [vmem:[#allocation2 + $0x110] sm:$0xff]
      %v507 = vld [vmem:[#allocation2 + $0x120] sm:$0xff]
      %v508 = vld [vmem:[#allocation2 + $0x128] sm:$0xff]
      %v509 = vld [vmem:[#allocation2 + $0x138] sm:$0xff]
      %v510 = vld [vmem:[#allocation2 + $0x140] sm:$0xff]
      %v511 = vld [vmem:[#allocation2 + $0x150] sm:$0xff]
      %v512 = vld [vmem:[#allocation2 + $0x158] sm:$0xff]
      %v513 = vld [vmem:[#allocation2 + $0x168] sm:$0xff]
      %v514 = vld [vmem:[#allocation2 + $0x170] sm:$0xff]
      %v515 = vpack.c.bf16 %v483, %v483
      %v516 = vpack.c.bf16 %v484, %v484
      %v517 = vpack.c.bf16 %v485, %v485
      %v518 = vpack.c.bf16 %v486, %v486
      %v519 = vpack.c.bf16 %v487, %v487
      %v520 = vpack.c.bf16 %v488, %v488
      %v521 = vpack.c.bf16 %v489, %v489
      %v522 = vpack.c.bf16 %v490, %v490
      %v523 = vpack.c.bf16 %v491, %v491
      %v524 = vpack.c.bf16 %v492, %v492
      %v525 = vpack.c.bf16 %v493, %v493
      %v526 = vpack.c.bf16 %v494, %v494
      %v527 = vpack.c.bf16 %v495, %v495
      %v528 = vpack.c.bf16 %v496, %v496
      %v529 = vpack.c.bf16 %v497, %v497
      %v530 = vpack.c.bf16 %v498, %v498
      %v531 = vpack.c.bf16 %v499, %v499
      %v532 = vpack.c.bf16 %v500, %v500
      %v533 = vpack.c.bf16 %v501, %v501
      %v534 = vpack.c.bf16 %v502, %v502
      %v535 = vpack.c.bf16 %v503, %v503
      %v536 = vpack.c.bf16 %v504, %v504
      %v537 = vpack.c.bf16 %v505, %v505
      %v538 = vpack.c.bf16 %v506, %v506
      %v539 = vpack.c.bf16 %v507, %v507
      %v540 = vpack.c.bf16 %v508, %v508
      %v541 = vpack.c.bf16 %v509, %v509
      %v542 = vpack.c.bf16 %v510, %v510
      %v543 = vpack.c.bf16 %v511, %v511
      %v544 = vpack.c.bf16 %v512, %v512
      %v545 = vpack.c.bf16 %v513, %v513
      %v546 = vpack.c.bf16 %v514, %v514
      %547 = vst [vmem:[#allocation3] sm:$0xf] %v515
      %548 = vst [vmem:[#allocation3 + $0x24] sm:$0xf] %v516
      %549 = vst [vmem:[#allocation3 + $0x48] sm:$0xf] %v517
      %550 = vst [vmem:[#allocation3 + $0x6c] sm:$0xf] %v518
      %551 = vst [vmem:[#allocation3 + $0x90] sm:$0xf] %v519
      %552 = vst [vmem:[#allocation3 + $0xb4] sm:$0xf] %v520
      %553 = vst [vmem:[#allocation3 + $0xd8] sm:$0xf] %v521
      %554 = vst [vmem:[#allocation3 + $0xfc] sm:$0xf] %v522
      %555 = vst [vmem:[#allocation3 + $0x120] sm:$0xf] %v523
      %556 = vst [vmem:[#allocation3 + $0x144] sm:$0xf] %v524
      %557 = vst [vmem:[#allocation3 + $0x168] sm:$0xf] %v525
      %558 = vst [vmem:[#allocation3 + $0x18c] sm:$0xf] %v526
      %559 = vst [vmem:[#allocation3 + $0x1b0] sm:$0xf] %v527
      %560 = vst [vmem:[#allocation3 + $0x1d4] sm:$0xf] %v528
      %561 = vst [vmem:[#allocation3 + $0x1f8] sm:$0xf] %v529
      %562 = vst [vmem:[#allocation3 + $0x21c] sm:$0xf] %v530
      %563 = vst [vmem:[#allocation3 + $0x240] sm:$0xf] %v531
      %564 = vst [vmem:[#allocation3 + $0x264] sm:$0xf] %v532
      %565 = vst [vmem:[#allocation3 + $0x288] sm:$0xf] %v533
      %566 = vst [vmem:[#allocation3 + $0x2ac] sm:$0xf] %v534
      %567 = vst [vmem:[#allocation3 + $0x2d0] sm:$0xf] %v535
      %568 = vst [vmem:[#allocation3 + $0x2f4] sm:$0xf] %v536
      %569 = vst [vmem:[#allocation3 + $0x318] sm:$0xf] %v537
      %570 = vst [vmem:[#allocation3 + $0x33c] sm:$0xf] %v538
      %571 = vst [vmem:[#allocation3 + $0x360] sm:$0xf] %v539
      %572 = vst [vmem:[#allocation3 + $0x384] sm:$0xf] %v540
      %573 = vst [vmem:[#allocation3 + $0x3a8] sm:$0xf] %v541
      %574 = vst [vmem:[#allocation3 + $0x3cc] sm:$0xf] %v542
      %575 = vst [vmem:[#allocation3 + $0x3f0] sm:$0xf] %v543
      %576 = vst [vmem:[#allocation3 + $0x414] sm:$0xf] %v544
      %577 = vst [vmem:[#allocation3 + $0x438] sm:$0xf] %v545
      %578 = vst [vmem:[#allocation3 + $0x45c] sm:$0xf] %v546
      %v579 = vld [vmem:[#allocation2 + $0x1] sm:$0xff]
      %v580 = vld [vmem:[#allocation2 + $0x9] sm:$0xff]
      %v581 = vld [vmem:[#allocation2 + $0x19] sm:$0xff]
      %v582 = vld [vmem:[#allocation2 + $0x21] sm:$0xff]
      %v583 = vld [vmem:[#allocation2 + $0x31] sm:$0xff]
      %v584 = vld [vmem:[#allocation2 + $0x39] sm:$0xff]
      %v585 = vld [vmem:[#allocation2 + $0x49] sm:$0xff]
      %v586 = vld [vmem:[#allocation2 + $0x51] sm:$0xff]
      %v587 = vld [vmem:[#allocation2 + $0x61] sm:$0xff]
      %v588 = vld [vmem:[#allocation2 + $0x69] sm:$0xff]
      %v589 = vld [vmem:[#allocation2 + $0x79] sm:$0xff]
      %v590 = vld [vmem:[#allocation2 + $0x81] sm:$0xff]
      %v591 = vld [vmem:[#allocation2 + $0x91] sm:$0xff]
      %v592 = vld [vmem:[#allocation2 + $0x99] sm:$0xff]
      %v593 = vld [vmem:[#allocation2 + $0xa9] sm:$0xff]
      %v594 = vld [vmem:[#allocation2 + $0xb1] sm:$0xff]
      %v595 = vld [vmem:[#allocation2 + $0xc1] sm:$0xff]
      %v596 = vld [vmem:[#allocation2 + $0xc9] sm:$0xff]
      %v597 = vld [vmem:[#allocation2 + $0xd9] sm:$0xff]
      %v598 = vld [vmem:[#allocation2 + $0xe1] sm:$0xff]
      %v599 = vld [vmem:[#allocation2 + $0xf1] sm:$0xff]
      %v600 = vld [vmem:[#allocation2 + $0xf9] sm:$0xff]
      %v601 = vld [vmem:[#allocation2 + $0x109] sm:$0xff]
      %v602 = vld [vmem:[#allocation2 + $0x111] sm:$0xff]
      %v603 = vld [vmem:[#allocation2 + $0x121] sm:$0xff]
      %v604 = vld [vmem:[#allocation2 + $0x129] sm:$0xff]
      %v605 = vld [vmem:[#allocation2 + $0x139] sm:$0xff]
      %v606 = vld [vmem:[#allocation2 + $0x141] sm:$0xff]
      %v607 = vld [vmem:[#allocation2 + $0x151] sm:$0xff]
      %v608 = vld [vmem:[#allocation2 + $0x159] sm:$0xff]
      %v609 = vld [vmem:[#allocation2 + $0x169] sm:$0xff]
      %v610 = vld [vmem:[#allocation2 + $0x171] sm:$0xff]
      %v611 = vpack.c.bf16 %v579, %v579
      %v612 = vpack.c.bf16 %v580, %v580
      %v613 = vpack.c.bf16 %v581, %v581
      %v614 = vpack.c.bf16 %v582, %v582
      %v615 = vpack.c.bf16 %v583, %v583
      %v616 = vpack.c.bf16 %v584, %v584
      %v617 = vpack.c.bf16 %v585, %v585
      %v618 = vpack.c.bf16 %v586, %v586
      %v619 = vpack.c.bf16 %v587, %v587
      %v620 = vpack.c.bf16 %v588, %v588
      %v621 = vpack.c.bf16 %v589, %v589
      %v622 = vpack.c.bf16 %v590, %v590
      %v623 = vpack.c.bf16 %v591, %v591
      %v624 = vpack.c.bf16 %v592, %v592
      %v625 = vpack.c.bf16 %v593, %v593
      %v626 = vpack.c.bf16 %v594, %v594
      %v627 = vpack.c.bf16 %v595, %v595
      %v628 = vpack.c.bf16 %v596, %v596
      %v629 = vpack.c.bf16 %v597, %v597
      %v630 = vpack.c.bf16 %v598, %v598
      %v631 = vpack.c.bf16 %v599, %v599
      %v632 = vpack.c.bf16 %v600, %v600
      %v633 = vpack.c.bf16 %v601, %v601
      %v634 = vpack.c.bf16 %v602, %v602
      %v635 = vpack.c.bf16 %v603, %v603
      %v636 = vpack.c.bf16 %v604, %v604
      %v637 = vpack.c.bf16 %v605, %v605
      %v638 = vpack.c.bf16 %v606, %v606
      %v639 = vpack.c.bf16 %v607, %v607
      %v640 = vpack.c.bf16 %v608, %v608
      %v641 = vpack.c.bf16 %v609, %v609
      %v642 = vpack.c.bf16 %v610, %v610
      %643 = vst [vmem:[#allocation3 + $0x4] sm:$0xf] %v611
      %644 = vst [vmem:[#allocation3 + $0x28] sm:$0xf] %v612
      %645 = vst [vmem:[#allocation3 + $0x4c] sm:$0xf] %v613
      %646 = vst [vmem:[#allocation3 + $0x70] sm:$0xf] %v614
      %647 = vst [vmem:[#allocation3 + $0x94] sm:$0xf] %v615
      %648 = vst [vmem:[#allocation3 + $0xb8] sm:$0xf] %v616
      %649 = vst [vmem:[#allocation3 + $0xdc] sm:$0xf] %v617
      %650 = vst [vmem:[#allocation3 + $0x100] sm:$0xf] %v618
      %651 = vst [vmem:[#allocation3 + $0x124] sm:$0xf] %v619
      %652 = vst [vmem:[#allocation3 + $0x148] sm:$0xf] %v620
      %653 = vst [vmem:[#allocation3 + $0x16c] sm:$0xf] %v621
      %654 = vst [vmem:[#allocation3 + $0x190] sm:$0xf] %v622
      %655 = vst [vmem:[#allocation3 + $0x1b4] sm:$0xf] %v623
      %656 = vst [vmem:[#allocation3 + $0x1d8] sm:$0xf] %v624
      %657 = vst [vmem:[#allocation3 + $0x1fc] sm:$0xf] %v625
      %658 = vst [vmem:[#allocation3 + $0x220] sm:$0xf] %v626
      %659 = vst [vmem:[#allocation3 + $0x244] sm:$0xf] %v627
      %660 = vst [vmem:[#allocation3 + $0x268] sm:$0xf] %v628
      %661 = vst [vmem:[#allocation3 + $0x28c] sm:$0xf] %v629
      %662 = vst [vmem:[#allocation3 + $0x2b0] sm:$0xf] %v630
      %663 = vst [vmem:[#allocation3 + $0x2d4] sm:$0xf] %v631
      %664 = vst [vmem:[#allocation3 + $0x2f8] sm:$0xf] %v632
      %665 = vst [vmem:[#allocation3 + $0x31c] sm:$0xf] %v633
      %666 = vst [vmem:[#allocation3 + $0x340] sm:$0xf] %v634
      %667 = vst [vmem:[#allocation3 + $0x364] sm:$0xf] %v635
      %668 = vst [vmem:[#allocation3 + $0x388] sm:$0xf] %v636
      %669 = vst [vmem:[#allocation3 + $0x3ac] sm:$0xf] %v637
      %670 = vst [vmem:[#allocation3 + $0x3d0] sm:$0xf] %v638
      %671 = vst [vmem:[#allocation3 + $0x3f4] sm:$0xf] %v639
      %672 = vst [vmem:[#allocation3 + $0x418] sm:$0xf] %v640
      %673 = vst [vmem:[#allocation3 + $0x43c] sm:$0xf] %v641
      %674 = vst [vmem:[#allocation3 + $0x460] sm:$0xf] %v642
      %v675 = vld [vmem:[#allocation2 + $0x2] sm:$0xff]
      %v676 = vld [vmem:[#allocation2 + $0xa] sm:$0xff]
      %v677 = vld [vmem:[#allocation2 + $0x1a] sm:$0xff]
      %v678 = vld [vmem:[#allocation2 + $0x22] sm:$0xff]
      %v679 = vld [vmem:[#allocation2 + $0x32] sm:$0xff]
      %v680 = vld [vmem:[#allocation2 + $0x3a] sm:$0xff]
      %v681 = vld [vmem:[#allocation2 + $0x4a] sm:$0xff]
      %v682 = vld [vmem:[#allocation2 + $0x52] sm:$0xff]
      %v683 = vld [vmem:[#allocation2 + $0x62] sm:$0xff]
      %v684 = vld [vmem:[#allocation2 + $0x6a] sm:$0xff]
      %v685 = vld [vmem:[#allocation2 + $0x7a] sm:$0xff]
      %v686 = vld [vmem:[#allocation2 + $0x82] sm:$0xff]
      %v687 = vld [vmem:[#allocation2 + $0x92] sm:$0xff]
      %v688 = vld [vmem:[#allocation2 + $0x9a] sm:$0xff]
      %v689 = vld [vmem:[#allocation2 + $0xaa] sm:$0xff]
      %v690 = vld [vmem:[#allocation2 + $0xb2] sm:$0xff]
      %v691 = vld [vmem:[#allocation2 + $0xc2] sm:$0xff]
      %v692 = vld [vmem:[#allocation2 + $0xca] sm:$0xff]
      %v693 = vld [vmem:[#allocation2 + $0xda] sm:$0xff]
      %v694 = vld [vmem:[#allocation2 + $0xe2] sm:$0xff]
      %v695 = vld [vmem:[#allocation2 + $0xf2] sm:$0xff]
      %v696 = vld [vmem:[#allocation2 + $0xfa] sm:$0xff]
      %v697 = vld [vmem:[#allocation2 + $0x10a] sm:$0xff]
      %v698 = vld [vmem:[#allocation2 + $0x112] sm:$0xff]
      %v699 = vld [vmem:[#allocation2 + $0x122] sm:$0xff]
      %v700 = vld [vmem:[#allocation2 + $0x12a] sm:$0xff]
      %v701 = vld [vmem:[#allocation2 + $0x13a] sm:$0xff]
      %v702 = vld [vmem:[#allocation2 + $0x142] sm:$0xff]
      %v703 = vld [vmem:[#allocation2 + $0x152] sm:$0xff]
      %v704 = vld [vmem:[#allocation2 + $0x15a] sm:$0xff]
      %v705 = vld [vmem:[#allocation2 + $0x16a] sm:$0xff]
      %v706 = vld [vmem:[#allocation2 + $0x172] sm:$0xff]
      %v707 = vpack.c.bf16 %v675, %v675
      %v708 = vpack.c.bf16 %v676, %v676
      %v709 = vpack.c.bf16 %v677, %v677
      %v710 = vpack.c.bf16 %v678, %v678
      %v711 = vpack.c.bf16 %v679, %v679
      %v712 = vpack.c.bf16 %v680, %v680
      %v713 = vpack.c.bf16 %v681, %v681
      %v714 = vpack.c.bf16 %v682, %v682
      %v715 = vpack.c.bf16 %v683, %v683
      %v716 = vpack.c.bf16 %v684, %v684
      %v717 = vpack.c.bf16 %v685, %v685
      %v718 = vpack.c.bf16 %v686, %v686
      %v719 = vpack.c.bf16 %v687, %v687
      %v720 = vpack.c.bf16 %v688, %v688
      %v721 = vpack.c.bf16 %v689, %v689
      %v722 = vpack.c.bf16 %v690, %v690
      %v723 = vpack.c.bf16 %v691, %v691
      %v724 = vpack.c.bf16 %v692, %v692
      %v725 = vpack.c.bf16 %v693, %v693
      %v726 = vpack.c.bf16 %v694, %v694
      %v727 = vpack.c.bf16 %v695, %v695
      %v728 = vpack.c.bf16 %v696, %v696
      %v729 = vpack.c.bf16 %v697, %v697
      %v730 = vpack.c.bf16 %v698, %v698
      %v731 = vpack.c.bf16 %v699, %v699
      %v732 = vpack.c.bf16 %v700, %v700
      %v733 = vpack.c.bf16 %v701, %v701
      %v734 = vpack.c.bf16 %v702, %v702
      %v735 = vpack.c.bf16 %v703, %v703
      %v736 = vpack.c.bf16 %v704, %v704
      %v737 = vpack.c.bf16 %v705, %v705
      %v738 = vpack.c.bf16 %v706, %v706
      %739 = vst [vmem:[#allocation3 + $0x8] sm:$0xf] %v707
      %740 = vst [vmem:[#allocation3 + $0x2c] sm:$0xf] %v708
      %741 = vst [vmem:[#allocation3 + $0x50] sm:$0xf] %v709
      %742 = vst [vmem:[#allocation3 + $0x74] sm:$0xf] %v710
      %743 = vst [vmem:[#allocation3 + $0x98] sm:$0xf] %v711
      %744 = vst [vmem:[#allocation3 + $0xbc] sm:$0xf] %v712
      %745 = vst [vmem:[#allocation3 + $0xe0] sm:$0xf] %v713
      %746 = vst [vmem:[#allocation3 + $0x104] sm:$0xf] %v714
      %747 = vst [vmem:[#allocation3 + $0x128] sm:$0xf] %v715
      %748 = vst [vmem:[#allocation3 + $0x14c] sm:$0xf] %v716
      %749 = vst [vmem:[#allocation3 + $0x170] sm:$0xf] %v717
      %750 = vst [vmem:[#allocation3 + $0x194] sm:$0xf] %v718
      %751 = vst [vmem:[#allocation3 + $0x1b8] sm:$0xf] %v719
      %752 = vst [vmem:[#allocation3 + $0x1dc] sm:$0xf] %v720
      %753 = vst [vmem:[#allocation3 + $0x200] sm:$0xf] %v721
      %754 = vst [vmem:[#allocation3 + $0x224] sm:$0xf] %v722
      %755 = vst [vmem:[#allocation3 + $0x248] sm:$0xf] %v723
      %756 = vst [vmem:[#allocation3 + $0x26c] sm:$0xf] %v724
      %757 = vst [vmem:[#allocation3 + $0x290] sm:$0xf] %v725
      %758 = vst [vmem:[#allocation3 + $0x2b4] sm:$0xf] %v726
      %759 = vst [vmem:[#allocation3 + $0x2d8] sm:$0xf] %v727
      %760 = vst [vmem:[#allocation3 + $0x2fc] sm:$0xf] %v728
      %761 = vst [vmem:[#allocation3 + $0x320] sm:$0xf] %v729
      %762 = vst [vmem:[#allocation3 + $0x344] sm:$0xf] %v730
      %763 = vst [vmem:[#allocation3 + $0x368] sm:$0xf] %v731
      %764 = vst [vmem:[#allocation3 + $0x38c] sm:$0xf] %v732
      %765 = vst [vmem:[#allocation3 + $0x3b0] sm:$0xf] %v733
      %766 = vst [vmem:[#allocation3 + $0x3d4] sm:$0xf] %v734
      %767 = vst [vmem:[#allocation3 + $0x3f8] sm:$0xf] %v735
      %768 = vst [vmem:[#allocation3 + $0x41c] sm:$0xf] %v736
      %769 = vst [vmem:[#allocation3 + $0x440] sm:$0xf] %v737
      %770 = vst [vmem:[#allocation3 + $0x464] sm:$0xf] %v738
      %v771 = vld [vmem:[%s450] sm:$0xff]
      %v772 = vld [vmem:[%s450 + $0x8] sm:$0xff]
      %v773 = vld [vmem:[%s450 + $0x18] sm:$0xff]
      %v774 = vld [vmem:[%s450 + $0x20] sm:$0xff]
      %v775 = vld [vmem:[%s450 + $0x30] sm:$0xff]
      %v776 = vld [vmem:[%s450 + $0x38] sm:$0xff]
      %v777 = vld [vmem:[%s450 + $0x48] sm:$0xff]
      %v778 = vld [vmem:[%s450 + $0x50] sm:$0xff]
      %v779 = vld [vmem:[%s450 + $0x60] sm:$0xff]
      %v780 = vld [vmem:[%s450 + $0x68] sm:$0xff]
      %v781 = vld [vmem:[%s450 + $0x78] sm:$0xff]
      %v782 = vld [vmem:[%s450 + $0x80] sm:$0xff]
      %v783 = vld [vmem:[%s450 + $0x90] sm:$0xff]
      %v784 = vld [vmem:[%s450 + $0x98] sm:$0xff]
      %v785 = vld [vmem:[%s450 + $0xa8] sm:$0xff]
      %v786 = vld [vmem:[%s450 + $0xb0] sm:$0xff]
      %v787 = vld [vmem:[%s450 + $0xc0] sm:$0xff]
      %v788 = vld [vmem:[%s450 + $0xc8] sm:$0xff]
      %v789 = vld [vmem:[%s450 + $0xd8] sm:$0xff]
      %v790 = vld [vmem:[%s450 + $0xe0] sm:$0xff]
      %v791 = vld [vmem:[%s450 + $0xf0] sm:$0xff]
      %v792 = vld [vmem:[%s450 + $0xf8] sm:$0xff]
      %v793 = vld [vmem:[%s450 + $0x108] sm:$0xff]
      %v794 = vld [vmem:[%s450 + $0x110] sm:$0xff]
      %v795 = vld [vmem:[%s450 + $0x120] sm:$0xff]
      %v796 = vld [vmem:[%s450 + $0x128] sm:$0xff]
      %v797 = vld [vmem:[%s450 + $0x138] sm:$0xff]
      %v798 = vld [vmem:[%s450 + $0x140] sm:$0xff]
      %v799 = vld [vmem:[%s450 + $0x150] sm:$0xff]
      %v800 = vld [vmem:[%s450 + $0x158] sm:$0xff]
      %v801 = vld [vmem:[%s450 + $0x168] sm:$0xff]
      %v802 = vld [vmem:[%s450 + $0x170] sm:$0xff]
      %v803 = vpack.c.bf16 %v771, %v771
      %v804 = vpack.c.bf16 %v772, %v772
      %v805 = vpack.c.bf16 %v773, %v773
      %v806 = vpack.c.bf16 %v774, %v774
      %v807 = vpack.c.bf16 %v775, %v775
      %v808 = vpack.c.bf16 %v776, %v776
      %v809 = vpack.c.bf16 %v777, %v777
      %v810 = vpack.c.bf16 %v778, %v778
      %v811 = vpack.c.bf16 %v779, %v779
      %v812 = vpack.c.bf16 %v780, %v780
      %v813 = vpack.c.bf16 %v781, %v781
      %v814 = vpack.c.bf16 %v782, %v782
      %v815 = vpack.c.bf16 %v783, %v783
      %v816 = vpack.c.bf16 %v784, %v784
      %v817 = vpack.c.bf16 %v785, %v785
      %v818 = vpack.c.bf16 %v786, %v786
      %v819 = vpack.c.bf16 %v787, %v787
      %v820 = vpack.c.bf16 %v788, %v788
      %v821 = vpack.c.bf16 %v789, %v789
      %v822 = vpack.c.bf16 %v790, %v790
      %v823 = vpack.c.bf16 %v791, %v791
      %v824 = vpack.c.bf16 %v792, %v792
      %v825 = vpack.c.bf16 %v793, %v793
      %v826 = vpack.c.bf16 %v794, %v794
      %v827 = vpack.c.bf16 %v795, %v795
      %v828 = vpack.c.bf16 %v796, %v796
      %v829 = vpack.c.bf16 %v797, %v797
      %v830 = vpack.c.bf16 %v798, %v798
      %v831 = vpack.c.bf16 %v799, %v799
      %v832 = vpack.c.bf16 %v800, %v800
      %v833 = vpack.c.bf16 %v801, %v801
      %v834 = vpack.c.bf16 %v802, %v802
      %835 = vst [vmem:[#allocation3 + $0xc] sm:$0xf] %v803
      %836 = vst [vmem:[#allocation3 + $0x30] sm:$0xf] %v804
      %837 = vst [vmem:[#allocation3 + $0x54] sm:$0xf] %v805
      %838 = vst [vmem:[#allocation3 + $0x78] sm:$0xf] %v806
      %839 = vst [vmem:[#allocation3 + $0x9c] sm:$0xf] %v807
      %840 = vst [vmem:[#allocation3 + $0xc0] sm:$0xf] %v808
      %841 = vst [vmem:[#allocation3 + $0xe4] sm:$0xf] %v809
      %842 = vst [vmem:[#allocation3 + $0x108] sm:$0xf] %v810
      %843 = vst [vmem:[#allocation3 + $0x12c] sm:$0xf] %v811
      %844 = vst [vmem:[#allocation3 + $0x150] sm:$0xf] %v812
      %845 = vst [vmem:[#allocation3 + $0x174] sm:$0xf] %v813
      %846 = vst [vmem:[#allocation3 + $0x198] sm:$0xf] %v814
      %847 = vst [vmem:[#allocation3 + $0x1bc] sm:$0xf] %v815
      %848 = vst [vmem:[#allocation3 + $0x1e0] sm:$0xf] %v816
      %849 = vst [vmem:[#allocation3 + $0x204] sm:$0xf] %v817
      %850 = vst [vmem:[#allocation3 + $0x228] sm:$0xf] %v818
      %851 = vst [vmem:[#allocation3 + $0x24c] sm:$0xf] %v819
      %852 = vst [vmem:[#allocation3 + $0x270] sm:$0xf] %v820
      %853 = vst [vmem:[#allocation3 + $0x294] sm:$0xf] %v821
      %854 = vst [vmem:[#allocation3 + $0x2b8] sm:$0xf] %v822
      %855 = vst [vmem:[#allocation3 + $0x2dc] sm:$0xf] %v823
      %856 = vst [vmem:[#allocation3 + $0x300] sm:$0xf] %v824
      %857 = vst [vmem:[#allocation3 + $0x324] sm:$0xf] %v825
      %858 = vst [vmem:[#allocation3 + $0x348] sm:$0xf] %v826
      %859 = vst [vmem:[#allocation3 + $0x36c] sm:$0xf] %v827
      %860 = vst [vmem:[#allocation3 + $0x390] sm:$0xf] %v828
      %861 = vst [vmem:[#allocation3 + $0x3b4] sm:$0xf] %v829
      %862 = vst [vmem:[#allocation3 + $0x3d8] sm:$0xf] %v830
      %863 = vst [vmem:[#allocation3 + $0x3fc] sm:$0xf] %v831
      %864 = vst [vmem:[#allocation3 + $0x420] sm:$0xf] %v832
      %865 = vst [vmem:[#allocation3 + $0x444] sm:$0xf] %v833
      %866 = vst [vmem:[#allocation3 + $0x468] sm:$0xf] %v834
      %v867 = vld [vmem:[%s450 + $0x1] sm:$0xff]
      %v868 = vld [vmem:[%s450 + $0x9] sm:$0xff]
      %v869 = vld [vmem:[%s450 + $0x19] sm:$0xff]
      %v870 = vld [vmem:[%s450 + $0x21] sm:$0xff]
      %v871 = vld [vmem:[%s450 + $0x31] sm:$0xff]
      %v872 = vld [vmem:[%s450 + $0x39] sm:$0xff]
      %v873 = vld [vmem:[%s450 + $0x49] sm:$0xff]
      %v874 = vld [vmem:[%s450 + $0x51] sm:$0xff]
      %v875 = vld [vmem:[%s450 + $0x61] sm:$0xff]
      %v876 = vld [vmem:[%s450 + $0x69] sm:$0xff]
      %v877 = vld [vmem:[%s450 + $0x79] sm:$0xff]
      %v878 = vld [vmem:[%s450 + $0x81] sm:$0xff]
      %v879 = vld [vmem:[%s450 + $0x91] sm:$0xff]
      %v880 = vld [vmem:[%s450 + $0x99] sm:$0xff]
      %v881 = vld [vmem:[%s450 + $0xa9] sm:$0xff]
      %v882 = vld [vmem:[%s450 + $0xb1] sm:$0xff]
      %v883 = vld [vmem:[%s450 + $0xc1] sm:$0xff]
      %v884 = vld [vmem:[%s450 + $0xc9] sm:$0xff]
      %v885 = vld [vmem:[%s450 + $0xd9] sm:$0xff]
      %v886 = vld [vmem:[%s450 + $0xe1] sm:$0xff]
      %v887 = vld [vmem:[%s450 + $0xf1] sm:$0xff]
      %v888 = vld [vmem:[%s450 + $0xf9] sm:$0xff]
      %v889 = vld [vmem:[%s450 + $0x109] sm:$0xff]
      %v890 = vld [vmem:[%s450 + $0x111] sm:$0xff]
      %v891 = vld [vmem:[%s450 + $0x121] sm:$0xff]
      %v892 = vld [vmem:[%s450 + $0x129] sm:$0xff]
      %v893 = vld [vmem:[%s450 + $0x139] sm:$0xff]
      %v894 = vld [vmem:[%s450 + $0x141] sm:$0xff]
      %v895 = vld [vmem:[%s450 + $0x151] sm:$0xff]
      %v896 = vld [vmem:[%s450 + $0x159] sm:$0xff]
      %v897 = vld [vmem:[%s450 + $0x169] sm:$0xff]
      %v898 = vld [vmem:[%s450 + $0x171] sm:$0xff]
      %v899 = vpack.c.bf16 %v867, %v867
      %v900 = vpack.c.bf16 %v868, %v868
      %v901 = vpack.c.bf16 %v869, %v869
      %v902 = vpack.c.bf16 %v870, %v870
      %v903 = vpack.c.bf16 %v871, %v871
      %v904 = vpack.c.bf16 %v872, %v872
      %v905 = vpack.c.bf16 %v873, %v873
      %v906 = vpack.c.bf16 %v874, %v874
      %v907 = vpack.c.bf16 %v875, %v875
      %v908 = vpack.c.bf16 %v876, %v876
      %v909 = vpack.c.bf16 %v877, %v877
      %v910 = vpack.c.bf16 %v878, %v878
      %v911 = vpack.c.bf16 %v879, %v879
      %v912 = vpack.c.bf16 %v880, %v880
      %v913 = vpack.c.bf16 %v881, %v881
      %v914 = vpack.c.bf16 %v882, %v882
      %v915 = vpack.c.bf16 %v883, %v883
      %v916 = vpack.c.bf16 %v884, %v884
      %v917 = vpack.c.bf16 %v885, %v885
      %v918 = vpack.c.bf16 %v886, %v886
      %v919 = vpack.c.bf16 %v887, %v887
      %v920 = vpack.c.bf16 %v888, %v888
      %v921 = vpack.c.bf16 %v889, %v889
      %v922 = vpack.c.bf16 %v890, %v890
      %v923 = vpack.c.bf16 %v891, %v891
      %v924 = vpack.c.bf16 %v892, %v892
      %v925 = vpack.c.bf16 %v893, %v893
      %v926 = vpack.c.bf16 %v894, %v894
      %v927 = vpack.c.bf16 %v895, %v895
      %v928 = vpack.c.bf16 %v896, %v896
      %v929 = vpack.c.bf16 %v897, %v897
      %v930 = vpack.c.bf16 %v898, %v898
      %931 = vst [vmem:[#allocation3 + $0x10] sm:$0xf] %v899
      %932 = vst [vmem:[#allocation3 + $0x34] sm:$0xf] %v900
      %933 = vst [vmem:[#allocation3 + $0x58] sm:$0xf] %v901
      %934 = vst [vmem:[#allocation3 + $0x7c] sm:$0xf] %v902
      %935 = vst [vmem:[#allocation3 + $0xa0] sm:$0xf] %v903
      %936 = vst [vmem:[#allocation3 + $0xc4] sm:$0xf] %v904
      %937 = vst [vmem:[#allocation3 + $0xe8] sm:$0xf] %v905
      %938 = vst [vmem:[#allocation3 + $0x10c] sm:$0xf] %v906
      %939 = vst [vmem:[#allocation3 + $0x130] sm:$0xf] %v907
      %940 = vst [vmem:[#allocation3 + $0x154] sm:$0xf] %v908
      %941 = vst [vmem:[#allocation3 + $0x178] sm:$0xf] %v909
      %942 = vst [vmem:[#allocation3 + $0x19c] sm:$0xf] %v910
      %943 = vst [vmem:[#allocation3 + $0x1c0] sm:$0xf] %v911
      %944 = vst [vmem:[#allocation3 + $0x1e4] sm:$0xf] %v912
      %945 = vst [vmem:[#allocation3 + $0x208] sm:$0xf] %v913
      %946 = vst [vmem:[#allocation3 + $0x22c] sm:$0xf] %v914
      %947 = vst [vmem:[#allocation3 + $0x250] sm:$0xf] %v915
      %948 = vst [vmem:[#allocation3 + $0x274] sm:$0xf] %v916
      %949 = vst [vmem:[#allocation3 + $0x298] sm:$0xf] %v917
      %950 = vst [vmem:[#allocation3 + $0x2bc] sm:$0xf] %v918
      %951 = vst [vmem:[#allocation3 + $0x2e0] sm:$0xf] %v919
      %952 = vst [vmem:[#allocation3 + $0x304] sm:$0xf] %v920
      %953 = vst [vmem:[#allocation3 + $0x328] sm:$0xf] %v921
      %954 = vst [vmem:[#allocation3 + $0x34c] sm:$0xf] %v922
      %955 = vst [vmem:[#allocation3 + $0x370] sm:$0xf] %v923
      %956 = vst [vmem:[#allocation3 + $0x394] sm:$0xf] %v924
      %957 = vst [vmem:[#allocation3 + $0x3b8] sm:$0xf] %v925
      %958 = vst [vmem:[#allocation3 + $0x3dc] sm:$0xf] %v926
      %959 = vst [vmem:[#allocation3 + $0x400] sm:$0xf] %v927
      %960 = vst [vmem:[#allocation3 + $0x424] sm:$0xf] %v928
      %961 = vst [vmem:[#allocation3 + $0x448] sm:$0xf] %v929
      %962 = vst [vmem:[#allocation3 + $0x46c] sm:$0xf] %v930
      %v963 = vld [vmem:[%s450 + $0x2] sm:$0xff]
      %v964 = vld [vmem:[%s450 + $0xa] sm:$0xff]
      %v965 = vld [vmem:[%s450 + $0x1a] sm:$0xff]
      %v966 = vld [vmem:[%s450 + $0x22] sm:$0xff]
      %v967 = vld [vmem:[%s450 + $0x32] sm:$0xff]
      %v968 = vld [vmem:[%s450 + $0x3a] sm:$0xff]
      %v969 = vld [vmem:[%s450 + $0x4a] sm:$0xff]
      %v970 = vld [vmem:[%s450 + $0x52] sm:$0xff]
      %v971 = vld [vmem:[%s450 + $0x62] sm:$0xff]
      %v972 = vld [vmem:[%s450 + $0x6a] sm:$0xff]
      %v973 = vld [vmem:[%s450 + $0x7a] sm:$0xff]
      %v974 = vld [vmem:[%s450 + $0x82] sm:$0xff]
      %v975 = vld [vmem:[%s450 + $0x92] sm:$0xff]
      %v976 = vld [vmem:[%s450 + $0x9a] sm:$0xff]
      %v977 = vld [vmem:[%s450 + $0xaa] sm:$0xff]
      %v978 = vld [vmem:[%s450 + $0xb2] sm:$0xff]
      %v979 = vld [vmem:[%s450 + $0xc2] sm:$0xff]
      %v980 = vld [vmem:[%s450 + $0xca] sm:$0xff]
      %v981 = vld [vmem:[%s450 + $0xda] sm:$0xff]
      %v982 = vld [vmem:[%s450 + $0xe2] sm:$0xff]
      %v983 = vld [vmem:[%s450 + $0xf2] sm:$0xff]
      %v984 = vld [vmem:[%s450 + $0xfa] sm:$0xff]
      %v985 = vld [vmem:[%s450 + $0x10a] sm:$0xff]
      %v986 = vld [vmem:[%s450 + $0x112] sm:$0xff]
      %v987 = vld [vmem:[%s450 + $0x122] sm:$0xff]
      %v988 = vld [vmem:[%s450 + $0x12a] sm:$0xff]
      %v989 = vld [vmem:[%s450 + $0x13a] sm:$0xff]
      %v990 = vld [vmem:[%s450 + $0x142] sm:$0xff]
      %v991 = vld [vmem:[%s450 + $0x152] sm:$0xff]
      %v992 = vld [vmem:[%s450 + $0x15a] sm:$0xff]
      %v993 = vld [vmem:[%s450 + $0x16a] sm:$0xff]
      %v994 = vld [vmem:[%s450 + $0x172] sm:$0xff]
      %v995 = vpack.c.bf16 %v963, %v963
      %v996 = vpack.c.bf16 %v964, %v964
      %v997 = vpack.c.bf16 %v965, %v965
      %v998 = vpack.c.bf16 %v966, %v966
      %v999 = vpack.c.bf16 %v967, %v967
      %v1000 = vpack.c.bf16 %v968, %v968
      %v1001 = vpack.c.bf16 %v969, %v969
      %v1002 = vpack.c.bf16 %v970, %v970
      %v1003 = vpack.c.bf16 %v971, %v971
      %v1004 = vpack.c.bf16 %v972, %v972
      %v1005 = vpack.c.bf16 %v973, %v973
      %v1006 = vpack.c.bf16 %v974, %v974
      %v1007 = vpack.c.bf16 %v975, %v975
      %v1008 = vpack.c.bf16 %v976, %v976
      %v1009 = vpack.c.bf16 %v977, %v977
      %v1010 = vpack.c.bf16 %v978, %v978
      %v1011 = vpack.c.bf16 %v979, %v979
      %v1012 = vpack.c.bf16 %v980, %v980
      %v1013 = vpack.c.bf16 %v981, %v981
      %v1014 = vpack.c.bf16 %v982, %v982
      %v1015 = vpack.c.bf16 %v983, %v983
      %v1016 = vpack.c.bf16 %v984, %v984
      %v1017 = vpack.c.bf16 %v985, %v985
      %v1018 = vpack.c.bf16 %v986, %v986
      %v1019 = vpack.c.bf16 %v987, %v987
      %v1020 = vpack.c.bf16 %v988, %v988
      %v1021 = vpack.c.bf16 %v989, %v989
      %v1022 = vpack.c.bf16 %v990, %v990
      %v1023 = vpack.c.bf16 %v991, %v991
      %v1024 = vpack.c.bf16 %v992, %v992
      %v1025 = vpack.c.bf16 %v993, %v993
      %v1026 = vpack.c.bf16 %v994, %v994
      %1027 = vst [vmem:[#allocation3 + $0x14] sm:$0xf] %v995
      %1028 = vst [vmem:[#allocation3 + $0x38] sm:$0xf] %v996
      %1029 = vst [vmem:[#allocation3 + $0x5c] sm:$0xf] %v997
      %1030 = vst [vmem:[#allocation3 + $0x80] sm:$0xf] %v998
      %1031 = vst [vmem:[#allocation3 + $0xa4] sm:$0xf] %v999
      %1032 = vst [vmem:[#allocation3 + $0xc8] sm:$0xf] %v1000
      %1033 = vst [vmem:[#allocation3 + $0xec] sm:$0xf] %v1001
      %1034 = vst [vmem:[#allocation3 + $0x110] sm:$0xf] %v1002
      %1035 = vst [vmem:[#allocation3 + $0x134] sm:$0xf] %v1003
      %1036 = vst [vmem:[#allocation3 + $0x158] sm:$0xf] %v1004
      %1037 = vst [vmem:[#allocation3 + $0x17c] sm:$0xf] %v1005
      %1038 = vst [vmem:[#allocation3 + $0x1a0] sm:$0xf] %v1006
      %1039 = vst [vmem:[#allocation3 + $0x1c4] sm:$0xf] %v1007
      %1040 = vst [vmem:[#allocation3 + $0x1e8] sm:$0xf] %v1008
      %1041 = vst [vmem:[#allocation3 + $0x20c] sm:$0xf] %v1009
      %1042 = vst [vmem:[#allocation3 + $0x230] sm:$0xf] %v1010
      %1043 = vst [vmem:[#allocation3 + $0x254] sm:$0xf] %v1011
      %1044 = vst [vmem:[#allocation3 + $0x278] sm:$0xf] %v1012
      %1045 = vst [vmem:[#allocation3 + $0x29c] sm:$0xf] %v1013
      %1046 = vst [vmem:[#allocation3 + $0x2c0] sm:$0xf] %v1014
      %1047 = vst [vmem:[#allocation3 + $0x2e4] sm:$0xf] %v1015
      %1048 = vst [vmem:[#allocation3 + $0x308] sm:$0xf] %v1016
      %1049 = vst [vmem:[#allocation3 + $0x32c] sm:$0xf] %v1017
      %1050 = vst [vmem:[#allocation3 + $0x350] sm:$0xf] %v1018
      %1051 = vst [vmem:[#allocation3 + $0x374] sm:$0xf] %v1019
      %1052 = vst [vmem:[#allocation3 + $0x398] sm:$0xf] %v1020
      %1053 = vst [vmem:[#allocation3 + $0x3bc] sm:$0xf] %v1021
      %1054 = vst [vmem:[#allocation3 + $0x3e0] sm:$0xf] %v1022
      %1055 = vst [vmem:[#allocation3 + $0x404] sm:$0xf] %v1023
      %1056 = vst [vmem:[#allocation3 + $0x428] sm:$0xf] %v1024
      %1057 = vst [vmem:[#allocation3 + $0x44c] sm:$0xf] %v1025
      %1058 = vst [vmem:[#allocation3 + $0x470] sm:$0xf] %v1026
      %s1059 = scalar_lea.vmem [#allocation2], 48
      %v1060 = vld [vmem:[%s1059] sm:$0xff]
      %v1061 = vld [vmem:[%s1059 + $0x8] sm:$0xff]
      %v1062 = vld [vmem:[%s1059 + $0x18] sm:$0xff]
      %v1063 = vld [vmem:[%s1059 + $0x20] sm:$0xff]
      %v1064 = vld [vmem:[%s1059 + $0x30] sm:$0xff]
      %v1065 = vld [vmem:[%s1059 + $0x38] sm:$0xff]
      %v1066 = vld [vmem:[%s1059 + $0x48] sm:$0xff]
      %v1067 = vld [vmem:[%s1059 + $0x50] sm:$0xff]
      %v1068 = vld [vmem:[%s1059 + $0x60] sm:$0xff]
      %v1069 = vld [vmem:[%s1059 + $0x68] sm:$0xff]
      %v1070 = vld [vmem:[%s1059 + $0x78] sm:$0xff]
      %v1071 = vld [vmem:[%s1059 + $0x80] sm:$0xff]
      %v1072 = vld [vmem:[%s1059 + $0x90] sm:$0xff]
      %v1073 = vld [vmem:[%s1059 + $0x98] sm:$0xff]
      %v1074 = vld [vmem:[%s1059 + $0xa8] sm:$0xff]
      %v1075 = vld [vmem:[%s1059 + $0xb0] sm:$0xff]
      %v1076 = vld [vmem:[%s1059 + $0xc0] sm:$0xff]
      %v1077 = vld [vmem:[%s1059 + $0xc8] sm:$0xff]
      %v1078 = vld [vmem:[%s1059 + $0xd8] sm:$0xff]
      %v1079 = vld [vmem:[%s1059 + $0xe0] sm:$0xff]
      %v1080 = vld [vmem:[%s1059 + $0xf0] sm:$0xff]
      %v1081 = vld [vmem:[%s1059 + $0xf8] sm:$0xff]
      %v1082 = vld [vmem:[%s1059 + $0x108] sm:$0xff]
      %v1083 = vld [vmem:[%s1059 + $0x110] sm:$0xff]
      %v1084 = vld [vmem:[%s1059 + $0x120] sm:$0xff]
      %v1085 = vld [vmem:[%s1059 + $0x128] sm:$0xff]
      %v1086 = vld [vmem:[%s1059 + $0x138] sm:$0xff]
      %v1087 = vld [vmem:[%s1059 + $0x140] sm:$0xff]
      %v1088 = vld [vmem:[%s1059 + $0x150] sm:$0xff]
      %v1089 = vld [vmem:[%s1059 + $0x158] sm:$0xff]
      %v1090 = vld [vmem:[%s1059 + $0x168] sm:$0xff]
      %v1091 = vld [vmem:[%s1059 + $0x170] sm:$0xff]
      %v1092 = vpack.c.bf16 %v1060, %v1060
      %v1093 = vpack.c.bf16 %v1061, %v1061
      %v1094 = vpack.c.bf16 %v1062, %v1062
      %v1095 = vpack.c.bf16 %v1063, %v1063
      %v1096 = vpack.c.bf16 %v1064, %v1064
      %v1097 = vpack.c.bf16 %v1065, %v1065
      %v1098 = vpack.c.bf16 %v1066, %v1066
      %v1099 = vpack.c.bf16 %v1067, %v1067
      %v1100 = vpack.c.bf16 %v1068, %v1068
      %v1101 = vpack.c.bf16 %v1069, %v1069
      %v1102 = vpack.c.bf16 %v1070, %v1070
      %v1103 = vpack.c.bf16 %v1071, %v1071
      %v1104 = vpack.c.bf16 %v1072, %v1072
      %v1105 = vpack.c.bf16 %v1073, %v1073
      %v1106 = vpack.c.bf16 %v1074, %v1074
      %v1107 = vpack.c.bf16 %v1075, %v1075
      %v1108 = vpack.c.bf16 %v1076, %v1076
      %v1109 = vpack.c.bf16 %v1077, %v1077
      %v1110 = vpack.c.bf16 %v1078, %v1078
      %v1111 = vpack.c.bf16 %v1079, %v1079
      %v1112 = vpack.c.bf16 %v1080, %v1080
      %v1113 = vpack.c.bf16 %v1081, %v1081
      %v1114 = vpack.c.bf16 %v1082, %v1082
      %v1115 = vpack.c.bf16 %v1083, %v1083
      %v1116 = vpack.c.bf16 %v1084, %v1084
      %v1117 = vpack.c.bf16 %v1085, %v1085
      %v1118 = vpack.c.bf16 %v1086, %v1086
      %v1119 = vpack.c.bf16 %v1087, %v1087
      %v1120 = vpack.c.bf16 %v1088, %v1088
      %v1121 = vpack.c.bf16 %v1089, %v1089
      %v1122 = vpack.c.bf16 %v1090, %v1090
      %v1123 = vpack.c.bf16 %v1091, %v1091
      %1124 = vst [vmem:[#allocation3 + $0x18] sm:$0xf] %v1092
      %1125 = vst [vmem:[#allocation3 + $0x3c] sm:$0xf] %v1093
      %1126 = vst [vmem:[#allocation3 + $0x60] sm:$0xf] %v1094
      %1127 = vst [vmem:[#allocation3 + $0x84] sm:$0xf] %v1095
      %1128 = vst [vmem:[#allocation3 + $0xa8] sm:$0xf] %v1096
      %1129 = vst [vmem:[#allocation3 + $0xcc] sm:$0xf] %v1097
      %1130 = vst [vmem:[#allocation3 + $0xf0] sm:$0xf] %v1098
      %1131 = vst [vmem:[#allocation3 + $0x114] sm:$0xf] %v1099
      %1132 = vst [vmem:[#allocation3 + $0x138] sm:$0xf] %v1100
      %1133 = vst [vmem:[#allocation3 + $0x15c] sm:$0xf] %v1101
      %1134 = vst [vmem:[#allocation3 + $0x180] sm:$0xf] %v1102
      %1135 = vst [vmem:[#allocation3 + $0x1a4] sm:$0xf] %v1103
      %1136 = vst [vmem:[#allocation3 + $0x1c8] sm:$0xf] %v1104
      %1137 = vst [vmem:[#allocation3 + $0x1ec] sm:$0xf] %v1105
      %1138 = vst [vmem:[#allocation3 + $0x210] sm:$0xf] %v1106
      %1139 = vst [vmem:[#allocation3 + $0x234] sm:$0xf] %v1107
      %1140 = vst [vmem:[#allocation3 + $0x258] sm:$0xf] %v1108
      %1141 = vst [vmem:[#allocation3 + $0x27c] sm:$0xf] %v1109
      %1142 = vst [vmem:[#allocation3 + $0x2a0] sm:$0xf] %v1110
      %1143 = vst [vmem:[#allocation3 + $0x2c4] sm:$0xf] %v1111
      %1144 = vst [vmem:[#allocation3 + $0x2e8] sm:$0xf] %v1112
      %1145 = vst [vmem:[#allocation3 + $0x30c] sm:$0xf] %v1113
      %1146 = vst [vmem:[#allocation3 + $0x330] sm:$0xf] %v1114
      %1147 = vst [vmem:[#allocation3 + $0x354] sm:$0xf] %v1115
      %1148 = vst [vmem:[#allocation3 + $0x378] sm:$0xf] %v1116
      %1149 = vst [vmem:[#allocation3 + $0x39c] sm:$0xf] %v1117
      %1150 = vst [vmem:[#allocation3 + $0x3c0] sm:$0xf] %v1118
      %1151 = vst [vmem:[#allocation3 + $0x3e4] sm:$0xf] %v1119
      %1152 = vst [vmem:[#allocation3 + $0x408] sm:$0xf] %v1120
      %1153 = vst [vmem:[#allocation3 + $0x42c] sm:$0xf] %v1121
      %1154 = vst [vmem:[#allocation3 + $0x450] sm:$0xf] %v1122
      %1155 = vst [vmem:[#allocation3 + $0x474] sm:$0xf] %v1123
      %v1156 = vld [vmem:[%s1059 + $0x1] sm:$0xff]
      %v1157 = vld [vmem:[%s1059 + $0x9] sm:$0xff]
      %v1158 = vld [vmem:[%s1059 + $0x19] sm:$0xff]
      %v1159 = vld [vmem:[%s1059 + $0x21] sm:$0xff]
      %v1160 = vld [vmem:[%s1059 + $0x31] sm:$0xff]
      %v1161 = vld [vmem:[%s1059 + $0x39] sm:$0xff]
      %v1162 = vld [vmem:[%s1059 + $0x49] sm:$0xff]
      %v1163 = vld [vmem:[%s1059 + $0x51] sm:$0xff]
      %v1164 = vld [vmem:[%s1059 + $0x61] sm:$0xff]
      %v1165 = vld [vmem:[%s1059 + $0x69] sm:$0xff]
      %v1166 = vld [vmem:[%s1059 + $0x79] sm:$0xff]
      %v1167 = vld [vmem:[%s1059 + $0x81] sm:$0xff]
      %v1168 = vld [vmem:[%s1059 + $0x91] sm:$0xff]
      %v1169 = vld [vmem:[%s1059 + $0x99] sm:$0xff]
      %v1170 = vld [vmem:[%s1059 + $0xa9] sm:$0xff]
      %v1171 = vld [vmem:[%s1059 + $0xb1] sm:$0xff]
      %v1172 = vld [vmem:[%s1059 + $0xc1] sm:$0xff]
      %v1173 = vld [vmem:[%s1059 + $0xc9] sm:$0xff]
      %v1174 = vld [vmem:[%s1059 + $0xd9] sm:$0xff]
      %v1175 = vld [vmem:[%s1059 + $0xe1] sm:$0xff]
      %v1176 = vld [vmem:[%s1059 + $0xf1] sm:$0xff]
      %v1177 = vld [vmem:[%s1059 + $0xf9] sm:$0xff]
      %v1178 = vld [vmem:[%s1059 + $0x109] sm:$0xff]
      %v1179 = vld [vmem:[%s1059 + $0x111] sm:$0xff]
      %v1180 = vld [vmem:[%s1059 + $0x121] sm:$0xff]
      %v1181 = vld [vmem:[%s1059 + $0x129] sm:$0xff]
      %v1182 = vld [vmem:[%s1059 + $0x139] sm:$0xff]
      %v1183 = vld [vmem:[%s1059 + $0x141] sm:$0xff]
      %v1184 = vld [vmem:[%s1059 + $0x151] sm:$0xff]
      %v1185 = vld [vmem:[%s1059 + $0x159] sm:$0xff]
      %v1186 = vld [vmem:[%s1059 + $0x169] sm:$0xff]
      %v1187 = vld [vmem:[%s1059 + $0x171] sm:$0xff]
      %v1188 = vpack.c.bf16 %v1156, %v1156
      %v1189 = vpack.c.bf16 %v1157, %v1157
      %v1190 = vpack.c.bf16 %v1158, %v1158
      %v1191 = vpack.c.bf16 %v1159, %v1159
      %v1192 = vpack.c.bf16 %v1160, %v1160
      %v1193 = vpack.c.bf16 %v1161, %v1161
      %v1194 = vpack.c.bf16 %v1162, %v1162
      %v1195 = vpack.c.bf16 %v1163, %v1163
      %v1196 = vpack.c.bf16 %v1164, %v1164
      %v1197 = vpack.c.bf16 %v1165, %v1165
      %v1198 = vpack.c.bf16 %v1166, %v1166
      %v1199 = vpack.c.bf16 %v1167, %v1167
      %v1200 = vpack.c.bf16 %v1168, %v1168
      %v1201 = vpack.c.bf16 %v1169, %v1169
      %v1202 = vpack.c.bf16 %v1170, %v1170
      %v1203 = vpack.c.bf16 %v1171, %v1171
      %v1204 = vpack.c.bf16 %v1172, %v1172
      %v1205 = vpack.c.bf16 %v1173, %v1173
      %v1206 = vpack.c.bf16 %v1174, %v1174
      %v1207 = vpack.c.bf16 %v1175, %v1175
      %v1208 = vpack.c.bf16 %v1176, %v1176
      %v1209 = vpack.c.bf16 %v1177, %v1177
      %v1210 = vpack.c.bf16 %v1178, %v1178
      %v1211 = vpack.c.bf16 %v1179, %v1179
      %v1212 = vpack.c.bf16 %v1180, %v1180
      %v1213 = vpack.c.bf16 %v1181, %v1181
      %v1214 = vpack.c.bf16 %v1182, %v1182
      %v1215 = vpack.c.bf16 %v1183, %v1183
      %v1216 = vpack.c.bf16 %v1184, %v1184
      %v1217 = vpack.c.bf16 %v1185, %v1185
      %v1218 = vpack.c.bf16 %v1186, %v1186
      %v1219 = vpack.c.bf16 %v1187, %v1187
      %1220 = vst [vmem:[#allocation3 + $0x1c] sm:$0xf] %v1188
      %1221 = vst [vmem:[#allocation3 + $0x40] sm:$0xf] %v1189
      %1222 = vst [vmem:[#allocation3 + $0x64] sm:$0xf] %v1190
      %1223 = vst [vmem:[#allocation3 + $0x88] sm:$0xf] %v1191
      %1224 = vst [vmem:[#allocation3 + $0xac] sm:$0xf] %v1192
      %1225 = vst [vmem:[#allocation3 + $0xd0] sm:$0xf] %v1193
      %1226 = vst [vmem:[#allocation3 + $0xf4] sm:$0xf] %v1194
      %1227 = vst [vmem:[#allocation3 + $0x118] sm:$0xf] %v1195
      %1228 = vst [vmem:[#allocation3 + $0x13c] sm:$0xf] %v1196
      %1229 = vst [vmem:[#allocation3 + $0x160] sm:$0xf] %v1197
      %1230 = vst [vmem:[#allocation3 + $0x184] sm:$0xf] %v1198
      %1231 = vst [vmem:[#allocation3 + $0x1a8] sm:$0xf] %v1199
      %1232 = vst [vmem:[#allocation3 + $0x1cc] sm:$0xf] %v1200
      %1233 = vst [vmem:[#allocation3 + $0x1f0] sm:$0xf] %v1201
      %1234 = vst [vmem:[#allocation3 + $0x214] sm:$0xf] %v1202
      %1235 = vst [vmem:[#allocation3 + $0x238] sm:$0xf] %v1203
      %1236 = vst [vmem:[#allocation3 + $0x25c] sm:$0xf] %v1204
      %1237 = vst [vmem:[#allocation3 + $0x280] sm:$0xf] %v1205
      %1238 = vst [vmem:[#allocation3 + $0x2a4] sm:$0xf] %v1206
      %1239 = vst [vmem:[#allocation3 + $0x2c8] sm:$0xf] %v1207
      %1240 = vst [vmem:[#allocation3 + $0x2ec] sm:$0xf] %v1208
      %1241 = vst [vmem:[#allocation3 + $0x310] sm:$0xf] %v1209
      %1242 = vst [vmem:[#allocation3 + $0x334] sm:$0xf] %v1210
      %1243 = vst [vmem:[#allocation3 + $0x358] sm:$0xf] %v1211
      %1244 = vst [vmem:[#allocation3 + $0x37c] sm:$0xf] %v1212
      %1245 = vst [vmem:[#allocation3 + $0x3a0] sm:$0xf] %v1213
      %1246 = vst [vmem:[#allocation3 + $0x3c4] sm:$0xf] %v1214
      %1247 = vst [vmem:[#allocation3 + $0x3e8] sm:$0xf] %v1215
      %1248 = vst [vmem:[#allocation3 + $0x40c] sm:$0xf] %v1216
      %1249 = vst [vmem:[#allocation3 + $0x430] sm:$0xf] %v1217
      %1250 = vst [vmem:[#allocation3 + $0x454] sm:$0xf] %v1218
      %1251 = vst [vmem:[#allocation3 + $0x478] sm:$0xf] %v1219
      %v1252 = vld [vmem:[%s1059 + $0x2] sm:$0xff]
      %v1253 = vld [vmem:[%s1059 + $0xa] sm:$0xff]
      %v1254 = vld [vmem:[%s1059 + $0x1a] sm:$0xff]
      %v1255 = vld [vmem:[%s1059 + $0x22] sm:$0xff]
      %v1256 = vld [vmem:[%s1059 + $0x32] sm:$0xff]
      %v1257 = vld [vmem:[%s1059 + $0x3a] sm:$0xff]
      %v1258 = vld [vmem:[%s1059 + $0x4a] sm:$0xff]
      %v1259 = vld [vmem:[%s1059 + $0x52] sm:$0xff]
      %v1260 = vld [vmem:[%s1059 + $0x62] sm:$0xff]
      %v1261 = vld [vmem:[%s1059 + $0x6a] sm:$0xff]
      %v1262 = vld [vmem:[%s1059 + $0x7a] sm:$0xff]
      %v1263 = vld [vmem:[%s1059 + $0x82] sm:$0xff]
      %v1264 = vld [vmem:[%s1059 + $0x92] sm:$0xff]
      %v1265 = vld [vmem:[%s1059 + $0x9a] sm:$0xff]
      %v1266 = vld [vmem:[%s1059 + $0xaa] sm:$0xff]
      %v1267 = vld [vmem:[%s1059 + $0xb2] sm:$0xff]
      %v1268 = vld [vmem:[%s1059 + $0xc2] sm:$0xff]
      %v1269 = vld [vmem:[%s1059 + $0xca] sm:$0xff]
      %v1270 = vld [vmem:[%s1059 + $0xda] sm:$0xff]
      %v1271 = vld [vmem:[%s1059 + $0xe2] sm:$0xff]
      %v1272 = vld [vmem:[%s1059 + $0xf2] sm:$0xff]
      %v1273 = vld [vmem:[%s1059 + $0xfa] sm:$0xff]
      %v1274 = vld [vmem:[%s1059 + $0x10a] sm:$0xff]
      %v1275 = vld [vmem:[%s1059 + $0x112] sm:$0xff]
      %v1276 = vld [vmem:[%s1059 + $0x122] sm:$0xff]
      %v1277 = vld [vmem:[%s1059 + $0x12a] sm:$0xff]
      %v1278 = vld [vmem:[%s1059 + $0x13a] sm:$0xff]
      %v1279 = vld [vmem:[%s1059 + $0x142] sm:$0xff]
      %v1280 = vld [vmem:[%s1059 + $0x152] sm:$0xff]
      %v1281 = vld [vmem:[%s1059 + $0x15a] sm:$0xff]
      %v1282 = vld [vmem:[%s1059 + $0x16a] sm:$0xff]
      %v1283 = vld [vmem:[%s1059 + $0x172] sm:$0xff]
      %v1284 = vpack.c.bf16 %v1252, %v1252
      %v1285 = vpack.c.bf16 %v1253, %v1253
      %v1286 = vpack.c.bf16 %v1254, %v1254
      %v1287 = vpack.c.bf16 %v1255, %v1255
      %v1288 = vpack.c.bf16 %v1256, %v1256
      %v1289 = vpack.c.bf16 %v1257, %v1257
      %v1290 = vpack.c.bf16 %v1258, %v1258
      %v1291 = vpack.c.bf16 %v1259, %v1259
      %v1292 = vpack.c.bf16 %v1260, %v1260
      %v1293 = vpack.c.bf16 %v1261, %v1261
      %v1294 = vpack.c.bf16 %v1262, %v1262
      %v1295 = vpack.c.bf16 %v1263, %v1263
      %v1296 = vpack.c.bf16 %v1264, %v1264
      %v1297 = vpack.c.bf16 %v1265, %v1265
      %v1298 = vpack.c.bf16 %v1266, %v1266
      %v1299 = vpack.c.bf16 %v1267, %v1267
      %v1300 = vpack.c.bf16 %v1268, %v1268
      %v1301 = vpack.c.bf16 %v1269, %v1269
      %v1302 = vpack.c.bf16 %v1270, %v1270
      %v1303 = vpack.c.bf16 %v1271, %v1271
      %v1304 = vpack.c.bf16 %v1272, %v1272
      %v1305 = vpack.c.bf16 %v1273, %v1273
      %v1306 = vpack.c.bf16 %v1274, %v1274
      %v1307 = vpack.c.bf16 %v1275, %v1275
      %v1308 = vpack.c.bf16 %v1276, %v1276
      %v1309 = vpack.c.bf16 %v1277, %v1277
      %v1310 = vpack.c.bf16 %v1278, %v1278
      %v1311 = vpack.c.bf16 %v1279, %v1279
      %v1312 = vpack.c.bf16 %v1280, %v1280
      %v1313 = vpack.c.bf16 %v1281, %v1281
      %v1314 = vpack.c.bf16 %v1282, %v1282
      %v1315 = vpack.c.bf16 %v1283, %v1283
      %1316 = vst [vmem:[#allocation3 + $0x20] sm:$0xf] %v1284
      %1317 = vst [vmem:[#allocation3 + $0x44] sm:$0xf] %v1285
      %1318 = vst [vmem:[#allocation3 + $0x68] sm:$0xf] %v1286
      %1319 = vst [vmem:[#allocation3 + $0x8c] sm:$0xf] %v1287
      %1320 = vst [vmem:[#allocation3 + $0xb0] sm:$0xf] %v1288
      %1321 = vst [vmem:[#allocation3 + $0xd4] sm:$0xf] %v1289
      %1322 = vst [vmem:[#allocation3 + $0xf8] sm:$0xf] %v1290
      %1323 = vst [vmem:[#allocation3 + $0x11c] sm:$0xf] %v1291
      %1324 = vst [vmem:[#allocation3 + $0x140] sm:$0xf] %v1292
      %1325 = vst [vmem:[#allocation3 + $0x164] sm:$0xf] %v1293
      %1326 = vst [vmem:[#allocation3 + $0x188] sm:$0xf] %v1294
      %1327 = vst [vmem:[#allocation3 + $0x1ac] sm:$0xf] %v1295
      %1328 = vst [vmem:[#allocation3 + $0x1d0] sm:$0xf] %v1296
      %1329 = vst [vmem:[#allocation3 + $0x1f4] sm:$0xf] %v1297
      %1330 = vst [vmem:[#allocation3 + $0x218] sm:$0xf] %v1298
      %1331 = vst [vmem:[#allocation3 + $0x23c] sm:$0xf] %v1299
      %1332 = vst [vmem:[#allocation3 + $0x260] sm:$0xf] %v1300
      %1333 = vst [vmem:[#allocation3 + $0x284] sm:$0xf] %v1301
      %1334 = vst [vmem:[#allocation3 + $0x2a8] sm:$0xf] %v1302
      %1335 = vst [vmem:[#allocation3 + $0x2cc] sm:$0xf] %v1303
      %1336 = vst [vmem:[#allocation3 + $0x2f0] sm:$0xf] %v1304
      %1337 = vst [vmem:[#allocation3 + $0x314] sm:$0xf] %v1305
      %1338 = vst [vmem:[#allocation3 + $0x338] sm:$0xf] %v1306
      %1339 = vst [vmem:[#allocation3 + $0x35c] sm:$0xf] %v1307
      %1340 = vst [vmem:[#allocation3 + $0x380] sm:$0xf] %v1308
      %1341 = vst [vmem:[#allocation3 + $0x3a4] sm:$0xf] %v1309
      %1342 = vst [vmem:[#allocation3 + $0x3c8] sm:$0xf] %v1310
      %1343 = vst [vmem:[#allocation3 + $0x3ec] sm:$0xf] %v1311
      %1344 = vst [vmem:[#allocation3 + $0x410] sm:$0xf] %v1312
      %1345 = vst [vmem:[#allocation3 + $0x434] sm:$0xf] %v1313
      %1346 = vst [vmem:[#allocation3 + $0x458] sm:$0xf] %v1314
      %1347 = vst [vmem:[#allocation3 + $0x47c] sm:$0xf] %v1315
      %v1348 = vld [vmem:[#allocation3] sm:$0xff]
      %v1349 = vld [vmem:[#allocation3 + $0x8] sm:$0xff]
      %v1350 = vld [vmem:[#allocation3 + $0x10] sm:$0xff]
      %v1351 = vld [vmem:[#allocation3 + $0x18] sm:$0xff]
      %v1352 = vld [vmem:[#allocation3 + $0x20] sm:$0xf]
      %v1353 = vld [vmem:[#allocation3 + $0x24] sm:$0xff]
      %v1354 = vld [vmem:[#allocation3 + $0x2c] sm:$0xff]
      %v1355 = vld [vmem:[#allocation3 + $0x34] sm:$0xff]
      %v1356 = vld [vmem:[#allocation3 + $0x3c] sm:$0xff]
      %v1357 = vld [vmem:[#allocation3 + $0x44] sm:$0xf]
      %v1358 = vld [vmem:[#allocation3 + $0x48] sm:$0xff]
      %v1359 = vld [vmem:[#allocation3 + $0x50] sm:$0xff]
      %v1360 = vld [vmem:[#allocation3 + $0x58] sm:$0xff]
      %v1361 = vld [vmem:[#allocation3 + $0x60] sm:$0xff]
      %v1362 = vld [vmem:[#allocation3 + $0x68] sm:$0xf]
      %v1363 = vld [vmem:[#allocation3 + $0x6c] sm:$0xff]
      %v1364 = vld [vmem:[#allocation3 + $0x74] sm:$0xff]
      %v1365 = vld [vmem:[#allocation3 + $0x7c] sm:$0xff]
      %v1366 = vld [vmem:[#allocation3 + $0x84] sm:$0xff]
      %v1367 = vld [vmem:[#allocation3 + $0x8c] sm:$0xf]
      %v1368 = vld [vmem:[#allocation3 + $0x90] sm:$0xff]
      %v1369 = vld [vmem:[#allocation3 + $0x98] sm:$0xff]
      %v1370 = vld [vmem:[#allocation3 + $0xa0] sm:$0xff]
      %v1371 = vld [vmem:[#allocation3 + $0xa8] sm:$0xff]
      %v1372 = vld [vmem:[#allocation3 + $0xb0] sm:$0xf]
      %v1373 = vld [vmem:[#allocation3 + $0xb4] sm:$0xff]
      %v1374 = vld [vmem:[#allocation3 + $0xbc] sm:$0xff]
      %v1375 = vld [vmem:[#allocation3 + $0xc4] sm:$0xff]
      %v1376 = vld [vmem:[#allocation3 + $0xcc] sm:$0xff]
      %v1377 = vld [vmem:[#allocation3 + $0xd4] sm:$0xf]
      %v1378 = vld [vmem:[#allocation3 + $0xd8] sm:$0xff]
      %v1379 = vld [vmem:[#allocation3 + $0xe0] sm:$0xff]
      %v1380 = vld [vmem:[#allocation3 + $0xe8] sm:$0xff]
      %v1381 = vld [vmem:[#allocation3 + $0xf0] sm:$0xff]
      %v1382 = vld [vmem:[#allocation3 + $0xf8] sm:$0xf]
      %v1383 = vld [vmem:[#allocation3 + $0xfc] sm:$0xff]
      %v1384 = vld [vmem:[#allocation3 + $0x104] sm:$0xff]
      %v1385 = vld [vmem:[#allocation3 + $0x10c] sm:$0xff]
      %v1386 = vld [vmem:[#allocation3 + $0x114] sm:$0xff]
      %v1387 = vld [vmem:[#allocation3 + $0x11c] sm:$0xf]
      %v1388 = vld [vmem:[#allocation3 + $0x120] sm:$0xff]
      %v1389 = vld [vmem:[#allocation3 + $0x128] sm:$0xff]
      %v1390 = vld [vmem:[#allocation3 + $0x130] sm:$0xff]
      %v1391 = vld [vmem:[#allocation3 + $0x138] sm:$0xff]
      %v1392 = vld [vmem:[#allocation3 + $0x140] sm:$0xf]
      %v1393 = vld [vmem:[#allocation3 + $0x144] sm:$0xff]
      %v1394 = vld [vmem:[#allocation3 + $0x14c] sm:$0xff]
      %v1395 = vld [vmem:[#allocation3 + $0x154] sm:$0xff]
      %v1396 = vld [vmem:[#allocation3 + $0x15c] sm:$0xff]
      %v1397 = vld [vmem:[#allocation3 + $0x164] sm:$0xf]
      %v1398 = vld [vmem:[#allocation3 + $0x168] sm:$0xff]
      %v1399 = vld [vmem:[#allocation3 + $0x170] sm:$0xff]
      %v1400 = vld [vmem:[#allocation3 + $0x178] sm:$0xff]
      %v1401 = vld [vmem:[#allocation3 + $0x180] sm:$0xff]
      %v1402 = vld [vmem:[#allocation3 + $0x188] sm:$0xf]
      %v1403 = vld [vmem:[#allocation3 + $0x18c] sm:$0xff]
      %v1404 = vld [vmem:[#allocation3 + $0x194] sm:$0xff]
      %v1405 = vld [vmem:[#allocation3 + $0x19c] sm:$0xff]
      %v1406 = vld [vmem:[#allocation3 + $0x1a4] sm:$0xff]
      %v1407 = vld [vmem:[#allocation3 + $0x1ac] sm:$0xf]
      %v1408 = vld [vmem:[#allocation3 + $0x1b0] sm:$0xff]
      %v1409 = vld [vmem:[#allocation3 + $0x1b8] sm:$0xff]
      %v1410 = vld [vmem:[#allocation3 + $0x1c0] sm:$0xff]
      %v1411 = vld [vmem:[#allocation3 + $0x1c8] sm:$0xff]
      %v1412 = vld [vmem:[#allocation3 + $0x1d0] sm:$0xf]
      %v1413 = vld [vmem:[#allocation3 + $0x1d4] sm:$0xff]
      %v1414 = vld [vmem:[#allocation3 + $0x1dc] sm:$0xff]
      %v1415 = vld [vmem:[#allocation3 + $0x1e4] sm:$0xff]
      %v1416 = vld [vmem:[#allocation3 + $0x1ec] sm:$0xff]
      %v1417 = vld [vmem:[#allocation3 + $0x1f4] sm:$0xf]
      %v1418 = vld [vmem:[#allocation3 + $0x1f8] sm:$0xff]
      %v1419 = vld [vmem:[#allocation3 + $0x200] sm:$0xff]
      %v1420 = vld [vmem:[#allocation3 + $0x208] sm:$0xff]
      %v1421 = vld [vmem:[#allocation3 + $0x210] sm:$0xff]
      %v1422 = vld [vmem:[#allocation3 + $0x218] sm:$0xf]
      %v1423 = vld [vmem:[#allocation3 + $0x21c] sm:$0xff]
      %v1424 = vld [vmem:[#allocation3 + $0x224] sm:$0xff]
      %v1425 = vld [vmem:[#allocation3 + $0x22c] sm:$0xff]
      %v1426 = vld [vmem:[#allocation3 + $0x234] sm:$0xff]
      %v1427 = vld [vmem:[#allocation3 + $0x23c] sm:$0xf]
      %v1428 = vld [vmem:[#allocation3 + $0x240] sm:$0xff]
      %v1429 = vld [vmem:[#allocation3 + $0x248] sm:$0xff]
      %v1430 = vld [vmem:[#allocation3 + $0x250] sm:$0xff]
      %v1431 = vld [vmem:[#allocation3 + $0x258] sm:$0xff]
      %v1432 = vld [vmem:[#allocation3 + $0x260] sm:$0xf]
      %v1433 = vld [vmem:[#allocation3 + $0x264] sm:$0xff]
      %v1434 = vld [vmem:[#allocation3 + $0x26c] sm:$0xff]
      %v1435 = vld [vmem:[#allocation3 + $0x274] sm:$0xff]
      %v1436 = vld [vmem:[#allocation3 + $0x27c] sm:$0xff]
      %v1437 = vld [vmem:[#allocation3 + $0x284] sm:$0xf]
      %v1438 = vld [vmem:[#allocation3 + $0x288] sm:$0xff]
      %v1439 = vld [vmem:[#allocation3 + $0x290] sm:$0xff]
      %v1440 = vld [vmem:[#allocation3 + $0x298] sm:$0xff]
      %v1441 = vld [vmem:[#allocation3 + $0x2a0] sm:$0xff]
      %v1442 = vld [vmem:[#allocation3 + $0x2a8] sm:$0xf]
      %v1443 = vld [vmem:[#allocation3 + $0x2ac] sm:$0xff]
      %v1444 = vld [vmem:[#allocation3 + $0x2b4] sm:$0xff]
      %v1445 = vld [vmem:[#allocation3 + $0x2bc] sm:$0xff]
      %v1446 = vld [vmem:[#allocation3 + $0x2c4] sm:$0xff]
      %v1447 = vld [vmem:[#allocation3 + $0x2cc] sm:$0xf]
      %v1448 = vld [vmem:[#allocation3 + $0x2d0] sm:$0xff]
      %v1449 = vld [vmem:[#allocation3 + $0x2d8] sm:$0xff]
      %v1450 = vld [vmem:[#allocation3 + $0x2e0] sm:$0xff]
      %v1451 = vld [vmem:[#allocation3 + $0x2e8] sm:$0xff]
      %v1452 = vld [vmem:[#allocation3 + $0x2f0] sm:$0xf]
      %v1453 = vld [vmem:[#allocation3 + $0x2f4] sm:$0xff]
      %v1454 = vld [vmem:[#allocation3 + $0x2fc] sm:$0xff]
      %v1455 = vld [vmem:[#allocation3 + $0x304] sm:$0xff]
      %v1456 = vld [vmem:[#allocation3 + $0x30c] sm:$0xff]
      %v1457 = vld [vmem:[#allocation3 + $0x314] sm:$0xf]
      %v1458 = vld [vmem:[#allocation3 + $0x318] sm:$0xff]
      %v1459 = vld [vmem:[#allocation3 + $0x320] sm:$0xff]
      %v1460 = vld [vmem:[#allocation3 + $0x328] sm:$0xff]
      %v1461 = vld [vmem:[#allocation3 + $0x330] sm:$0xff]
      %v1462 = vld [vmem:[#allocation3 + $0x338] sm:$0xf]
      %v1463 = vld [vmem:[#allocation3 + $0x33c] sm:$0xff]
      %v1464 = vld [vmem:[#allocation3 + $0x344] sm:$0xff]
      %v1465 = vld [vmem:[#allocation3 + $0x34c] sm:$0xff]
      %v1466 = vld [vmem:[#allocation3 + $0x354] sm:$0xff]
      %v1467 = vld [vmem:[#allocation3 + $0x35c] sm:$0xf]
      %v1468 = vld [vmem:[#allocation3 + $0x360] sm:$0xff]
      %v1469 = vld [vmem:[#allocation3 + $0x368] sm:$0xff]
      %v1470 = vld [vmem:[#allocation3 + $0x370] sm:$0xff]
      %v1471 = vld [vmem:[#allocation3 + $0x378] sm:$0xff]
      %v1472 = vld [vmem:[#allocation3 + $0x380] sm:$0xf]
      %v1473 = vld [vmem:[#allocation3 + $0x384] sm:$0xff]
      %v1474 = vld [vmem:[#allocation3 + $0x38c] sm:$0xff]
      %v1475 = vld [vmem:[#allocation3 + $0x394] sm:$0xff]
      %v1476 = vld [vmem:[#allocation3 + $0x39c] sm:$0xff]
      %v1477 = vld [vmem:[#allocation3 + $0x3a4] sm:$0xf]
      %v1478 = vld [vmem:[#allocation3 + $0x3a8] sm:$0xff]
      %v1479 = vld [vmem:[#allocation3 + $0x3b0] sm:$0xff]
      %v1480 = vld [vmem:[#allocation3 + $0x3b8] sm:$0xff]
      %v1481 = vld [vmem:[#allocation3 + $0x3c0] sm:$0xff]
      %v1482 = vld [vmem:[#allocation3 + $0x3c8] sm:$0xf]
      %v1483 = vld [vmem:[#allocation3 + $0x3cc] sm:$0xff]
      %v1484 = vld [vmem:[#allocation3 + $0x3d4] sm:$0xff]
      %v1485 = vld [vmem:[#allocation3 + $0x3dc] sm:$0xff]
      %v1486 = vld [vmem:[#allocation3 + $0x3e4] sm:$0xff]
      %v1487 = vld [vmem:[#allocation3 + $0x3ec] sm:$0xf]
      %v1488 = vld [vmem:[#allocation3 + $0x3f0] sm:$0xff]
      %v1489 = vld [vmem:[#allocation3 + $0x3f8] sm:$0xff]
      %v1490 = vld [vmem:[#allocation3 + $0x400] sm:$0xff]
      %v1491 = vld [vmem:[#allocation3 + $0x408] sm:$0xff]
      %v1492 = vld [vmem:[#allocation3 + $0x410] sm:$0xf]
      %v1493 = vld [vmem:[#allocation3 + $0x414] sm:$0xff]
      %v1494 = vld [vmem:[#allocation3 + $0x41c] sm:$0xff]
      %v1495 = vld [vmem:[#allocation3 + $0x424] sm:$0xff]
      %v1496 = vld [vmem:[#allocation3 + $0x42c] sm:$0xff]
      %v1497 = vld [vmem:[#allocation3 + $0x434] sm:$0xf]
      %v1498 = vld [vmem:[#allocation3 + $0x438] sm:$0xff]
      %v1499 = vld [vmem:[#allocation3 + $0x440] sm:$0xff]
      %v1500 = vld [vmem:[#allocation3 + $0x448] sm:$0xff]
      %v1501 = vld [vmem:[#allocation3 + $0x450] sm:$0xff]
      %v1502 = vld [vmem:[#allocation3 + $0x458] sm:$0xf]
      %v1503 = vld [vmem:[#allocation3 + $0x45c] sm:$0xff]
      %v1504 = vld [vmem:[#allocation3 + $0x464] sm:$0xff]
      %v1505 = vld [vmem:[#allocation3 + $0x46c] sm:$0xff]
      %v1506 = vld [vmem:[#allocation3 + $0x474] sm:$0xff]
      %v1507 = vld [vmem:[#allocation3 + $0x47c] sm:$0xf]
      %v1508 = vld [vmem:[%s3] sm:$0xf]
      %v1509 = vld [vmem:[%s3 + $0x4] sm:$0xf]
      %v1510 = vld [vmem:[%s3 + $0x8] sm:$0xf]
      %v1511 = vld [vmem:[%s3 + $0xc] sm:$0xf]
      %v1512 = vld [vmem:[%s3 + $0x10] sm:$0xf]
      %v1513 = vld [vmem:[%s3 + $0x14] sm:$0xf]
      %v1514 = vld [vmem:[%s3 + $0x18] sm:$0xf]
      %v1515 = vld [vmem:[%s3 + $0x1c] sm:$0xf]
      %v1516 = vld [vmem:[%s3 + $0x20] sm:$0xf]
      %v1517 = vld [vmem:[%s3 + $0x24] sm:$0xf]
      %v1518 = vld [vmem:[%s3 + $0x28] sm:$0xf]
      %v1519 = vld [vmem:[%s3 + $0x2c] sm:$0xf]
      %v1520 = vld [vmem:[%s3 + $0x30] sm:$0xf]
      %v1521 = vld [vmem:[%s3 + $0x34] sm:$0xf]
      %v1522 = vld [vmem:[%s3 + $0x38] sm:$0xf]
      %v1523 = vld [vmem:[%s3 + $0x3c] sm:$0xf]
      %v1524 = vld [vmem:[%s3 + $0x40] sm:$0xf]
      %v1525 = vld [vmem:[%s3 + $0x44] sm:$0xf]
      %v1526 = vld [vmem:[%s3 + $0x48] sm:$0xf]
      %v1527 = vld [vmem:[%s3 + $0x4c] sm:$0xf]
      %v1528 = vld [vmem:[%s3 + $0x50] sm:$0xf]
      %v1529 = vld [vmem:[%s3 + $0x54] sm:$0xf]
      %v1530 = vld [vmem:[%s3 + $0x58] sm:$0xf]
      %v1531 = vld [vmem:[%s3 + $0x5c] sm:$0xf]
      %v1532 = vld [vmem:[%s3 + $0x60] sm:$0xf]
      %v1533 = vld [vmem:[%s3 + $0x64] sm:$0xf]
      %v1534 = vld [vmem:[%s3 + $0x68] sm:$0xf]
      %v1535 = vld [vmem:[%s3 + $0x6c] sm:$0xf]
      %v1536 = vld [vmem:[%s3 + $0x70] sm:$0xf]
      %v1537 = vld [vmem:[%s3 + $0x74] sm:$0xf]
      %v1538 = vld [vmem:[%s3 + $0x78] sm:$0xf]
      %v1539 = vld [vmem:[%s3 + $0x7c] sm:$0xf]
      %v1540 = vld [vmem:[%s3 + $0x80] sm:$0xf]
      %v1541 = vld [vmem:[%s3 + $0x84] sm:$0xf]
      %v1542 = vld [vmem:[%s3 + $0x88] sm:$0xf]
      %v1543 = vld [vmem:[%s3 + $0x8c] sm:$0xf]
      %v1544 = vld [vmem:[%s3 + $0x90] sm:$0xf]
      %v1545 = vld [vmem:[%s3 + $0x94] sm:$0xf]
      %v1546 = vld [vmem:[%s3 + $0x98] sm:$0xf]
      %v1547 = vld [vmem:[%s3 + $0x9c] sm:$0xf]
      %v1548 = vld [vmem:[%s3 + $0xa0] sm:$0xf]
      %v1549 = vld [vmem:[%s3 + $0xa4] sm:$0xf]
      %v1550 = vld [vmem:[%s3 + $0xa8] sm:$0xf]
      %v1551 = vld [vmem:[%s3 + $0xac] sm:$0xf]
      %v1552 = vld [vmem:[%s3 + $0xb0] sm:$0xf]
      %v1553 = vld [vmem:[%s3 + $0xb4] sm:$0xf]
      %v1554 = vld [vmem:[%s3 + $0xb8] sm:$0xf]
      %v1555 = vld [vmem:[%s3 + $0xbc] sm:$0xf]
      %v1556 = vld [vmem:[%s3 + $0xc0] sm:$0xf]
      %v1557 = vld [vmem:[%s3 + $0xc4] sm:$0xf]
      %v1558 = vld [vmem:[%s3 + $0xc8] sm:$0xf]
      %v1559 = vld [vmem:[%s3 + $0xcc] sm:$0xf]
      %v1560 = vld [vmem:[%s3 + $0xd0] sm:$0xf]
      %v1561 = vld [vmem:[%s3 + $0xd4] sm:$0xf]
      %v1562 = vld [vmem:[%s3 + $0xd8] sm:$0xf]
      %v1563 = vld [vmem:[%s3 + $0xdc] sm:$0xf]
      %v1564 = vld [vmem:[%s3 + $0xe0] sm:$0xf]
      %v1565 = vld [vmem:[%s3 + $0xe4] sm:$0xf]
      %v1566 = vld [vmem:[%s3 + $0xe8] sm:$0xf]
      %v1567 = vld [vmem:[%s3 + $0xec] sm:$0xf]
      %v1568 = vld [vmem:[%s3 + $0xf0] sm:$0xf]
      %v1569 = vld [vmem:[%s3 + $0xf4] sm:$0xf]
      %v1570 = vld [vmem:[%s3 + $0xf8] sm:$0xf]
      %v1571 = vld [vmem:[%s3 + $0xfc] sm:$0xf]
      %v1572 = vld [vmem:[%s3 + $0x100] sm:$0xf]
      %v1573 = vld [vmem:[%s3 + $0x104] sm:$0xf]
      %v1574 = vld [vmem:[%s3 + $0x108] sm:$0xf]
      %v1575 = vld [vmem:[%s3 + $0x10c] sm:$0xf]
      %v1576 = vld [vmem:[%s3 + $0x110] sm:$0xf]
      %v1577 = vld [vmem:[%s3 + $0x114] sm:$0xf]
      %v1578 = vld [vmem:[%s3 + $0x118] sm:$0xf]
      %v1579 = vld [vmem:[%s3 + $0x11c] sm:$0xf]
      %v1580 = vld [vmem:[%s3 + $0x120] sm:$0xf]
      %v1581 = vld [vmem:[%s3 + $0x124] sm:$0xf]
      %v1582 = vld [vmem:[%s3 + $0x128] sm:$0xf]
      %v1583 = vld [vmem:[%s3 + $0x12c] sm:$0xf]
      %v1584 = vld [vmem:[%s3 + $0x130] sm:$0xf]
      %v1585 = vld [vmem:[%s3 + $0x134] sm:$0xf]
      %v1586 = vld [vmem:[%s3 + $0x138] sm:$0xf]
      %v1587 = vld [vmem:[%s3 + $0x13c] sm:$0xf]
      %v1588 = vld [vmem:[%s3 + $0x140] sm:$0xf]
      %v1589 = vld [vmem:[%s3 + $0x144] sm:$0xf]
      %v1590 = vld [vmem:[%s3 + $0x148] sm:$0xf]
      %v1591 = vld [vmem:[%s3 + $0x14c] sm:$0xf]
      %v1592 = vld [vmem:[%s3 + $0x150] sm:$0xf]
      %v1593 = vld [vmem:[%s3 + $0x154] sm:$0xf]
      %v1594 = vld [vmem:[%s3 + $0x158] sm:$0xf]
      %v1595 = vld [vmem:[%s3 + $0x15c] sm:$0xf]
      %v1596 = vld [vmem:[%s3 + $0x160] sm:$0xf]
      %v1597 = vld [vmem:[%s3 + $0x164] sm:$0xf]
      %v1598 = vld [vmem:[%s3 + $0x168] sm:$0xf]
      %v1599 = vld [vmem:[%s3 + $0x16c] sm:$0xf]
      %v1600 = vld [vmem:[%s3 + $0x170] sm:$0xf]
      %v1601 = vld [vmem:[%s3 + $0x174] sm:$0xf]
      %v1602 = vld [vmem:[%s3 + $0x178] sm:$0xf]
      %v1603 = vld [vmem:[%s3 + $0x17c] sm:$0xf]
      %v1604 = vld [vmem:[%s3 + $0x180] sm:$0xf]
      %v1605 = vld [vmem:[%s3 + $0x184] sm:$0xf]
      %v1606 = vld [vmem:[%s3 + $0x188] sm:$0xf]
      %v1607 = vld [vmem:[%s3 + $0x18c] sm:$0xf]
      %v1608 = vld [vmem:[%s3 + $0x190] sm:$0xf]
      %v1609 = vld [vmem:[%s3 + $0x194] sm:$0xf]
      %v1610 = vld [vmem:[%s3 + $0x198] sm:$0xf]
      %v1611 = vld [vmem:[%s3 + $0x19c] sm:$0xf]
      %v1612 = vld [vmem:[%s3 + $0x1a0] sm:$0xf]
      %v1613 = vld [vmem:[%s3 + $0x1a4] sm:$0xf]
      %v1614 = vld [vmem:[%s3 + $0x1a8] sm:$0xf]
      %v1615 = vld [vmem:[%s3 + $0x1ac] sm:$0xf]
      %v1616 = vld [vmem:[%s3 + $0x1b0] sm:$0xf]
      %v1617 = vld [vmem:[%s3 + $0x1b4] sm:$0xf]
      %v1618 = vld [vmem:[%s3 + $0x1b8] sm:$0xf]
      %v1619 = vld [vmem:[%s3 + $0x1bc] sm:$0xf]
      %v1620 = vld [vmem:[%s3 + $0x1c0] sm:$0xf]
      %v1621 = vld [vmem:[%s3 + $0x1c4] sm:$0xf]
      %v1622 = vld [vmem:[%s3 + $0x1c8] sm:$0xf]
      %v1623 = vld [vmem:[%s3 + $0x1cc] sm:$0xf]
      %v1624 = vld [vmem:[%s3 + $0x1d0] sm:$0xf]
      %v1625 = vld [vmem:[%s3 + $0x1d4] sm:$0xf]
      %v1626 = vld [vmem:[%s3 + $0x1d8] sm:$0xf]
      %v1627 = vld [vmem:[%s3 + $0x1dc] sm:$0xf]
      %v1628 = vld [vmem:[%s3 + $0x1e0] sm:$0xf]
      %v1629 = vld [vmem:[%s3 + $0x1e4] sm:$0xf]
      %v1630 = vld [vmem:[%s3 + $0x1e8] sm:$0xf]
      %v1631 = vld [vmem:[%s3 + $0x1ec] sm:$0xf]
      %v1632 = vld [vmem:[%s3 + $0x1f0] sm:$0xf]
      %v1633 = vld [vmem:[%s3 + $0x1f4] sm:$0xf]
      %v1634 = vld [vmem:[%s3 + $0x1f8] sm:$0xf]
      %v1635 = vld [vmem:[%s3 + $0x1fc] sm:$0xf]
      %v1636 = vld [vmem:[%s3 + $0x200] sm:$0xf]
      %v1637 = vld [vmem:[%s3 + $0x204] sm:$0xf]
      %v1638 = vld [vmem:[%s3 + $0x208] sm:$0xf]
      %v1639 = vld [vmem:[%s3 + $0x20c] sm:$0xf]
      %v1640 = vld [vmem:[%s3 + $0x210] sm:$0xf]
      %v1641 = vld [vmem:[%s3 + $0x214] sm:$0xf]
      %v1642 = vld [vmem:[%s3 + $0x218] sm:$0xf]
      %v1643 = vld [vmem:[%s3 + $0x21c] sm:$0xf]
      %v1644 = vld [vmem:[%s3 + $0x220] sm:$0xf]
      %v1645 = vld [vmem:[%s3 + $0x224] sm:$0xf]
      %v1646 = vld [vmem:[%s3 + $0x228] sm:$0xf]
      %v1647 = vld [vmem:[%s3 + $0x22c] sm:$0xf]
      %v1648 = vld [vmem:[%s3 + $0x230] sm:$0xf]
      %v1649 = vld [vmem:[%s3 + $0x234] sm:$0xf]
      %v1650 = vld [vmem:[%s3 + $0x238] sm:$0xf]
      %v1651 = vld [vmem:[%s3 + $0x23c] sm:$0xf]
      %v1812 = vunpack.c.l.b16 %v1348
      %v1813 = vunpack.c.h.b16 %v1348
      %v1814 = vunpack.c.l.b16 %v1349
      %v1815 = vunpack.c.h.b16 %v1349
      %v1816 = vunpack.c.l.b16 %v1350
      %v1817 = vunpack.c.h.b16 %v1350
      %v1818 = vunpack.c.l.b16 %v1351
      %v1819 = vunpack.c.h.b16 %v1351
      %v1820 = vunpack.c.l.b16 %v1352
      %v1821 = vunpack.c.l.b16 %v1353
      %v1822 = vunpack.c.h.b16 %v1353
      %v1823 = vunpack.c.l.b16 %v1354
      %v1824 = vunpack.c.h.b16 %v1354
      %v1825 = vunpack.c.l.b16 %v1355
      %v1826 = vunpack.c.h.b16 %v1355
      %v1827 = vunpack.c.l.b16 %v1356
      %v1828 = vunpack.c.h.b16 %v1356
      %v1829 = vunpack.c.l.b16 %v1357
      %v1830 = vunpack.c.l.b16 %v1358
      %v1831 = vunpack.c.h.b16 %v1358
      %v1832 = vunpack.c.l.b16 %v1359
      %v1833 = vunpack.c.h.b16 %v1359
      %v1834 = vunpack.c.l.b16 %v1360
      %v1835 = vunpack.c.h.b16 %v1360
      %v1836 = vunpack.c.l.b16 %v1361
      %v1837 = vunpack.c.h.b16 %v1361
      %v1838 = vunpack.c.l.b16 %v1362
      %v1839 = vunpack.c.l.b16 %v1363
      %v1840 = vunpack.c.h.b16 %v1363
      %v1841 = vunpack.c.l.b16 %v1364
      %v1842 = vunpack.c.h.b16 %v1364
      %v1843 = vunpack.c.l.b16 %v1365
      %v1844 = vunpack.c.h.b16 %v1365
      %v1845 = vunpack.c.l.b16 %v1366
      %v1846 = vunpack.c.h.b16 %v1366
      %v1847 = vunpack.c.l.b16 %v1367
      %v1848 = vunpack.c.l.b16 %v1368
      %v1849 = vunpack.c.h.b16 %v1368
      %v1850 = vunpack.c.l.b16 %v1369
      %v1851 = vunpack.c.h.b16 %v1369
      %v1852 = vunpack.c.l.b16 %v1370
      %v1853 = vunpack.c.h.b16 %v1370
      %v1854 = vunpack.c.l.b16 %v1371
      %v1855 = vunpack.c.h.b16 %v1371
      %v1856 = vunpack.c.l.b16 %v1372
      %v1857 = vunpack.c.l.b16 %v1373
      %v1858 = vunpack.c.h.b16 %v1373
      %v1859 = vunpack.c.l.b16 %v1374
      %v1860 = vunpack.c.h.b16 %v1374
      %v1861 = vunpack.c.l.b16 %v1375
      %v1862 = vunpack.c.h.b16 %v1375
      %v1863 = vunpack.c.l.b16 %v1376
      %v1864 = vunpack.c.h.b16 %v1376
      %v1865 = vunpack.c.l.b16 %v1377
      %v1866 = vunpack.c.l.b16 %v1378
      %v1867 = vunpack.c.h.b16 %v1378
      %v1868 = vunpack.c.l.b16 %v1379
      %v1869 = vunpack.c.h.b16 %v1379
      %v1870 = vunpack.c.l.b16 %v1380
      %v1871 = vunpack.c.h.b16 %v1380
      %v1872 = vunpack.c.l.b16 %v1381
      %v1873 = vunpack.c.h.b16 %v1381
      %v1874 = vunpack.c.l.b16 %v1382
      %v1875 = vunpack.c.l.b16 %v1383
      %v1876 = vunpack.c.h.b16 %v1383
      %v1877 = vunpack.c.l.b16 %v1384
      %v1878 = vunpack.c.h.b16 %v1384
      %v1879 = vunpack.c.l.b16 %v1385
      %v1880 = vunpack.c.h.b16 %v1385
      %v1881 = vunpack.c.l.b16 %v1386
      %v1882 = vunpack.c.h.b16 %v1386
      %v1883 = vunpack.c.l.b16 %v1387
      %v1884 = vunpack.c.l.b16 %v1388
      %v1885 = vunpack.c.h.b16 %v1388
      %v1886 = vunpack.c.l.b16 %v1389
      %v1887 = vunpack.c.h.b16 %v1389
      %v1888 = vunpack.c.l.b16 %v1390
      %v1889 = vunpack.c.h.b16 %v1390
      %v1890 = vunpack.c.l.b16 %v1391
      %v1891 = vunpack.c.h.b16 %v1391
      %v1892 = vunpack.c.l.b16 %v1392
      %v1893 = vunpack.c.l.b16 %v1393
      %v1894 = vunpack.c.h.b16 %v1393
      %v1895 = vunpack.c.l.b16 %v1394
      %v1896 = vunpack.c.h.b16 %v1394
      %v1897 = vunpack.c.l.b16 %v1395
      %v1898 = vunpack.c.h.b16 %v1395
      %v1899 = vunpack.c.l.b16 %v1396
      %v1900 = vunpack.c.h.b16 %v1396
      %v1901 = vunpack.c.l.b16 %v1397
      %v1902 = vunpack.c.l.b16 %v1398
      %v1903 = vunpack.c.h.b16 %v1398
      %v1904 = vunpack.c.l.b16 %v1399
      %v1905 = vunpack.c.h.b16 %v1399
      %v1906 = vunpack.c.l.b16 %v1400
      %v1907 = vunpack.c.h.b16 %v1400
      %v1908 = vunpack.c.l.b16 %v1401
      %v1909 = vunpack.c.h.b16 %v1401
      %v1910 = vunpack.c.l.b16 %v1402
      %v1911 = vunpack.c.l.b16 %v1403
      %v1912 = vunpack.c.h.b16 %v1403
      %v1913 = vunpack.c.l.b16 %v1404
      %v1914 = vunpack.c.h.b16 %v1404
      %v1915 = vunpack.c.l.b16 %v1405
      %v1916 = vunpack.c.h.b16 %v1405
      %v1917 = vunpack.c.l.b16 %v1406
      %v1918 = vunpack.c.h.b16 %v1406
      %v1919 = vunpack.c.l.b16 %v1407
      %v1920 = vunpack.c.l.b16 %v1408
      %v1921 = vunpack.c.h.b16 %v1408
      %v1922 = vunpack.c.l.b16 %v1409
      %v1923 = vunpack.c.h.b16 %v1409
      %v1924 = vunpack.c.l.b16 %v1410
      %v1925 = vunpack.c.h.b16 %v1410
      %v1926 = vunpack.c.l.b16 %v1411
      %v1927 = vunpack.c.h.b16 %v1411
      %v1928 = vunpack.c.l.b16 %v1412
      %v1929 = vunpack.c.l.b16 %v1413
      %v1930 = vunpack.c.h.b16 %v1413
      %v1931 = vunpack.c.l.b16 %v1414
      %v1932 = vunpack.c.h.b16 %v1414
      %v1933 = vunpack.c.l.b16 %v1415
      %v1934 = vunpack.c.h.b16 %v1415
      %v1935 = vunpack.c.l.b16 %v1416
      %v1936 = vunpack.c.h.b16 %v1416
      %v1937 = vunpack.c.l.b16 %v1417
      %v1938 = vunpack.c.l.b16 %v1418
      %v1939 = vunpack.c.h.b16 %v1418
      %v1940 = vunpack.c.l.b16 %v1419
      %v1941 = vunpack.c.h.b16 %v1419
      %v1942 = vunpack.c.l.b16 %v1420
      %v1943 = vunpack.c.h.b16 %v1420
      %v1944 = vunpack.c.l.b16 %v1421
      %v1945 = vunpack.c.h.b16 %v1421
      %v1946 = vunpack.c.l.b16 %v1422
      %v1947 = vunpack.c.l.b16 %v1423
      %v1948 = vunpack.c.h.b16 %v1423
      %v1949 = vunpack.c.l.b16 %v1424
      %v1950 = vunpack.c.h.b16 %v1424
      %v1951 = vunpack.c.l.b16 %v1425
      %v1952 = vunpack.c.h.b16 %v1425
      %v1953 = vunpack.c.l.b16 %v1426
      %v1954 = vunpack.c.h.b16 %v1426
      %v1955 = vunpack.c.l.b16 %v1427
      %v1956 = vunpack.c.l.b16 %v1428
      %v1957 = vunpack.c.h.b16 %v1428
      %v1958 = vunpack.c.l.b16 %v1429
      %v1959 = vunpack.c.h.b16 %v1429
      %v1960 = vunpack.c.l.b16 %v1430
      %v1961 = vunpack.c.h.b16 %v1430
      %v1962 = vunpack.c.l.b16 %v1431
      %v1963 = vunpack.c.h.b16 %v1431
      %v1964 = vunpack.c.l.b16 %v1432
      %v1965 = vunpack.c.l.b16 %v1433
      %v1966 = vunpack.c.h.b16 %v1433
      %v1967 = vunpack.c.l.b16 %v1434
      %v1968 = vunpack.c.h.b16 %v1434
      %v1969 = vunpack.c.l.b16 %v1435
      %v1970 = vunpack.c.h.b16 %v1435
      %v1971 = vunpack.c.l.b16 %v1436
      %v1972 = vunpack.c.h.b16 %v1436
      %v1973 = vunpack.c.l.b16 %v1437
      %v1974 = vunpack.c.l.b16 %v1438
      %v1975 = vunpack.c.h.b16 %v1438
      %v1976 = vunpack.c.l.b16 %v1439
      %v1977 = vunpack.c.h.b16 %v1439
      %v1978 = vunpack.c.l.b16 %v1440
      %v1979 = vunpack.c.h.b16 %v1440
      %v1980 = vunpack.c.l.b16 %v1441
      %v1981 = vunpack.c.h.b16 %v1441
      %v1982 = vunpack.c.l.b16 %v1442
      %v1983 = vunpack.c.l.b16 %v1443
      %v1984 = vunpack.c.h.b16 %v1443
      %v1985 = vunpack.c.l.b16 %v1444
      %v1986 = vunpack.c.h.b16 %v1444
      %v1987 = vunpack.c.l.b16 %v1445
      %v1988 = vunpack.c.h.b16 %v1445
      %v1989 = vunpack.c.l.b16 %v1446
      %v1990 = vunpack.c.h.b16 %v1446
      %v1991 = vunpack.c.l.b16 %v1447
      %v1992 = vunpack.c.l.b16 %v1448
      %v1993 = vunpack.c.h.b16 %v1448
      %v1994 = vunpack.c.l.b16 %v1449
      %v1995 = vunpack.c.h.b16 %v1449
      %v1996 = vunpack.c.l.b16 %v1450
      %v1997 = vunpack.c.h.b16 %v1450
      %v1998 = vunpack.c.l.b16 %v1451
      %v1999 = vunpack.c.h.b16 %v1451
      %v2000 = vunpack.c.l.b16 %v1452
      %v2001 = vunpack.c.l.b16 %v1453
      %v2002 = vunpack.c.h.b16 %v1453
      %v2003 = vunpack.c.l.b16 %v1454
      %v2004 = vunpack.c.h.b16 %v1454
      %v2005 = vunpack.c.l.b16 %v1455
      %v2006 = vunpack.c.h.b16 %v1455
      %v2007 = vunpack.c.l.b16 %v1456
      %v2008 = vunpack.c.h.b16 %v1456
      %v2009 = vunpack.c.l.b16 %v1457
      %v2010 = vunpack.c.l.b16 %v1458
      %v2011 = vunpack.c.h.b16 %v1458
      %v2012 = vunpack.c.l.b16 %v1459
      %v2013 = vunpack.c.h.b16 %v1459
      %v2014 = vunpack.c.l.b16 %v1460
      %v2015 = vunpack.c.h.b16 %v1460
      %v2016 = vunpack.c.l.b16 %v1461
      %v2017 = vunpack.c.h.b16 %v1461
      %v2018 = vunpack.c.l.b16 %v1462
      %v2019 = vunpack.c.l.b16 %v1463
      %v2020 = vunpack.c.h.b16 %v1463
      %v2021 = vunpack.c.l.b16 %v1464
      %v2022 = vunpack.c.h.b16 %v1464
      %v2023 = vunpack.c.l.b16 %v1465
      %v2024 = vunpack.c.h.b16 %v1465
      %v2025 = vunpack.c.l.b16 %v1466
      %v2026 = vunpack.c.h.b16 %v1466
      %v2027 = vunpack.c.l.b16 %v1467
      %v2028 = vunpack.c.l.b16 %v1468
      %v2029 = vunpack.c.h.b16 %v1468
      %v2030 = vunpack.c.l.b16 %v1469
      %v2031 = vunpack.c.h.b16 %v1469
      %v2032 = vunpack.c.l.b16 %v1470
      %v2033 = vunpack.c.h.b16 %v1470
      %v2034 = vunpack.c.l.b16 %v1471
      %v2035 = vunpack.c.h.b16 %v1471
      %v2036 = vunpack.c.l.b16 %v1472
      %v2037 = vunpack.c.l.b16 %v1473
      %v2038 = vunpack.c.h.b16 %v1473
      %v2039 = vunpack.c.l.b16 %v1474
      %v2040 = vunpack.c.h.b16 %v1474
      %v2041 = vunpack.c.l.b16 %v1475
      %v2042 = vunpack.c.h.b16 %v1475
      %v2043 = vunpack.c.l.b16 %v1476
      %v2044 = vunpack.c.h.b16 %v1476
      %v2045 = vunpack.c.l.b16 %v1477
      %v2046 = vunpack.c.l.b16 %v1478
      %v2047 = vunpack.c.h.b16 %v1478
      %v2048 = vunpack.c.l.b16 %v1479
      %v2049 = vunpack.c.h.b16 %v1479
      %v2050 = vunpack.c.l.b16 %v1480
      %v2051 = vunpack.c.h.b16 %v1480
      %v2052 = vunpack.c.l.b16 %v1481
      %v2053 = vunpack.c.h.b16 %v1481
      %v2054 = vunpack.c.l.b16 %v1482
      %v2055 = vunpack.c.l.b16 %v1483
      %v2056 = vunpack.c.h.b16 %v1483
      %v2057 = vunpack.c.l.b16 %v1484
      %v2058 = vunpack.c.h.b16 %v1484
      %v2059 = vunpack.c.l.b16 %v1485
      %v2060 = vunpack.c.h.b16 %v1485
      %v2061 = vunpack.c.l.b16 %v1486
      %v2062 = vunpack.c.h.b16 %v1486
      %v2063 = vunpack.c.l.b16 %v1487
      %v2064 = vunpack.c.l.b16 %v1488
      %v2065 = vunpack.c.h.b16 %v1488
      %v2066 = vunpack.c.l.b16 %v1489
      %v2067 = vunpack.c.h.b16 %v1489
      %v2068 = vunpack.c.l.b16 %v1490
      %v2069 = vunpack.c.h.b16 %v1490
      %v2070 = vunpack.c.l.b16 %v1491
      %v2071 = vunpack.c.h.b16 %v1491
      %v2072 = vunpack.c.l.b16 %v1492
      %v2073 = vunpack.c.l.b16 %v1493
      %v2074 = vunpack.c.h.b16 %v1493
      %v2075 = vunpack.c.l.b16 %v1494
      %v2076 = vunpack.c.h.b16 %v1494
      %v2077 = vunpack.c.l.b16 %v1495
      %v2078 = vunpack.c.h.b16 %v1495
      %v2079 = vunpack.c.l.b16 %v1496
      %v2080 = vunpack.c.h.b16 %v1496
      %v2081 = vunpack.c.l.b16 %v1497
      %v2082 = vunpack.c.l.b16 %v1498
      %v2083 = vunpack.c.h.b16 %v1498
      %v2084 = vunpack.c.l.b16 %v1499
      %v2085 = vunpack.c.h.b16 %v1499
      %v2086 = vunpack.c.l.b16 %v1500
      %v2087 = vunpack.c.h.b16 %v1500
      %v2088 = vunpack.c.l.b16 %v1501
      %v2089 = vunpack.c.h.b16 %v1501
      %v2090 = vunpack.c.l.b16 %v1502
      %v2091 = vunpack.c.l.b16 %v1503
      %v2092 = vunpack.c.h.b16 %v1503
      %v2093 = vunpack.c.l.b16 %v1504
      %v2094 = vunpack.c.h.b16 %v1504
      %v2095 = vunpack.c.l.b16 %v1505
      %v2096 = vunpack.c.h.b16 %v1505
      %v2097 = vunpack.c.l.b16 %v1506
      %v2098 = vunpack.c.h.b16 %v1506
      %v2099 = vunpack.c.l.b16 %v1507
      %v2100 = vpack.c.b16 %v1821, %v1812
      %v2101 = vpack.c.b16 %v1822, %v1813
      %v2102 = vpack.c.b16 %v1823, %v1814
      %v2103 = vpack.c.b16 %v1824, %v1815
      %v2104 = vpack.c.b16 %v1825, %v1816
      %v2105 = vpack.c.b16 %v1826, %v1817
      %v2106 = vpack.c.b16 %v1827, %v1818
      %v2107 = vpack.c.b16 %v1828, %v1819
      %v2108 = vpack.c.b16 %v1829, %v1820
      %v2109 = vpack.c.b16 %v1839, %v1830
      %v2110 = vpack.c.b16 %v1840, %v1831
      %v2111 = vpack.c.b16 %v1841, %v1832
      %v2112 = vpack.c.b16 %v1842, %v1833
      %v2113 = vpack.c.b16 %v1843, %v1834
      %v2114 = vpack.c.b16 %v1844, %v1835
      %v2115 = vpack.c.b16 %v1845, %v1836
      %v2116 = vpack.c.b16 %v1846, %v1837
      %v2117 = vpack.c.b16 %v1847, %v1838
      %v2118 = vpack.c.b16 %v1857, %v1848
      %v2119 = vpack.c.b16 %v1858, %v1849
      %v2120 = vpack.c.b16 %v1859, %v1850
      %v2121 = vpack.c.b16 %v1860, %v1851
      %v2122 = vpack.c.b16 %v1861, %v1852
      %v2123 = vpack.c.b16 %v1862, %v1853
      %v2124 = vpack.c.b16 %v1863, %v1854
      %v2125 = vpack.c.b16 %v1864, %v1855
      %v2126 = vpack.c.b16 %v1865, %v1856
      %v2127 = vpack.c.b16 %v1875, %v1866
      %v2128 = vpack.c.b16 %v1876, %v1867
      %v2129 = vpack.c.b16 %v1877, %v1868
      %v2130 = vpack.c.b16 %v1878, %v1869
      %v2131 = vpack.c.b16 %v1879, %v1870
      %v2132 = vpack.c.b16 %v1880, %v1871
      %v2133 = vpack.c.b16 %v1881, %v1872
      %v2134 = vpack.c.b16 %v1882, %v1873
      %v2135 = vpack.c.b16 %v1883, %v1874
      %v2136 = vpack.c.b16 %v1893, %v1884
      %v2137 = vpack.c.b16 %v1894, %v1885
      %v2138 = vpack.c.b16 %v1895, %v1886
      %v2139 = vpack.c.b16 %v1896, %v1887
      %v2140 = vpack.c.b16 %v1897, %v1888
      %v2141 = vpack.c.b16 %v1898, %v1889
      %v2142 = vpack.c.b16 %v1899, %v1890
      %v2143 = vpack.c.b16 %v1900, %v1891
      %v2144 = vpack.c.b16 %v1901, %v1892
      %v2145 = vpack.c.b16 %v1911, %v1902
      %v2146 = vpack.c.b16 %v1912, %v1903
      %v2147 = vpack.c.b16 %v1913, %v1904
      %v2148 = vpack.c.b16 %v1914, %v1905
      %v2149 = vpack.c.b16 %v1915, %v1906
      %v2150 = vpack.c.b16 %v1916, %v1907
      %v2151 = vpack.c.b16 %v1917, %v1908
      %v2152 = vpack.c.b16 %v1918, %v1909
      %v2153 = vpack.c.b16 %v1919, %v1910
      %v2154 = vpack.c.b16 %v1929, %v1920
      %v2155 = vpack.c.b16 %v1930, %v1921
      %v2156 = vpack.c.b16 %v1931, %v1922
      %v2157 = vpack.c.b16 %v1932, %v1923
      %v2158 = vpack.c.b16 %v1933, %v1924
      %v2159 = vpack.c.b16 %v1934, %v1925
      %v2160 = vpack.c.b16 %v1935, %v1926
      %v2161 = vpack.c.b16 %v1936, %v1927
      %v2162 = vpack.c.b16 %v1937, %v1928
      %v2163 = vpack.c.b16 %v1947, %v1938
      %v2164 = vpack.c.b16 %v1948, %v1939
      %v2165 = vpack.c.b16 %v1949, %v1940
      %v2166 = vpack.c.b16 %v1950, %v1941
      %v2167 = vpack.c.b16 %v1951, %v1942
      %v2168 = vpack.c.b16 %v1952, %v1943
      %v2169 = vpack.c.b16 %v1953, %v1944
      %v2170 = vpack.c.b16 %v1954, %v1945
      %v2171 = vpack.c.b16 %v1955, %v1946
      %v2172 = vpack.c.b16 %v1965, %v1956
      %v2173 = vpack.c.b16 %v1966, %v1957
      %v2174 = vpack.c.b16 %v1967, %v1958
      %v2175 = vpack.c.b16 %v1968, %v1959
      %v2176 = vpack.c.b16 %v1969, %v1960
      %v2177 = vpack.c.b16 %v1970, %v1961
      %v2178 = vpack.c.b16 %v1971, %v1962
      %v2179 = vpack.c.b16 %v1972, %v1963
      %v2180 = vpack.c.b16 %v1973, %v1964
      %v2181 = vpack.c.b16 %v1983, %v1974
      %v2182 = vpack.c.b16 %v1984, %v1975
      %v2183 = vpack.c.b16 %v1985, %v1976
      %v2184 = vpack.c.b16 %v1986, %v1977
      %v2185 = vpack.c.b16 %v1987, %v1978
      %v2186 = vpack.c.b16 %v1988, %v1979
      %v2187 = vpack.c.b16 %v1989, %v1980
      %v2188 = vpack.c.b16 %v1990, %v1981
      %v2189 = vpack.c.b16 %v1991, %v1982
      %v2190 = vpack.c.b16 %v2001, %v1992
      %v2191 = vpack.c.b16 %v2002, %v1993
      %v2192 = vpack.c.b16 %v2003, %v1994
      %v2193 = vpack.c.b16 %v2004, %v1995
      %v2194 = vpack.c.b16 %v2005, %v1996
      %v2195 = vpack.c.b16 %v2006, %v1997
      %v2196 = vpack.c.b16 %v2007, %v1998
      %v2197 = vpack.c.b16 %v2008, %v1999
      %v2198 = vpack.c.b16 %v2009, %v2000
      %v2199 = vpack.c.b16 %v2019, %v2010
      %v2200 = vpack.c.b16 %v2020, %v2011
      %v2201 = vpack.c.b16 %v2021, %v2012
      %v2202 = vpack.c.b16 %v2022, %v2013
      %v2203 = vpack.c.b16 %v2023, %v2014
      %v2204 = vpack.c.b16 %v2024, %v2015
      %v2205 = vpack.c.b16 %v2025, %v2016
      %v2206 = vpack.c.b16 %v2026, %v2017
      %v2207 = vpack.c.b16 %v2027, %v2018
      %v2208 = vpack.c.b16 %v2037, %v2028
      %v2209 = vpack.c.b16 %v2038, %v2029
      %v2210 = vpack.c.b16 %v2039, %v2030
      %v2211 = vpack.c.b16 %v2040, %v2031
      %v2212 = vpack.c.b16 %v2041, %v2032
      %v2213 = vpack.c.b16 %v2042, %v2033
      %v2214 = vpack.c.b16 %v2043, %v2034
      %v2215 = vpack.c.b16 %v2044, %v2035
      %v2216 = vpack.c.b16 %v2045, %v2036
      %v2217 = vpack.c.b16 %v2055, %v2046
      %v2218 = vpack.c.b16 %v2056, %v2047
      %v2219 = vpack.c.b16 %v2057, %v2048
      %v2220 = vpack.c.b16 %v2058, %v2049
      %v2221 = vpack.c.b16 %v2059, %v2050
      %v2222 = vpack.c.b16 %v2060, %v2051
      %v2223 = vpack.c.b16 %v2061, %v2052
      %v2224 = vpack.c.b16 %v2062, %v2053
      %v2225 = vpack.c.b16 %v2063, %v2054
      %v2226 = vpack.c.b16 %v2073, %v2064
      %v2227 = vpack.c.b16 %v2074, %v2065
      %v2228 = vpack.c.b16 %v2075, %v2066
      %v2229 = vpack.c.b16 %v2076, %v2067
      %v2230 = vpack.c.b16 %v2077, %v2068
      %v2231 = vpack.c.b16 %v2078, %v2069
      %v2232 = vpack.c.b16 %v2079, %v2070
      %v2233 = vpack.c.b16 %v2080, %v2071
      %v2234 = vpack.c.b16 %v2081, %v2072
      %v2235 = vpack.c.b16 %v2091, %v2082
      %v2236 = vpack.c.b16 %v2092, %v2083
      %v2237 = vpack.c.b16 %v2093, %v2084
      %v2238 = vpack.c.b16 %v2094, %v2085
      %v2239 = vpack.c.b16 %v2095, %v2086
      %v2240 = vpack.c.b16 %v2096, %v2087
      %v2241 = vpack.c.b16 %v2097, %v2088
      %v2242 = vpack.c.b16 %v2098, %v2089
      %v2243 = vpack.c.b16 %v2099, %v2090
      %v2532 = vunpack.c.l.b16 %v1508
      %v2533 = vunpack.c.l.b16 %v1509
      %v2534 = vunpack.c.l.b16 %v1510
      %v2535 = vunpack.c.l.b16 %v1511
      %v2536 = vunpack.c.l.b16 %v1512
      %v2537 = vunpack.c.l.b16 %v1513
      %v2538 = vunpack.c.l.b16 %v1514
      %v2539 = vunpack.c.l.b16 %v1515
      %v2540 = vunpack.c.l.b16 %v1516
      %v2541 = vunpack.c.l.b16 %v1517
      %v2542 = vunpack.c.l.b16 %v1518
      %v2543 = vunpack.c.l.b16 %v1519
      %v2544 = vunpack.c.l.b16 %v1520
      %v2545 = vunpack.c.l.b16 %v1521
      %v2546 = vunpack.c.l.b16 %v1522
      %v2547 = vunpack.c.l.b16 %v1523
      %v2548 = vunpack.c.l.b16 %v1524
      %v2549 = vunpack.c.l.b16 %v1525
      %v2550 = vunpack.c.l.b16 %v1526
      %v2551 = vunpack.c.l.b16 %v1527
      %v2552 = vunpack.c.l.b16 %v1528
      %v2553 = vunpack.c.l.b16 %v1529
      %v2554 = vunpack.c.l.b16 %v1530
      %v2555 = vunpack.c.l.b16 %v1531
      %v2556 = vunpack.c.l.b16 %v1532
      %v2557 = vunpack.c.l.b16 %v1533
      %v2558 = vunpack.c.l.b16 %v1534
      %v2559 = vunpack.c.l.b16 %v1535
      %v2560 = vunpack.c.l.b16 %v1536
      %v2561 = vunpack.c.l.b16 %v1537
      %v2562 = vunpack.c.l.b16 %v1538
      %v2563 = vunpack.c.l.b16 %v1539
      %v2564 = vunpack.c.l.b16 %v1540
      %v2565 = vunpack.c.l.b16 %v1541
      %v2566 = vunpack.c.l.b16 %v1542
      %v2567 = vunpack.c.l.b16 %v1543
      %v2568 = vunpack.c.l.b16 %v1544
      %v2569 = vunpack.c.l.b16 %v1545
      %v2570 = vunpack.c.l.b16 %v1546
      %v2571 = vunpack.c.l.b16 %v1547
      %v2572 = vunpack.c.l.b16 %v1548
      %v2573 = vunpack.c.l.b16 %v1549
      %v2574 = vunpack.c.l.b16 %v1550
      %v2575 = vunpack.c.l.b16 %v1551
      %v2576 = vunpack.c.l.b16 %v1552
      %v2577 = vunpack.c.l.b16 %v1553
      %v2578 = vunpack.c.l.b16 %v1554
      %v2579 = vunpack.c.l.b16 %v1555
      %v2580 = vunpack.c.l.b16 %v1556
      %v2581 = vunpack.c.l.b16 %v1557
      %v2582 = vunpack.c.l.b16 %v1558
      %v2583 = vunpack.c.l.b16 %v1559
      %v2584 = vunpack.c.l.b16 %v1560
      %v2585 = vunpack.c.l.b16 %v1561
      %v2586 = vunpack.c.l.b16 %v1562
      %v2587 = vunpack.c.l.b16 %v1563
      %v2588 = vunpack.c.l.b16 %v1564
      %v2589 = vunpack.c.l.b16 %v1565
      %v2590 = vunpack.c.l.b16 %v1566
      %v2591 = vunpack.c.l.b16 %v1567
      %v2592 = vunpack.c.l.b16 %v1568
      %v2593 = vunpack.c.l.b16 %v1569
      %v2594 = vunpack.c.l.b16 %v1570
      %v2595 = vunpack.c.l.b16 %v1571
      %v2596 = vunpack.c.l.b16 %v1572
      %v2597 = vunpack.c.l.b16 %v1573
      %v2598 = vunpack.c.l.b16 %v1574
      %v2599 = vunpack.c.l.b16 %v1575
      %v2600 = vunpack.c.l.b16 %v1576
      %v2601 = vunpack.c.l.b16 %v1577
      %v2602 = vunpack.c.l.b16 %v1578
      %v2603 = vunpack.c.l.b16 %v1579
      %v2604 = vunpack.c.l.b16 %v1580
      %v2605 = vunpack.c.l.b16 %v1581
      %v2606 = vunpack.c.l.b16 %v1582
      %v2607 = vunpack.c.l.b16 %v1583
      %v2608 = vunpack.c.l.b16 %v1584
      %v2609 = vunpack.c.l.b16 %v1585
      %v2610 = vunpack.c.l.b16 %v1586
      %v2611 = vunpack.c.l.b16 %v1587
      %v2612 = vunpack.c.l.b16 %v1588
      %v2613 = vunpack.c.l.b16 %v1589
      %v2614 = vunpack.c.l.b16 %v1590
      %v2615 = vunpack.c.l.b16 %v1591
      %v2616 = vunpack.c.l.b16 %v1592
      %v2617 = vunpack.c.l.b16 %v1593
      %v2618 = vunpack.c.l.b16 %v1594
      %v2619 = vunpack.c.l.b16 %v1595
      %v2620 = vunpack.c.l.b16 %v1596
      %v2621 = vunpack.c.l.b16 %v1597
      %v2622 = vunpack.c.l.b16 %v1598
      %v2623 = vunpack.c.l.b16 %v1599
      %v2624 = vunpack.c.l.b16 %v1600
      %v2625 = vunpack.c.l.b16 %v1601
      %v2626 = vunpack.c.l.b16 %v1602
      %v2627 = vunpack.c.l.b16 %v1603
      %v2628 = vunpack.c.l.b16 %v1604
      %v2629 = vunpack.c.l.b16 %v1605
      %v2630 = vunpack.c.l.b16 %v1606
      %v2631 = vunpack.c.l.b16 %v1607
      %v2632 = vunpack.c.l.b16 %v1608
      %v2633 = vunpack.c.l.b16 %v1609
      %v2634 = vunpack.c.l.b16 %v1610
      %v2635 = vunpack.c.l.b16 %v1611
      %v2636 = vunpack.c.l.b16 %v1612
      %v2637 = vunpack.c.l.b16 %v1613
      %v2638 = vunpack.c.l.b16 %v1614
      %v2639 = vunpack.c.l.b16 %v1615
      %v2640 = vunpack.c.l.b16 %v1616
      %v2641 = vunpack.c.l.b16 %v1617
      %v2642 = vunpack.c.l.b16 %v1618
      %v2643 = vunpack.c.l.b16 %v1619
      %v2644 = vunpack.c.l.b16 %v1620
      %v2645 = vunpack.c.l.b16 %v1621
      %v2646 = vunpack.c.l.b16 %v1622
      %v2647 = vunpack.c.l.b16 %v1623
      %v2648 = vunpack.c.l.b16 %v1624
      %v2649 = vunpack.c.l.b16 %v1625
      %v2650 = vunpack.c.l.b16 %v1626
      %v2651 = vunpack.c.l.b16 %v1627
      %v2652 = vunpack.c.l.b16 %v1628
      %v2653 = vunpack.c.l.b16 %v1629
      %v2654 = vunpack.c.l.b16 %v1630
      %v2655 = vunpack.c.l.b16 %v1631
      %v2656 = vunpack.c.l.b16 %v1632
      %v2657 = vunpack.c.l.b16 %v1633
      %v2658 = vunpack.c.l.b16 %v1634
      %v2659 = vunpack.c.l.b16 %v1635
      %v2660 = vunpack.c.l.b16 %v1636
      %v2661 = vunpack.c.l.b16 %v1637
      %v2662 = vunpack.c.l.b16 %v1638
      %v2663 = vunpack.c.l.b16 %v1639
      %v2664 = vunpack.c.l.b16 %v1640
      %v2665 = vunpack.c.l.b16 %v1641
      %v2666 = vunpack.c.l.b16 %v1642
      %v2667 = vunpack.c.l.b16 %v1643
      %v2668 = vunpack.c.l.b16 %v1644
      %v2669 = vunpack.c.l.b16 %v1645
      %v2670 = vunpack.c.l.b16 %v1646
      %v2671 = vunpack.c.l.b16 %v1647
      %v2672 = vunpack.c.l.b16 %v1648
      %v2673 = vunpack.c.l.b16 %v1649
      %v2674 = vunpack.c.l.b16 %v1650
      %v2675 = vunpack.c.l.b16 %v1651
      %v2676 = vpack.c.b16 %v2533, %v2532
      %v2677 = vpack.c.b16 %v2535, %v2534
      %v2678 = vpack.c.b16 %v2537, %v2536
      %v2679 = vpack.c.b16 %v2539, %v2538
      %v2680 = vpack.c.b16 %v2541, %v2540
      %v2681 = vpack.c.b16 %v2543, %v2542
      %v2682 = vpack.c.b16 %v2545, %v2544
      %v2683 = vpack.c.b16 %v2547, %v2546
      %v2684 = vpack.c.b16 %v2549, %v2548
      %v2685 = vpack.c.b16 %v2551, %v2550
      %v2686 = vpack.c.b16 %v2553, %v2552
      %v2687 = vpack.c.b16 %v2555, %v2554
      %v2688 = vpack.c.b16 %v2557, %v2556
      %v2689 = vpack.c.b16 %v2559, %v2558
      %v2690 = vpack.c.b16 %v2561, %v2560
      %v2691 = vpack.c.b16 %v2563, %v2562
      %v2692 = vpack.c.b16 %v2565, %v2564
      %v2693 = vpack.c.b16 %v2567, %v2566
      %v2694 = vpack.c.b16 %v2569, %v2568
      %v2695 = vpack.c.b16 %v2571, %v2570
      %v2696 = vpack.c.b16 %v2573, %v2572
      %v2697 = vpack.c.b16 %v2575, %v2574
      %v2698 = vpack.c.b16 %v2577, %v2576
      %v2699 = vpack.c.b16 %v2579, %v2578
      %v2700 = vpack.c.b16 %v2581, %v2580
      %v2701 = vpack.c.b16 %v2583, %v2582
      %v2702 = vpack.c.b16 %v2585, %v2584
      %v2703 = vpack.c.b16 %v2587, %v2586
      %v2704 = vpack.c.b16 %v2589, %v2588
      %v2705 = vpack.c.b16 %v2591, %v2590
      %v2706 = vpack.c.b16 %v2593, %v2592
      %v2707 = vpack.c.b16 %v2595, %v2594
      %v2708 = vpack.c.b16 %v2597, %v2596
      %v2709 = vpack.c.b16 %v2599, %v2598
      %v2710 = vpack.c.b16 %v2601, %v2600
      %v2711 = vpack.c.b16 %v2603, %v2602
      %v2712 = vpack.c.b16 %v2605, %v2604
      %v2713 = vpack.c.b16 %v2607, %v2606
      %v2714 = vpack.c.b16 %v2609, %v2608
      %v2715 = vpack.c.b16 %v2611, %v2610
      %v2716 = vpack.c.b16 %v2613, %v2612
      %v2717 = vpack.c.b16 %v2615, %v2614
      %v2718 = vpack.c.b16 %v2617, %v2616
      %v2719 = vpack.c.b16 %v2619, %v2618
      %v2720 = vpack.c.b16 %v2621, %v2620
      %v2721 = vpack.c.b16 %v2623, %v2622
      %v2722 = vpack.c.b16 %v2625, %v2624
      %v2723 = vpack.c.b16 %v2627, %v2626
      %v2724 = vpack.c.b16 %v2629, %v2628
      %v2725 = vpack.c.b16 %v2631, %v2630
      %v2726 = vpack.c.b16 %v2633, %v2632
      %v2727 = vpack.c.b16 %v2635, %v2634
      %v2728 = vpack.c.b16 %v2637, %v2636
      %v2729 = vpack.c.b16 %v2639, %v2638
      %v2730 = vpack.c.b16 %v2641, %v2640
      %v2731 = vpack.c.b16 %v2643, %v2642
      %v2732 = vpack.c.b16 %v2645, %v2644
      %v2733 = vpack.c.b16 %v2647, %v2646
      %v2734 = vpack.c.b16 %v2649, %v2648
      %v2735 = vpack.c.b16 %v2651, %v2650
      %v2736 = vpack.c.b16 %v2653, %v2652
      %v2737 = vpack.c.b16 %v2655, %v2654
      %v2738 = vpack.c.b16 %v2657, %v2656
      %v2739 = vpack.c.b16 %v2659, %v2658
      %v2740 = vpack.c.b16 %v2661, %v2660
      %v2741 = vpack.c.b16 %v2663, %v2662
      %v2742 = vpack.c.b16 %v2665, %v2664
      %v2743 = vpack.c.b16 %v2667, %v2666
      %v2744 = vpack.c.b16 %v2669, %v2668
      %v2745 = vpack.c.b16 %v2671, %v2670
      %v2746 = vpack.c.b16 %v2673, %v2672
      %v2747 = vpack.c.b16 %v2675, %v2674
      %2820 = vmatpush.bf16.msra.mxu0 %v2683
      %2821 = vmatpush.bf16.msra.mxu0 %v2682
      %2822 = vmatpush.bf16.msra.mxu0 %v2681
      %2823 = vmatpush.bf16.msra.mxu0 %v2680
      %2824 = vmatpush.bf16.msra.mxu0 %v2679
      %2825 = vmatpush.bf16.msra.mxu0 %v2678
      %2826 = vmatpush.bf16.msra.mxu0 %v2677
      %2827 = vmatpush.bf16.msra.mxu0 %v2676
      %2828 = vmatmul.bf16.gmra.mxu0 %v2100
      %v2829 = vpop.f32.mrf.mxu0
      %v2830 = vadd.f32 0.0, %v2829
      %v2831 = vpop.f32.mrf.mxu0
      %v2832 = vadd.f32 0.0, %v2831
      %2833 = vmatmul.bf16.gmra.mxu0 %v2109
      %v2834 = vpop.f32.mrf.mxu0
      %v2835 = vadd.f32 0.0, %v2834
      %v2836 = vpop.f32.mrf.mxu0
      %v2837 = vadd.f32 0.0, %v2836
      %2838 = vmatmul.bf16.gmra.mxu0 %v2118
      %v2839 = vpop.f32.mrf.mxu0
      %v2840 = vadd.f32 0.0, %v2839
      %v2841 = vpop.f32.mrf.mxu0
      %v2842 = vadd.f32 0.0, %v2841
      %2843 = vmatmul.bf16.gmra.mxu0 %v2127
      %v2844 = vpop.f32.mrf.mxu0
      %v2845 = vadd.f32 0.0, %v2844
      %v2846 = vpop.f32.mrf.mxu0
      %v2847 = vadd.f32 0.0, %v2846
      %2848 = vmatmul.bf16.gmra.mxu0 %v2136
      %v2849 = vpop.f32.mrf.mxu0
      %v2850 = vadd.f32 0.0, %v2849
      %v2851 = vpop.f32.mrf.mxu0
      %v2852 = vadd.f32 0.0, %v2851
      %2853 = vmatmul.bf16.gmra.mxu0 %v2145
      %v2854 = vpop.f32.mrf.mxu0
      %v2855 = vadd.f32 0.0, %v2854
      %v2856 = vpop.f32.mrf.mxu0
      %v2857 = vadd.f32 0.0, %v2856
      %2858 = vmatmul.bf16.gmra.mxu0 %v2154
      %v2859 = vpop.f32.mrf.mxu0
      %v2860 = vadd.f32 0.0, %v2859
      %v2861 = vpop.f32.mrf.mxu0
      %v2862 = vadd.f32 0.0, %v2861
      %2863 = vmatmul.bf16.gmra.mxu0 %v2163
      %v2864 = vpop.f32.mrf.mxu0
      %v2865 = vadd.f32 0.0, %v2864
      %v2866 = vpop.f32.mrf.mxu0
      %v2867 = vadd.f32 0.0, %v2866
      %2868 = vmatmul.bf16.gmra.mxu0 %v2172
      %v2869 = vpop.f32.mrf.mxu0
      %v2870 = vadd.f32 0.0, %v2869
      %v2871 = vpop.f32.mrf.mxu0
      %v2872 = vadd.f32 0.0, %v2871
      %2873 = vmatmul.bf16.gmra.mxu0 %v2181
      %v2874 = vpop.f32.mrf.mxu0
      %v2875 = vadd.f32 0.0, %v2874
      %v2876 = vpop.f32.mrf.mxu0
      %v2877 = vadd.f32 0.0, %v2876
      %2878 = vmatmul.bf16.gmra.mxu0 %v2190
      %v2879 = vpop.f32.mrf.mxu0
      %v2880 = vadd.f32 0.0, %v2879
      %v2881 = vpop.f32.mrf.mxu0
      %v2882 = vadd.f32 0.0, %v2881
      %2883 = vmatmul.bf16.gmra.mxu0 %v2199
      %v2884 = vpop.f32.mrf.mxu0
      %v2885 = vadd.f32 0.0, %v2884
      %v2886 = vpop.f32.mrf.mxu0
      %v2887 = vadd.f32 0.0, %v2886
      %2888 = vmatmul.bf16.gmra.mxu0 %v2208
      %v2889 = vpop.f32.mrf.mxu0
      %v2890 = vadd.f32 0.0, %v2889
      %v2891 = vpop.f32.mrf.mxu0
      %v2892 = vadd.f32 0.0, %v2891
      %2893 = vmatmul.bf16.gmra.mxu0 %v2217
      %v2894 = vpop.f32.mrf.mxu0
      %v2895 = vadd.f32 0.0, %v2894
      %v2896 = vpop.f32.mrf.mxu0
      %v2897 = vadd.f32 0.0, %v2896
      %2898 = vmatmul.bf16.gmra.mxu0 %v2226
      %v2899 = vpop.f32.mrf.mxu0
      %v2900 = vadd.f32 0.0, %v2899
      %v2901 = vpop.f32.mrf.mxu0
      %v2902 = vadd.f32 0.0, %v2901
      %2903 = vmatmul.bf16.gmra.mxu0 %v2235
      %v2904 = vpop.f32.mrf.mxu0
      %v2905 = vadd.f32 0.0, %v2904
      %v2906 = vpop.f32.mrf.mxu0
      %v2907 = vadd.f32 0.0, %v2906
      %2908 = vdwg.mxu0
      %2909 = vmatpush.bf16.msra.mxu0 %v2691
      %2910 = vmatpush.bf16.msra.mxu0 %v2690
      %2911 = vmatpush.bf16.msra.mxu0 %v2689
      %2912 = vmatpush.bf16.msra.mxu0 %v2688
      %2913 = vmatpush.bf16.msra.mxu0 %v2687
      %2914 = vmatpush.bf16.msra.mxu0 %v2686
      %2915 = vmatpush.bf16.msra.mxu0 %v2685
      %2916 = vmatpush.bf16.msra.mxu0 %v2684
      %2917 = vmatmul.bf16.gmra.mxu0 %v2101
      %v2918 = vpop.f32.mrf.mxu0
      %v2919 = vadd.f32 %v2830, %v2918
      %v2920 = vpop.f32.mrf.mxu0
      %v2921 = vadd.f32 %v2832, %v2920
      %2922 = vmatmul.bf16.gmra.mxu0 %v2110
      %v2923 = vpop.f32.mrf.mxu0
      %v2924 = vadd.f32 %v2835, %v2923
      %v2925 = vpop.f32.mrf.mxu0
      %v2926 = vadd.f32 %v2837, %v2925
      %2927 = vmatmul.bf16.gmra.mxu0 %v2119
      %v2928 = vpop.f32.mrf.mxu0
      %v2929 = vadd.f32 %v2840, %v2928
      %v2930 = vpop.f32.mrf.mxu0
      %v2931 = vadd.f32 %v2842, %v2930
      %2932 = vmatmul.bf16.gmra.mxu0 %v2128
      %v2933 = vpop.f32.mrf.mxu0
      %v2934 = vadd.f32 %v2845, %v2933
      %v2935 = vpop.f32.mrf.mxu0
      %v2936 = vadd.f32 %v2847, %v2935
      %2937 = vmatmul.bf16.gmra.mxu0 %v2137
      %v2938 = vpop.f32.mrf.mxu0
      %v2939 = vadd.f32 %v2850, %v2938
      %v2940 = vpop.f32.mrf.mxu0
      %v2941 = vadd.f32 %v2852, %v2940
      %2942 = vmatmul.bf16.gmra.mxu0 %v2146
      %v2943 = vpop.f32.mrf.mxu0
      %v2944 = vadd.f32 %v2855, %v2943
      %v2945 = vpop.f32.mrf.mxu0
      %v2946 = vadd.f32 %v2857, %v2945
      %2947 = vmatmul.bf16.gmra.mxu0 %v2155
      %v2948 = vpop.f32.mrf.mxu0
      %v2949 = vadd.f32 %v2860, %v2948
      %v2950 = vpop.f32.mrf.mxu0
      %v2951 = vadd.f32 %v2862, %v2950
      %2952 = vmatmul.bf16.gmra.mxu0 %v2164
      %v2953 = vpop.f32.mrf.mxu0
      %v2954 = vadd.f32 %v2865, %v2953
      %v2955 = vpop.f32.mrf.mxu0
      %v2956 = vadd.f32 %v2867, %v2955
      %2957 = vmatmul.bf16.gmra.mxu0 %v2173
      %v2958 = vpop.f32.mrf.mxu0
      %v2959 = vadd.f32 %v2870, %v2958
      %v2960 = vpop.f32.mrf.mxu0
      %v2961 = vadd.f32 %v2872, %v2960
      %2962 = vmatmul.bf16.gmra.mxu0 %v2182
      %v2963 = vpop.f32.mrf.mxu0
      %v2964 = vadd.f32 %v2875, %v2963
      %v2965 = vpop.f32.mrf.mxu0
      %v2966 = vadd.f32 %v2877, %v2965
      %2967 = vmatmul.bf16.gmra.mxu0 %v2191
      %v2968 = vpop.f32.mrf.mxu0
      %v2969 = vadd.f32 %v2880, %v2968
      %v2970 = vpop.f32.mrf.mxu0
      %v2971 = vadd.f32 %v2882, %v2970
      %2972 = vmatmul.bf16.gmra.mxu0 %v2200
      %v2973 = vpop.f32.mrf.mxu0
      %v2974 = vadd.f32 %v2885, %v2973
      %v2975 = vpop.f32.mrf.mxu0
      %v2976 = vadd.f32 %v2887, %v2975
      %2977 = vmatmul.bf16.gmra.mxu0 %v2209
      %v2978 = vpop.f32.mrf.mxu0
      %v2979 = vadd.f32 %v2890, %v2978
      %v2980 = vpop.f32.mrf.mxu0
      %v2981 = vadd.f32 %v2892, %v2980
      %2982 = vmatmul.bf16.gmra.mxu0 %v2218
      %v2983 = vpop.f32.mrf.mxu0
      %v2984 = vadd.f32 %v2895, %v2983
      %v2985 = vpop.f32.mrf.mxu0
      %v2986 = vadd.f32 %v2897, %v2985
      %2987 = vmatmul.bf16.gmra.mxu0 %v2227
      %v2988 = vpop.f32.mrf.mxu0
      %v2989 = vadd.f32 %v2900, %v2988
      %v2990 = vpop.f32.mrf.mxu0
      %v2991 = vadd.f32 %v2902, %v2990
      %2992 = vmatmul.bf16.gmra.mxu0 %v2236
      %v2993 = vpop.f32.mrf.mxu0
      %v2994 = vadd.f32 %v2905, %v2993
      %v2995 = vpop.f32.mrf.mxu0
      %v2996 = vadd.f32 %v2907, %v2995
      %2997 = vdwg.mxu0
      %2998 = vmatpush.bf16.msra.mxu0 %v2699
      %2999 = vmatpush.bf16.msra.mxu0 %v2698
      %3000 = vmatpush.bf16.msra.mxu0 %v2697
      %3001 = vmatpush.bf16.msra.mxu0 %v2696
      %3002 = vmatpush.bf16.msra.mxu0 %v2695
      %3003 = vmatpush.bf16.msra.mxu0 %v2694
      %3004 = vmatpush.bf16.msra.mxu0 %v2693
      %3005 = vmatpush.bf16.msra.mxu0 %v2692
      %3006 = vmatmul.bf16.gmra.mxu0 %v2102
      %v3007 = vpop.f32.mrf.mxu0
      %v3008 = vadd.f32 %v2919, %v3007
      %v3009 = vpop.f32.mrf.mxu0
      %v3010 = vadd.f32 %v2921, %v3009
      %3011 = vmatmul.bf16.gmra.mxu0 %v2111
      %v3012 = vpop.f32.mrf.mxu0
      %v3013 = vadd.f32 %v2924, %v3012
      %v3014 = vpop.f32.mrf.mxu0
      %v3015 = vadd.f32 %v2926, %v3014
      %3016 = vmatmul.bf16.gmra.mxu0 %v2120
      %v3017 = vpop.f32.mrf.mxu0
      %v3018 = vadd.f32 %v2929, %v3017
      %v3019 = vpop.f32.mrf.mxu0
      %v3020 = vadd.f32 %v2931, %v3019
      %3021 = vmatmul.bf16.gmra.mxu0 %v2129
      %v3022 = vpop.f32.mrf.mxu0
      %v3023 = vadd.f32 %v2934, %v3022
      %v3024 = vpop.f32.mrf.mxu0
      %v3025 = vadd.f32 %v2936, %v3024
      %3026 = vmatmul.bf16.gmra.mxu0 %v2138
      %v3027 = vpop.f32.mrf.mxu0
      %v3028 = vadd.f32 %v2939, %v3027
      %v3029 = vpop.f32.mrf.mxu0
      %v3030 = vadd.f32 %v2941, %v3029
      %3031 = vmatmul.bf16.gmra.mxu0 %v2147
      %v3032 = vpop.f32.mrf.mxu0
      %v3033 = vadd.f32 %v2944, %v3032
      %v3034 = vpop.f32.mrf.mxu0
      %v3035 = vadd.f32 %v2946, %v3034
      %3036 = vmatmul.bf16.gmra.mxu0 %v2156
      %v3037 = vpop.f32.mrf.mxu0
      %v3038 = vadd.f32 %v2949, %v3037
      %v3039 = vpop.f32.mrf.mxu0
      %v3040 = vadd.f32 %v2951, %v3039
      %3041 = vmatmul.bf16.gmra.mxu0 %v2165
      %v3042 = vpop.f32.mrf.mxu0
      %v3043 = vadd.f32 %v2954, %v3042
      %v3044 = vpop.f32.mrf.mxu0
      %v3045 = vadd.f32 %v2956, %v3044
      %3046 = vmatmul.bf16.gmra.mxu0 %v2174
      %v3047 = vpop.f32.mrf.mxu0
      %v3048 = vadd.f32 %v2959, %v3047
      %v3049 = vpop.f32.mrf.mxu0
      %v3050 = vadd.f32 %v2961, %v3049
      %3051 = vmatmul.bf16.gmra.mxu0 %v2183
      %v3052 = vpop.f32.mrf.mxu0
      %v3053 = vadd.f32 %v2964, %v3052
      %v3054 = vpop.f32.mrf.mxu0
      %v3055 = vadd.f32 %v2966, %v3054
      %3056 = vmatmul.bf16.gmra.mxu0 %v2192
      %v3057 = vpop.f32.mrf.mxu0
      %v3058 = vadd.f32 %v2969, %v3057
      %v3059 = vpop.f32.mrf.mxu0
      %v3060 = vadd.f32 %v2971, %v3059
      %3061 = vmatmul.bf16.gmra.mxu0 %v2201
      %v3062 = vpop.f32.mrf.mxu0
      %v3063 = vadd.f32 %v2974, %v3062
      %v3064 = vpop.f32.mrf.mxu0
      %v3065 = vadd.f32 %v2976, %v3064
      %3066 = vmatmul.bf16.gmra.mxu0 %v2210
      %v3067 = vpop.f32.mrf.mxu0
      %v3068 = vadd.f32 %v2979, %v3067
      %v3069 = vpop.f32.mrf.mxu0
      %v3070 = vadd.f32 %v2981, %v3069
      %3071 = vmatmul.bf16.gmra.mxu0 %v2219
      %v3072 = vpop.f32.mrf.mxu0
      %v3073 = vadd.f32 %v2984, %v3072
      %v3074 = vpop.f32.mrf.mxu0
      %v3075 = vadd.f32 %v2986, %v3074
      %3076 = vmatmul.bf16.gmra.mxu0 %v2228
      %v3077 = vpop.f32.mrf.mxu0
      %v3078 = vadd.f32 %v2989, %v3077
      %v3079 = vpop.f32.mrf.mxu0
      %v3080 = vadd.f32 %v2991, %v3079
      %3081 = vmatmul.bf16.gmra.mxu0 %v2237
      %v3082 = vpop.f32.mrf.mxu0
      %v3083 = vadd.f32 %v2994, %v3082
      %v3084 = vpop.f32.mrf.mxu0
      %v3085 = vadd.f32 %v2996, %v3084
      %3086 = vdwg.mxu0
      %3087 = vmatpush.bf16.msra.mxu0 %v2707
      %3088 = vmatpush.bf16.msra.mxu0 %v2706
      %3089 = vmatpush.bf16.msra.mxu0 %v2705
      %3090 = vmatpush.bf16.msra.mxu0 %v2704
      %3091 = vmatpush.bf16.msra.mxu0 %v2703
      %3092 = vmatpush.bf16.msra.mxu0 %v2702
      %3093 = vmatpush.bf16.msra.mxu0 %v2701
      %3094 = vmatpush.bf16.msra.mxu0 %v2700
      %3095 = vmatmul.bf16.gmra.mxu0 %v2103
      %v3096 = vpop.f32.mrf.mxu0
      %v3097 = vadd.f32 %v3008, %v3096
      %v3098 = vpop.f32.mrf.mxu0
      %v3099 = vadd.f32 %v3010, %v3098
      %3100 = vmatmul.bf16.gmra.mxu0 %v2112
      %v3101 = vpop.f32.mrf.mxu0
      %v3102 = vadd.f32 %v3013, %v3101
      %v3103 = vpop.f32.mrf.mxu0
      %v3104 = vadd.f32 %v3015, %v3103
      %3105 = vmatmul.bf16.gmra.mxu0 %v2121
      %v3106 = vpop.f32.mrf.mxu0
      %v3107 = vadd.f32 %v3018, %v3106
      %v3108 = vpop.f32.mrf.mxu0
      %v3109 = vadd.f32 %v3020, %v3108
      %3110 = vmatmul.bf16.gmra.mxu0 %v2130
      %v3111 = vpop.f32.mrf.mxu0
      %v3112 = vadd.f32 %v3023, %v3111
      %v3113 = vpop.f32.mrf.mxu0
      %v3114 = vadd.f32 %v3025, %v3113
      %3115 = vmatmul.bf16.gmra.mxu0 %v2139
      %v3116 = vpop.f32.mrf.mxu0
      %v3117 = vadd.f32 %v3028, %v3116
      %v3118 = vpop.f32.mrf.mxu0
      %v3119 = vadd.f32 %v3030, %v3118
      %3120 = vmatmul.bf16.gmra.mxu0 %v2148
      %v3121 = vpop.f32.mrf.mxu0
      %v3122 = vadd.f32 %v3033, %v3121
      %v3123 = vpop.f32.mrf.mxu0
      %v3124 = vadd.f32 %v3035, %v3123
      %3125 = vmatmul.bf16.gmra.mxu0 %v2157
      %v3126 = vpop.f32.mrf.mxu0
      %v3127 = vadd.f32 %v3038, %v3126
      %v3128 = vpop.f32.mrf.mxu0
      %v3129 = vadd.f32 %v3040, %v3128
      %3130 = vmatmul.bf16.gmra.mxu0 %v2166
      %v3131 = vpop.f32.mrf.mxu0
      %v3132 = vadd.f32 %v3043, %v3131
      %v3133 = vpop.f32.mrf.mxu0
      %v3134 = vadd.f32 %v3045, %v3133
      %3135 = vmatmul.bf16.gmra.mxu0 %v2175
      %v3136 = vpop.f32.mrf.mxu0
      %v3137 = vadd.f32 %v3048, %v3136
      %v3138 = vpop.f32.mrf.mxu0
      %v3139 = vadd.f32 %v3050, %v3138
      %3140 = vmatmul.bf16.gmra.mxu0 %v2184
      %v3141 = vpop.f32.mrf.mxu0
      %v3142 = vadd.f32 %v3053, %v3141
      %v3143 = vpop.f32.mrf.mxu0
      %v3144 = vadd.f32 %v3055, %v3143
      %3145 = vmatmul.bf16.gmra.mxu0 %v2193
      %v3146 = vpop.f32.mrf.mxu0
      %v3147 = vadd.f32 %v3058, %v3146
      %v3148 = vpop.f32.mrf.mxu0
      %v3149 = vadd.f32 %v3060, %v3148
      %3150 = vmatmul.bf16.gmra.mxu0 %v2202
      %v3151 = vpop.f32.mrf.mxu0
      %v3152 = vadd.f32 %v3063, %v3151
      %v3153 = vpop.f32.mrf.mxu0
      %v3154 = vadd.f32 %v3065, %v3153
      %3155 = vmatmul.bf16.gmra.mxu0 %v2211
      %v3156 = vpop.f32.mrf.mxu0
      %v3157 = vadd.f32 %v3068, %v3156
      %v3158 = vpop.f32.mrf.mxu0
      %v3159 = vadd.f32 %v3070, %v3158
      %3160 = vmatmul.bf16.gmra.mxu0 %v2220
      %v3161 = vpop.f32.mrf.mxu0
      %v3162 = vadd.f32 %v3073, %v3161
      %v3163 = vpop.f32.mrf.mxu0
      %v3164 = vadd.f32 %v3075, %v3163
      %3165 = vmatmul.bf16.gmra.mxu0 %v2229
      %v3166 = vpop.f32.mrf.mxu0
      %v3167 = vadd.f32 %v3078, %v3166
      %v3168 = vpop.f32.mrf.mxu0
      %v3169 = vadd.f32 %v3080, %v3168
      %3170 = vmatmul.bf16.gmra.mxu0 %v2238
      %v3171 = vpop.f32.mrf.mxu0
      %v3172 = vadd.f32 %v3083, %v3171
      %v3173 = vpop.f32.mrf.mxu0
      %v3174 = vadd.f32 %v3085, %v3173
      %3175 = vdwg.mxu0
      %3176 = vmatpush.bf16.msra.mxu0 %v2715
      %3177 = vmatpush.bf16.msra.mxu0 %v2714
      %3178 = vmatpush.bf16.msra.mxu0 %v2713
      %3179 = vmatpush.bf16.msra.mxu0 %v2712
      %3180 = vmatpush.bf16.msra.mxu0 %v2711
      %3181 = vmatpush.bf16.msra.mxu0 %v2710
      %3182 = vmatpush.bf16.msra.mxu0 %v2709
      %3183 = vmatpush.bf16.msra.mxu0 %v2708
      %3184 = vmatmul.bf16.gmra.mxu0 %v2104
      %v3185 = vpop.f32.mrf.mxu0
      %v3186 = vadd.f32 %v3097, %v3185
      %v3187 = vpop.f32.mrf.mxu0
      %v3188 = vadd.f32 %v3099, %v3187
      %3189 = vmatmul.bf16.gmra.mxu0 %v2113
      %v3190 = vpop.f32.mrf.mxu0
      %v3191 = vadd.f32 %v3102, %v3190
      %v3192 = vpop.f32.mrf.mxu0
      %v3193 = vadd.f32 %v3104, %v3192
      %3194 = vmatmul.bf16.gmra.mxu0 %v2122
      %v3195 = vpop.f32.mrf.mxu0
      %v3196 = vadd.f32 %v3107, %v3195
      %v3197 = vpop.f32.mrf.mxu0
      %v3198 = vadd.f32 %v3109, %v3197
      %3199 = vmatmul.bf16.gmra.mxu0 %v2131
      %v3200 = vpop.f32.mrf.mxu0
      %v3201 = vadd.f32 %v3112, %v3200
      %v3202 = vpop.f32.mrf.mxu0
      %v3203 = vadd.f32 %v3114, %v3202
      %3204 = vmatmul.bf16.gmra.mxu0 %v2140
      %v3205 = vpop.f32.mrf.mxu0
      %v3206 = vadd.f32 %v3117, %v3205
      %v3207 = vpop.f32.mrf.mxu0
      %v3208 = vadd.f32 %v3119, %v3207
      %3209 = vmatmul.bf16.gmra.mxu0 %v2149
      %v3210 = vpop.f32.mrf.mxu0
      %v3211 = vadd.f32 %v3122, %v3210
      %v3212 = vpop.f32.mrf.mxu0
      %v3213 = vadd.f32 %v3124, %v3212
      %3214 = vmatmul.bf16.gmra.mxu0 %v2158
      %v3215 = vpop.f32.mrf.mxu0
      %v3216 = vadd.f32 %v3127, %v3215
      %v3217 = vpop.f32.mrf.mxu0
      %v3218 = vadd.f32 %v3129, %v3217
      %3219 = vmatmul.bf16.gmra.mxu0 %v2167
      %v3220 = vpop.f32.mrf.mxu0
      %v3221 = vadd.f32 %v3132, %v3220
      %v3222 = vpop.f32.mrf.mxu0
      %v3223 = vadd.f32 %v3134, %v3222
      %3224 = vmatmul.bf16.gmra.mxu0 %v2176
      %v3225 = vpop.f32.mrf.mxu0
      %v3226 = vadd.f32 %v3137, %v3225
      %v3227 = vpop.f32.mrf.mxu0
      %v3228 = vadd.f32 %v3139, %v3227
      %3229 = vmatmul.bf16.gmra.mxu0 %v2185
      %v3230 = vpop.f32.mrf.mxu0
      %v3231 = vadd.f32 %v3142, %v3230
      %v3232 = vpop.f32.mrf.mxu0
      %v3233 = vadd.f32 %v3144, %v3232
      %3234 = vmatmul.bf16.gmra.mxu0 %v2194
      %v3235 = vpop.f32.mrf.mxu0
      %v3236 = vadd.f32 %v3147, %v3235
      %v3237 = vpop.f32.mrf.mxu0
      %v3238 = vadd.f32 %v3149, %v3237
      %3239 = vmatmul.bf16.gmra.mxu0 %v2203
      %v3240 = vpop.f32.mrf.mxu0
      %v3241 = vadd.f32 %v3152, %v3240
      %v3242 = vpop.f32.mrf.mxu0
      %v3243 = vadd.f32 %v3154, %v3242
      %3244 = vmatmul.bf16.gmra.mxu0 %v2212
      %v3245 = vpop.f32.mrf.mxu0
      %v3246 = vadd.f32 %v3157, %v3245
      %v3247 = vpop.f32.mrf.mxu0
      %v3248 = vadd.f32 %v3159, %v3247
      %3249 = vmatmul.bf16.gmra.mxu0 %v2221
      %v3250 = vpop.f32.mrf.mxu0
      %v3251 = vadd.f32 %v3162, %v3250
      %v3252 = vpop.f32.mrf.mxu0
      %v3253 = vadd.f32 %v3164, %v3252
      %3254 = vmatmul.bf16.gmra.mxu0 %v2230
      %v3255 = vpop.f32.mrf.mxu0
      %v3256 = vadd.f32 %v3167, %v3255
      %v3257 = vpop.f32.mrf.mxu0
      %v3258 = vadd.f32 %v3169, %v3257
      %3259 = vmatmul.bf16.gmra.mxu0 %v2239
      %v3260 = vpop.f32.mrf.mxu0
      %v3261 = vadd.f32 %v3172, %v3260
      %v3262 = vpop.f32.mrf.mxu0
      %v3263 = vadd.f32 %v3174, %v3262
      %3264 = vdwg.mxu0
      %3265 = vmatpush.bf16.msra.mxu0 %v2723
      %3266 = vmatpush.bf16.msra.mxu0 %v2722
      %3267 = vmatpush.bf16.msra.mxu0 %v2721
      %3268 = vmatpush.bf16.msra.mxu0 %v2720
      %3269 = vmatpush.bf16.msra.mxu0 %v2719
      %3270 = vmatpush.bf16.msra.mxu0 %v2718
      %3271 = vmatpush.bf16.msra.mxu0 %v2717
      %3272 = vmatpush.bf16.msra.mxu0 %v2716
      %3273 = vmatmul.bf16.gmra.mxu0 %v2105
      %v3274 = vpop.f32.mrf.mxu0
      %v3275 = vadd.f32 %v3186, %v3274
      %v3276 = vpop.f32.mrf.mxu0
      %v3277 = vadd.f32 %v3188, %v3276
      %3278 = vmatmul.bf16.gmra.mxu0 %v2114
      %v3279 = vpop.f32.mrf.mxu0
      %v3280 = vadd.f32 %v3191, %v3279
      %v3281 = vpop.f32.mrf.mxu0
      %v3282 = vadd.f32 %v3193, %v3281
      %3283 = vmatmul.bf16.gmra.mxu0 %v2123
      %v3284 = vpop.f32.mrf.mxu0
      %v3285 = vadd.f32 %v3196, %v3284
      %v3286 = vpop.f32.mrf.mxu0
      %v3287 = vadd.f32 %v3198, %v3286
      %3288 = vmatmul.bf16.gmra.mxu0 %v2132
      %v3289 = vpop.f32.mrf.mxu0
      %v3290 = vadd.f32 %v3201, %v3289
      %v3291 = vpop.f32.mrf.mxu0
      %v3292 = vadd.f32 %v3203, %v3291
      %3293 = vmatmul.bf16.gmra.mxu0 %v2141
      %v3294 = vpop.f32.mrf.mxu0
      %v3295 = vadd.f32 %v3206, %v3294
      %v3296 = vpop.f32.mrf.mxu0
      %v3297 = vadd.f32 %v3208, %v3296
      %3298 = vmatmul.bf16.gmra.mxu0 %v2150
      %v3299 = vpop.f32.mrf.mxu0
      %v3300 = vadd.f32 %v3211, %v3299
      %v3301 = vpop.f32.mrf.mxu0
      %v3302 = vadd.f32 %v3213, %v3301
      %3303 = vmatmul.bf16.gmra.mxu0 %v2159
      %v3304 = vpop.f32.mrf.mxu0
      %v3305 = vadd.f32 %v3216, %v3304
      %v3306 = vpop.f32.mrf.mxu0
      %v3307 = vadd.f32 %v3218, %v3306
      %3308 = vmatmul.bf16.gmra.mxu0 %v2168
      %v3309 = vpop.f32.mrf.mxu0
      %v3310 = vadd.f32 %v3221, %v3309
      %v3311 = vpop.f32.mrf.mxu0
      %v3312 = vadd.f32 %v3223, %v3311
      %3313 = vmatmul.bf16.gmra.mxu0 %v2177
      %v3314 = vpop.f32.mrf.mxu0
      %v3315 = vadd.f32 %v3226, %v3314
      %v3316 = vpop.f32.mrf.mxu0
      %v3317 = vadd.f32 %v3228, %v3316
      %3318 = vmatmul.bf16.gmra.mxu0 %v2186
      %v3319 = vpop.f32.mrf.mxu0
      %v3320 = vadd.f32 %v3231, %v3319
      %v3321 = vpop.f32.mrf.mxu0
      %v3322 = vadd.f32 %v3233, %v3321
      %3323 = vmatmul.bf16.gmra.mxu0 %v2195
      %v3324 = vpop.f32.mrf.mxu0
      %v3325 = vadd.f32 %v3236, %v3324
      %v3326 = vpop.f32.mrf.mxu0
      %v3327 = vadd.f32 %v3238, %v3326
      %3328 = vmatmul.bf16.gmra.mxu0 %v2204
      %v3329 = vpop.f32.mrf.mxu0
      %v3330 = vadd.f32 %v3241, %v3329
      %v3331 = vpop.f32.mrf.mxu0
      %v3332 = vadd.f32 %v3243, %v3331
      %3333 = vmatmul.bf16.gmra.mxu0 %v2213
      %v3334 = vpop.f32.mrf.mxu0
      %v3335 = vadd.f32 %v3246, %v3334
      %v3336 = vpop.f32.mrf.mxu0
      %v3337 = vadd.f32 %v3248, %v3336
      %3338 = vmatmul.bf16.gmra.mxu0 %v2222
      %v3339 = vpop.f32.mrf.mxu0
      %v3340 = vadd.f32 %v3251, %v3339
      %v3341 = vpop.f32.mrf.mxu0
      %v3342 = vadd.f32 %v3253, %v3341
      %3343 = vmatmul.bf16.gmra.mxu0 %v2231
      %v3344 = vpop.f32.mrf.mxu0
      %v3345 = vadd.f32 %v3256, %v3344
      %v3346 = vpop.f32.mrf.mxu0
      %v3347 = vadd.f32 %v3258, %v3346
      %3348 = vmatmul.bf16.gmra.mxu0 %v2240
      %v3349 = vpop.f32.mrf.mxu0
      %v3350 = vadd.f32 %v3261, %v3349
      %v3351 = vpop.f32.mrf.mxu0
      %v3352 = vadd.f32 %v3263, %v3351
      %3353 = vdwg.mxu0
      %3354 = vmatpush.bf16.msra.mxu0 %v2731
      %3355 = vmatpush.bf16.msra.mxu0 %v2730
      %3356 = vmatpush.bf16.msra.mxu0 %v2729
      %3357 = vmatpush.bf16.msra.mxu0 %v2728
      %3358 = vmatpush.bf16.msra.mxu0 %v2727
      %3359 = vmatpush.bf16.msra.mxu0 %v2726
      %3360 = vmatpush.bf16.msra.mxu0 %v2725
      %3361 = vmatpush.bf16.msra.mxu0 %v2724
      %3362 = vmatmul.bf16.gmra.mxu0 %v2106
      %v3363 = vpop.f32.mrf.mxu0
      %v3364 = vadd.f32 %v3275, %v3363
      %v3365 = vpop.f32.mrf.mxu0
      %v3366 = vadd.f32 %v3277, %v3365
      %3367 = vmatmul.bf16.gmra.mxu0 %v2115
      %v3368 = vpop.f32.mrf.mxu0
      %v3369 = vadd.f32 %v3280, %v3368
      %v3370 = vpop.f32.mrf.mxu0
      %v3371 = vadd.f32 %v3282, %v3370
      %3372 = vmatmul.bf16.gmra.mxu0 %v2124
      %v3373 = vpop.f32.mrf.mxu0
      %v3374 = vadd.f32 %v3285, %v3373
      %v3375 = vpop.f32.mrf.mxu0
      %v3376 = vadd.f32 %v3287, %v3375
      %3377 = vmatmul.bf16.gmra.mxu0 %v2133
      %v3378 = vpop.f32.mrf.mxu0
      %v3379 = vadd.f32 %v3290, %v3378
      %v3380 = vpop.f32.mrf.mxu0
      %v3381 = vadd.f32 %v3292, %v3380
      %3382 = vmatmul.bf16.gmra.mxu0 %v2142
      %v3383 = vpop.f32.mrf.mxu0
      %v3384 = vadd.f32 %v3295, %v3383
      %v3385 = vpop.f32.mrf.mxu0
      %v3386 = vadd.f32 %v3297, %v3385
      %3387 = vmatmul.bf16.gmra.mxu0 %v2151
      %v3388 = vpop.f32.mrf.mxu0
      %v3389 = vadd.f32 %v3300, %v3388
      %v3390 = vpop.f32.mrf.mxu0
      %v3391 = vadd.f32 %v3302, %v3390
      %3392 = vmatmul.bf16.gmra.mxu0 %v2160
      %v3393 = vpop.f32.mrf.mxu0
      %v3394 = vadd.f32 %v3305, %v3393
      %v3395 = vpop.f32.mrf.mxu0
      %v3396 = vadd.f32 %v3307, %v3395
      %3397 = vmatmul.bf16.gmra.mxu0 %v2169
      %v3398 = vpop.f32.mrf.mxu0
      %v3399 = vadd.f32 %v3310, %v3398
      %v3400 = vpop.f32.mrf.mxu0
      %v3401 = vadd.f32 %v3312, %v3400
      %3402 = vmatmul.bf16.gmra.mxu0 %v2178
      %v3403 = vpop.f32.mrf.mxu0
      %v3404 = vadd.f32 %v3315, %v3403
      %v3405 = vpop.f32.mrf.mxu0
      %v3406 = vadd.f32 %v3317, %v3405
      %3407 = vmatmul.bf16.gmra.mxu0 %v2187
      %v3408 = vpop.f32.mrf.mxu0
      %v3409 = vadd.f32 %v3320, %v3408
      %v3410 = vpop.f32.mrf.mxu0
      %v3411 = vadd.f32 %v3322, %v3410
      %3412 = vmatmul.bf16.gmra.mxu0 %v2196
      %v3413 = vpop.f32.mrf.mxu0
      %v3414 = vadd.f32 %v3325, %v3413
      %v3415 = vpop.f32.mrf.mxu0
      %v3416 = vadd.f32 %v3327, %v3415
      %3417 = vmatmul.bf16.gmra.mxu0 %v2205
      %v3418 = vpop.f32.mrf.mxu0
      %v3419 = vadd.f32 %v3330, %v3418
      %v3420 = vpop.f32.mrf.mxu0
      %v3421 = vadd.f32 %v3332, %v3420
      %3422 = vmatmul.bf16.gmra.mxu0 %v2214
      %v3423 = vpop.f32.mrf.mxu0
      %v3424 = vadd.f32 %v3335, %v3423
      %v3425 = vpop.f32.mrf.mxu0
      %v3426 = vadd.f32 %v3337, %v3425
      %3427 = vmatmul.bf16.gmra.mxu0 %v2223
      %v3428 = vpop.f32.mrf.mxu0
      %v3429 = vadd.f32 %v3340, %v3428
      %v3430 = vpop.f32.mrf.mxu0
      %v3431 = vadd.f32 %v3342, %v3430
      %3432 = vmatmul.bf16.gmra.mxu0 %v2232
      %v3433 = vpop.f32.mrf.mxu0
      %v3434 = vadd.f32 %v3345, %v3433
      %v3435 = vpop.f32.mrf.mxu0
      %v3436 = vadd.f32 %v3347, %v3435
      %3437 = vmatmul.bf16.gmra.mxu0 %v2241
      %v3438 = vpop.f32.mrf.mxu0
      %v3439 = vadd.f32 %v3350, %v3438
      %v3440 = vpop.f32.mrf.mxu0
      %v3441 = vadd.f32 %v3352, %v3440
      %3442 = vdwg.mxu0
      %3443 = vmatpush.bf16.msra.mxu0 %v2739
      %3444 = vmatpush.bf16.msra.mxu0 %v2738
      %3445 = vmatpush.bf16.msra.mxu0 %v2737
      %3446 = vmatpush.bf16.msra.mxu0 %v2736
      %3447 = vmatpush.bf16.msra.mxu0 %v2735
      %3448 = vmatpush.bf16.msra.mxu0 %v2734
      %3449 = vmatpush.bf16.msra.mxu0 %v2733
      %3450 = vmatpush.bf16.msra.mxu0 %v2732
      %3451 = vmatmul.bf16.gmra.mxu0 %v2107
      %v3452 = vpop.f32.mrf.mxu0
      %v3453 = vadd.f32 %v3364, %v3452
      %v3454 = vpop.f32.mrf.mxu0
      %v3455 = vadd.f32 %v3366, %v3454
      %3456 = vmatmul.bf16.gmra.mxu0 %v2116
      %v3457 = vpop.f32.mrf.mxu0
      %v3458 = vadd.f32 %v3369, %v3457
      %v3459 = vpop.f32.mrf.mxu0
      %v3460 = vadd.f32 %v3371, %v3459
      %3461 = vmatmul.bf16.gmra.mxu0 %v2125
      %v3462 = vpop.f32.mrf.mxu0
      %v3463 = vadd.f32 %v3374, %v3462
      %v3464 = vpop.f32.mrf.mxu0
      %v3465 = vadd.f32 %v3376, %v3464
      %3466 = vmatmul.bf16.gmra.mxu0 %v2134
      %v3467 = vpop.f32.mrf.mxu0
      %v3468 = vadd.f32 %v3379, %v3467
      %v3469 = vpop.f32.mrf.mxu0
      %v3470 = vadd.f32 %v3381, %v3469
      %3471 = vmatmul.bf16.gmra.mxu0 %v2143
      %v3472 = vpop.f32.mrf.mxu0
      %v3473 = vadd.f32 %v3384, %v3472
      %v3474 = vpop.f32.mrf.mxu0
      %v3475 = vadd.f32 %v3386, %v3474
      %3476 = vmatmul.bf16.gmra.mxu0 %v2152
      %v3477 = vpop.f32.mrf.mxu0
      %v3478 = vadd.f32 %v3389, %v3477
      %v3479 = vpop.f32.mrf.mxu0
      %v3480 = vadd.f32 %v3391, %v3479
      %3481 = vmatmul.bf16.gmra.mxu0 %v2161
      %v3482 = vpop.f32.mrf.mxu0
      %v3483 = vadd.f32 %v3394, %v3482
      %v3484 = vpop.f32.mrf.mxu0
      %v3485 = vadd.f32 %v3396, %v3484
      %3486 = vmatmul.bf16.gmra.mxu0 %v2170
      %v3487 = vpop.f32.mrf.mxu0
      %v3488 = vadd.f32 %v3399, %v3487
      %v3489 = vpop.f32.mrf.mxu0
      %v3490 = vadd.f32 %v3401, %v3489
      %3491 = vmatmul.bf16.gmra.mxu0 %v2179
      %v3492 = vpop.f32.mrf.mxu0
      %v3493 = vadd.f32 %v3404, %v3492
      %v3494 = vpop.f32.mrf.mxu0
      %v3495 = vadd.f32 %v3406, %v3494
      %3496 = vmatmul.bf16.gmra.mxu0 %v2188
      %v3497 = vpop.f32.mrf.mxu0
      %v3498 = vadd.f32 %v3409, %v3497
      %v3499 = vpop.f32.mrf.mxu0
      %v3500 = vadd.f32 %v3411, %v3499
      %3501 = vmatmul.bf16.gmra.mxu0 %v2197
      %v3502 = vpop.f32.mrf.mxu0
      %v3503 = vadd.f32 %v3414, %v3502
      %v3504 = vpop.f32.mrf.mxu0
      %v3505 = vadd.f32 %v3416, %v3504
      %3506 = vmatmul.bf16.gmra.mxu0 %v2206
      %v3507 = vpop.f32.mrf.mxu0
      %v3508 = vadd.f32 %v3419, %v3507
      %v3509 = vpop.f32.mrf.mxu0
      %v3510 = vadd.f32 %v3421, %v3509
      %3511 = vmatmul.bf16.gmra.mxu0 %v2215
      %v3512 = vpop.f32.mrf.mxu0
      %v3513 = vadd.f32 %v3424, %v3512
      %v3514 = vpop.f32.mrf.mxu0
      %v3515 = vadd.f32 %v3426, %v3514
      %3516 = vmatmul.bf16.gmra.mxu0 %v2224
      %v3517 = vpop.f32.mrf.mxu0
      %v3518 = vadd.f32 %v3429, %v3517
      %v3519 = vpop.f32.mrf.mxu0
      %v3520 = vadd.f32 %v3431, %v3519
      %3521 = vmatmul.bf16.gmra.mxu0 %v2233
      %v3522 = vpop.f32.mrf.mxu0
      %v3523 = vadd.f32 %v3434, %v3522
      %v3524 = vpop.f32.mrf.mxu0
      %v3525 = vadd.f32 %v3436, %v3524
      %3526 = vmatmul.bf16.gmra.mxu0 %v2242
      %v3527 = vpop.f32.mrf.mxu0
      %v3528 = vadd.f32 %v3439, %v3527
      %v3529 = vpop.f32.mrf.mxu0
      %v3530 = vadd.f32 %v3441, %v3529
      %3531 = vdwg.mxu0
      %3532 = vmatpush.bf16.msra.mxu0 %v2747
      %3533 = vmatpush.bf16.msra.mxu0 %v2746
      %3534 = vmatpush.bf16.msra.mxu0 %v2745
      %3535 = vmatpush.bf16.msra.mxu0 %v2744
      %3536 = vmatpush.bf16.msra.mxu0 %v2743
      %3537 = vmatpush.bf16.msra.mxu0 %v2742
      %3538 = vmatpush.bf16.msra.mxu0 %v2741
      %3539 = vmatpush.bf16.msra.mxu0 %v2740
      %3540 = vmatmul.bf16.gmra.mxu0 %v2108
      %v3541 = vpop.f32.mrf.mxu0
      %v3542 = vadd.f32 %v3453, %v3541
      %v3543 = vpop.f32.mrf.mxu0
      %v3544 = vadd.f32 %v3455, %v3543
      %3545 = vmatmul.bf16.gmra.mxu0 %v2117
      %v3546 = vpop.f32.mrf.mxu0
      %v3547 = vadd.f32 %v3458, %v3546
      %v3548 = vpop.f32.mrf.mxu0
      %v3549 = vadd.f32 %v3460, %v3548
      %3550 = vmatmul.bf16.gmra.mxu0 %v2126
      %v3551 = vpop.f32.mrf.mxu0
      %v3552 = vadd.f32 %v3463, %v3551
      %v3553 = vpop.f32.mrf.mxu0
      %v3554 = vadd.f32 %v3465, %v3553
      %3555 = vmatmul.bf16.gmra.mxu0 %v2135
      %v3556 = vpop.f32.mrf.mxu0
      %v3557 = vadd.f32 %v3468, %v3556
      %v3558 = vpop.f32.mrf.mxu0
      %v3559 = vadd.f32 %v3470, %v3558
      %3560 = vmatmul.bf16.gmra.mxu0 %v2144
      %v3561 = vpop.f32.mrf.mxu0
      %v3562 = vadd.f32 %v3473, %v3561
      %v3563 = vpop.f32.mrf.mxu0
      %v3564 = vadd.f32 %v3475, %v3563
      %3565 = vmatmul.bf16.gmra.mxu0 %v2153
      %v3566 = vpop.f32.mrf.mxu0
      %v3567 = vadd.f32 %v3478, %v3566
      %v3568 = vpop.f32.mrf.mxu0
      %v3569 = vadd.f32 %v3480, %v3568
      %3570 = vmatmul.bf16.gmra.mxu0 %v2162
      %v3571 = vpop.f32.mrf.mxu0
      %v3572 = vadd.f32 %v3483, %v3571
      %v3573 = vpop.f32.mrf.mxu0
      %v3574 = vadd.f32 %v3485, %v3573
      %3575 = vmatmul.bf16.gmra.mxu0 %v2171
      %v3576 = vpop.f32.mrf.mxu0
      %v3577 = vadd.f32 %v3488, %v3576
      %v3578 = vpop.f32.mrf.mxu0
      %v3579 = vadd.f32 %v3490, %v3578
      %3580 = vmatmul.bf16.gmra.mxu0 %v2180
      %v3581 = vpop.f32.mrf.mxu0
      %v3582 = vadd.f32 %v3493, %v3581
      %v3583 = vpop.f32.mrf.mxu0
      %v3584 = vadd.f32 %v3495, %v3583
      %3585 = vmatmul.bf16.gmra.mxu0 %v2189
      %v3586 = vpop.f32.mrf.mxu0
      %v3587 = vadd.f32 %v3498, %v3586
      %v3588 = vpop.f32.mrf.mxu0
      %v3589 = vadd.f32 %v3500, %v3588
      %3590 = vmatmul.bf16.gmra.mxu0 %v2198
      %v3591 = vpop.f32.mrf.mxu0
      %v3592 = vadd.f32 %v3503, %v3591
      %v3593 = vpop.f32.mrf.mxu0
      %v3594 = vadd.f32 %v3505, %v3593
      %3595 = vmatmul.bf16.gmra.mxu0 %v2207
      %v3596 = vpop.f32.mrf.mxu0
      %v3597 = vadd.f32 %v3508, %v3596
      %v3598 = vpop.f32.mrf.mxu0
      %v3599 = vadd.f32 %v3510, %v3598
      %3600 = vmatmul.bf16.gmra.mxu0 %v2216
      %v3601 = vpop.f32.mrf.mxu0
      %v3602 = vadd.f32 %v3513, %v3601
      %v3603 = vpop.f32.mrf.mxu0
      %v3604 = vadd.f32 %v3515, %v3603
      %3605 = vmatmul.bf16.gmra.mxu0 %v2225
      %v3606 = vpop.f32.mrf.mxu0
      %v3607 = vadd.f32 %v3518, %v3606
      %v3608 = vpop.f32.mrf.mxu0
      %v3609 = vadd.f32 %v3520, %v3608
      %3610 = vmatmul.bf16.gmra.mxu0 %v2234
      %v3611 = vpop.f32.mrf.mxu0
      %v3612 = vadd.f32 %v3523, %v3611
      %v3613 = vpop.f32.mrf.mxu0
      %v3614 = vadd.f32 %v3525, %v3613
      %3615 = vmatmul.bf16.gmra.mxu0 %v2243
      %v3616 = vpop.f32.mrf.mxu0
      %v3617 = vadd.f32 %v3528, %v3616
      %v3618 = vpop.f32.mrf.mxu0
      %v3619 = vadd.f32 %v3530, %v3618
      %3620 = vdwg.mxu0
      %v3621 = vpack.c.bf16 %v3542, %v3542
      %v3622 = vpack.c.bf16 %v3544, %v3544
      %v3623 = vpack.c.bf16 %v3547, %v3547
      %v3624 = vpack.c.bf16 %v3549, %v3549
      %v3625 = vpack.c.bf16 %v3552, %v3552
      %v3626 = vpack.c.bf16 %v3554, %v3554
      %v3627 = vpack.c.bf16 %v3557, %v3557
      %v3628 = vpack.c.bf16 %v3559, %v3559
      %v3629 = vpack.c.bf16 %v3562, %v3562
      %v3630 = vpack.c.bf16 %v3564, %v3564
      %v3631 = vpack.c.bf16 %v3567, %v3567
      %v3632 = vpack.c.bf16 %v3569, %v3569
      %v3633 = vpack.c.bf16 %v3572, %v3572
      %v3634 = vpack.c.bf16 %v3574, %v3574
      %v3635 = vpack.c.bf16 %v3577, %v3577
      %v3636 = vpack.c.bf16 %v3579, %v3579
      %v3637 = vpack.c.bf16 %v3582, %v3582
      %v3638 = vpack.c.bf16 %v3584, %v3584
      %v3639 = vpack.c.bf16 %v3587, %v3587
      %v3640 = vpack.c.bf16 %v3589, %v3589
      %v3641 = vpack.c.bf16 %v3592, %v3592
      %v3642 = vpack.c.bf16 %v3594, %v3594
      %v3643 = vpack.c.bf16 %v3597, %v3597
      %v3644 = vpack.c.bf16 %v3599, %v3599
      %v3645 = vpack.c.bf16 %v3602, %v3602
      %v3646 = vpack.c.bf16 %v3604, %v3604
      %v3647 = vpack.c.bf16 %v3607, %v3607
      %v3648 = vpack.c.bf16 %v3609, %v3609
      %v3649 = vpack.c.bf16 %v3612, %v3612
      %v3650 = vpack.c.bf16 %v3614, %v3614
      %v3651 = vpack.c.bf16 %v3617, %v3617
      %v3652 = vpack.c.bf16 %v3619, %v3619
      %3653 = vst [vmem:[%s233] sm:$0xf] %v3621
      %3654 = vst [vmem:[%s233 + $0x4] sm:$0xf] %v3622
      %3655 = vst [vmem:[%s233 + $0x8] sm:$0xf] %v3623
      %3656 = vst [vmem:[%s233 + $0xc] sm:$0xf] %v3624
      %3657 = vst [vmem:[%s233 + $0x10] sm:$0xf] %v3625
      %3658 = vst [vmem:[%s233 + $0x14] sm:$0xf] %v3626
      %3659 = vst [vmem:[%s233 + $0x18] sm:$0xf] %v3627
      %3660 = vst [vmem:[%s233 + $0x1c] sm:$0xf] %v3628
      %3661 = vst [vmem:[%s233 + $0x20] sm:$0xf] %v3629
      %3662 = vst [vmem:[%s233 + $0x24] sm:$0xf] %v3630
      %3663 = vst [vmem:[%s233 + $0x28] sm:$0xf] %v3631
      %3664 = vst [vmem:[%s233 + $0x2c] sm:$0xf] %v3632
      %3665 = vst [vmem:[%s233 + $0x30] sm:$0xf] %v3633
      %3666 = vst [vmem:[%s233 + $0x34] sm:$0xf] %v3634
      %3667 = vst [vmem:[%s233 + $0x38] sm:$0xf] %v3635
      %3668 = vst [vmem:[%s233 + $0x3c] sm:$0xf] %v3636
      %3669 = vst [vmem:[%s233 + $0x40] sm:$0xf] %v3637
      %3670 = vst [vmem:[%s233 + $0x44] sm:$0xf] %v3638
      %3671 = vst [vmem:[%s233 + $0x48] sm:$0xf] %v3639
      %3672 = vst [vmem:[%s233 + $0x4c] sm:$0xf] %v3640
      %3673 = vst [vmem:[%s233 + $0x50] sm:$0xf] %v3641
      %3674 = vst [vmem:[%s233 + $0x54] sm:$0xf] %v3642
      %3675 = vst [vmem:[%s233 + $0x58] sm:$0xf] %v3643
      %3676 = vst [vmem:[%s233 + $0x5c] sm:$0xf] %v3644
      %3677 = vst [vmem:[%s233 + $0x60] sm:$0xf] %v3645
      %3678 = vst [vmem:[%s233 + $0x64] sm:$0xf] %v3646
      %3679 = vst [vmem:[%s233 + $0x68] sm:$0xf] %v3647
      %3680 = vst [vmem:[%s233 + $0x6c] sm:$0xf] %v3648
      %3681 = vst [vmem:[%s233 + $0x70] sm:$0xf] %v3649
      %3682 = vst [vmem:[%s233 + $0x74] sm:$0xf] %v3650
      %3683 = vst [vmem:[%s233 + $0x78] sm:$0xf] %v3651
      %3684 = vst [vmem:[%s233 + $0x7c] sm:$0xf] %v3652
      %v3685 = vadd.f32 %v3542, %v3544
      %v3686 = vadd.f32 %v3685, %v3547
      %v3687 = vadd.f32 %v3686, %v3549
      %v3688 = vadd.f32 %v3687, %v3552
      %v3689 = vadd.f32 %v3688, %v3554
      %v3690 = vadd.f32 %v3689, %v3557
      %v3691 = vadd.f32 %v3690, %v3559
      %v3692 = vadd.f32 %v3691, %v3562
      %v3693 = vadd.f32 %v3692, %v3564
      %v3694 = vadd.f32 %v3693, %v3567
      %v3695 = vadd.f32 %v3694, %v3569
      %v3696 = vadd.f32 %v3695, %v3572
      %v3697 = vadd.f32 %v3696, %v3574
      %v3698 = vadd.f32 %v3697, %v3577
      %v3699 = vadd.f32 %v3698, %v3579
      %v3700 = vadd.f32 %v3699, %v3582
      %v3701 = vadd.f32 %v3700, %v3584
      %v3702 = vadd.f32 %v3701, %v3587
      %v3703 = vadd.f32 %v3702, %v3589
      %v3704 = vadd.f32 %v3703, %v3592
      %v3705 = vadd.f32 %v3704, %v3594
      %v3706 = vadd.f32 %v3705, %v3597
      %v3707 = vadd.f32 %v3706, %v3599
      %v3708 = vadd.f32 %v3707, %v3602
      %v3709 = vadd.f32 %v3708, %v3604
      %v3710 = vadd.f32 %v3709, %v3607
      %v3711 = vadd.f32 %v3710, %v3609
      %v3712 = vadd.f32 %v3711, %v3612
      %v3713 = vadd.f32 %v3712, %v3614
      %v3714 = vadd.f32 %v3713, %v3617
      %v3715 = vadd.f32 %v3714, %v3619
      %v3716 = vrot.slane %v3715, 4
      %v3717 = vadd.f32 %v3715, %v3716
      %v3718 = vrot.slane %v3717, 2
      %v3719 = vadd.f32 %v3717, %v3718
      %v3720 = vrot.slane %v3719, 1
      %v3721 = vadd.f32 %v3719, %v3720
      %v3722 = vadd.f32 %v3721, 0.0
      %v3723 = vmul.f32 %v3542, %v3542
      %v3724 = vmul.f32 %v3544, %v3544
      %v3725 = vmul.f32 %v3547, %v3547
      %v3726 = vmul.f32 %v3549, %v3549
      %v3727 = vmul.f32 %v3552, %v3552
      %v3728 = vmul.f32 %v3554, %v3554
      %v3729 = vmul.f32 %v3557, %v3557
      %v3730 = vmul.f32 %v3559, %v3559
      %v3731 = vmul.f32 %v3562, %v3562
      %v3732 = vmul.f32 %v3564, %v3564
      %v3733 = vmul.f32 %v3567, %v3567
      %v3734 = vmul.f32 %v3569, %v3569
      %v3735 = vmul.f32 %v3572, %v3572
      %v3736 = vmul.f32 %v3574, %v3574
      %v3737 = vmul.f32 %v3577, %v3577
      %v3738 = vmul.f32 %v3579, %v3579
      %v3739 = vmul.f32 %v3582, %v3582
      %v3740 = vmul.f32 %v3584, %v3584
      %v3741 = vmul.f32 %v3587, %v3587
      %v3742 = vmul.f32 %v3589, %v3589
      %v3743 = vmul.f32 %v3592, %v3592
      %v3744 = vmul.f32 %v3594, %v3594
      %v3745 = vmul.f32 %v3597, %v3597
      %v3746 = vmul.f32 %v3599, %v3599
      %v3747 = vmul.f32 %v3602, %v3602
      %v3748 = vmul.f32 %v3604, %v3604
      %v3749 = vmul.f32 %v3607, %v3607
      %v3750 = vmul.f32 %v3609, %v3609
      %v3751 = vmul.f32 %v3612, %v3612
      %v3752 = vmul.f32 %v3614, %v3614
      %v3753 = vmul.f32 %v3617, %v3617
      %v3754 = vmul.f32 %v3619, %v3619
      %v3755 = vadd.f32 %v3723, %v3724
      %v3756 = vadd.f32 %v3755, %v3725
      %v3757 = vadd.f32 %v3756, %v3726
      %v3758 = vadd.f32 %v3757, %v3727
      %v3759 = vadd.f32 %v3758, %v3728
      %v3760 = vadd.f32 %v3759, %v3729
      %v3761 = vadd.f32 %v3760, %v3730
      %v3762 = vadd.f32 %v3761, %v3731
      %v3763 = vadd.f32 %v3762, %v3732
      %v3764 = vadd.f32 %v3763, %v3733
      %v3765 = vadd.f32 %v3764, %v3734
      %v3766 = vadd.f32 %v3765, %v3735
      %v3767 = vadd.f32 %v3766, %v3736
      %v3768 = vadd.f32 %v3767, %v3737
      %v3769 = vadd.f32 %v3768, %v3738
      %v3770 = vadd.f32 %v3769, %v3739
      %v3771 = vadd.f32 %v3770, %v3740
      %v3772 = vadd.f32 %v3771, %v3741
      %v3773 = vadd.f32 %v3772, %v3742
      %v3774 = vadd.f32 %v3773, %v3743
      %v3775 = vadd.f32 %v3774, %v3744
      %v3776 = vadd.f32 %v3775, %v3745
      %v3777 = vadd.f32 %v3776, %v3746
      %v3778 = vadd.f32 %v3777, %v3747
      %v3779 = vadd.f32 %v3778, %v3748
      %v3780 = vadd.f32 %v3779, %v3749
      %v3781 = vadd.f32 %v3780, %v3750
      %v3782 = vadd.f32 %v3781, %v3751
      %v3783 = vadd.f32 %v3782, %v3752
      %v3784 = vadd.f32 %v3783, %v3753
      %v3785 = vadd.f32 %v3784, %v3754
      %v3786 = vrot.slane %v3785, 4
      %v3787 = vadd.f32 %v3785, %v3786
      %v3788 = vrot.slane %v3787, 2
      %v3789 = vadd.f32 %v3787, %v3788
      %v3790 = vrot.slane %v3789, 1
      %v3791 = vadd.f32 %v3789, %v3790
      %v3792 = vadd.f32 %v3791, 0.0
      %3793 = vst [vmem:[%s238] sm:$0x1] %v3722
      %3794 = vst [vmem:[%s238 + $0x1] sm:$0x1] %v3792
      %s3795 = smul.u32 32, %s17
      %p3796 = scmp.lt.s32.totalorder %s3795, 63
      %s3797 = scalar_select %p3796, %s3795, 63
      %s3798 = smul.addr %s3797, 4
      %s3799 = scalar_lea.vmem %s4, %s3798
      %p3800 = scmp.lt.s32.totalorder %s17, 1
      %s3801 = scalar_select %p3800, %s17, 1
      %s3802 = smul.addr %s3801, 2
      %s3803 = scalar_lea.vmem %s5, %s3802
      // Predicated region
      $region37: #{double_conv.4} parent=35 // pred_check
        %p3804 = pneg %p124
      $region38: #{double_conv.4} parent=35 // pred_check_branch
        %3806 = sbr.rel (%p3804) target = $region40
      $region39: #{double_conv.4} parent=35 // pred_region
        %s3807 = smul.u32 32, %s17
      $region40: #{double_conv.4} parent=35 // pred_fallthru
        _
      // Predicated region
      $region41: #{double_conv.4} parent=35 // pred_check
        %p3808 = pneg %p150
      $region42: #{double_conv.4} parent=35 // pred_check_branch
        %3810 = sbr.rel (%p3808) target = $region44
      $region43: #{double_conv.4} parent=35 // pred_region
        _
      $region44: #{double_conv.4} parent=35 // pred_fallthru
        _
    $region36: #{double_conv.4} parent=5 // pred_fallthru
      _
    %p3811 = scmp.le.s32.totalorder 2, %s12
    // Predicated region
    $region45: #{double_conv.4} parent=5 // pred_check
      %p3812 = pneg %p3811
    $region46: #{double_conv.4} parent=5 // pred_check_branch
      %3814 = sbr.rel (%p3812) target = $region48
    $region47: #{double_conv.4} parent=5 // pred_region
      %s3815 = ssub.s32 %s12, 2
      // Predicated region
      $region49: #{double_conv.4} parent=47 // pred_check
        %p3816 = pneg %p130
      $region50: #{double_conv.4} parent=47 // pred_check_branch
        %3818 = sbr.rel (%p3816) target = $region52
      $region51: #{double_conv.4} parent=47 // pred_region
        %s3819 = smul.u32 32, %s18
        %p3820 = scmp.lt.s32.totalorder %s3819, 63
        %s3821 = scalar_select %p3820, %s3819, 63
        %s3822 = smul.addr %s3821, 4
        %s3823 = scalar_lea.vmem %s4, %s3822
      $region52: #{double_conv.4} parent=47 // pred_fallthru
        _
      // Predicated region
      $region53: #{double_conv.4} parent=47 // pred_check
        %p3824 = pneg %p156
      $region54: #{double_conv.4} parent=47 // pred_check_branch
        %3826 = sbr.rel (%p3824) target = $region56
      $region55: #{double_conv.4} parent=47 // pred_region
        %p3827 = scmp.lt.s32.totalorder %s18, 1
        %s3828 = scalar_select %p3827, %s18, 1
        %s3829 = smul.addr %s3828, 2
        %s3830 = scalar_lea.vmem %s5, %s3829
      $region56: #{double_conv.4} parent=47 // pred_fallthru
        _
    $region48: #{double_conv.4} parent=5 // pred_fallthru
      _
  $region6: #{double_conv.4} parent=0 // loop_footer
    %s16 = sadd.s32 1, %s12
  $region7: #{double_conv.4} parent=0 // loop_footer_branch
    %11 = sbr.rel target = $region3
  $region8: #{double_conv.4} parent=0 // loop_exit
    _

</llo_original>
